<compile_context>
chip_gen: v5e
topology: v5e:2x2
jax: 0.10.0
libtpu: 0.0.40
codegen_flags: <defaults>
</compile_context>

<pallas_src>
import functools

import jax
import jax.numpy as jnp
from jax import lax
from jax.experimental import pallas as pl
from jax.experimental.pallas import tpu as pltpu


def routing_kernel(b_ref, c0_ref, p_ref, pt_ref, u_ref, v_ref, *,
                   n_iterations, TB, ICp, OCp, Fp, precision):
    """One grid step: complete routing for TB batch elements.

    b_ref : (ICp, OCp)        routing logits (padded output caps filled with -1e30)
    c0_ref: (ICp, Fp)         softmax(b, axis=OC) pre-repeated over output_dim
    p_ref : (Fp, OCp)         0/1 matrix: sum the D lanes of each output capsule
    pt_ref: (OCp, Fp)         0/1 matrix: broadcast a per-capsule scalar over D lanes
    u_ref : (1, TB, ICp, Fp)  predictions tile (native dtype, zero-padded)
    v_ref : (1, TB, Fp)       output capsules, lanes = cap*dim
    """
    f32 = jnp.float32

    u3 = u_ref[0]                               # (TB, ICp, Fp) native dtype (no f32 copy)
    u2 = u3.reshape(TB * ICp, Fp)               # free view: ICp % 8 == 0
    c0 = c0_ref[...]                            # (ICp, Fp) f32
    b0 = b_ref[...]                             # (ICp, OCp) f32
    P = p_ref[...]                              # (Fp, OCp)
    PT = pt_ref[...]                            # (OCp, Fp)

    def mm(a, m):
        # bf16 inputs take the native single-pass MXU path; f32 inputs use the
        # multi-pass HIGHEST path so routing stays well inside tolerance.
        return jnp.dot(a, m, precision=precision, preferred_element_type=f32)

    def softmax_oc(x):
        # Softmax over the (padded) output-caps axis; padded columns sit at -1e30.
        xm = jnp.max(x, axis=-1, keepdims=True)
        e = jnp.exp(x - xm)
        return e / jnp.sum(e, axis=-1, keepdims=True)     # exact divide

    def squash(s):
        # s: (TB, Fp); per-capsule |s|^2 via MXU segment matmul.
        l2 = mm(s * s, P)                                  # (TB, OCp)
        # TODO(synk): zero-length capsules return 0 here; the PyTorch reference
        # divides by zero and yields NaN/Inf.
        scale = l2 / ((1.0 + l2) * jnp.sqrt(l2 + 1e-12))   # lengths2/(1+lengths2)/lengths
        return s * mm(scale, PT)                           # (TB, Fp)

    # Iteration 0: softmax(b) is batch independent and hoisted to the wrapper.
    s = jnp.sum(c0[None, :, :] * u3, axis=1)               # (TB, Fp) f32, sum over input caps
    v = squash(s)

    # Routing logits expanded over the batch tile (accumulated across iterations).
    b_rows = jnp.broadcast_to(b0[None], (TB, ICp, OCp)).reshape(TB * ICp, OCp)

    # n_iterations is a small static int -> unrolled at trace time.
    # TODO(synk): for OCp << 128, lane-pack the softmax/agreement path and fuse the
    # two tiny *@P matmuls per iteration; for very large input_caps tile ICp with an
    # inner fori_loop to bound live VMEM temporaries.
    for _ in range(n_iterations):
        uv = (u3 * v[:, None, :]).reshape(TB * ICp, Fp)     # broadcast v over input caps
        b_rows = b_rows + mm(uv, P)                         # agreement: sum over D lanes
        c = softmax_oc(b_rows)                              # (TB*ICp, OCp) coupling coeffs
        cu = mm(c, PT) * u2                                 # repeat coeffs over D lanes
        s = jnp.sum(cu.reshape(TB, ICp, Fp), axis=1)        # sum over input caps (axis-1)
        v = squash(s)

    v_ref[0] = v.astype(v_ref.dtype)


def _vmem_budget_bytes():
    """(tile budget, scoped vmem limit) -- generation aware, conservative."""
    cap = 64 * 1024 * 1024
    try:
        info = pltpu.get_tpu_info()
        cap = int(getattr(info, "vmem_capacity_bytes", cap)) or cap
    except Exception:
        pass
    # Leave ~half the physical VMEM for pipeline double-buffering / compiler scratch.
    return cap // 4, cap // 2


def agreement_routing(u_predict, b, n_iterations):
    """AgreementRouting.forward(u_predict) with routing logits `b`."""
    B, IC, OC, D = u_predict.shape
    F = OC * D

    # Lane padding: pad whole output capsules so the flat last axis is % 128 == 0.
    if F % 128 == 0:
        OCp = OC
    elif 128 % D == 0:
        OCp = (-(-F // 128) * 128) // D
    else:
        # TODO(synk): general output_dim that neither divides 128 nor gives F%128==0.
        raise NotImplementedError("output_dim must divide 128 or OC*D % 128 == 0")
    Fp = OCp * D
    ICp = -(-IC // 8) * 8                       # sublane-align input caps

    vmem_budget, vmem_limit = _vmem_budget_bytes()

    # Working set per batch element: u tile (x2 pipeline buffers, native dtype)
    # plus ~4 live f32 (ICp, Fp) temporaries inside the routing loop.
    itemsize = jnp.dtype(u_predict.dtype).itemsize
    per_elem = ICp * Fp * (2 * itemsize + 4 * 4)
    TB = int(max(1, min(B, vmem_budget // max(per_elem, 1))))
    nblocks = -(-B // TB)
    # TODO(synk): on v7x (2 TensorCores) round nblocks up to an even count so both
    # cores get equal work when nblocks > 1; on v5e/v6e no forced split is applied.
    Bp = nblocks * TB

    # Host-side prep (cheap XLA ops): flatten + zero-pad u, hoist the initial softmax.
    u = u_predict.reshape(B, IC, F)
    u = jnp.pad(u, ((0, Bp - B), (0, ICp - IC), (0, Fp - F)))
    u = u.reshape(nblocks, TB, ICp, Fp)

    bf = b.astype(jnp.float32)
    c0 = jax.nn.softmax(bf, axis=1)                                    # (IC, OC)
    c0_rep = jnp.broadcast_to(c0[:, :, None], (IC, OC, D)).reshape(IC, F)
    c0_rep = jnp.pad(c0_rep, ((0, ICp - IC), (0, Fp - F)))
    bf = jnp.pad(bf, ((0, ICp - IC), (0, 0)))
    # Padded output capsules get a huge negative logit -> softmax weight 0.
    bf = jnp.pad(bf, ((0, 0), (0, OCp - OC)), constant_values=-1e30)

    # Grid-invariant 0/1 segment matrices (built once, resident across grid steps).
    cap_of_lane = jnp.arange(Fp, dtype=jnp.int32) // D
    P = (cap_of_lane[:, None] == jnp.arange(OCp, dtype=jnp.int32)[None, :]
         ).astype(jnp.float32)                                         # (Fp, OCp)
    PT = P.T                                                           # (OCp, Fp)

    precision = (lax.Precision.HIGHEST if u_predict.dtype == jnp.float32
                 else lax.Precision.DEFAULT)

    kernel = functools.partial(
        routing_kernel, n_iterations=int(n_iterations), TB=TB, ICp=ICp,
        OCp=OCp, Fp=Fp, precision=precision)

    v = pl.pallas_call(
        kernel,
        out_shape=jax.ShapeDtypeStruct((nblocks, TB, Fp), u_predict.dtype),
        grid=(nblocks,),
        in_specs=[
            pl.BlockSpec((ICp, OCp), lambda i: (0, 0)),            # b (replicated)
            pl.BlockSpec((ICp, Fp), lambda i: (0, 0)),             # softmax(b) repeated
            pl.BlockSpec((Fp, OCp), lambda i: (0, 0)),             # P
            pl.BlockSpec((OCp, Fp), lambda i: (0, 0)),             # PT
            pl.BlockSpec((1, TB, ICp, Fp), lambda i: (i, 0, 0, 0)),  # u tile (TB batch elems)
        ],
        out_specs=pl.BlockSpec((1, TB, Fp), lambda i: (i, 0, 0)),
        compiler_params=pltpu.CompilerParams(
            dimension_semantics=("parallel",),
            vmem_limit_bytes=vmem_limit,
        ),
    )(bf, c0_rep, P, PT, u)

    return v.reshape(Bp, Fp)[:B, :F].reshape(B, OC, D)


def agreement_routing_ref(u_predict, b, n_iterations):
    """Pure-JAX reference mirroring the PyTorch forward exactly."""
    def squash(x):
        lengths2 = jnp.sum(x ** 2, axis=2)
        lengths = jnp.sqrt(lengths2)
        return x * (lengths2 / (1 + lengths2) / lengths)[:, :, None]

    c = jax.nn.softmax(b, axis=1)
    s = jnp.sum(c[None, :, :, None] * u_predict, axis=1)
    v = squash(s)
    if n_iterations > 0:
        b_batch = jnp.broadcast_to(b, (u_predict.shape[0],) + b.shape)
        for _ in range(n_iterations):
            b_batch = b_batch + jnp.sum(u_predict * v[:, None, :, :], axis=-1)
            c = jax.nn.softmax(b_batch, axis=-1)[..., None]
            s = jnp.sum(c * u_predict, axis=1)
            v = squash(s)
    return v


if __name__ == "__main__":
    batch, input_caps, output_caps, output_dim = 2, 8, 16, 16
    n_iterations = 3

    key = jax.random.PRNGKey(0)
    ku, kb = jax.random.split(key)
    u_predict = jax.random.normal(
        ku, (batch, input_caps, output_caps, output_dim), dtype=jnp.float32)
    # The module initialises b to zeros; a small non-zero b exercises the hoisted
    # initial softmax with non-uniform coupling weights.
    b = 0.5 * jax.random.normal(kb, (input_caps, output_caps), dtype=jnp.float32)

    v = agreement_routing(u_predict, b, n_iterations)
    v = jax.block_until_ready(v)

    v_ref = agreement_routing_ref(u_predict, b, n_iterations)
    assert v.shape == (batch, output_caps, output_dim)
    err = float(jnp.max(jnp.abs(v - v_ref)))
    assert jnp.allclose(v, v_ref, atol=5e-3, rtol=5e-3), f"max err {err}"

    print("KERNEL_OK")
</pallas_src>

<mosaic_0001>
module attributes {stable_mosaic.version = 11 : i64} {
  func.func @routing_kernel(%arg0: i32, %arg1: memref<8x16xf32, #tpu.memory_space<vmem>>, %arg2: memref<8x256xf32, #tpu.memory_space<vmem>>, %arg3: memref<256x16xf32, #tpu.memory_space<vmem>>, %arg4: memref<16x256xf32, #tpu.memory_space<vmem>>, %arg5: memref<1x2x8x256xf32, #tpu.memory_space<vmem>>, %arg6: memref<1x2x256xf32, #tpu.memory_space<vmem>>) attributes {dimension_semantics = [#tpu.dimension_semantics<parallel>], iteration_bounds = array<i64: 1>, scalar_prefetch = 0 : i64, scratch_operands = 0 : i64, tpu.core_type = #tpu.core_type<tc>, window_params = [{pipeline_mode = #tpu.pipeline_mode<synchronous>, transform_indices = @transform_0, window_bounds = array<i64: 8, 16>}, {pipeline_mode = #tpu.pipeline_mode<synchronous>, transform_indices = @transform_1, window_bounds = array<i64: 8, 256>}, {pipeline_mode = #tpu.pipeline_mode<synchronous>, transform_indices = @transform_2, window_bounds = array<i64: 256, 16>}, {pipeline_mode = #tpu.pipeline_mode<synchronous>, transform_indices = @transform_3, window_bounds = array<i64: 16, 256>}, {transform_indices = @transform_4, window_bounds = array<i64: 1, 2, 8, 256>}, {transform_indices = @transform_5, window_bounds = array<i64: 1, 2, 256>}]} {
    %c0 = arith.constant 0 : index
    %c0_0 = arith.constant 0 : index
    %c0_1 = arith.constant 0 : index
    %c0_2 = arith.constant 0 : index
    %0 = vector.load %arg5[%c0, %c0_0, %c0_1, %c0_2] : memref<1x2x8x256xf32, #tpu.memory_space<vmem>>, vector<1x2x8x256xf32>
    %1 = vector.shape_cast %0 : vector<1x2x8x256xf32> to vector<2x8x256xf32>
    %2 = vector.shape_cast %1 : vector<2x8x256xf32> to vector<16x256xf32>
    %c0_3 = arith.constant 0 : index
    %c0_4 = arith.constant 0 : index
    %3 = vector.load %arg2[%c0_3, %c0_4] : memref<8x256xf32, #tpu.memory_space<vmem>>, vector<8x256xf32>
    %c0_5 = arith.constant 0 : index
    %c0_6 = arith.constant 0 : index
    %4 = vector.load %arg1[%c0_5, %c0_6] : memref<8x16xf32, #tpu.memory_space<vmem>>, vector<8x16xf32>
    %c0_7 = arith.constant 0 : index
    %c0_8 = arith.constant 0 : index
    %5 = vector.load %arg3[%c0_7, %c0_8] : memref<256x16xf32, #tpu.memory_space<vmem>>, vector<256x16xf32>
    %c0_9 = arith.constant 0 : index
    %c0_10 = arith.constant 0 : index
    %6 = vector.load %arg4[%c0_9, %c0_10] : memref<16x256xf32, #tpu.memory_space<vmem>>, vector<16x256xf32>
    %7 = vector.shape_cast %3 : vector<8x256xf32> to vector<1x8x256xf32>
    %8 = vector.broadcast %7 : vector<1x8x256xf32> to vector<2x8x256xf32>
    %9 = arith.mulf %8, %1 : vector<2x8x256xf32>
    %cst = arith.constant dense<0.000000e+00> : vector<2x256xf32>
    %10 = vector.multi_reduction <add>, %9, %cst [1] : vector<2x8x256xf32> to vector<2x256xf32>
    %11 = arith.mulf %10, %10 : vector<2x256xf32>
    %cst_11 = arith.constant dense<0.000000e+00> : vector<2x16xf32>
    %12 = tpu.matmul %11, %5, %cst_11 {dimension_numbers = #tpu.dot_dimension_numbers<[1], [0], [0], [1], [0, 0, 1, 1], [], []>, precision = #tpu.contract_precision<fp32>} : vector<2x256xf32>, vector<256x16xf32>, vector<2x16xf32> -> vector<2x16xf32>
    %cst_12 = arith.constant 1.000000e+00 : f32
    %13 = vector.broadcast %cst_12 : f32 to vector<2x16xf32>
    %14 = arith.addf %13, %12 : vector<2x16xf32>
    %cst_13 = arith.constant 9.99999996E-13 : f32
    %15 = vector.broadcast %cst_13 : f32 to vector<2x16xf32>
    %16 = arith.addf %12, %15 : vector<2x16xf32>
    %17 = math.sqrt %16 : vector<2x16xf32>
    %18 = arith.mulf %14, %17 : vector<2x16xf32>
    %19 = arith.divf %12, %18 : vector<2x16xf32>
    %cst_14 = arith.constant dense<0.000000e+00> : vector<2x256xf32>
    %20 = tpu.matmul %19, %6, %cst_14 {dimension_numbers = #tpu.dot_dimension_numbers<[1], [0], [0], [1], [0, 0, 1, 1], [], []>, precision = #tpu.contract_precision<fp32>} : vector<2x16xf32>, vector<16x256xf32>, vector<2x256xf32> -> vector<2x256xf32>
    %21 = arith.mulf %10, %20 : vector<2x256xf32>
    %22 = vector.shape_cast %4 : vector<8x16xf32> to vector<1x8x16xf32>
    %23 = vector.shape_cast %22 : vector<1x8x16xf32> to vector<1x8x16xf32>
    %24 = vector.broadcast %23 : vector<1x8x16xf32> to vector<2x8x16xf32>
    %25 = vector.shape_cast %24 : vector<2x8x16xf32> to vector<16x16xf32>
    %26 = vector.shape_cast %21 : vector<2x256xf32> to vector<2x1x256xf32>
    %27 = vector.broadcast %26 : vector<2x1x256xf32> to vector<2x8x256xf32>
    %28 = arith.mulf %1, %27 : vector<2x8x256xf32>
    %29 = vector.shape_cast %28 : vector<2x8x256xf32> to vector<16x256xf32>
    %cst_15 = arith.constant dense<0.000000e+00> : vector<16x16xf32>
    %30 = tpu.matmul %29, %5, %cst_15 {dimension_numbers = #tpu.dot_dimension_numbers<[1], [0], [0], [1], [0, 0, 1, 1], [], []>, precision = #tpu.contract_precision<fp32>} : vector<16x256xf32>, vector<256x16xf32>, vector<16x16xf32> -> vector<16x16xf32>
    %31 = arith.addf %25, %30 : vector<16x16xf32>
    %cst_16 = arith.constant dense<0xFF800000> : vector<16xf32>
    %32 = vector.multi_reduction <maximumf>, %31, %cst_16 [1] : vector<16x16xf32> to vector<16xf32>
    %33 = vector.shape_cast %32 : vector<16xf32> to vector<16x1xf32>
    %34 = vector.broadcast %33 : vector<16x1xf32> to vector<16x16xf32>
    %35 = arith.subf %31, %34 : vector<16x16xf32>
    %36 = math.exp %35 : vector<16x16xf32>
    %cst_17 = arith.constant dense<0.000000e+00> : vector<16xf32>
    %37 = vector.multi_reduction <add>, %36, %cst_17 [1] : vector<16x16xf32> to vector<16xf32>
    %38 = vector.shape_cast %37 : vector<16xf32> to vector<16x1xf32>
    %39 = vector.broadcast %38 : vector<16x1xf32> to vector<16x16xf32>
    %40 = arith.divf %36, %39 : vector<16x16xf32>
    %cst_18 = arith.constant dense<0.000000e+00> : vector<16x256xf32>
    %41 = tpu.matmul %40, %6, %cst_18 {dimension_numbers = #tpu.dot_dimension_numbers<[1], [0], [0], [1], [0, 0, 1, 1], [], []>, precision = #tpu.contract_precision<fp32>} : vector<16x16xf32>, vector<16x256xf32>, vector<16x256xf32> -> vector<16x256xf32>
    %42 = arith.mulf %41, %2 : vector<16x256xf32>
    %43 = vector.shape_cast %42 : vector<16x256xf32> to vector<2x8x256xf32>
    %cst_19 = arith.constant dense<0.000000e+00> : vector<2x256xf32>
    %44 = vector.multi_reduction <add>, %43, %cst_19 [1] : vector<2x8x256xf32> to vector<2x256xf32>
    %45 = arith.mulf %44, %44 : vector<2x256xf32>
    %cst_20 = arith.constant dense<0.000000e+00> : vector<2x16xf32>
    %46 = tpu.matmul %45, %5, %cst_20 {dimension_numbers = #tpu.dot_dimension_numbers<[1], [0], [0], [1], [0, 0, 1, 1], [], []>, precision = #tpu.contract_precision<fp32>} : vector<2x256xf32>, vector<256x16xf32>, vector<2x16xf32> -> vector<2x16xf32>
    %cst_21 = arith.constant 1.000000e+00 : f32
    %47 = vector.broadcast %cst_21 : f32 to vector<2x16xf32>
    %48 = arith.addf %47, %46 : vector<2x16xf32>
    %cst_22 = arith.constant 9.99999996E-13 : f32
    %49 = vector.broadcast %cst_22 : f32 to vector<2x16xf32>
    %50 = arith.addf %46, %49 : vector<2x16xf32>
    %51 = math.sqrt %50 : vector<2x16xf32>
    %52 = arith.mulf %48, %51 : vector<2x16xf32>
    %53 = arith.divf %46, %52 : vector<2x16xf32>
    %cst_23 = arith.constant dense<0.000000e+00> : vector<2x256xf32>
    %54 = tpu.matmul %53, %6, %cst_23 {dimension_numbers = #tpu.dot_dimension_numbers<[1], [0], [0], [1], [0, 0, 1, 1], [], []>, precision = #tpu.contract_precision<fp32>} : vector<2x16xf32>, vector<16x256xf32>, vector<2x256xf32> -> vector<2x256xf32>
    %55 = arith.mulf %44, %54 : vector<2x256xf32>
    %56 = vector.shape_cast %55 : vector<2x256xf32> to vector<2x1x256xf32>
    %57 = vector.broadcast %56 : vector<2x1x256xf32> to vector<2x8x256xf32>
    %58 = arith.mulf %1, %57 : vector<2x8x256xf32>
    %59 = vector.shape_cast %58 : vector<2x8x256xf32> to vector<16x256xf32>
    %cst_24 = arith.constant dense<0.000000e+00> : vector<16x16xf32>
    %60 = tpu.matmul %59, %5, %cst_24 {dimension_numbers = #tpu.dot_dimension_numbers<[1], [0], [0], [1], [0, 0, 1, 1], [], []>, precision = #tpu.contract_precision<fp32>} : vector<16x256xf32>, vector<256x16xf32>, vector<16x16xf32> -> vector<16x16xf32>
    %61 = arith.addf %31, %60 : vector<16x16xf32>
    %cst_25 = arith.constant dense<0xFF800000> : vector<16xf32>
    %62 = vector.multi_reduction <maximumf>, %61, %cst_25 [1] : vector<16x16xf32> to vector<16xf32>
    %63 = vector.shape_cast %62 : vector<16xf32> to vector<16x1xf32>
    %64 = vector.broadcast %63 : vector<16x1xf32> to vector<16x16xf32>
    %65 = arith.subf %61, %64 : vector<16x16xf32>
    %66 = math.exp %65 : vector<16x16xf32>
    %cst_26 = arith.constant dense<0.000000e+00> : vector<16xf32>
    %67 = vector.multi_reduction <add>, %66, %cst_26 [1] : vector<16x16xf32> to vector<16xf32>
    %68 = vector.shape_cast %67 : vector<16xf32> to vector<16x1xf32>
    %69 = vector.broadcast %68 : vector<16x1xf32> to vector<16x16xf32>
    %70 = arith.divf %66, %69 : vector<16x16xf32>
    %cst_27 = arith.constant dense<0.000000e+00> : vector<16x256xf32>
    %71 = tpu.matmul %70, %6, %cst_27 {dimension_numbers = #tpu.dot_dimension_numbers<[1], [0], [0], [1], [0, 0, 1, 1], [], []>, precision = #tpu.contract_precision<fp32>} : vector<16x16xf32>, vector<16x256xf32>, vector<16x256xf32> -> vector<16x256xf32>
    %72 = arith.mulf %71, %2 : vector<16x256xf32>
    %73 = vector.shape_cast %72 : vector<16x256xf32> to vector<2x8x256xf32>
    %cst_28 = arith.constant dense<0.000000e+00> : vector<2x256xf32>
    %74 = vector.multi_reduction <add>, %73, %cst_28 [1] : vector<2x8x256xf32> to vector<2x256xf32>
    %75 = arith.mulf %74, %74 : vector<2x256xf32>
    %cst_29 = arith.constant dense<0.000000e+00> : vector<2x16xf32>
    %76 = tpu.matmul %75, %5, %cst_29 {dimension_numbers = #tpu.dot_dimension_numbers<[1], [0], [0], [1], [0, 0, 1, 1], [], []>, precision = #tpu.contract_precision<fp32>} : vector<2x256xf32>, vector<256x16xf32>, vector<2x16xf32> -> vector<2x16xf32>
    %cst_30 = arith.constant 1.000000e+00 : f32
    %77 = vector.broadcast %cst_30 : f32 to vector<2x16xf32>
    %78 = arith.addf %77, %76 : vector<2x16xf32>
    %cst_31 = arith.constant 9.99999996E-13 : f32
    %79 = vector.broadcast %cst_31 : f32 to vector<2x16xf32>
    %80 = arith.addf %76, %79 : vector<2x16xf32>
    %81 = math.sqrt %80 : vector<2x16xf32>
    %82 = arith.mulf %78, %81 : vector<2x16xf32>
    %83 = arith.divf %76, %82 : vector<2x16xf32>
    %cst_32 = arith.constant dense<0.000000e+00> : vector<2x256xf32>
    %84 = tpu.matmul %83, %6, %cst_32 {dimension_numbers = #tpu.dot_dimension_numbers<[1], [0], [0], [1], [0, 0, 1, 1], [], []>, precision = #tpu.contract_precision<fp32>} : vector<2x16xf32>, vector<16x256xf32>, vector<2x256xf32> -> vector<2x256xf32>
    %85 = arith.mulf %74, %84 : vector<2x256xf32>
    %86 = vector.shape_cast %85 : vector<2x256xf32> to vector<2x1x256xf32>
    %87 = vector.broadcast %86 : vector<2x1x256xf32> to vector<2x8x256xf32>
    %88 = arith.mulf %1, %87 : vector<2x8x256xf32>
    %89 = vector.shape_cast %88 : vector<2x8x256xf32> to vector<16x256xf32>
    %cst_33 = arith.constant dense<0.000000e+00> : vector<16x16xf32>
    %90 = tpu.matmul %89, %5, %cst_33 {dimension_numbers = #tpu.dot_dimension_numbers<[1], [0], [0], [1], [0, 0, 1, 1], [], []>, precision = #tpu.contract_precision<fp32>} : vector<16x256xf32>, vector<256x16xf32>, vector<16x16xf32> -> vector<16x16xf32>
    %91 = arith.addf %61, %90 : vector<16x16xf32>
    %cst_34 = arith.constant dense<0xFF800000> : vector<16xf32>
    %92 = vector.multi_reduction <maximumf>, %91, %cst_34 [1] : vector<16x16xf32> to vector<16xf32>
    %93 = vector.shape_cast %92 : vector<16xf32> to vector<16x1xf32>
    %94 = vector.broadcast %93 : vector<16x1xf32> to vector<16x16xf32>
    %95 = arith.subf %91, %94 : vector<16x16xf32>
    %96 = math.exp %95 : vector<16x16xf32>
    %cst_35 = arith.constant dense<0.000000e+00> : vector<16xf32>
    %97 = vector.multi_reduction <add>, %96, %cst_35 [1] : vector<16x16xf32> to vector<16xf32>
    %98 = vector.shape_cast %97 : vector<16xf32> to vector<16x1xf32>
    %99 = vector.broadcast %98 : vector<16x1xf32> to vector<16x16xf32>
    %100 = arith.divf %96, %99 : vector<16x16xf32>
    %cst_36 = arith.constant dense<0.000000e+00> : vector<16x256xf32>
    %101 = tpu.matmul %100, %6, %cst_36 {dimension_numbers = #tpu.dot_dimension_numbers<[1], [0], [0], [1], [0, 0, 1, 1], [], []>, precision = #tpu.contract_precision<fp32>} : vector<16x16xf32>, vector<16x256xf32>, vector<16x256xf32> -> vector<16x256xf32>
    %102 = arith.mulf %101, %2 : vector<16x256xf32>
    %103 = vector.shape_cast %102 : vector<16x256xf32> to vector<2x8x256xf32>
    %cst_37 = arith.constant dense<0.000000e+00> : vector<2x256xf32>
    %104 = vector.multi_reduction <add>, %103, %cst_37 [1] : vector<2x8x256xf32> to vector<2x256xf32>
    %105 = arith.mulf %104, %104 : vector<2x256xf32>
    %cst_38 = arith.constant dense<0.000000e+00> : vector<2x16xf32>
    %106 = tpu.matmul %105, %5, %cst_38 {dimension_numbers = #tpu.dot_dimension_numbers<[1], [0], [0], [1], [0, 0, 1, 1], [], []>, precision = #tpu.contract_precision<fp32>} : vector<2x256xf32>, vector<256x16xf32>, vector<2x16xf32> -> vector<2x16xf32>
    %cst_39 = arith.constant 1.000000e+00 : f32
    %107 = vector.broadcast %cst_39 : f32 to vector<2x16xf32>
    %108 = arith.addf %107, %106 : vector<2x16xf32>
    %cst_40 = arith.constant 9.99999996E-13 : f32
    %109 = vector.broadcast %cst_40 : f32 to vector<2x16xf32>
    %110 = arith.addf %106, %109 : vector<2x16xf32>
    %111 = math.sqrt %110 : vector<2x16xf32>
    %112 = arith.mulf %108, %111 : vector<2x16xf32>
    %113 = arith.divf %106, %112 : vector<2x16xf32>
    %cst_41 = arith.constant dense<0.000000e+00> : vector<2x256xf32>
    %114 = tpu.matmul %113, %6, %cst_41 {dimension_numbers = #tpu.dot_dimension_numbers<[1], [0], [0], [1], [0, 0, 1, 1], [], []>, precision = #tpu.contract_precision<fp32>} : vector<2x16xf32>, vector<16x256xf32>, vector<2x256xf32> -> vector<2x256xf32>
    %115 = arith.mulf %104, %114 : vector<2x256xf32>
    %c0_42 = arith.constant 0 : index
    %c0_43 = arith.constant 0 : index
    %c0_44 = arith.constant 0 : index
    %116 = vector.load %arg6[%c0_42, %c0_43, %c0_44] : memref<1x2x256xf32, #tpu.memory_space<vmem>>, vector<1x2x256xf32>
    %117 = vector.shape_cast %116 : vector<1x2x256xf32> to vector<2x256xf32>
    %118 = vector.shape_cast %115 : vector<2x256xf32> to vector<1x2x256xf32>
    tpu.vector_store %arg6[%c0_42, %c0_43, %c0_44], %118 {strides = array<i32>} : memref<1x2x256xf32, #tpu.memory_space<vmem>>, vector<1x2x256xf32>,
    return
  }
  func.func @transform_0(%arg0: i32) -> (i32, i32) {
    %c0_i32 = arith.constant 0 : i32
    %c0_i32_0 = arith.constant 0 : i32
    %c0_i32_1 = arith.constant 0 : i32
    return %c0_i32, %c0_i32_0 : i32, i32
  }
  func.func @transform_1(%arg0: i32) -> (i32, i32) {
    %c0_i32 = arith.constant 0 : i32
    %c0_i32_0 = arith.constant 0 : i32
    %c0_i32_1 = arith.constant 0 : i32
    return %c0_i32, %c0_i32_0 : i32, i32
  }
  func.func @transform_2(%arg0: i32) -> (i32, i32) {
    %c0_i32 = arith.constant 0 : i32
    %c0_i32_0 = arith.constant 0 : i32
    %c0_i32_1 = arith.constant 0 : i32
    return %c0_i32, %c0_i32_0 : i32, i32
  }
  func.func @transform_3(%arg0: i32) -> (i32, i32) {
    %c0_i32 = arith.constant 0 : i32
    %c0_i32_0 = arith.constant 0 : i32
    %c0_i32_1 = arith.constant 0 : i32
    return %c0_i32, %c0_i32_0 : i32, i32
  }
  func.func @transform_4(%arg0: i32) -> (i32, i32, i32, i32) {
    %c0_i32 = arith.constant 0 : i32
    %c0_i32_0 = arith.constant 0 : i32
    %c0_i32_1 = arith.constant 0 : i32
    %c0_i32_2 = arith.constant 0 : i32
    return %arg0, %c0_i32, %c0_i32_0, %c0_i32_1 : i32, i32, i32, i32
  }
  func.func @transform_5(%arg0: i32) -> (i32, i32, i32) {
    %c0_i32 = arith.constant 0 : i32
    %c0_i32_0 = arith.constant 0 : i32
    %c0_i32_1 = arith.constant 0 : i32
    return %arg0, %c0_i32, %c0_i32_0 : i32, i32, i32
  }
}

</mosaic_0001>

<llo_original>
// kernel: tpu_custom_call.1
$region0: #{tpu_custom_call.1}
  #allocation0 [shape = 'u32[]', space=smem, size = 0x4, offset = 0x4, fixed_abs, tag = 'smem constant byte address 0x4 - core index']
  #allocation1 [shape = 'u32[72,128]{1,0:T(1,128)}', space=vmem, size = 0x9000, scoped, tag = 'internal scratch']
  %s0 = inlined_call_operand.vmem [shape: f32[8,16], index: 0, kind: input, shape index: {}]
  %s1 = inlined_call_operand.vmem [shape: f32[8,256], index: 1, kind: input, shape index: {}]
  %s2 = inlined_call_operand.vmem [shape: f32[256,16], index: 2, kind: input, shape index: {}]
  %s3 = inlined_call_operand.vmem [shape: f32[16,256], index: 3, kind: input, shape index: {}]
  %s4 = inlined_call_operand.vmem [shape: f32[1,2,8,256], index: 4, kind: input, shape index: {}]
  %s5 = inlined_call_operand.hbm [shape: f32[1,2,256], index: 5, kind: output, shape index: {}]
  %s6 = sld [smem:[#allocation0]]
  $region30: #{tpu_custom_call.1} parent=0
    _
  %s8 = ssub.s32 1, %s6
  %s9 = scalar_select 0, %s8, %s6
  $region1: #{tpu_custom_call.1} parent=0
    #allocation2 [shape = 'u8[2048]{0}', space=vmem, size = 0x800, scoped, tag = 'output window, operand 0, single buffered']
    #allocation3 [shape = 's32[1]{0}', space=sflag, size = 0x4, scoped, tag = 'scoped memory for tpu_custom_call.1']
    %10 = vsyncpa [#allocation3], 0
    // Predicated region
    $region2: #{tpu_custom_call.1} parent=1 // pred_check
      _
    $region3: #{tpu_custom_call.1} parent=1 // pred_check_branch
      %12 = sbr.rel (0) target = $region5
    $region4: #{tpu_custom_call.1} parent=1 // pred_region
      _
    $region5: #{tpu_custom_call.1} parent=1 // pred_fallthru
      _
    // Predicated region
    $region6: #{tpu_custom_call.1} parent=1 // pred_check
      _
    $region7: #{tpu_custom_call.1} parent=1 // pred_check_branch
      %14 = sbr.rel (0) target = $region9
    $region8: #{tpu_custom_call.1} parent=1 // pred_region
      _
    $region9: #{tpu_custom_call.1} parent=1 // pred_fallthru
      _
    // Predicated region
    $region10: #{tpu_custom_call.1} parent=1 // pred_check
      _
    $region11: #{tpu_custom_call.1} parent=1 // pred_check_branch
      %16 = sbr.rel (0) target = $region13
    $region12: #{tpu_custom_call.1} parent=1 // pred_region
      _
    $region13: #{tpu_custom_call.1} parent=1 // pred_fallthru
      _
    // Predicated region
    $region14: #{tpu_custom_call.1} parent=1 // pred_check
      _
    $region15: #{tpu_custom_call.1} parent=1 // pred_check_branch
      %18 = sbr.rel (0) target = $region17
    $region16: #{tpu_custom_call.1} parent=1 // pred_region
      _
    $region17: #{tpu_custom_call.1} parent=1 // pred_fallthru
      _
    // Predicated region
    $region18: #{tpu_custom_call.1} parent=1 // pred_check
      _
    $region19: #{tpu_custom_call.1} parent=1 // pred_check_branch
      %20 = sbr.rel (0) target = $region21
    $region20: #{tpu_custom_call.1} parent=1 // pred_region
      _
    $region21: #{tpu_custom_call.1} parent=1 // pred_fallthru
      _
    %v21 = vld [vmem:[%s4] sm:$0xff]
    %v22 = vld [vmem:[%s4 + $0x8] sm:$0xff]
    %v23 = vld [vmem:[%s4 + $0x10] sm:$0xff]
    %v24 = vld [vmem:[%s4 + $0x18] sm:$0xff]
    %v25 = vld [vmem:[%s1] sm:$0xff]
    %v26 = vld [vmem:[%s1 + $0x8] sm:$0xff]
    %v27 = vld [vmem:[%s0] sm:$0xff]
    %v28 = vld [vmem:[%s2] sm:$0xff]
    %v29 = vld [vmem:[%s2 + $0x8] sm:$0xff]
    %v30 = vld [vmem:[%s2 + $0x10] sm:$0xff]
    %v31 = vld [vmem:[%s2 + $0x18] sm:$0xff]
    %v32 = vld [vmem:[%s2 + $0x20] sm:$0xff]
    %v33 = vld [vmem:[%s2 + $0x28] sm:$0xff]
    %v34 = vld [vmem:[%s2 + $0x30] sm:$0xff]
    %v35 = vld [vmem:[%s2 + $0x38] sm:$0xff]
    %v36 = vld [vmem:[%s2 + $0x40] sm:$0xff]
    %v37 = vld [vmem:[%s2 + $0x48] sm:$0xff]
    %v38 = vld [vmem:[%s2 + $0x50] sm:$0xff]
    %v39 = vld [vmem:[%s2 + $0x58] sm:$0xff]
    %v40 = vld [vmem:[%s2 + $0x60] sm:$0xff]
    %v41 = vld [vmem:[%s2 + $0x68] sm:$0xff]
    %v42 = vld [vmem:[%s2 + $0x70] sm:$0xff]
    %v43 = vld [vmem:[%s2 + $0x78] sm:$0xff]
    %v44 = vld [vmem:[%s2 + $0x80] sm:$0xff]
    %v45 = vld [vmem:[%s2 + $0x88] sm:$0xff]
    %v46 = vld [vmem:[%s2 + $0x90] sm:$0xff]
    %v47 = vld [vmem:[%s2 + $0x98] sm:$0xff]
    %v48 = vld [vmem:[%s2 + $0xa0] sm:$0xff]
    %v49 = vld [vmem:[%s2 + $0xa8] sm:$0xff]
    %v50 = vld [vmem:[%s2 + $0xb0] sm:$0xff]
    %v51 = vld [vmem:[%s2 + $0xb8] sm:$0xff]
    %v52 = vld [vmem:[%s2 + $0xc0] sm:$0xff]
    %v53 = vld [vmem:[%s2 + $0xc8] sm:$0xff]
    %v54 = vld [vmem:[%s2 + $0xd0] sm:$0xff]
    %v55 = vld [vmem:[%s2 + $0xd8] sm:$0xff]
    %v56 = vld [vmem:[%s2 + $0xe0] sm:$0xff]
    %v57 = vld [vmem:[%s2 + $0xe8] sm:$0xff]
    %v58 = vld [vmem:[%s2 + $0xf0] sm:$0xff]
    %v59 = vld [vmem:[%s2 + $0xf8] sm:$0xff]
    %v60 = vld [vmem:[%s3] sm:$0xff]
    %v61 = vld [vmem:[%s3 + $0x8] sm:$0xff]
    %v62 = vld [vmem:[%s3 + $0x10] sm:$0xff]
    %v63 = vld [vmem:[%s3 + $0x18] sm:$0xff]
    %v64 = vmul.f32 %v25, %v21
    %v65 = vmul.f32 %v26, %v22
    %v66 = vmul.f32 %v25, %v23
    %v67 = vmul.f32 %v26, %v24
    %v68 = vrot.slane %v64, 4
    %v69 = vadd.f32 %v64, %v68
    %v70 = vrot.slane %v69, 2
    %v71 = vadd.f32 %v69, %v70
    %v72 = vrot.slane %v71, 1
    %v73 = vadd.f32 %v71, %v72
    %v74 = vrot.slane %v65, 4
    %v75 = vadd.f32 %v65, %v74
    %v76 = vrot.slane %v75, 2
    %v77 = vadd.f32 %v75, %v76
    %v78 = vrot.slane %v77, 1
    %v79 = vadd.f32 %v77, %v78
    %v80 = vrot.slane %v66, 4
    %v81 = vadd.f32 %v66, %v80
    %v82 = vrot.slane %v81, 2
    %v83 = vadd.f32 %v81, %v82
    %v84 = vrot.slane %v83, 1
    %v85 = vadd.f32 %v83, %v84
    %v86 = vrot.slane %v67, 4
    %v87 = vadd.f32 %v67, %v86
    %v88 = vrot.slane %v87, 2
    %v89 = vadd.f32 %v87, %v88
    %v90 = vrot.slane %v89, 1
    %v91 = vadd.f32 %v89, %v90
    %v92 = vmul.f32 %v73, %v73
    %v93 = vmul.f32 %v79, %v79
    %v94 = vmul.f32 %v85, %v85
    %v95 = vmul.f32 %v91, %v91
    %vm100 = vcmask 1041409
    %v101 = vsel %vm100, %v94, %v92
    %v102 = vsel %vm100, %v95, %v93
    %v105 = vand.u32 %v43, 4294901760
    %106 = vmatpush.msra.mxu0 %v105
    %v107 = vand.u32 %v42, 4294901760
    %108 = vmatpush.msra.mxu0 %v107
    %v109 = vand.u32 %v41, 4294901760
    %110 = vmatpush.msra.mxu0 %v109
    %v111 = vand.u32 %v40, 4294901760
    %112 = vmatpush.msra.mxu0 %v111
    %v113 = vand.u32 %v39, 4294901760
    %114 = vmatpush.msra.mxu0 %v113
    %v115 = vand.u32 %v38, 4294901760
    %116 = vmatpush.msra.mxu0 %v115
    %v117 = vand.u32 %v37, 4294901760
    %118 = vmatpush.msra.mxu0 %v117
    %v119 = vand.u32 %v36, 4294901760
    %120 = vmatpush.msra.mxu0 %v119
    %v121 = vand.u32 %v35, 4294901760
    %122 = vmatpush.msra.mxu0 %v121
    %v123 = vand.u32 %v34, 4294901760
    %124 = vmatpush.msra.mxu0 %v123
    %v125 = vand.u32 %v33, 4294901760
    %126 = vmatpush.msra.mxu0 %v125
    %v127 = vand.u32 %v32, 4294901760
    %128 = vmatpush.msra.mxu0 %v127
    %v129 = vand.u32 %v31, 4294901760
    %130 = vmatpush.msra.mxu0 %v129
    %v131 = vand.u32 %v30, 4294901760
    %132 = vmatpush.msra.mxu0 %v131
    %v133 = vand.u32 %v29, 4294901760
    %134 = vmatpush.msra.mxu0 %v133
    %v135 = vand.u32 %v28, 4294901760
    %136 = vmatpush.msra.mxu0 %v135
    %v137 = vand.u32 %v101, 4294901760
    %v138 = vsub.f32 %v101, %v137
    %v139 = vand.u32 %v138, 4294901760
    %v140 = vsub.f32 %v138, %v139
    %v141 = vand.u32 %v140, 4294901760
    %142 = vmatmul.f32.gmra.mxu0 %v141
    %v143 = vpop.f32.mrf.mxu0
    %v144 = vadd.f32 0.0, %v143
    %145 = vdwg.mxu0
    %v146 = vand.u32 %v43, 4294901760
    %v147 = vsub.f32 %v43, %v146
    %v148 = vand.u32 %v147, 4294901760
    %v149 = vsub.f32 %v147, %v148
    %v150 = vand.u32 %v149, 4294901760
    %151 = vmatpush.msra.mxu0 %v150
    %v152 = vand.u32 %v42, 4294901760
    %v153 = vsub.f32 %v42, %v152
    %v154 = vand.u32 %v153, 4294901760
    %v155 = vsub.f32 %v153, %v154
    %v156 = vand.u32 %v155, 4294901760
    %157 = vmatpush.msra.mxu0 %v156
    %v158 = vand.u32 %v41, 4294901760
    %v159 = vsub.f32 %v41, %v158
    %v160 = vand.u32 %v159, 4294901760
    %v161 = vsub.f32 %v159, %v160
    %v162 = vand.u32 %v161, 4294901760
    %163 = vmatpush.msra.mxu0 %v162
    %v164 = vand.u32 %v40, 4294901760
    %v165 = vsub.f32 %v40, %v164
    %v166 = vand.u32 %v165, 4294901760
    %v167 = vsub.f32 %v165, %v166
    %v168 = vand.u32 %v167, 4294901760
    %169 = vmatpush.msra.mxu0 %v168
    %v170 = vand.u32 %v39, 4294901760
    %v171 = vsub.f32 %v39, %v170
    %v172 = vand.u32 %v171, 4294901760
    %v173 = vsub.f32 %v171, %v172
    %v174 = vand.u32 %v173, 4294901760
    %175 = vmatpush.msra.mxu0 %v174
    %v176 = vand.u32 %v38, 4294901760
    %v177 = vsub.f32 %v38, %v176
    %v178 = vand.u32 %v177, 4294901760
    %v179 = vsub.f32 %v177, %v178
    %v180 = vand.u32 %v179, 4294901760
    %181 = vmatpush.msra.mxu0 %v180
    %v182 = vand.u32 %v37, 4294901760
    %v183 = vsub.f32 %v37, %v182
    %v184 = vand.u32 %v183, 4294901760
    %v185 = vsub.f32 %v183, %v184
    %v186 = vand.u32 %v185, 4294901760
    %187 = vmatpush.msra.mxu0 %v186
    %v188 = vand.u32 %v36, 4294901760
    %v189 = vsub.f32 %v36, %v188
    %v190 = vand.u32 %v189, 4294901760
    %v191 = vsub.f32 %v189, %v190
    %v192 = vand.u32 %v191, 4294901760
    %193 = vmatpush.msra.mxu0 %v192
    %v194 = vand.u32 %v35, 4294901760
    %v195 = vsub.f32 %v35, %v194
    %v196 = vand.u32 %v195, 4294901760
    %v197 = vsub.f32 %v195, %v196
    %v198 = vand.u32 %v197, 4294901760
    %199 = vmatpush.msra.mxu0 %v198
    %v200 = vand.u32 %v34, 4294901760
    %v201 = vsub.f32 %v34, %v200
    %v202 = vand.u32 %v201, 4294901760
    %v203 = vsub.f32 %v201, %v202
    %v204 = vand.u32 %v203, 4294901760
    %205 = vmatpush.msra.mxu0 %v204
    %v206 = vand.u32 %v33, 4294901760
    %v207 = vsub.f32 %v33, %v206
    %v208 = vand.u32 %v207, 4294901760
    %v209 = vsub.f32 %v207, %v208
    %v210 = vand.u32 %v209, 4294901760
    %211 = vmatpush.msra.mxu0 %v210
    %v212 = vand.u32 %v32, 4294901760
    %v213 = vsub.f32 %v32, %v212
    %v214 = vand.u32 %v213, 4294901760
    %v215 = vsub.f32 %v213, %v214
    %v216 = vand.u32 %v215, 4294901760
    %217 = vmatpush.msra.mxu0 %v216
    %v218 = vand.u32 %v31, 4294901760
    %v219 = vsub.f32 %v31, %v218
    %v220 = vand.u32 %v219, 4294901760
    %v221 = vsub.f32 %v219, %v220
    %v222 = vand.u32 %v221, 4294901760
    %223 = vmatpush.msra.mxu0 %v222
    %v224 = vand.u32 %v30, 4294901760
    %v225 = vsub.f32 %v30, %v224
    %v226 = vand.u32 %v225, 4294901760
    %v227 = vsub.f32 %v225, %v226
    %v228 = vand.u32 %v227, 4294901760
    %229 = vmatpush.msra.mxu0 %v228
    %v230 = vand.u32 %v29, 4294901760
    %v231 = vsub.f32 %v29, %v230
    %v232 = vand.u32 %v231, 4294901760
    %v233 = vsub.f32 %v231, %v232
    %v234 = vand.u32 %v233, 4294901760
    %235 = vmatpush.msra.mxu0 %v234
    %v236 = vand.u32 %v28, 4294901760
    %v237 = vsub.f32 %v28, %v236
    %v238 = vand.u32 %v237, 4294901760
    %v239 = vsub.f32 %v237, %v238
    %v240 = vand.u32 %v239, 4294901760
    %241 = vmatpush.msra.mxu0 %v240
    %v242 = vand.u32 %v101, 4294901760
    %243 = vmatmul.f32.gmra.mxu0 %v242
    %v244 = vpop.f32.mrf.mxu0
    %v245 = vadd.f32 %v144, %v244
    %246 = vdwg.mxu0
    %v247 = vand.u32 %v43, 4294901760
    %v248 = vsub.f32 %v43, %v247
    %249 = vmatpush.msra.mxu0 %v248
    %v250 = vand.u32 %v42, 4294901760
    %v251 = vsub.f32 %v42, %v250
    %252 = vmatpush.msra.mxu0 %v251
    %v253 = vand.u32 %v41, 4294901760
    %v254 = vsub.f32 %v41, %v253
    %255 = vmatpush.msra.mxu0 %v254
    %v256 = vand.u32 %v40, 4294901760
    %v257 = vsub.f32 %v40, %v256
    %258 = vmatpush.msra.mxu0 %v257
    %v259 = vand.u32 %v39, 4294901760
    %v260 = vsub.f32 %v39, %v259
    %261 = vmatpush.msra.mxu0 %v260
    %v262 = vand.u32 %v38, 4294901760
    %v263 = vsub.f32 %v38, %v262
    %264 = vmatpush.msra.mxu0 %v263
    %v265 = vand.u32 %v37, 4294901760
    %v266 = vsub.f32 %v37, %v265
    %267 = vmatpush.msra.mxu0 %v266
    %v268 = vand.u32 %v36, 4294901760
    %v269 = vsub.f32 %v36, %v268
    %270 = vmatpush.msra.mxu0 %v269
    %v271 = vand.u32 %v35, 4294901760
    %v272 = vsub.f32 %v35, %v271
    %273 = vmatpush.msra.mxu0 %v272
    %v274 = vand.u32 %v34, 4294901760
    %v275 = vsub.f32 %v34, %v274
    %276 = vmatpush.msra.mxu0 %v275
    %v277 = vand.u32 %v33, 4294901760
    %v278 = vsub.f32 %v33, %v277
    %279 = vmatpush.msra.mxu0 %v278
    %v280 = vand.u32 %v32, 4294901760
    %v281 = vsub.f32 %v32, %v280
    %282 = vmatpush.msra.mxu0 %v281
    %v283 = vand.u32 %v31, 4294901760
    %v284 = vsub.f32 %v31, %v283
    %285 = vmatpush.msra.mxu0 %v284
    %v286 = vand.u32 %v30, 4294901760
    %v287 = vsub.f32 %v30, %v286
    %288 = vmatpush.msra.mxu0 %v287
    %v289 = vand.u32 %v29, 4294901760
    %v290 = vsub.f32 %v29, %v289
    %291 = vmatpush.msra.mxu0 %v290
    %v292 = vand.u32 %v28, 4294901760
    %v293 = vsub.f32 %v28, %v292
    %294 = vmatpush.msra.mxu0 %v293
    %v295 = vand.u32 %v101, 4294901760
    %v296 = vsub.f32 %v101, %v295
    %297 = vmatmul.f32.gmra.mxu0 %v296
    %v298 = vpop.f32.mrf.mxu0
    %v299 = vadd.f32 %v245, %v298
    %300 = vdwg.mxu0
    %v301 = vand.u32 %v43, 4294901760
    %302 = vmatpush.msra.mxu0 %v301
    %v303 = vand.u32 %v42, 4294901760
    %304 = vmatpush.msra.mxu0 %v303
    %v305 = vand.u32 %v41, 4294901760
    %306 = vmatpush.msra.mxu0 %v305
    %v307 = vand.u32 %v40, 4294901760
    %308 = vmatpush.msra.mxu0 %v307
    %v309 = vand.u32 %v39, 4294901760
    %310 = vmatpush.msra.mxu0 %v309
    %v311 = vand.u32 %v38, 4294901760
    %312 = vmatpush.msra.mxu0 %v311
    %v313 = vand.u32 %v37, 4294901760
    %314 = vmatpush.msra.mxu0 %v313
    %v315 = vand.u32 %v36, 4294901760
    %316 = vmatpush.msra.mxu0 %v315
    %v317 = vand.u32 %v35, 4294901760
    %318 = vmatpush.msra.mxu0 %v317
    %v319 = vand.u32 %v34, 4294901760
    %320 = vmatpush.msra.mxu0 %v319
    %v321 = vand.u32 %v33, 4294901760
    %322 = vmatpush.msra.mxu0 %v321
    %v323 = vand.u32 %v32, 4294901760
    %324 = vmatpush.msra.mxu0 %v323
    %v325 = vand.u32 %v31, 4294901760
    %326 = vmatpush.msra.mxu0 %v325
    %v327 = vand.u32 %v30, 4294901760
    %328 = vmatpush.msra.mxu0 %v327
    %v329 = vand.u32 %v29, 4294901760
    %330 = vmatpush.msra.mxu0 %v329
    %v331 = vand.u32 %v28, 4294901760
    %332 = vmatpush.msra.mxu0 %v331
    %v333 = vand.u32 %v101, 4294901760
    %v334 = vsub.f32 %v101, %v333
    %v335 = vand.u32 %v334, 4294901760
    %336 = vmatmul.f32.gmra.mxu0 %v335
    %v337 = vpop.f32.mrf.mxu0
    %v338 = vadd.f32 %v299, %v337
    %339 = vdwg.mxu0
    %v340 = vand.u32 %v43, 4294901760
    %v341 = vsub.f32 %v43, %v340
    %v342 = vand.u32 %v341, 4294901760
    %343 = vmatpush.msra.mxu0 %v342
    %v344 = vand.u32 %v42, 4294901760
    %v345 = vsub.f32 %v42, %v344
    %v346 = vand.u32 %v345, 4294901760
    %347 = vmatpush.msra.mxu0 %v346
    %v348 = vand.u32 %v41, 4294901760
    %v349 = vsub.f32 %v41, %v348
    %v350 = vand.u32 %v349, 4294901760
    %351 = vmatpush.msra.mxu0 %v350
    %v352 = vand.u32 %v40, 4294901760
    %v353 = vsub.f32 %v40, %v352
    %v354 = vand.u32 %v353, 4294901760
    %355 = vmatpush.msra.mxu0 %v354
    %v356 = vand.u32 %v39, 4294901760
    %v357 = vsub.f32 %v39, %v356
    %v358 = vand.u32 %v357, 4294901760
    %359 = vmatpush.msra.mxu0 %v358
    %v360 = vand.u32 %v38, 4294901760
    %v361 = vsub.f32 %v38, %v360
    %v362 = vand.u32 %v361, 4294901760
    %363 = vmatpush.msra.mxu0 %v362
    %v364 = vand.u32 %v37, 4294901760
    %v365 = vsub.f32 %v37, %v364
    %v366 = vand.u32 %v365, 4294901760
    %367 = vmatpush.msra.mxu0 %v366
    %v368 = vand.u32 %v36, 4294901760
    %v369 = vsub.f32 %v36, %v368
    %v370 = vand.u32 %v369, 4294901760
    %371 = vmatpush.msra.mxu0 %v370
    %v372 = vand.u32 %v35, 4294901760
    %v373 = vsub.f32 %v35, %v372
    %v374 = vand.u32 %v373, 4294901760
    %375 = vmatpush.msra.mxu0 %v374
    %v376 = vand.u32 %v34, 4294901760
    %v377 = vsub.f32 %v34, %v376
    %v378 = vand.u32 %v377, 4294901760
    %379 = vmatpush.msra.mxu0 %v378
    %v380 = vand.u32 %v33, 4294901760
    %v381 = vsub.f32 %v33, %v380
    %v382 = vand.u32 %v381, 4294901760
    %383 = vmatpush.msra.mxu0 %v382
    %v384 = vand.u32 %v32, 4294901760
    %v385 = vsub.f32 %v32, %v384
    %v386 = vand.u32 %v385, 4294901760
    %387 = vmatpush.msra.mxu0 %v386
    %v388 = vand.u32 %v31, 4294901760
    %v389 = vsub.f32 %v31, %v388
    %v390 = vand.u32 %v389, 4294901760
    %391 = vmatpush.msra.mxu0 %v390
    %v392 = vand.u32 %v30, 4294901760
    %v393 = vsub.f32 %v30, %v392
    %v394 = vand.u32 %v393, 4294901760
    %395 = vmatpush.msra.mxu0 %v394
    %v396 = vand.u32 %v29, 4294901760
    %v397 = vsub.f32 %v29, %v396
    %v398 = vand.u32 %v397, 4294901760
    %399 = vmatpush.msra.mxu0 %v398
    %v400 = vand.u32 %v28, 4294901760
    %v401 = vsub.f32 %v28, %v400
    %v402 = vand.u32 %v401, 4294901760
    %403 = vmatpush.msra.mxu0 %v402
    %v404 = vand.u32 %v101, 4294901760
    %405 = vmatmul.f32.gmra.mxu0 %v404
    %v406 = vpop.f32.mrf.mxu0
    %v407 = vadd.f32 %v338, %v406
    %408 = vdwg.mxu0
    %v409 = vand.u32 %v43, 4294901760
    %410 = vmatpush.msra.mxu0 %v409
    %v411 = vand.u32 %v42, 4294901760
    %412 = vmatpush.msra.mxu0 %v411
    %v413 = vand.u32 %v41, 4294901760
    %414 = vmatpush.msra.mxu0 %v413
    %v415 = vand.u32 %v40, 4294901760
    %416 = vmatpush.msra.mxu0 %v415
    %v417 = vand.u32 %v39, 4294901760
    %418 = vmatpush.msra.mxu0 %v417
    %v419 = vand.u32 %v38, 4294901760
    %420 = vmatpush.msra.mxu0 %v419
    %v421 = vand.u32 %v37, 4294901760
    %422 = vmatpush.msra.mxu0 %v421
    %v423 = vand.u32 %v36, 4294901760
    %424 = vmatpush.msra.mxu0 %v423
    %v425 = vand.u32 %v35, 4294901760
    %426 = vmatpush.msra.mxu0 %v425
    %v427 = vand.u32 %v34, 4294901760
    %428 = vmatpush.msra.mxu0 %v427
    %v429 = vand.u32 %v33, 4294901760
    %430 = vmatpush.msra.mxu0 %v429
    %v431 = vand.u32 %v32, 4294901760
    %432 = vmatpush.msra.mxu0 %v431
    %v433 = vand.u32 %v31, 4294901760
    %434 = vmatpush.msra.mxu0 %v433
    %v435 = vand.u32 %v30, 4294901760
    %436 = vmatpush.msra.mxu0 %v435
    %v437 = vand.u32 %v29, 4294901760
    %438 = vmatpush.msra.mxu0 %v437
    %v439 = vand.u32 %v28, 4294901760
    %440 = vmatpush.msra.mxu0 %v439
    %v441 = vand.u32 %v101, 4294901760
    %442 = vmatmul.f32.gmra.mxu0 %v441
    %v443 = vpop.f32.mrf.mxu0
    %v444 = vadd.f32 %v407, %v443
    %445 = vdwg.mxu0
    %v446 = vand.u32 %v59, 4294901760
    %447 = vmatpush.msra.mxu0 %v446
    %v448 = vand.u32 %v58, 4294901760
    %449 = vmatpush.msra.mxu0 %v448
    %v450 = vand.u32 %v57, 4294901760
    %451 = vmatpush.msra.mxu0 %v450
    %v452 = vand.u32 %v56, 4294901760
    %453 = vmatpush.msra.mxu0 %v452
    %v454 = vand.u32 %v55, 4294901760
    %455 = vmatpush.msra.mxu0 %v454
    %v456 = vand.u32 %v54, 4294901760
    %457 = vmatpush.msra.mxu0 %v456
    %v458 = vand.u32 %v53, 4294901760
    %459 = vmatpush.msra.mxu0 %v458
    %v460 = vand.u32 %v52, 4294901760
    %461 = vmatpush.msra.mxu0 %v460
    %v462 = vand.u32 %v51, 4294901760
    %463 = vmatpush.msra.mxu0 %v462
    %v464 = vand.u32 %v50, 4294901760
    %465 = vmatpush.msra.mxu0 %v464
    %v466 = vand.u32 %v49, 4294901760
    %467 = vmatpush.msra.mxu0 %v466
    %v468 = vand.u32 %v48, 4294901760
    %469 = vmatpush.msra.mxu0 %v468
    %v470 = vand.u32 %v47, 4294901760
    %471 = vmatpush.msra.mxu0 %v470
    %v472 = vand.u32 %v46, 4294901760
    %473 = vmatpush.msra.mxu0 %v472
    %v474 = vand.u32 %v45, 4294901760
    %475 = vmatpush.msra.mxu0 %v474
    %v476 = vand.u32 %v44, 4294901760
    %477 = vmatpush.msra.mxu0 %v476
    %v478 = vand.u32 %v102, 4294901760
    %v479 = vsub.f32 %v102, %v478
    %v480 = vand.u32 %v479, 4294901760
    %v481 = vsub.f32 %v479, %v480
    %v482 = vand.u32 %v481, 4294901760
    %483 = vmatmul.f32.gmra.mxu0 %v482
    %v484 = vpop.f32.mrf.mxu0
    %v485 = vadd.f32 %v444, %v484
    %486 = vdwg.mxu0
    %v487 = vand.u32 %v59, 4294901760
    %v488 = vsub.f32 %v59, %v487
    %v489 = vand.u32 %v488, 4294901760
    %v490 = vsub.f32 %v488, %v489
    %v491 = vand.u32 %v490, 4294901760
    %492 = vmatpush.msra.mxu0 %v491
    %v493 = vand.u32 %v58, 4294901760
    %v494 = vsub.f32 %v58, %v493
    %v495 = vand.u32 %v494, 4294901760
    %v496 = vsub.f32 %v494, %v495
    %v497 = vand.u32 %v496, 4294901760
    %498 = vmatpush.msra.mxu0 %v497
    %v499 = vand.u32 %v57, 4294901760
    %v500 = vsub.f32 %v57, %v499
    %v501 = vand.u32 %v500, 4294901760
    %v502 = vsub.f32 %v500, %v501
    %v503 = vand.u32 %v502, 4294901760
    %504 = vmatpush.msra.mxu0 %v503
    %v505 = vand.u32 %v56, 4294901760
    %v506 = vsub.f32 %v56, %v505
    %v507 = vand.u32 %v506, 4294901760
    %v508 = vsub.f32 %v506, %v507
    %v509 = vand.u32 %v508, 4294901760
    %510 = vmatpush.msra.mxu0 %v509
    %v511 = vand.u32 %v55, 4294901760
    %v512 = vsub.f32 %v55, %v511
    %v513 = vand.u32 %v512, 4294901760
    %v514 = vsub.f32 %v512, %v513
    %v515 = vand.u32 %v514, 4294901760
    %516 = vmatpush.msra.mxu0 %v515
    %v517 = vand.u32 %v54, 4294901760
    %v518 = vsub.f32 %v54, %v517
    %v519 = vand.u32 %v518, 4294901760
    %v520 = vsub.f32 %v518, %v519
    %v521 = vand.u32 %v520, 4294901760
    %522 = vmatpush.msra.mxu0 %v521
    %v523 = vand.u32 %v53, 4294901760
    %v524 = vsub.f32 %v53, %v523
    %v525 = vand.u32 %v524, 4294901760
    %v526 = vsub.f32 %v524, %v525
    %v527 = vand.u32 %v526, 4294901760
    %528 = vmatpush.msra.mxu0 %v527
    %v529 = vand.u32 %v52, 4294901760
    %v530 = vsub.f32 %v52, %v529
    %v531 = vand.u32 %v530, 4294901760
    %v532 = vsub.f32 %v530, %v531
    %v533 = vand.u32 %v532, 4294901760
    %534 = vmatpush.msra.mxu0 %v533
    %v535 = vand.u32 %v51, 4294901760
    %v536 = vsub.f32 %v51, %v535
    %v537 = vand.u32 %v536, 4294901760
    %v538 = vsub.f32 %v536, %v537
    %v539 = vand.u32 %v538, 4294901760
    %540 = vmatpush.msra.mxu0 %v539
    %v541 = vand.u32 %v50, 4294901760
    %v542 = vsub.f32 %v50, %v541
    %v543 = vand.u32 %v542, 4294901760
    %v544 = vsub.f32 %v542, %v543
    %v545 = vand.u32 %v544, 4294901760
    %546 = vmatpush.msra.mxu0 %v545
    %v547 = vand.u32 %v49, 4294901760
    %v548 = vsub.f32 %v49, %v547
    %v549 = vand.u32 %v548, 4294901760
    %v550 = vsub.f32 %v548, %v549
    %v551 = vand.u32 %v550, 4294901760
    %552 = vmatpush.msra.mxu0 %v551
    %v553 = vand.u32 %v48, 4294901760
    %v554 = vsub.f32 %v48, %v553
    %v555 = vand.u32 %v554, 4294901760
    %v556 = vsub.f32 %v554, %v555
    %v557 = vand.u32 %v556, 4294901760
    %558 = vmatpush.msra.mxu0 %v557
    %v559 = vand.u32 %v47, 4294901760
    %v560 = vsub.f32 %v47, %v559
    %v561 = vand.u32 %v560, 4294901760
    %v562 = vsub.f32 %v560, %v561
    %v563 = vand.u32 %v562, 4294901760
    %564 = vmatpush.msra.mxu0 %v563
    %v565 = vand.u32 %v46, 4294901760
    %v566 = vsub.f32 %v46, %v565
    %v567 = vand.u32 %v566, 4294901760
    %v568 = vsub.f32 %v566, %v567
    %v569 = vand.u32 %v568, 4294901760
    %570 = vmatpush.msra.mxu0 %v569
    %v571 = vand.u32 %v45, 4294901760
    %v572 = vsub.f32 %v45, %v571
    %v573 = vand.u32 %v572, 4294901760
    %v574 = vsub.f32 %v572, %v573
    %v575 = vand.u32 %v574, 4294901760
    %576 = vmatpush.msra.mxu0 %v575
    %v577 = vand.u32 %v44, 4294901760
    %v578 = vsub.f32 %v44, %v577
    %v579 = vand.u32 %v578, 4294901760
    %v580 = vsub.f32 %v578, %v579
    %v581 = vand.u32 %v580, 4294901760
    %582 = vmatpush.msra.mxu0 %v581
    %v583 = vand.u32 %v102, 4294901760
    %584 = vmatmul.f32.gmra.mxu0 %v583
    %v585 = vpop.f32.mrf.mxu0
    %v586 = vadd.f32 %v485, %v585
    %587 = vdwg.mxu0
    %v588 = vand.u32 %v59, 4294901760
    %v589 = vsub.f32 %v59, %v588
    %590 = vmatpush.msra.mxu0 %v589
    %v591 = vand.u32 %v58, 4294901760
    %v592 = vsub.f32 %v58, %v591
    %593 = vmatpush.msra.mxu0 %v592
    %v594 = vand.u32 %v57, 4294901760
    %v595 = vsub.f32 %v57, %v594
    %596 = vmatpush.msra.mxu0 %v595
    %v597 = vand.u32 %v56, 4294901760
    %v598 = vsub.f32 %v56, %v597
    %599 = vmatpush.msra.mxu0 %v598
    %v600 = vand.u32 %v55, 4294901760
    %v601 = vsub.f32 %v55, %v600
    %602 = vmatpush.msra.mxu0 %v601
    %v603 = vand.u32 %v54, 4294901760
    %v604 = vsub.f32 %v54, %v603
    %605 = vmatpush.msra.mxu0 %v604
    %v606 = vand.u32 %v53, 4294901760
    %v607 = vsub.f32 %v53, %v606
    %608 = vmatpush.msra.mxu0 %v607
    %v609 = vand.u32 %v52, 4294901760
    %v610 = vsub.f32 %v52, %v609
    %611 = vmatpush.msra.mxu0 %v610
    %v612 = vand.u32 %v51, 4294901760
    %v613 = vsub.f32 %v51, %v612
    %614 = vmatpush.msra.mxu0 %v613
    %v615 = vand.u32 %v50, 4294901760
    %v616 = vsub.f32 %v50, %v615
    %617 = vmatpush.msra.mxu0 %v616
    %v618 = vand.u32 %v49, 4294901760
    %v619 = vsub.f32 %v49, %v618
    %620 = vmatpush.msra.mxu0 %v619
    %v621 = vand.u32 %v48, 4294901760
    %v622 = vsub.f32 %v48, %v621
    %623 = vmatpush.msra.mxu0 %v622
    %v624 = vand.u32 %v47, 4294901760
    %v625 = vsub.f32 %v47, %v624
    %626 = vmatpush.msra.mxu0 %v625
    %v627 = vand.u32 %v46, 4294901760
    %v628 = vsub.f32 %v46, %v627
    %629 = vmatpush.msra.mxu0 %v628
    %v630 = vand.u32 %v45, 4294901760
    %v631 = vsub.f32 %v45, %v630
    %632 = vmatpush.msra.mxu0 %v631
    %v633 = vand.u32 %v44, 4294901760
    %v634 = vsub.f32 %v44, %v633
    %635 = vmatpush.msra.mxu0 %v634
    %v636 = vand.u32 %v102, 4294901760
    %v637 = vsub.f32 %v102, %v636
    %638 = vmatmul.f32.gmra.mxu0 %v637
    %v639 = vpop.f32.mrf.mxu0
    %v640 = vadd.f32 %v586, %v639
    %641 = vdwg.mxu0
    %v642 = vand.u32 %v59, 4294901760
    %643 = vmatpush.msra.mxu0 %v642
    %v644 = vand.u32 %v58, 4294901760
    %645 = vmatpush.msra.mxu0 %v644
    %v646 = vand.u32 %v57, 4294901760
    %647 = vmatpush.msra.mxu0 %v646
    %v648 = vand.u32 %v56, 4294901760
    %649 = vmatpush.msra.mxu0 %v648
    %v650 = vand.u32 %v55, 4294901760
    %651 = vmatpush.msra.mxu0 %v650
    %v652 = vand.u32 %v54, 4294901760
    %653 = vmatpush.msra.mxu0 %v652
    %v654 = vand.u32 %v53, 4294901760
    %655 = vmatpush.msra.mxu0 %v654
    %v656 = vand.u32 %v52, 4294901760
    %657 = vmatpush.msra.mxu0 %v656
    %v658 = vand.u32 %v51, 4294901760
    %659 = vmatpush.msra.mxu0 %v658
    %v660 = vand.u32 %v50, 4294901760
    %661 = vmatpush.msra.mxu0 %v660
    %v662 = vand.u32 %v49, 4294901760
    %663 = vmatpush.msra.mxu0 %v662
    %v664 = vand.u32 %v48, 4294901760
    %665 = vmatpush.msra.mxu0 %v664
    %v666 = vand.u32 %v47, 4294901760
    %667 = vmatpush.msra.mxu0 %v666
    %v668 = vand.u32 %v46, 4294901760
    %669 = vmatpush.msra.mxu0 %v668
    %v670 = vand.u32 %v45, 4294901760
    %671 = vmatpush.msra.mxu0 %v670
    %v672 = vand.u32 %v44, 4294901760
    %673 = vmatpush.msra.mxu0 %v672
    %v674 = vand.u32 %v102, 4294901760
    %v675 = vsub.f32 %v102, %v674
    %v676 = vand.u32 %v675, 4294901760
    %677 = vmatmul.f32.gmra.mxu0 %v676
    %v678 = vpop.f32.mrf.mxu0
    %v679 = vadd.f32 %v640, %v678
    %680 = vdwg.mxu0
    %v681 = vand.u32 %v59, 4294901760
    %v682 = vsub.f32 %v59, %v681
    %v683 = vand.u32 %v682, 4294901760
    %684 = vmatpush.msra.mxu0 %v683
    %v685 = vand.u32 %v58, 4294901760
    %v686 = vsub.f32 %v58, %v685
    %v687 = vand.u32 %v686, 4294901760
    %688 = vmatpush.msra.mxu0 %v687
    %v689 = vand.u32 %v57, 4294901760
    %v690 = vsub.f32 %v57, %v689
    %v691 = vand.u32 %v690, 4294901760
    %692 = vmatpush.msra.mxu0 %v691
    %v693 = vand.u32 %v56, 4294901760
    %v694 = vsub.f32 %v56, %v693
    %v695 = vand.u32 %v694, 4294901760
    %696 = vmatpush.msra.mxu0 %v695
    %v697 = vand.u32 %v55, 4294901760
    %v698 = vsub.f32 %v55, %v697
    %v699 = vand.u32 %v698, 4294901760
    %700 = vmatpush.msra.mxu0 %v699
    %v701 = vand.u32 %v54, 4294901760
    %v702 = vsub.f32 %v54, %v701
    %v703 = vand.u32 %v702, 4294901760
    %704 = vmatpush.msra.mxu0 %v703
    %v705 = vand.u32 %v53, 4294901760
    %v706 = vsub.f32 %v53, %v705
    %v707 = vand.u32 %v706, 4294901760
    %708 = vmatpush.msra.mxu0 %v707
    %v709 = vand.u32 %v52, 4294901760
    %v710 = vsub.f32 %v52, %v709
    %v711 = vand.u32 %v710, 4294901760
    %712 = vmatpush.msra.mxu0 %v711
    %v713 = vand.u32 %v51, 4294901760
    %v714 = vsub.f32 %v51, %v713
    %v715 = vand.u32 %v714, 4294901760
    %716 = vmatpush.msra.mxu0 %v715
    %v717 = vand.u32 %v50, 4294901760
    %v718 = vsub.f32 %v50, %v717
    %v719 = vand.u32 %v718, 4294901760
    %720 = vmatpush.msra.mxu0 %v719
    %v721 = vand.u32 %v49, 4294901760
    %v722 = vsub.f32 %v49, %v721
    %v723 = vand.u32 %v722, 4294901760
    %724 = vmatpush.msra.mxu0 %v723
    %v725 = vand.u32 %v48, 4294901760
    %v726 = vsub.f32 %v48, %v725
    %v727 = vand.u32 %v726, 4294901760
    %728 = vmatpush.msra.mxu0 %v727
    %v729 = vand.u32 %v47, 4294901760
    %v730 = vsub.f32 %v47, %v729
    %v731 = vand.u32 %v730, 4294901760
    %732 = vmatpush.msra.mxu0 %v731
    %v733 = vand.u32 %v46, 4294901760
    %v734 = vsub.f32 %v46, %v733
    %v735 = vand.u32 %v734, 4294901760
    %736 = vmatpush.msra.mxu0 %v735
    %v737 = vand.u32 %v45, 4294901760
    %v738 = vsub.f32 %v45, %v737
    %v739 = vand.u32 %v738, 4294901760
    %740 = vmatpush.msra.mxu0 %v739
    %v741 = vand.u32 %v44, 4294901760
    %v742 = vsub.f32 %v44, %v741
    %v743 = vand.u32 %v742, 4294901760
    %744 = vmatpush.msra.mxu0 %v743
    %v745 = vand.u32 %v102, 4294901760
    %746 = vmatmul.f32.gmra.mxu0 %v745
    %v747 = vpop.f32.mrf.mxu0
    %v748 = vadd.f32 %v679, %v747
    %749 = vdwg.mxu0
    %v750 = vand.u32 %v59, 4294901760
    %751 = vmatpush.msra.mxu0 %v750
    %v752 = vand.u32 %v58, 4294901760
    %753 = vmatpush.msra.mxu0 %v752
    %v754 = vand.u32 %v57, 4294901760
    %755 = vmatpush.msra.mxu0 %v754
    %v756 = vand.u32 %v56, 4294901760
    %757 = vmatpush.msra.mxu0 %v756
    %v758 = vand.u32 %v55, 4294901760
    %759 = vmatpush.msra.mxu0 %v758
    %v760 = vand.u32 %v54, 4294901760
    %761 = vmatpush.msra.mxu0 %v760
    %v762 = vand.u32 %v53, 4294901760
    %763 = vmatpush.msra.mxu0 %v762
    %v764 = vand.u32 %v52, 4294901760
    %765 = vmatpush.msra.mxu0 %v764
    %v766 = vand.u32 %v51, 4294901760
    %767 = vmatpush.msra.mxu0 %v766
    %v768 = vand.u32 %v50, 4294901760
    %769 = vmatpush.msra.mxu0 %v768
    %v770 = vand.u32 %v49, 4294901760
    %771 = vmatpush.msra.mxu0 %v770
    %v772 = vand.u32 %v48, 4294901760
    %773 = vmatpush.msra.mxu0 %v772
    %v774 = vand.u32 %v47, 4294901760
    %775 = vmatpush.msra.mxu0 %v774
    %v776 = vand.u32 %v46, 4294901760
    %777 = vmatpush.msra.mxu0 %v776
    %v778 = vand.u32 %v45, 4294901760
    %779 = vmatpush.msra.mxu0 %v778
    %v780 = vand.u32 %v44, 4294901760
    %781 = vmatpush.msra.mxu0 %v780
    %v782 = vand.u32 %v102, 4294901760
    %783 = vmatmul.f32.gmra.mxu0 %v782
    %v784 = vpop.f32.mrf.mxu0
    %v785 = vadd.f32 %v748, %v784
    %786 = vdwg.mxu0
    %v787 = vadd.f32 %v785, 1.0
    %v788 = vadd.f32 %v785, 1e-12
    %v789 = vrsqrt.pop %v788
    %v790 = vmul.f32 %v789, %v788
    %v791 = vmul.f32 %v790, %v789
    %v792 = vmul.f32 0.5, %v791
    %v793 = vsub.f32 1.5, %v792
    %v794 = vmul.f32 %v789, %v793
    %v795 = vmul.f32 %v788, %v794
    %vm796 = vcmp.eq.f32.partialorder %v788, inf
    %v797 = vsel %vm796, %v788, %v795
    %vm798 = vcmp.eq.f32.partialorder %v788, 0.0
    %v799 = vand.u32 %v788, 2147483648
    %v800 = vsel %vm798, %v799, %v797
    %v801 = vmul.f32 %v787, %v800
    %v802 = vrcp.pop %v801
    %v803 = vmul.f32 %v801, %v802
    %v804 = vsub.f32 1.0, %v803
    %v805 = vmul.f32 %v802, %v804
    %v806 = vadd.f32 %v802, %v805
    %vm807 = vweird.f32 %v801
    %vm808 = vweird.f32 %v802
    %vm809 = vmor %vm807, %vm808
    %v810 = vsel %vm809, %v802, %v806
    %v811 = vand.u32 2147483647, %v801
    %vm812 = vcmp.eq.f32.partialorder %v811, 8.507059e+37
    %v813 = vand.u32 %v801, 2147483648
    %v814 = vor.u32 1.1754944e-38, %v813
    %v815 = vsel %vm812, %v814, %v810
    %v816 = vmul.f32 %v785, %v815
    %vm817 = vcmask 130048
    %v819 = vsel %vm817, %v816, 0
    %821 = vmatpush.msra.mxu0 0.0
    %822 = vmatpush.msra.mxu0 0.0
    %823 = vmatpush.msra.mxu0 0.0
    %824 = vmatpush.msra.mxu0 0.0
    %825 = vmatpush.msra.mxu0 0.0
    %826 = vmatpush.msra.mxu0 0.0
    %827 = vmatpush.msra.mxu0 0.0
    %828 = vmatpush.msra.mxu0 0.0
    %829 = vmatpush.msra.mxu0 0.0
    %830 = vmatpush.msra.mxu0 0.0
    %831 = vmatpush.msra.mxu0 0.0
    %832 = vmatpush.msra.mxu0 0.0
    %833 = vmatpush.msra.mxu0 0.0
    %834 = vmatpush.msra.mxu0 0.0
    %v835 = vand.u32 %v62, 4294901760
    %836 = vmatpush.msra.mxu0 %v835
    %v837 = vand.u32 %v60, 4294901760
    %838 = vmatpush.msra.mxu0 %v837
    %v839 = vand.u32 %v819, 4294901760
    %v840 = vsub.f32 %v819, %v839
    %v841 = vand.u32 %v840, 4294901760
    %v842 = vsub.f32 %v840, %v841
    %v843 = vand.u32 %v842, 4294901760
    %844 = vmatmul.f32.gmra.mxu0 %v843
    %v845 = vpop.f32.mrf.mxu0
    %v846 = vadd.f32 0.0, %v845
    %847 = vdwg.mxu0
    %848 = vmatpush.msra.mxu0 0.0
    %849 = vmatpush.msra.mxu0 0.0
    %850 = vmatpush.msra.mxu0 0.0
    %851 = vmatpush.msra.mxu0 0.0
    %852 = vmatpush.msra.mxu0 0.0
    %853 = vmatpush.msra.mxu0 0.0
    %854 = vmatpush.msra.mxu0 0.0
    %855 = vmatpush.msra.mxu0 0.0
    %856 = vmatpush.msra.mxu0 0.0
    %857 = vmatpush.msra.mxu0 0.0
    %858 = vmatpush.msra.mxu0 0.0
    %859 = vmatpush.msra.mxu0 0.0
    %860 = vmatpush.msra.mxu0 0.0
    %861 = vmatpush.msra.mxu0 0.0
    %v862 = vand.u32 %v62, 4294901760
    %v863 = vsub.f32 %v62, %v862
    %v864 = vand.u32 %v863, 4294901760
    %v865 = vsub.f32 %v863, %v864
    %v866 = vand.u32 %v865, 4294901760
    %867 = vmatpush.msra.mxu0 %v866
    %v868 = vand.u32 %v60, 4294901760
    %v869 = vsub.f32 %v60, %v868
    %v870 = vand.u32 %v869, 4294901760
    %v871 = vsub.f32 %v869, %v870
    %v872 = vand.u32 %v871, 4294901760
    %873 = vmatpush.msra.mxu0 %v872
    %v874 = vand.u32 %v819, 4294901760
    %875 = vmatmul.f32.gmra.mxu0 %v874
    %v876 = vpop.f32.mrf.mxu0
    %v877 = vadd.f32 %v846, %v876
    %878 = vdwg.mxu0
    %879 = vmatpush.msra.mxu0 0.0
    %880 = vmatpush.msra.mxu0 0.0
    %881 = vmatpush.msra.mxu0 0.0
    %882 = vmatpush.msra.mxu0 0.0
    %883 = vmatpush.msra.mxu0 0.0
    %884 = vmatpush.msra.mxu0 0.0
    %885 = vmatpush.msra.mxu0 0.0
    %886 = vmatpush.msra.mxu0 0.0
    %887 = vmatpush.msra.mxu0 0.0
    %888 = vmatpush.msra.mxu0 0.0
    %889 = vmatpush.msra.mxu0 0.0
    %890 = vmatpush.msra.mxu0 0.0
    %891 = vmatpush.msra.mxu0 0.0
    %892 = vmatpush.msra.mxu0 0.0
    %v893 = vand.u32 %v62, 4294901760
    %v894 = vsub.f32 %v62, %v893
    %895 = vmatpush.msra.mxu0 %v894
    %v896 = vand.u32 %v60, 4294901760
    %v897 = vsub.f32 %v60, %v896
    %898 = vmatpush.msra.mxu0 %v897
    %v899 = vand.u32 %v819, 4294901760
    %v900 = vsub.f32 %v819, %v899
    %901 = vmatmul.f32.gmra.mxu0 %v900
    %v902 = vpop.f32.mrf.mxu0
    %v903 = vadd.f32 %v877, %v902
    %904 = vdwg.mxu0
    %905 = vmatpush.msra.mxu0 0.0
    %906 = vmatpush.msra.mxu0 0.0
    %907 = vmatpush.msra.mxu0 0.0
    %908 = vmatpush.msra.mxu0 0.0
    %909 = vmatpush.msra.mxu0 0.0
    %910 = vmatpush.msra.mxu0 0.0
    %911 = vmatpush.msra.mxu0 0.0
    %912 = vmatpush.msra.mxu0 0.0
    %913 = vmatpush.msra.mxu0 0.0
    %914 = vmatpush.msra.mxu0 0.0
    %915 = vmatpush.msra.mxu0 0.0
    %916 = vmatpush.msra.mxu0 0.0
    %917 = vmatpush.msra.mxu0 0.0
    %918 = vmatpush.msra.mxu0 0.0
    %v919 = vand.u32 %v62, 4294901760
    %920 = vmatpush.msra.mxu0 %v919
    %v921 = vand.u32 %v60, 4294901760
    %922 = vmatpush.msra.mxu0 %v921
    %v923 = vand.u32 %v819, 4294901760
    %v924 = vsub.f32 %v819, %v923
    %v925 = vand.u32 %v924, 4294901760
    %926 = vmatmul.f32.gmra.mxu0 %v925
    %v927 = vpop.f32.mrf.mxu0
    %v928 = vadd.f32 %v903, %v927
    %929 = vdwg.mxu0
    %930 = vmatpush.msra.mxu0 0.0
    %931 = vmatpush.msra.mxu0 0.0
    %932 = vmatpush.msra.mxu0 0.0
    %933 = vmatpush.msra.mxu0 0.0
    %934 = vmatpush.msra.mxu0 0.0
    %935 = vmatpush.msra.mxu0 0.0
    %936 = vmatpush.msra.mxu0 0.0
    %937 = vmatpush.msra.mxu0 0.0
    %938 = vmatpush.msra.mxu0 0.0
    %939 = vmatpush.msra.mxu0 0.0
    %940 = vmatpush.msra.mxu0 0.0
    %941 = vmatpush.msra.mxu0 0.0
    %942 = vmatpush.msra.mxu0 0.0
    %943 = vmatpush.msra.mxu0 0.0
    %v944 = vand.u32 %v62, 4294901760
    %v945 = vsub.f32 %v62, %v944
    %v946 = vand.u32 %v945, 4294901760
    %947 = vmatpush.msra.mxu0 %v946
    %v948 = vand.u32 %v60, 4294901760
    %v949 = vsub.f32 %v60, %v948
    %v950 = vand.u32 %v949, 4294901760
    %951 = vmatpush.msra.mxu0 %v950
    %v952 = vand.u32 %v819, 4294901760
    %953 = vmatmul.f32.gmra.mxu0 %v952
    %v954 = vpop.f32.mrf.mxu0
    %v955 = vadd.f32 %v928, %v954
    %956 = vdwg.mxu0
    %957 = vmatpush.msra.mxu0 0.0
    %958 = vmatpush.msra.mxu0 0.0
    %959 = vmatpush.msra.mxu0 0.0
    %960 = vmatpush.msra.mxu0 0.0
    %961 = vmatpush.msra.mxu0 0.0
    %962 = vmatpush.msra.mxu0 0.0
    %963 = vmatpush.msra.mxu0 0.0
    %964 = vmatpush.msra.mxu0 0.0
    %965 = vmatpush.msra.mxu0 0.0
    %966 = vmatpush.msra.mxu0 0.0
    %967 = vmatpush.msra.mxu0 0.0
    %968 = vmatpush.msra.mxu0 0.0
    %969 = vmatpush.msra.mxu0 0.0
    %970 = vmatpush.msra.mxu0 0.0
    %v971 = vand.u32 %v62, 4294901760
    %972 = vmatpush.msra.mxu0 %v971
    %v973 = vand.u32 %v60, 4294901760
    %974 = vmatpush.msra.mxu0 %v973
    %v975 = vand.u32 %v819, 4294901760
    %976 = vmatmul.f32.gmra.mxu0 %v975
    %v977 = vpop.f32.mrf.mxu0
    %v978 = vadd.f32 %v955, %v977
    %979 = vdwg.mxu0
    %980 = vmatpush.msra.mxu0 0.0
    %981 = vmatpush.msra.mxu0 0.0
    %982 = vmatpush.msra.mxu0 0.0
    %983 = vmatpush.msra.mxu0 0.0
    %984 = vmatpush.msra.mxu0 0.0
    %985 = vmatpush.msra.mxu0 0.0
    %986 = vmatpush.msra.mxu0 0.0
    %987 = vmatpush.msra.mxu0 0.0
    %988 = vmatpush.msra.mxu0 0.0
    %989 = vmatpush.msra.mxu0 0.0
    %990 = vmatpush.msra.mxu0 0.0
    %991 = vmatpush.msra.mxu0 0.0
    %992 = vmatpush.msra.mxu0 0.0
    %993 = vmatpush.msra.mxu0 0.0
    %v994 = vand.u32 %v63, 4294901760
    %995 = vmatpush.msra.mxu0 %v994
    %v996 = vand.u32 %v61, 4294901760
    %997 = vmatpush.msra.mxu0 %v996
    %v998 = vand.u32 %v819, 4294901760
    %v999 = vsub.f32 %v819, %v998
    %v1000 = vand.u32 %v999, 4294901760
    %v1001 = vsub.f32 %v999, %v1000
    %v1002 = vand.u32 %v1001, 4294901760
    %1003 = vmatmul.f32.gmra.mxu0 %v1002
    %v1004 = vpop.f32.mrf.mxu0
    %v1005 = vadd.f32 0.0, %v1004
    %1006 = vdwg.mxu0
    %1007 = vmatpush.msra.mxu0 0.0
    %1008 = vmatpush.msra.mxu0 0.0
    %1009 = vmatpush.msra.mxu0 0.0
    %1010 = vmatpush.msra.mxu0 0.0
    %1011 = vmatpush.msra.mxu0 0.0
    %1012 = vmatpush.msra.mxu0 0.0
    %1013 = vmatpush.msra.mxu0 0.0
    %1014 = vmatpush.msra.mxu0 0.0
    %1015 = vmatpush.msra.mxu0 0.0
    %1016 = vmatpush.msra.mxu0 0.0
    %1017 = vmatpush.msra.mxu0 0.0
    %1018 = vmatpush.msra.mxu0 0.0
    %1019 = vmatpush.msra.mxu0 0.0
    %1020 = vmatpush.msra.mxu0 0.0
    %v1021 = vand.u32 %v63, 4294901760
    %v1022 = vsub.f32 %v63, %v1021
    %v1023 = vand.u32 %v1022, 4294901760
    %v1024 = vsub.f32 %v1022, %v1023
    %v1025 = vand.u32 %v1024, 4294901760
    %1026 = vmatpush.msra.mxu0 %v1025
    %v1027 = vand.u32 %v61, 4294901760
    %v1028 = vsub.f32 %v61, %v1027
    %v1029 = vand.u32 %v1028, 4294901760
    %v1030 = vsub.f32 %v1028, %v1029
    %v1031 = vand.u32 %v1030, 4294901760
    %1032 = vmatpush.msra.mxu0 %v1031
    %v1033 = vand.u32 %v819, 4294901760
    %1034 = vmatmul.f32.gmra.mxu0 %v1033
    %v1035 = vpop.f32.mrf.mxu0
    %v1036 = vadd.f32 %v1005, %v1035
    %1037 = vdwg.mxu0
    %1038 = vmatpush.msra.mxu0 0.0
    %1039 = vmatpush.msra.mxu0 0.0
    %1040 = vmatpush.msra.mxu0 0.0
    %1041 = vmatpush.msra.mxu0 0.0
    %1042 = vmatpush.msra.mxu0 0.0
    %1043 = vmatpush.msra.mxu0 0.0
    %1044 = vmatpush.msra.mxu0 0.0
    %1045 = vmatpush.msra.mxu0 0.0
    %1046 = vmatpush.msra.mxu0 0.0
    %1047 = vmatpush.msra.mxu0 0.0
    %1048 = vmatpush.msra.mxu0 0.0
    %1049 = vmatpush.msra.mxu0 0.0
    %1050 = vmatpush.msra.mxu0 0.0
    %1051 = vmatpush.msra.mxu0 0.0
    %v1052 = vand.u32 %v63, 4294901760
    %v1053 = vsub.f32 %v63, %v1052
    %1054 = vmatpush.msra.mxu0 %v1053
    %v1055 = vand.u32 %v61, 4294901760
    %v1056 = vsub.f32 %v61, %v1055
    %1057 = vmatpush.msra.mxu0 %v1056
    %v1058 = vand.u32 %v819, 4294901760
    %v1059 = vsub.f32 %v819, %v1058
    %1060 = vmatmul.f32.gmra.mxu0 %v1059
    %v1061 = vpop.f32.mrf.mxu0
    %v1062 = vadd.f32 %v1036, %v1061
    %1063 = vdwg.mxu0
    %1064 = vmatpush.msra.mxu0 0.0
    %1065 = vmatpush.msra.mxu0 0.0
    %1066 = vmatpush.msra.mxu0 0.0
    %1067 = vmatpush.msra.mxu0 0.0
    %1068 = vmatpush.msra.mxu0 0.0
    %1069 = vmatpush.msra.mxu0 0.0
    %1070 = vmatpush.msra.mxu0 0.0
    %1071 = vmatpush.msra.mxu0 0.0
    %1072 = vmatpush.msra.mxu0 0.0
    %1073 = vmatpush.msra.mxu0 0.0
    %1074 = vmatpush.msra.mxu0 0.0
    %1075 = vmatpush.msra.mxu0 0.0
    %1076 = vmatpush.msra.mxu0 0.0
    %1077 = vmatpush.msra.mxu0 0.0
    %v1078 = vand.u32 %v63, 4294901760
    %1079 = vmatpush.msra.mxu0 %v1078
    %v1080 = vand.u32 %v61, 4294901760
    %1081 = vmatpush.msra.mxu0 %v1080
    %v1082 = vand.u32 %v819, 4294901760
    %v1083 = vsub.f32 %v819, %v1082
    %v1084 = vand.u32 %v1083, 4294901760
    %1085 = vmatmul.f32.gmra.mxu0 %v1084
    %v1086 = vpop.f32.mrf.mxu0
    %v1087 = vadd.f32 %v1062, %v1086
    %1088 = vdwg.mxu0
    %1089 = vmatpush.msra.mxu0 0.0
    %1090 = vmatpush.msra.mxu0 0.0
    %1091 = vmatpush.msra.mxu0 0.0
    %1092 = vmatpush.msra.mxu0 0.0
    %1093 = vmatpush.msra.mxu0 0.0
    %1094 = vmatpush.msra.mxu0 0.0
    %1095 = vmatpush.msra.mxu0 0.0
    %1096 = vmatpush.msra.mxu0 0.0
    %1097 = vmatpush.msra.mxu0 0.0
    %1098 = vmatpush.msra.mxu0 0.0
    %1099 = vmatpush.msra.mxu0 0.0
    %1100 = vmatpush.msra.mxu0 0.0
    %1101 = vmatpush.msra.mxu0 0.0
    %1102 = vmatpush.msra.mxu0 0.0
    %v1103 = vand.u32 %v63, 4294901760
    %v1104 = vsub.f32 %v63, %v1103
    %v1105 = vand.u32 %v1104, 4294901760
    %1106 = vmatpush.msra.mxu0 %v1105
    %v1107 = vand.u32 %v61, 4294901760
    %v1108 = vsub.f32 %v61, %v1107
    %v1109 = vand.u32 %v1108, 4294901760
    %1110 = vmatpush.msra.mxu0 %v1109
    %v1111 = vand.u32 %v819, 4294901760
    %1112 = vmatmul.f32.gmra.mxu0 %v1111
    %v1113 = vpop.f32.mrf.mxu0
    %v1114 = vadd.f32 %v1087, %v1113
    %1115 = vdwg.mxu0
    %1116 = vmatpush.msra.mxu0 0.0
    %1117 = vmatpush.msra.mxu0 0.0
    %1118 = vmatpush.msra.mxu0 0.0
    %1119 = vmatpush.msra.mxu0 0.0
    %1120 = vmatpush.msra.mxu0 0.0
    %1121 = vmatpush.msra.mxu0 0.0
    %1122 = vmatpush.msra.mxu0 0.0
    %1123 = vmatpush.msra.mxu0 0.0
    %1124 = vmatpush.msra.mxu0 0.0
    %1125 = vmatpush.msra.mxu0 0.0
    %1126 = vmatpush.msra.mxu0 0.0
    %1127 = vmatpush.msra.mxu0 0.0
    %1128 = vmatpush.msra.mxu0 0.0
    %1129 = vmatpush.msra.mxu0 0.0
    %v1130 = vand.u32 %v63, 4294901760
    %1131 = vmatpush.msra.mxu0 %v1130
    %v1132 = vand.u32 %v61, 4294901760
    %1133 = vmatpush.msra.mxu0 %v1132
    %v1134 = vand.u32 %v819, 4294901760
    %1135 = vmatmul.f32.gmra.mxu0 %v1134
    %v1136 = vpop.f32.mrf.mxu0
    %v1137 = vadd.f32 %v1114, %v1136
    %1138 = vdwg.mxu0
    %v1141 = vrot.slane %v978, 1
    %v1142 = vrot.slane %v1137, 1
    %v1147 = vmul.f32 %v73, %v978
    %v1148 = vmul.f32 %v79, %v1137
    %v1149 = vmul.f32 %v85, %v1141
    %v1150 = vmul.f32 %v91, %v1142
    %v1151 = vperm.slane %v1147, 0
    %v1152 = vperm.slane %v1148, 0
    %v1153 = vperm.slane %v1149, 0
    %v1154 = vperm.slane %v1150, 0
    %v1155 = vmul.f32 %v21, %v1151
    %v1156 = vmul.f32 %v22, %v1152
    %v1157 = vmul.f32 %v23, %v1153
    %v1158 = vmul.f32 %v24, %v1154
    %v1159 = vand.u32 %v43, 4294901760
    %1160 = vmatpush.msra.mxu0 %v1159
    %v1161 = vand.u32 %v42, 4294901760
    %1162 = vmatpush.msra.mxu0 %v1161
    %v1163 = vand.u32 %v41, 4294901760
    %1164 = vmatpush.msra.mxu0 %v1163
    %v1165 = vand.u32 %v40, 4294901760
    %1166 = vmatpush.msra.mxu0 %v1165
    %v1167 = vand.u32 %v39, 4294901760
    %1168 = vmatpush.msra.mxu0 %v1167
    %v1169 = vand.u32 %v38, 4294901760
    %1170 = vmatpush.msra.mxu0 %v1169
    %v1171 = vand.u32 %v37, 4294901760
    %1172 = vmatpush.msra.mxu0 %v1171
    %v1173 = vand.u32 %v36, 4294901760
    %1174 = vmatpush.msra.mxu0 %v1173
    %v1175 = vand.u32 %v35, 4294901760
    %1176 = vmatpush.msra.mxu0 %v1175
    %v1177 = vand.u32 %v34, 4294901760
    %1178 = vmatpush.msra.mxu0 %v1177
    %v1179 = vand.u32 %v33, 4294901760
    %1180 = vmatpush.msra.mxu0 %v1179
    %v1181 = vand.u32 %v32, 4294901760
    %1182 = vmatpush.msra.mxu0 %v1181
    %v1183 = vand.u32 %v31, 4294901760
    %1184 = vmatpush.msra.mxu0 %v1183
    %v1185 = vand.u32 %v30, 4294901760
    %1186 = vmatpush.msra.mxu0 %v1185
    %v1187 = vand.u32 %v29, 4294901760
    %1188 = vmatpush.msra.mxu0 %v1187
    %v1189 = vand.u32 %v28, 4294901760
    %1190 = vmatpush.msra.mxu0 %v1189
    %v1191 = vand.u32 %v1155, 4294901760
    %v1192 = vsub.f32 %v1155, %v1191
    %v1193 = vand.u32 %v1192, 4294901760
    %v1194 = vsub.f32 %v1192, %v1193
    %v1195 = vand.u32 %v1194, 4294901760
    %1196 = vmatmul.f32.gmra.mxu0 %v1195
    %v1197 = vpop.f32.mrf.mxu0
    %v1198 = vadd.f32 0.0, %v1197
    %v1199 = vand.u32 %v1157, 4294901760
    %v1200 = vsub.f32 %v1157, %v1199
    %v1201 = vand.u32 %v1200, 4294901760
    %v1202 = vsub.f32 %v1200, %v1201
    %v1203 = vand.u32 %v1202, 4294901760
    %1204 = vmatmul.f32.gmra.mxu0 %v1203
    %v1205 = vpop.f32.mrf.mxu0
    %v1206 = vadd.f32 0.0, %v1205
    %1207 = vdwg.mxu0
    %v1208 = vand.u32 %v43, 4294901760
    %v1209 = vsub.f32 %v43, %v1208
    %v1210 = vand.u32 %v1209, 4294901760
    %v1211 = vsub.f32 %v1209, %v1210
    %v1212 = vand.u32 %v1211, 4294901760
    %1213 = vmatpush.msra.mxu0 %v1212
    %v1214 = vand.u32 %v42, 4294901760
    %v1215 = vsub.f32 %v42, %v1214
    %v1216 = vand.u32 %v1215, 4294901760
    %v1217 = vsub.f32 %v1215, %v1216
    %v1218 = vand.u32 %v1217, 4294901760
    %1219 = vmatpush.msra.mxu0 %v1218
    %v1220 = vand.u32 %v41, 4294901760
    %v1221 = vsub.f32 %v41, %v1220
    %v1222 = vand.u32 %v1221, 4294901760
    %v1223 = vsub.f32 %v1221, %v1222
    %v1224 = vand.u32 %v1223, 4294901760
    %1225 = vmatpush.msra.mxu0 %v1224
    %v1226 = vand.u32 %v40, 4294901760
    %v1227 = vsub.f32 %v40, %v1226
    %v1228 = vand.u32 %v1227, 4294901760
    %v1229 = vsub.f32 %v1227, %v1228
    %v1230 = vand.u32 %v1229, 4294901760
    %1231 = vmatpush.msra.mxu0 %v1230
    %v1232 = vand.u32 %v39, 4294901760
    %v1233 = vsub.f32 %v39, %v1232
    %v1234 = vand.u32 %v1233, 4294901760
    %v1235 = vsub.f32 %v1233, %v1234
    %v1236 = vand.u32 %v1235, 4294901760
    %1237 = vmatpush.msra.mxu0 %v1236
    %v1238 = vand.u32 %v38, 4294901760
    %v1239 = vsub.f32 %v38, %v1238
    %v1240 = vand.u32 %v1239, 4294901760
    %v1241 = vsub.f32 %v1239, %v1240
    %v1242 = vand.u32 %v1241, 4294901760
    %1243 = vmatpush.msra.mxu0 %v1242
    %v1244 = vand.u32 %v37, 4294901760
    %v1245 = vsub.f32 %v37, %v1244
    %v1246 = vand.u32 %v1245, 4294901760
    %v1247 = vsub.f32 %v1245, %v1246
    %v1248 = vand.u32 %v1247, 4294901760
    %1249 = vmatpush.msra.mxu0 %v1248
    %v1250 = vand.u32 %v36, 4294901760
    %v1251 = vsub.f32 %v36, %v1250
    %v1252 = vand.u32 %v1251, 4294901760
    %v1253 = vsub.f32 %v1251, %v1252
    %v1254 = vand.u32 %v1253, 4294901760
    %1255 = vmatpush.msra.mxu0 %v1254
    %v1256 = vand.u32 %v35, 4294901760
    %v1257 = vsub.f32 %v35, %v1256
    %v1258 = vand.u32 %v1257, 4294901760
    %v1259 = vsub.f32 %v1257, %v1258
    %v1260 = vand.u32 %v1259, 4294901760
    %1261 = vmatpush.msra.mxu0 %v1260
    %v1262 = vand.u32 %v34, 4294901760
    %v1263 = vsub.f32 %v34, %v1262
    %v1264 = vand.u32 %v1263, 4294901760
    %v1265 = vsub.f32 %v1263, %v1264
    %v1266 = vand.u32 %v1265, 4294901760
    %1267 = vmatpush.msra.mxu0 %v1266
    %v1268 = vand.u32 %v33, 4294901760
    %v1269 = vsub.f32 %v33, %v1268
    %v1270 = vand.u32 %v1269, 4294901760
    %v1271 = vsub.f32 %v1269, %v1270
    %v1272 = vand.u32 %v1271, 4294901760
    %1273 = vmatpush.msra.mxu0 %v1272
    %v1274 = vand.u32 %v32, 4294901760
    %v1275 = vsub.f32 %v32, %v1274
    %v1276 = vand.u32 %v1275, 4294901760
    %v1277 = vsub.f32 %v1275, %v1276
    %v1278 = vand.u32 %v1277, 4294901760
    %1279 = vmatpush.msra.mxu0 %v1278
    %v1280 = vand.u32 %v31, 4294901760
    %v1281 = vsub.f32 %v31, %v1280
    %v1282 = vand.u32 %v1281, 4294901760
    %v1283 = vsub.f32 %v1281, %v1282
    %v1284 = vand.u32 %v1283, 4294901760
    %1285 = vmatpush.msra.mxu0 %v1284
    %v1286 = vand.u32 %v30, 4294901760
    %v1287 = vsub.f32 %v30, %v1286
    %v1288 = vand.u32 %v1287, 4294901760
    %v1289 = vsub.f32 %v1287, %v1288
    %v1290 = vand.u32 %v1289, 4294901760
    %1291 = vmatpush.msra.mxu0 %v1290
    %v1292 = vand.u32 %v29, 4294901760
    %v1293 = vsub.f32 %v29, %v1292
    %v1294 = vand.u32 %v1293, 4294901760
    %v1295 = vsub.f32 %v1293, %v1294
    %v1296 = vand.u32 %v1295, 4294901760
    %1297 = vmatpush.msra.mxu0 %v1296
    %v1298 = vand.u32 %v28, 4294901760
    %v1299 = vsub.f32 %v28, %v1298
    %v1300 = vand.u32 %v1299, 4294901760
    %v1301 = vsub.f32 %v1299, %v1300
    %v1302 = vand.u32 %v1301, 4294901760
    %1303 = vmatpush.msra.mxu0 %v1302
    %v1304 = vand.u32 %v1155, 4294901760
    %1305 = vmatmul.f32.gmra.mxu0 %v1304
    %v1306 = vpop.f32.mrf.mxu0
    %v1307 = vadd.f32 %v1198, %v1306
    %v1308 = vand.u32 %v1157, 4294901760
    %1309 = vmatmul.f32.gmra.mxu0 %v1308
    %v1310 = vpop.f32.mrf.mxu0
    %v1311 = vadd.f32 %v1206, %v1310
    %1312 = vdwg.mxu0
    %v1313 = vand.u32 %v43, 4294901760
    %v1314 = vsub.f32 %v43, %v1313
    %1315 = vmatpush.msra.mxu0 %v1314
    %v1316 = vand.u32 %v42, 4294901760
    %v1317 = vsub.f32 %v42, %v1316
    %1318 = vmatpush.msra.mxu0 %v1317
    %v1319 = vand.u32 %v41, 4294901760
    %v1320 = vsub.f32 %v41, %v1319
    %1321 = vmatpush.msra.mxu0 %v1320
    %v1322 = vand.u32 %v40, 4294901760
    %v1323 = vsub.f32 %v40, %v1322
    %1324 = vmatpush.msra.mxu0 %v1323
    %v1325 = vand.u32 %v39, 4294901760
    %v1326 = vsub.f32 %v39, %v1325
    %1327 = vmatpush.msra.mxu0 %v1326
    %v1328 = vand.u32 %v38, 4294901760
    %v1329 = vsub.f32 %v38, %v1328
    %1330 = vmatpush.msra.mxu0 %v1329
    %v1331 = vand.u32 %v37, 4294901760
    %v1332 = vsub.f32 %v37, %v1331
    %1333 = vmatpush.msra.mxu0 %v1332
    %v1334 = vand.u32 %v36, 4294901760
    %v1335 = vsub.f32 %v36, %v1334
    %1336 = vmatpush.msra.mxu0 %v1335
    %v1337 = vand.u32 %v35, 4294901760
    %v1338 = vsub.f32 %v35, %v1337
    %1339 = vmatpush.msra.mxu0 %v1338
    %v1340 = vand.u32 %v34, 4294901760
    %v1341 = vsub.f32 %v34, %v1340
    %1342 = vmatpush.msra.mxu0 %v1341
    %v1343 = vand.u32 %v33, 4294901760
    %v1344 = vsub.f32 %v33, %v1343
    %1345 = vmatpush.msra.mxu0 %v1344
    %v1346 = vand.u32 %v32, 4294901760
    %v1347 = vsub.f32 %v32, %v1346
    %1348 = vmatpush.msra.mxu0 %v1347
    %v1349 = vand.u32 %v31, 4294901760
    %v1350 = vsub.f32 %v31, %v1349
    %1351 = vmatpush.msra.mxu0 %v1350
    %v1352 = vand.u32 %v30, 4294901760
    %v1353 = vsub.f32 %v30, %v1352
    %1354 = vmatpush.msra.mxu0 %v1353
    %v1355 = vand.u32 %v29, 4294901760
    %v1356 = vsub.f32 %v29, %v1355
    %1357 = vmatpush.msra.mxu0 %v1356
    %v1358 = vand.u32 %v28, 4294901760
    %v1359 = vsub.f32 %v28, %v1358
    %1360 = vmatpush.msra.mxu0 %v1359
    %v1361 = vand.u32 %v1155, 4294901760
    %v1362 = vsub.f32 %v1155, %v1361
    %1363 = vmatmul.f32.gmra.mxu0 %v1362
    %v1364 = vpop.f32.mrf.mxu0
    %v1365 = vadd.f32 %v1307, %v1364
    %v1366 = vand.u32 %v1157, 4294901760
    %v1367 = vsub.f32 %v1157, %v1366
    %1368 = vmatmul.f32.gmra.mxu0 %v1367
    %v1369 = vpop.f32.mrf.mxu0
    %v1370 = vadd.f32 %v1311, %v1369
    %1371 = vdwg.mxu0
    %v1372 = vand.u32 %v43, 4294901760
    %1373 = vmatpush.msra.mxu0 %v1372
    %v1374 = vand.u32 %v42, 4294901760
    %1375 = vmatpush.msra.mxu0 %v1374
    %v1376 = vand.u32 %v41, 4294901760
    %1377 = vmatpush.msra.mxu0 %v1376
    %v1378 = vand.u32 %v40, 4294901760
    %1379 = vmatpush.msra.mxu0 %v1378
    %v1380 = vand.u32 %v39, 4294901760
    %1381 = vmatpush.msra.mxu0 %v1380
    %v1382 = vand.u32 %v38, 4294901760
    %1383 = vmatpush.msra.mxu0 %v1382
    %v1384 = vand.u32 %v37, 4294901760
    %1385 = vmatpush.msra.mxu0 %v1384
    %v1386 = vand.u32 %v36, 4294901760
    %1387 = vmatpush.msra.mxu0 %v1386
    %v1388 = vand.u32 %v35, 4294901760
    %1389 = vmatpush.msra.mxu0 %v1388
    %v1390 = vand.u32 %v34, 4294901760
    %1391 = vmatpush.msra.mxu0 %v1390
    %v1392 = vand.u32 %v33, 4294901760
    %1393 = vmatpush.msra.mxu0 %v1392
    %v1394 = vand.u32 %v32, 4294901760
    %1395 = vmatpush.msra.mxu0 %v1394
    %v1396 = vand.u32 %v31, 4294901760
    %1397 = vmatpush.msra.mxu0 %v1396
    %v1398 = vand.u32 %v30, 4294901760
    %1399 = vmatpush.msra.mxu0 %v1398
    %v1400 = vand.u32 %v29, 4294901760
    %1401 = vmatpush.msra.mxu0 %v1400
    %v1402 = vand.u32 %v28, 4294901760
    %1403 = vmatpush.msra.mxu0 %v1402
    %v1404 = vand.u32 %v1155, 4294901760
    %v1405 = vsub.f32 %v1155, %v1404
    %v1406 = vand.u32 %v1405, 4294901760
    %1407 = vmatmul.f32.gmra.mxu0 %v1406
    %v1408 = vpop.f32.mrf.mxu0
    %v1409 = vadd.f32 %v1365, %v1408
    %v1410 = vand.u32 %v1157, 4294901760
    %v1411 = vsub.f32 %v1157, %v1410
    %v1412 = vand.u32 %v1411, 4294901760
    %1413 = vmatmul.f32.gmra.mxu0 %v1412
    %v1414 = vpop.f32.mrf.mxu0
    %v1415 = vadd.f32 %v1370, %v1414
    %1416 = vdwg.mxu0
    %v1417 = vand.u32 %v43, 4294901760
    %v1418 = vsub.f32 %v43, %v1417
    %v1419 = vand.u32 %v1418, 4294901760
    %1420 = vmatpush.msra.mxu0 %v1419
    %v1421 = vand.u32 %v42, 4294901760
    %v1422 = vsub.f32 %v42, %v1421
    %v1423 = vand.u32 %v1422, 4294901760
    %1424 = vmatpush.msra.mxu0 %v1423
    %v1425 = vand.u32 %v41, 4294901760
    %v1426 = vsub.f32 %v41, %v1425
    %v1427 = vand.u32 %v1426, 4294901760
    %1428 = vmatpush.msra.mxu0 %v1427
    %v1429 = vand.u32 %v40, 4294901760
    %v1430 = vsub.f32 %v40, %v1429
    %v1431 = vand.u32 %v1430, 4294901760
    %1432 = vmatpush.msra.mxu0 %v1431
    %v1433 = vand.u32 %v39, 4294901760
    %v1434 = vsub.f32 %v39, %v1433
    %v1435 = vand.u32 %v1434, 4294901760
    %1436 = vmatpush.msra.mxu0 %v1435
    %v1437 = vand.u32 %v38, 4294901760
    %v1438 = vsub.f32 %v38, %v1437
    %v1439 = vand.u32 %v1438, 4294901760
    %1440 = vmatpush.msra.mxu0 %v1439
    %v1441 = vand.u32 %v37, 4294901760
    %v1442 = vsub.f32 %v37, %v1441
    %v1443 = vand.u32 %v1442, 4294901760
    %1444 = vmatpush.msra.mxu0 %v1443
    %v1445 = vand.u32 %v36, 4294901760
    %v1446 = vsub.f32 %v36, %v1445
    %v1447 = vand.u32 %v1446, 4294901760
    %1448 = vmatpush.msra.mxu0 %v1447
    %v1449 = vand.u32 %v35, 4294901760
    %v1450 = vsub.f32 %v35, %v1449
    %v1451 = vand.u32 %v1450, 4294901760
    %1452 = vmatpush.msra.mxu0 %v1451
    %v1453 = vand.u32 %v34, 4294901760
    %v1454 = vsub.f32 %v34, %v1453
    %v1455 = vand.u32 %v1454, 4294901760
    %1456 = vmatpush.msra.mxu0 %v1455
    %v1457 = vand.u32 %v33, 4294901760
    %v1458 = vsub.f32 %v33, %v1457
    %v1459 = vand.u32 %v1458, 4294901760
    %1460 = vmatpush.msra.mxu0 %v1459
    %v1461 = vand.u32 %v32, 4294901760
    %v1462 = vsub.f32 %v32, %v1461
    %v1463 = vand.u32 %v1462, 4294901760
    %1464 = vmatpush.msra.mxu0 %v1463
    %v1465 = vand.u32 %v31, 4294901760
    %v1466 = vsub.f32 %v31, %v1465
    %v1467 = vand.u32 %v1466, 4294901760
    %1468 = vmatpush.msra.mxu0 %v1467
    %v1469 = vand.u32 %v30, 4294901760
    %v1470 = vsub.f32 %v30, %v1469
    %v1471 = vand.u32 %v1470, 4294901760
    %1472 = vmatpush.msra.mxu0 %v1471
    %v1473 = vand.u32 %v29, 4294901760
    %v1474 = vsub.f32 %v29, %v1473
    %v1475 = vand.u32 %v1474, 4294901760
    %1476 = vmatpush.msra.mxu0 %v1475
    %v1477 = vand.u32 %v28, 4294901760
    %v1478 = vsub.f32 %v28, %v1477
    %v1479 = vand.u32 %v1478, 4294901760
    %1480 = vmatpush.msra.mxu0 %v1479
    %v1481 = vand.u32 %v1155, 4294901760
    %1482 = vmatmul.f32.gmra.mxu0 %v1481
    %v1483 = vpop.f32.mrf.mxu0
    %v1484 = vadd.f32 %v1409, %v1483
    %v1485 = vand.u32 %v1157, 4294901760
    %1486 = vmatmul.f32.gmra.mxu0 %v1485
    %v1487 = vpop.f32.mrf.mxu0
    %v1488 = vadd.f32 %v1415, %v1487
    %1489 = vdwg.mxu0
    %v1490 = vand.u32 %v43, 4294901760
    %1491 = vmatpush.msra.mxu0 %v1490
    %v1492 = vand.u32 %v42, 4294901760
    %1493 = vmatpush.msra.mxu0 %v1492
    %v1494 = vand.u32 %v41, 4294901760
    %1495 = vmatpush.msra.mxu0 %v1494
    %v1496 = vand.u32 %v40, 4294901760
    %1497 = vmatpush.msra.mxu0 %v1496
    %v1498 = vand.u32 %v39, 4294901760
    %1499 = vmatpush.msra.mxu0 %v1498
    %v1500 = vand.u32 %v38, 4294901760
    %1501 = vmatpush.msra.mxu0 %v1500
    %v1502 = vand.u32 %v37, 4294901760
    %1503 = vmatpush.msra.mxu0 %v1502
    %v1504 = vand.u32 %v36, 4294901760
    %1505 = vmatpush.msra.mxu0 %v1504
    %v1506 = vand.u32 %v35, 4294901760
    %1507 = vmatpush.msra.mxu0 %v1506
    %v1508 = vand.u32 %v34, 4294901760
    %1509 = vmatpush.msra.mxu0 %v1508
    %v1510 = vand.u32 %v33, 4294901760
    %1511 = vmatpush.msra.mxu0 %v1510
    %v1512 = vand.u32 %v32, 4294901760
    %1513 = vmatpush.msra.mxu0 %v1512
    %v1514 = vand.u32 %v31, 4294901760
    %1515 = vmatpush.msra.mxu0 %v1514
    %v1516 = vand.u32 %v30, 4294901760
    %1517 = vmatpush.msra.mxu0 %v1516
    %v1518 = vand.u32 %v29, 4294901760
    %1519 = vmatpush.msra.mxu0 %v1518
    %v1520 = vand.u32 %v28, 4294901760
    %1521 = vmatpush.msra.mxu0 %v1520
    %v1522 = vand.u32 %v1155, 4294901760
    %1523 = vmatmul.f32.gmra.mxu0 %v1522
    %v1524 = vpop.f32.mrf.mxu0
    %v1525 = vadd.f32 %v1484, %v1524
    %v1526 = vand.u32 %v1157, 4294901760
    %1527 = vmatmul.f32.gmra.mxu0 %v1526
    %v1528 = vpop.f32.mrf.mxu0
    %v1529 = vadd.f32 %v1488, %v1528
    %1530 = vdwg.mxu0
    %v1531 = vand.u32 %v59, 4294901760
    %1532 = vmatpush.msra.mxu0 %v1531
    %v1533 = vand.u32 %v58, 4294901760
    %1534 = vmatpush.msra.mxu0 %v1533
    %v1535 = vand.u32 %v57, 4294901760
    %1536 = vmatpush.msra.mxu0 %v1535
    %v1537 = vand.u32 %v56, 4294901760
    %1538 = vmatpush.msra.mxu0 %v1537
    %v1539 = vand.u32 %v55, 4294901760
    %1540 = vmatpush.msra.mxu0 %v1539
    %v1541 = vand.u32 %v54, 4294901760
    %1542 = vmatpush.msra.mxu0 %v1541
    %v1543 = vand.u32 %v53, 4294901760
    %1544 = vmatpush.msra.mxu0 %v1543
    %v1545 = vand.u32 %v52, 4294901760
    %1546 = vmatpush.msra.mxu0 %v1545
    %v1547 = vand.u32 %v51, 4294901760
    %1548 = vmatpush.msra.mxu0 %v1547
    %v1549 = vand.u32 %v50, 4294901760
    %1550 = vmatpush.msra.mxu0 %v1549
    %v1551 = vand.u32 %v49, 4294901760
    %1552 = vmatpush.msra.mxu0 %v1551
    %v1553 = vand.u32 %v48, 4294901760
    %1554 = vmatpush.msra.mxu0 %v1553
    %v1555 = vand.u32 %v47, 4294901760
    %1556 = vmatpush.msra.mxu0 %v1555
    %v1557 = vand.u32 %v46, 4294901760
    %1558 = vmatpush.msra.mxu0 %v1557
    %v1559 = vand.u32 %v45, 4294901760
    %1560 = vmatpush.msra.mxu0 %v1559
    %v1561 = vand.u32 %v44, 4294901760
    %1562 = vmatpush.msra.mxu0 %v1561
    %v1563 = vand.u32 %v1156, 4294901760
    %v1564 = vsub.f32 %v1156, %v1563
    %v1565 = vand.u32 %v1564, 4294901760
    %v1566 = vsub.f32 %v1564, %v1565
    %v1567 = vand.u32 %v1566, 4294901760
    %1568 = vmatmul.f32.gmra.mxu0 %v1567
    %v1569 = vpop.f32.mrf.mxu0
    %v1570 = vadd.f32 %v1525, %v1569
    %v1571 = vand.u32 %v1158, 4294901760
    %v1572 = vsub.f32 %v1158, %v1571
    %v1573 = vand.u32 %v1572, 4294901760
    %v1574 = vsub.f32 %v1572, %v1573
    %v1575 = vand.u32 %v1574, 4294901760
    %1576 = vmatmul.f32.gmra.mxu0 %v1575
    %v1577 = vpop.f32.mrf.mxu0
    %v1578 = vadd.f32 %v1529, %v1577
    %1579 = vdwg.mxu0
    %v1580 = vand.u32 %v59, 4294901760
    %v1581 = vsub.f32 %v59, %v1580
    %v1582 = vand.u32 %v1581, 4294901760
    %v1583 = vsub.f32 %v1581, %v1582
    %v1584 = vand.u32 %v1583, 4294901760
    %1585 = vmatpush.msra.mxu0 %v1584
    %v1586 = vand.u32 %v58, 4294901760
    %v1587 = vsub.f32 %v58, %v1586
    %v1588 = vand.u32 %v1587, 4294901760
    %v1589 = vsub.f32 %v1587, %v1588
    %v1590 = vand.u32 %v1589, 4294901760
    %1591 = vmatpush.msra.mxu0 %v1590
    %v1592 = vand.u32 %v57, 4294901760
    %v1593 = vsub.f32 %v57, %v1592
    %v1594 = vand.u32 %v1593, 4294901760
    %v1595 = vsub.f32 %v1593, %v1594
    %v1596 = vand.u32 %v1595, 4294901760
    %1597 = vmatpush.msra.mxu0 %v1596
    %v1598 = vand.u32 %v56, 4294901760
    %v1599 = vsub.f32 %v56, %v1598
    %v1600 = vand.u32 %v1599, 4294901760
    %v1601 = vsub.f32 %v1599, %v1600
    %v1602 = vand.u32 %v1601, 4294901760
    %1603 = vmatpush.msra.mxu0 %v1602
    %v1604 = vand.u32 %v55, 4294901760
    %v1605 = vsub.f32 %v55, %v1604
    %v1606 = vand.u32 %v1605, 4294901760
    %v1607 = vsub.f32 %v1605, %v1606
    %v1608 = vand.u32 %v1607, 4294901760
    %1609 = vmatpush.msra.mxu0 %v1608
    %v1610 = vand.u32 %v54, 4294901760
    %v1611 = vsub.f32 %v54, %v1610
    %v1612 = vand.u32 %v1611, 4294901760
    %v1613 = vsub.f32 %v1611, %v1612
    %v1614 = vand.u32 %v1613, 4294901760
    %1615 = vmatpush.msra.mxu0 %v1614
    %v1616 = vand.u32 %v53, 4294901760
    %v1617 = vsub.f32 %v53, %v1616
    %v1618 = vand.u32 %v1617, 4294901760
    %v1619 = vsub.f32 %v1617, %v1618
    %v1620 = vand.u32 %v1619, 4294901760
    %1621 = vmatpush.msra.mxu0 %v1620
    %v1622 = vand.u32 %v52, 4294901760
    %v1623 = vsub.f32 %v52, %v1622
    %v1624 = vand.u32 %v1623, 4294901760
    %v1625 = vsub.f32 %v1623, %v1624
    %v1626 = vand.u32 %v1625, 4294901760
    %1627 = vmatpush.msra.mxu0 %v1626
    %v1628 = vand.u32 %v51, 4294901760
    %v1629 = vsub.f32 %v51, %v1628
    %v1630 = vand.u32 %v1629, 4294901760
    %v1631 = vsub.f32 %v1629, %v1630
    %v1632 = vand.u32 %v1631, 4294901760
    %1633 = vmatpush.msra.mxu0 %v1632
    %v1634 = vand.u32 %v50, 4294901760
    %v1635 = vsub.f32 %v50, %v1634
    %v1636 = vand.u32 %v1635, 4294901760
    %v1637 = vsub.f32 %v1635, %v1636
    %v1638 = vand.u32 %v1637, 4294901760
    %1639 = vmatpush.msra.mxu0 %v1638
    %v1640 = vand.u32 %v49, 4294901760
    %v1641 = vsub.f32 %v49, %v1640
    %v1642 = vand.u32 %v1641, 4294901760
    %v1643 = vsub.f32 %v1641, %v1642
    %v1644 = vand.u32 %v1643, 4294901760
    %1645 = vmatpush.msra.mxu0 %v1644
    %v1646 = vand.u32 %v48, 4294901760
    %v1647 = vsub.f32 %v48, %v1646
    %v1648 = vand.u32 %v1647, 4294901760
    %v1649 = vsub.f32 %v1647, %v1648
    %v1650 = vand.u32 %v1649, 4294901760
    %1651 = vmatpush.msra.mxu0 %v1650
    %v1652 = vand.u32 %v47, 4294901760
    %v1653 = vsub.f32 %v47, %v1652
    %v1654 = vand.u32 %v1653, 4294901760
    %v1655 = vsub.f32 %v1653, %v1654
    %v1656 = vand.u32 %v1655, 4294901760
    %1657 = vmatpush.msra.mxu0 %v1656
    %v1658 = vand.u32 %v46, 4294901760
    %v1659 = vsub.f32 %v46, %v1658
    %v1660 = vand.u32 %v1659, 4294901760
    %v1661 = vsub.f32 %v1659, %v1660
    %v1662 = vand.u32 %v1661, 4294901760
    %1663 = vmatpush.msra.mxu0 %v1662
    %v1664 = vand.u32 %v45, 4294901760
    %v1665 = vsub.f32 %v45, %v1664
    %v1666 = vand.u32 %v1665, 4294901760
    %v1667 = vsub.f32 %v1665, %v1666
    %v1668 = vand.u32 %v1667, 4294901760
    %1669 = vmatpush.msra.mxu0 %v1668
    %v1670 = vand.u32 %v44, 4294901760
    %v1671 = vsub.f32 %v44, %v1670
    %v1672 = vand.u32 %v1671, 4294901760
    %v1673 = vsub.f32 %v1671, %v1672
    %v1674 = vand.u32 %v1673, 4294901760
    %1675 = vmatpush.msra.mxu0 %v1674
    %v1676 = vand.u32 %v1156, 4294901760
    %1677 = vmatmul.f32.gmra.mxu0 %v1676
    %v1678 = vpop.f32.mrf.mxu0
    %v1679 = vadd.f32 %v1570, %v1678
    %v1680 = vand.u32 %v1158, 4294901760
    %1681 = vmatmul.f32.gmra.mxu0 %v1680
    %v1682 = vpop.f32.mrf.mxu0
    %v1683 = vadd.f32 %v1578, %v1682
    %1684 = vdwg.mxu0
    %v1685 = vand.u32 %v59, 4294901760
    %v1686 = vsub.f32 %v59, %v1685
    %1687 = vmatpush.msra.mxu0 %v1686
    %v1688 = vand.u32 %v58, 4294901760
    %v1689 = vsub.f32 %v58, %v1688
    %1690 = vmatpush.msra.mxu0 %v1689
    %v1691 = vand.u32 %v57, 4294901760
    %v1692 = vsub.f32 %v57, %v1691
    %1693 = vmatpush.msra.mxu0 %v1692
    %v1694 = vand.u32 %v56, 4294901760
    %v1695 = vsub.f32 %v56, %v1694
    %1696 = vmatpush.msra.mxu0 %v1695
    %v1697 = vand.u32 %v55, 4294901760
    %v1698 = vsub.f32 %v55, %v1697
    %1699 = vmatpush.msra.mxu0 %v1698
    %v1700 = vand.u32 %v54, 4294901760
    %v1701 = vsub.f32 %v54, %v1700
    %1702 = vmatpush.msra.mxu0 %v1701
    %v1703 = vand.u32 %v53, 4294901760
    %v1704 = vsub.f32 %v53, %v1703
    %1705 = vmatpush.msra.mxu0 %v1704
    %v1706 = vand.u32 %v52, 4294901760
    %v1707 = vsub.f32 %v52, %v1706
    %1708 = vmatpush.msra.mxu0 %v1707
    %v1709 = vand.u32 %v51, 4294901760
    %v1710 = vsub.f32 %v51, %v1709
    %1711 = vmatpush.msra.mxu0 %v1710
    %v1712 = vand.u32 %v50, 4294901760
    %v1713 = vsub.f32 %v50, %v1712
    %1714 = vmatpush.msra.mxu0 %v1713
    %v1715 = vand.u32 %v49, 4294901760
    %v1716 = vsub.f32 %v49, %v1715
    %1717 = vmatpush.msra.mxu0 %v1716
    %v1718 = vand.u32 %v48, 4294901760
    %v1719 = vsub.f32 %v48, %v1718
    %1720 = vmatpush.msra.mxu0 %v1719
    %v1721 = vand.u32 %v47, 4294901760
    %v1722 = vsub.f32 %v47, %v1721
    %1723 = vmatpush.msra.mxu0 %v1722
    %v1724 = vand.u32 %v46, 4294901760
    %v1725 = vsub.f32 %v46, %v1724
    %1726 = vmatpush.msra.mxu0 %v1725
    %v1727 = vand.u32 %v45, 4294901760
    %v1728 = vsub.f32 %v45, %v1727
    %1729 = vmatpush.msra.mxu0 %v1728
    %v1730 = vand.u32 %v44, 4294901760
    %v1731 = vsub.f32 %v44, %v1730
    %1732 = vmatpush.msra.mxu0 %v1731
    %v1733 = vand.u32 %v1156, 4294901760
    %v1734 = vsub.f32 %v1156, %v1733
    %1735 = vmatmul.f32.gmra.mxu0 %v1734
    %v1736 = vpop.f32.mrf.mxu0
    %v1737 = vadd.f32 %v1679, %v1736
    %v1738 = vand.u32 %v1158, 4294901760
    %v1739 = vsub.f32 %v1158, %v1738
    %1740 = vmatmul.f32.gmra.mxu0 %v1739
    %v1741 = vpop.f32.mrf.mxu0
    %v1742 = vadd.f32 %v1683, %v1741
    %1743 = vdwg.mxu0
    %v1744 = vand.u32 %v59, 4294901760
    %1745 = vmatpush.msra.mxu0 %v1744
    %v1746 = vand.u32 %v58, 4294901760
    %1747 = vmatpush.msra.mxu0 %v1746
    %v1748 = vand.u32 %v57, 4294901760
    %1749 = vmatpush.msra.mxu0 %v1748
    %v1750 = vand.u32 %v56, 4294901760
    %1751 = vmatpush.msra.mxu0 %v1750
    %v1752 = vand.u32 %v55, 4294901760
    %1753 = vmatpush.msra.mxu0 %v1752
    %v1754 = vand.u32 %v54, 4294901760
    %1755 = vmatpush.msra.mxu0 %v1754
    %v1756 = vand.u32 %v53, 4294901760
    %1757 = vmatpush.msra.mxu0 %v1756
    %v1758 = vand.u32 %v52, 4294901760
    %1759 = vmatpush.msra.mxu0 %v1758
    %v1760 = vand.u32 %v51, 4294901760
    %1761 = vmatpush.msra.mxu0 %v1760
    %v1762 = vand.u32 %v50, 4294901760
    %1763 = vmatpush.msra.mxu0 %v1762
    %v1764 = vand.u32 %v49, 4294901760
    %1765 = vmatpush.msra.mxu0 %v1764
    %v1766 = vand.u32 %v48, 4294901760
    %1767 = vmatpush.msra.mxu0 %v1766
    %v1768 = vand.u32 %v47, 4294901760
    %1769 = vmatpush.msra.mxu0 %v1768
    %v1770 = vand.u32 %v46, 4294901760
    %1771 = vmatpush.msra.mxu0 %v1770
    %v1772 = vand.u32 %v45, 4294901760
    %1773 = vmatpush.msra.mxu0 %v1772
    %v1774 = vand.u32 %v44, 4294901760
    %1775 = vmatpush.msra.mxu0 %v1774
    %v1776 = vand.u32 %v1156, 4294901760
    %v1777 = vsub.f32 %v1156, %v1776
    %v1778 = vand.u32 %v1777, 4294901760
    %1779 = vmatmul.f32.gmra.mxu0 %v1778
    %v1780 = vpop.f32.mrf.mxu0
    %v1781 = vadd.f32 %v1737, %v1780
    %v1782 = vand.u32 %v1158, 4294901760
    %v1783 = vsub.f32 %v1158, %v1782
    %v1784 = vand.u32 %v1783, 4294901760
    %1785 = vmatmul.f32.gmra.mxu0 %v1784
    %v1786 = vpop.f32.mrf.mxu0
    %v1787 = vadd.f32 %v1742, %v1786
    %1788 = vdwg.mxu0
    %v1789 = vand.u32 %v59, 4294901760
    %v1790 = vsub.f32 %v59, %v1789
    %v1791 = vand.u32 %v1790, 4294901760
    %1792 = vmatpush.msra.mxu0 %v1791
    %v1793 = vand.u32 %v58, 4294901760
    %v1794 = vsub.f32 %v58, %v1793
    %v1795 = vand.u32 %v1794, 4294901760
    %1796 = vmatpush.msra.mxu0 %v1795
    %v1797 = vand.u32 %v57, 4294901760
    %v1798 = vsub.f32 %v57, %v1797
    %v1799 = vand.u32 %v1798, 4294901760
    %1800 = vmatpush.msra.mxu0 %v1799
    %v1801 = vand.u32 %v56, 4294901760
    %v1802 = vsub.f32 %v56, %v1801
    %v1803 = vand.u32 %v1802, 4294901760
    %1804 = vmatpush.msra.mxu0 %v1803
    %v1805 = vand.u32 %v55, 4294901760
    %v1806 = vsub.f32 %v55, %v1805
    %v1807 = vand.u32 %v1806, 4294901760
    %1808 = vmatpush.msra.mxu0 %v1807
    %v1809 = vand.u32 %v54, 4294901760
    %v1810 = vsub.f32 %v54, %v1809
    %v1811 = vand.u32 %v1810, 4294901760
    %1812 = vmatpush.msra.mxu0 %v1811
    %v1813 = vand.u32 %v53, 4294901760
    %v1814 = vsub.f32 %v53, %v1813
    %v1815 = vand.u32 %v1814, 4294901760
    %1816 = vmatpush.msra.mxu0 %v1815
    %v1817 = vand.u32 %v52, 4294901760
    %v1818 = vsub.f32 %v52, %v1817
    %v1819 = vand.u32 %v1818, 4294901760
    %1820 = vmatpush.msra.mxu0 %v1819
    %v1821 = vand.u32 %v51, 4294901760
    %v1822 = vsub.f32 %v51, %v1821
    %v1823 = vand.u32 %v1822, 4294901760
    %1824 = vmatpush.msra.mxu0 %v1823
    %v1825 = vand.u32 %v50, 4294901760
    %v1826 = vsub.f32 %v50, %v1825
    %v1827 = vand.u32 %v1826, 4294901760
    %1828 = vmatpush.msra.mxu0 %v1827
    %v1829 = vand.u32 %v49, 4294901760
    %v1830 = vsub.f32 %v49, %v1829
    %v1831 = vand.u32 %v1830, 4294901760
    %1832 = vmatpush.msra.mxu0 %v1831
    %v1833 = vand.u32 %v48, 4294901760
    %v1834 = vsub.f32 %v48, %v1833
    %v1835 = vand.u32 %v1834, 4294901760
    %1836 = vmatpush.msra.mxu0 %v1835
    %v1837 = vand.u32 %v47, 4294901760
    %v1838 = vsub.f32 %v47, %v1837
    %v1839 = vand.u32 %v1838, 4294901760
    %1840 = vmatpush.msra.mxu0 %v1839
    %v1841 = vand.u32 %v46, 4294901760
    %v1842 = vsub.f32 %v46, %v1841
    %v1843 = vand.u32 %v1842, 4294901760
    %1844 = vmatpush.msra.mxu0 %v1843
    %v1845 = vand.u32 %v45, 4294901760
    %v1846 = vsub.f32 %v45, %v1845
    %v1847 = vand.u32 %v1846, 4294901760
    %1848 = vmatpush.msra.mxu0 %v1847
    %v1849 = vand.u32 %v44, 4294901760
    %v1850 = vsub.f32 %v44, %v1849
    %v1851 = vand.u32 %v1850, 4294901760
    %1852 = vmatpush.msra.mxu0 %v1851
    %v1853 = vand.u32 %v1156, 4294901760
    %1854 = vmatmul.f32.gmra.mxu0 %v1853
    %v1855 = vpop.f32.mrf.mxu0
    %v1856 = vadd.f32 %v1781, %v1855
    %v1857 = vand.u32 %v1158, 4294901760
    %1858 = vmatmul.f32.gmra.mxu0 %v1857
    %v1859 = vpop.f32.mrf.mxu0
    %v1860 = vadd.f32 %v1787, %v1859
    %1861 = vdwg.mxu0
    %v1862 = vand.u32 %v59, 4294901760
    %1863 = vmatpush.msra.mxu0 %v1862
    %v1864 = vand.u32 %v58, 4294901760
    %1865 = vmatpush.msra.mxu0 %v1864
    %v1866 = vand.u32 %v57, 4294901760
    %1867 = vmatpush.msra.mxu0 %v1866
    %v1868 = vand.u32 %v56, 4294901760
    %1869 = vmatpush.msra.mxu0 %v1868
    %v1870 = vand.u32 %v55, 4294901760
    %1871 = vmatpush.msra.mxu0 %v1870
    %v1872 = vand.u32 %v54, 4294901760
    %1873 = vmatpush.msra.mxu0 %v1872
    %v1874 = vand.u32 %v53, 4294901760
    %1875 = vmatpush.msra.mxu0 %v1874
    %v1876 = vand.u32 %v52, 4294901760
    %1877 = vmatpush.msra.mxu0 %v1876
    %v1878 = vand.u32 %v51, 4294901760
    %1879 = vmatpush.msra.mxu0 %v1878
    %v1880 = vand.u32 %v50, 4294901760
    %1881 = vmatpush.msra.mxu0 %v1880
    %v1882 = vand.u32 %v49, 4294901760
    %1883 = vmatpush.msra.mxu0 %v1882
    %v1884 = vand.u32 %v48, 4294901760
    %1885 = vmatpush.msra.mxu0 %v1884
    %v1886 = vand.u32 %v47, 4294901760
    %1887 = vmatpush.msra.mxu0 %v1886
    %v1888 = vand.u32 %v46, 4294901760
    %1889 = vmatpush.msra.mxu0 %v1888
    %v1890 = vand.u32 %v45, 4294901760
    %1891 = vmatpush.msra.mxu0 %v1890
    %v1892 = vand.u32 %v44, 4294901760
    %1893 = vmatpush.msra.mxu0 %v1892
    %v1894 = vand.u32 %v1156, 4294901760
    %1895 = vmatmul.f32.gmra.mxu0 %v1894
    %v1896 = vpop.f32.mrf.mxu0
    %v1897 = vadd.f32 %v1856, %v1896
    %v1898 = vand.u32 %v1158, 4294901760
    %1899 = vmatmul.f32.gmra.mxu0 %v1898
    %v1900 = vpop.f32.mrf.mxu0
    %v1901 = vadd.f32 %v1860, %v1900
    %1902 = vdwg.mxu0
    %v1903 = vadd.f32 %v27, %v1897
    %v1904 = vadd.f32 %v27, %v1901
    %v1905 = vsel %vm817, %v1903, -inf
    %1906 = vmax.xlane.f32.xlu0 %v1905
    %v1907 = vpop.xlane.xlu0 %1906
    %v1908 = vsel %vm817, %v1904, -inf
    %1909 = vmax.xlane.f32.xlu0 %v1908
    %v1910 = vpop.xlane.xlu0 %1909
    %v1911 = vsub.f32 %v1903, %v1907
    %v1912 = vsub.f32 %v1904, %v1910
    %v1913 = vmul.f32 %v1911, 1.442695
    %v1914 = vpow.pop %v1913
    %v1915 = vmul.f32 %v1912, 1.442695
    %v1916 = vpow.pop %v1915
    %v1917 = vsel %vm817, %v1914, 0.0
    %1918 = vadd.xlane.f32.xlu0 %v1917
    %v1919 = vpop.xlane.xlu0 %1918
    %v1920 = vsel %vm817, %v1916, 0.0
    %1921 = vadd.xlane.f32.xlu0 %v1920
    %v1922 = vpop.xlane.xlu0 %1921
    %v1923 = vrcp.pop %v1919
    %v1924 = vmul.f32 %v1919, %v1923
    %v1925 = vsub.f32 1.0, %v1924
    %v1926 = vmul.f32 %v1923, %v1925
    %v1927 = vadd.f32 %v1923, %v1926
    %vm1928 = vweird.f32 %v1919
    %vm1929 = vweird.f32 %v1923
    %vm1930 = vmor %vm1928, %vm1929
    %v1931 = vsel %vm1930, %v1923, %v1927
    %v1932 = vand.u32 2147483647, %v1919
    %vm1933 = vcmp.eq.f32.partialorder %v1932, 8.507059e+37
    %v1934 = vand.u32 %v1919, 2147483648
    %v1935 = vor.u32 1.1754944e-38, %v1934
    %v1936 = vsel %vm1933, %v1935, %v1931
    %v1937 = vmul.f32 %v1914, %v1936
    %v1938 = vrcp.pop %v1922
    %v1939 = vmul.f32 %v1922, %v1938
    %v1940 = vsub.f32 1.0, %v1939
    %v1941 = vmul.f32 %v1938, %v1940
    %v1942 = vadd.f32 %v1938, %v1941
    %vm1943 = vweird.f32 %v1922
    %vm1944 = vweird.f32 %v1938
    %vm1945 = vmor %vm1943, %vm1944
    %v1946 = vsel %vm1945, %v1938, %v1942
    %v1947 = vand.u32 2147483647, %v1922
    %vm1948 = vcmp.eq.f32.partialorder %v1947, 8.507059e+37
    %v1949 = vand.u32 %v1922, 2147483648
    %v1950 = vor.u32 1.1754944e-38, %v1949
    %v1951 = vsel %vm1948, %v1950, %v1946
    %v1952 = vmul.f32 %v1916, %v1951
    %v1954 = vsel %vm817, %v1937, 0
    %v1957 = vsel %vm817, %v1952, 0
    %1959 = vmatpush.msra.mxu0 0.0
    %1960 = vmatpush.msra.mxu0 0.0
    %1961 = vmatpush.msra.mxu0 0.0
    %1962 = vmatpush.msra.mxu0 0.0
    %1963 = vmatpush.msra.mxu0 0.0
    %1964 = vmatpush.msra.mxu0 0.0
    %1965 = vmatpush.msra.mxu0 0.0
    %1966 = vmatpush.msra.mxu0 0.0
    %1967 = vmatpush.msra.mxu0 0.0
    %1968 = vmatpush.msra.mxu0 0.0
    %1969 = vmatpush.msra.mxu0 0.0
    %1970 = vmatpush.msra.mxu0 0.0
    %1971 = vmatpush.msra.mxu0 0.0
    %1972 = vmatpush.msra.mxu0 0.0
    %v1973 = vand.u32 %v62, 4294901760
    %1974 = vmatpush.msra.mxu0 %v1973
    %v1975 = vand.u32 %v60, 4294901760
    %1976 = vmatpush.msra.mxu0 %v1975
    %v1977 = vand.u32 %v1954, 4294901760
    %v1978 = vsub.f32 %v1954, %v1977
    %v1979 = vand.u32 %v1978, 4294901760
    %v1980 = vsub.f32 %v1978, %v1979
    %v1981 = vand.u32 %v1980, 4294901760
    %1982 = vmatmul.f32.gmra.mxu0 %v1981
    %v1983 = vpop.f32.mrf.mxu0
    %v1984 = vadd.f32 0.0, %v1983
    %v1985 = vand.u32 %v1957, 4294901760
    %v1986 = vsub.f32 %v1957, %v1985
    %v1987 = vand.u32 %v1986, 4294901760
    %v1988 = vsub.f32 %v1986, %v1987
    %v1989 = vand.u32 %v1988, 4294901760
    %1990 = vmatmul.f32.gmra.mxu0 %v1989
    %v1991 = vpop.f32.mrf.mxu0
    %v1992 = vadd.f32 0.0, %v1991
    %1993 = vdwg.mxu0
    %1994 = vmatpush.msra.mxu0 0.0
    %1995 = vmatpush.msra.mxu0 0.0
    %1996 = vmatpush.msra.mxu0 0.0
    %1997 = vmatpush.msra.mxu0 0.0
    %1998 = vmatpush.msra.mxu0 0.0
    %1999 = vmatpush.msra.mxu0 0.0
    %2000 = vmatpush.msra.mxu0 0.0
    %2001 = vmatpush.msra.mxu0 0.0
    %2002 = vmatpush.msra.mxu0 0.0
    %2003 = vmatpush.msra.mxu0 0.0
    %2004 = vmatpush.msra.mxu0 0.0
    %2005 = vmatpush.msra.mxu0 0.0
    %2006 = vmatpush.msra.mxu0 0.0
    %2007 = vmatpush.msra.mxu0 0.0
    %v2008 = vand.u32 %v62, 4294901760
    %v2009 = vsub.f32 %v62, %v2008
    %v2010 = vand.u32 %v2009, 4294901760
    %v2011 = vsub.f32 %v2009, %v2010
    %v2012 = vand.u32 %v2011, 4294901760
    %2013 = vmatpush.msra.mxu0 %v2012
    %v2014 = vand.u32 %v60, 4294901760
    %v2015 = vsub.f32 %v60, %v2014
    %v2016 = vand.u32 %v2015, 4294901760
    %v2017 = vsub.f32 %v2015, %v2016
    %v2018 = vand.u32 %v2017, 4294901760
    %2019 = vmatpush.msra.mxu0 %v2018
    %v2020 = vand.u32 %v1954, 4294901760
    %2021 = vmatmul.f32.gmra.mxu0 %v2020
    %v2022 = vpop.f32.mrf.mxu0
    %v2023 = vadd.f32 %v1984, %v2022
    %v2024 = vand.u32 %v1957, 4294901760
    %2025 = vmatmul.f32.gmra.mxu0 %v2024
    %v2026 = vpop.f32.mrf.mxu0
    %v2027 = vadd.f32 %v1992, %v2026
    %2028 = vdwg.mxu0
    %2029 = vmatpush.msra.mxu0 0.0
    %2030 = vmatpush.msra.mxu0 0.0
    %2031 = vmatpush.msra.mxu0 0.0
    %2032 = vmatpush.msra.mxu0 0.0
    %2033 = vmatpush.msra.mxu0 0.0
    %2034 = vmatpush.msra.mxu0 0.0
    %2035 = vmatpush.msra.mxu0 0.0
    %2036 = vmatpush.msra.mxu0 0.0
    %2037 = vmatpush.msra.mxu0 0.0
    %2038 = vmatpush.msra.mxu0 0.0
    %2039 = vmatpush.msra.mxu0 0.0
    %2040 = vmatpush.msra.mxu0 0.0
    %2041 = vmatpush.msra.mxu0 0.0
    %2042 = vmatpush.msra.mxu0 0.0
    %v2043 = vand.u32 %v62, 4294901760
    %v2044 = vsub.f32 %v62, %v2043
    %2045 = vmatpush.msra.mxu0 %v2044
    %v2046 = vand.u32 %v60, 4294901760
    %v2047 = vsub.f32 %v60, %v2046
    %2048 = vmatpush.msra.mxu0 %v2047
    %v2049 = vand.u32 %v1954, 4294901760
    %v2050 = vsub.f32 %v1954, %v2049
    %2051 = vmatmul.f32.gmra.mxu0 %v2050
    %v2052 = vpop.f32.mrf.mxu0
    %v2053 = vadd.f32 %v2023, %v2052
    %v2054 = vand.u32 %v1957, 4294901760
    %v2055 = vsub.f32 %v1957, %v2054
    %2056 = vmatmul.f32.gmra.mxu0 %v2055
    %v2057 = vpop.f32.mrf.mxu0
    %v2058 = vadd.f32 %v2027, %v2057
    %2059 = vdwg.mxu0
    %2060 = vmatpush.msra.mxu0 0.0
    %2061 = vmatpush.msra.mxu0 0.0
    %2062 = vmatpush.msra.mxu0 0.0
    %2063 = vmatpush.msra.mxu0 0.0
    %2064 = vmatpush.msra.mxu0 0.0
    %2065 = vmatpush.msra.mxu0 0.0
    %2066 = vmatpush.msra.mxu0 0.0
    %2067 = vmatpush.msra.mxu0 0.0
    %2068 = vmatpush.msra.mxu0 0.0
    %2069 = vmatpush.msra.mxu0 0.0
    %2070 = vmatpush.msra.mxu0 0.0
    %2071 = vmatpush.msra.mxu0 0.0
    %2072 = vmatpush.msra.mxu0 0.0
    %2073 = vmatpush.msra.mxu0 0.0
    %v2074 = vand.u32 %v62, 4294901760
    %2075 = vmatpush.msra.mxu0 %v2074
    %v2076 = vand.u32 %v60, 4294901760
    %2077 = vmatpush.msra.mxu0 %v2076
    %v2078 = vand.u32 %v1954, 4294901760
    %v2079 = vsub.f32 %v1954, %v2078
    %v2080 = vand.u32 %v2079, 4294901760
    %2081 = vmatmul.f32.gmra.mxu0 %v2080
    %v2082 = vpop.f32.mrf.mxu0
    %v2083 = vadd.f32 %v2053, %v2082
    %v2084 = vand.u32 %v1957, 4294901760
    %v2085 = vsub.f32 %v1957, %v2084
    %v2086 = vand.u32 %v2085, 4294901760
    %2087 = vmatmul.f32.gmra.mxu0 %v2086
    %v2088 = vpop.f32.mrf.mxu0
    %v2089 = vadd.f32 %v2058, %v2088
    %2090 = vdwg.mxu0
    %2091 = vmatpush.msra.mxu0 0.0
    %2092 = vmatpush.msra.mxu0 0.0
    %2093 = vmatpush.msra.mxu0 0.0
    %2094 = vmatpush.msra.mxu0 0.0
    %2095 = vmatpush.msra.mxu0 0.0
    %2096 = vmatpush.msra.mxu0 0.0
    %2097 = vmatpush.msra.mxu0 0.0
    %2098 = vmatpush.msra.mxu0 0.0
    %2099 = vmatpush.msra.mxu0 0.0
    %2100 = vmatpush.msra.mxu0 0.0
    %2101 = vmatpush.msra.mxu0 0.0
    %2102 = vmatpush.msra.mxu0 0.0
    %2103 = vmatpush.msra.mxu0 0.0
    %2104 = vmatpush.msra.mxu0 0.0
    %v2105 = vand.u32 %v62, 4294901760
    %v2106 = vsub.f32 %v62, %v2105
    %v2107 = vand.u32 %v2106, 4294901760
    %2108 = vmatpush.msra.mxu0 %v2107
    %v2109 = vand.u32 %v60, 4294901760
    %v2110 = vsub.f32 %v60, %v2109
    %v2111 = vand.u32 %v2110, 4294901760
    %2112 = vmatpush.msra.mxu0 %v2111
    %v2113 = vand.u32 %v1954, 4294901760
    %2114 = vmatmul.f32.gmra.mxu0 %v2113
    %v2115 = vpop.f32.mrf.mxu0
    %v2116 = vadd.f32 %v2083, %v2115
    %v2117 = vand.u32 %v1957, 4294901760
    %2118 = vmatmul.f32.gmra.mxu0 %v2117
    %v2119 = vpop.f32.mrf.mxu0
    %v2120 = vadd.f32 %v2089, %v2119
    %2121 = vdwg.mxu0
    %2122 = vmatpush.msra.mxu0 0.0
    %2123 = vmatpush.msra.mxu0 0.0
    %2124 = vmatpush.msra.mxu0 0.0
    %2125 = vmatpush.msra.mxu0 0.0
    %2126 = vmatpush.msra.mxu0 0.0
    %2127 = vmatpush.msra.mxu0 0.0
    %2128 = vmatpush.msra.mxu0 0.0
    %2129 = vmatpush.msra.mxu0 0.0
    %2130 = vmatpush.msra.mxu0 0.0
    %2131 = vmatpush.msra.mxu0 0.0
    %2132 = vmatpush.msra.mxu0 0.0
    %2133 = vmatpush.msra.mxu0 0.0
    %2134 = vmatpush.msra.mxu0 0.0
    %2135 = vmatpush.msra.mxu0 0.0
    %v2136 = vand.u32 %v62, 4294901760
    %2137 = vmatpush.msra.mxu0 %v2136
    %v2138 = vand.u32 %v60, 4294901760
    %2139 = vmatpush.msra.mxu0 %v2138
    %v2140 = vand.u32 %v1954, 4294901760
    %2141 = vmatmul.f32.gmra.mxu0 %v2140
    %v2142 = vpop.f32.mrf.mxu0
    %v2143 = vadd.f32 %v2116, %v2142
    %v2144 = vand.u32 %v1957, 4294901760
    %2145 = vmatmul.f32.gmra.mxu0 %v2144
    %v2146 = vpop.f32.mrf.mxu0
    %v2147 = vadd.f32 %v2120, %v2146
    %2148 = vdwg.mxu0
    %2149 = vmatpush.msra.mxu0 0.0
    %2150 = vmatpush.msra.mxu0 0.0
    %2151 = vmatpush.msra.mxu0 0.0
    %2152 = vmatpush.msra.mxu0 0.0
    %2153 = vmatpush.msra.mxu0 0.0
    %2154 = vmatpush.msra.mxu0 0.0
    %2155 = vmatpush.msra.mxu0 0.0
    %2156 = vmatpush.msra.mxu0 0.0
    %2157 = vmatpush.msra.mxu0 0.0
    %2158 = vmatpush.msra.mxu0 0.0
    %2159 = vmatpush.msra.mxu0 0.0
    %2160 = vmatpush.msra.mxu0 0.0
    %2161 = vmatpush.msra.mxu0 0.0
    %2162 = vmatpush.msra.mxu0 0.0
    %v2163 = vand.u32 %v63, 4294901760
    %2164 = vmatpush.msra.mxu0 %v2163
    %v2165 = vand.u32 %v61, 4294901760
    %2166 = vmatpush.msra.mxu0 %v2165
    %v2167 = vand.u32 %v1954, 4294901760
    %v2168 = vsub.f32 %v1954, %v2167
    %v2169 = vand.u32 %v2168, 4294901760
    %v2170 = vsub.f32 %v2168, %v2169
    %v2171 = vand.u32 %v2170, 4294901760
    %2172 = vmatmul.f32.gmra.mxu0 %v2171
    %v2173 = vpop.f32.mrf.mxu0
    %v2174 = vadd.f32 0.0, %v2173
    %v2175 = vand.u32 %v1957, 4294901760
    %v2176 = vsub.f32 %v1957, %v2175
    %v2177 = vand.u32 %v2176, 4294901760
    %v2178 = vsub.f32 %v2176, %v2177
    %v2179 = vand.u32 %v2178, 4294901760
    %2180 = vmatmul.f32.gmra.mxu0 %v2179
    %v2181 = vpop.f32.mrf.mxu0
    %v2182 = vadd.f32 0.0, %v2181
    %2183 = vdwg.mxu0
    %2184 = vmatpush.msra.mxu0 0.0
    %2185 = vmatpush.msra.mxu0 0.0
    %2186 = vmatpush.msra.mxu0 0.0
    %2187 = vmatpush.msra.mxu0 0.0
    %2188 = vmatpush.msra.mxu0 0.0
    %2189 = vmatpush.msra.mxu0 0.0
    %2190 = vmatpush.msra.mxu0 0.0
    %2191 = vmatpush.msra.mxu0 0.0
    %2192 = vmatpush.msra.mxu0 0.0
    %2193 = vmatpush.msra.mxu0 0.0
    %2194 = vmatpush.msra.mxu0 0.0
    %2195 = vmatpush.msra.mxu0 0.0
    %2196 = vmatpush.msra.mxu0 0.0
    %2197 = vmatpush.msra.mxu0 0.0
    %v2198 = vand.u32 %v63, 4294901760
    %v2199 = vsub.f32 %v63, %v2198
    %v2200 = vand.u32 %v2199, 4294901760
    %v2201 = vsub.f32 %v2199, %v2200
    %v2202 = vand.u32 %v2201, 4294901760
    %2203 = vmatpush.msra.mxu0 %v2202
    %v2204 = vand.u32 %v61, 4294901760
    %v2205 = vsub.f32 %v61, %v2204
    %v2206 = vand.u32 %v2205, 4294901760
    %v2207 = vsub.f32 %v2205, %v2206
    %v2208 = vand.u32 %v2207, 4294901760
    %2209 = vmatpush.msra.mxu0 %v2208
    %v2210 = vand.u32 %v1954, 4294901760
    %2211 = vmatmul.f32.gmra.mxu0 %v2210
    %v2212 = vpop.f32.mrf.mxu0
    %v2213 = vadd.f32 %v2174, %v2212
    %v2214 = vand.u32 %v1957, 4294901760
    %2215 = vmatmul.f32.gmra.mxu0 %v2214
    %v2216 = vpop.f32.mrf.mxu0
    %v2217 = vadd.f32 %v2182, %v2216
    %2218 = vdwg.mxu0
    %2219 = vmatpush.msra.mxu0 0.0
    %2220 = vmatpush.msra.mxu0 0.0
    %2221 = vmatpush.msra.mxu0 0.0
    %2222 = vmatpush.msra.mxu0 0.0
    %2223 = vmatpush.msra.mxu0 0.0
    %2224 = vmatpush.msra.mxu0 0.0
    %2225 = vmatpush.msra.mxu0 0.0
    %2226 = vmatpush.msra.mxu0 0.0
    %2227 = vmatpush.msra.mxu0 0.0
    %2228 = vmatpush.msra.mxu0 0.0
    %2229 = vmatpush.msra.mxu0 0.0
    %2230 = vmatpush.msra.mxu0 0.0
    %2231 = vmatpush.msra.mxu0 0.0
    %2232 = vmatpush.msra.mxu0 0.0
    %v2233 = vand.u32 %v63, 4294901760
    %v2234 = vsub.f32 %v63, %v2233
    %2235 = vmatpush.msra.mxu0 %v2234
    %v2236 = vand.u32 %v61, 4294901760
    %v2237 = vsub.f32 %v61, %v2236
    %2238 = vmatpush.msra.mxu0 %v2237
    %v2239 = vand.u32 %v1954, 4294901760
    %v2240 = vsub.f32 %v1954, %v2239
    %2241 = vmatmul.f32.gmra.mxu0 %v2240
    %v2242 = vpop.f32.mrf.mxu0
    %v2243 = vadd.f32 %v2213, %v2242
    %v2244 = vand.u32 %v1957, 4294901760
    %v2245 = vsub.f32 %v1957, %v2244
    %2246 = vmatmul.f32.gmra.mxu0 %v2245
    %v2247 = vpop.f32.mrf.mxu0
    %v2248 = vadd.f32 %v2217, %v2247
    %2249 = vdwg.mxu0
    %2250 = vmatpush.msra.mxu0 0.0
    %2251 = vmatpush.msra.mxu0 0.0
    %2252 = vmatpush.msra.mxu0 0.0
    %2253 = vmatpush.msra.mxu0 0.0
    %2254 = vmatpush.msra.mxu0 0.0
    %2255 = vmatpush.msra.mxu0 0.0
    %2256 = vmatpush.msra.mxu0 0.0
    %2257 = vmatpush.msra.mxu0 0.0
    %2258 = vmatpush.msra.mxu0 0.0
    %2259 = vmatpush.msra.mxu0 0.0
    %2260 = vmatpush.msra.mxu0 0.0
    %2261 = vmatpush.msra.mxu0 0.0
    %2262 = vmatpush.msra.mxu0 0.0
    %2263 = vmatpush.msra.mxu0 0.0
    %v2264 = vand.u32 %v63, 4294901760
    %2265 = vmatpush.msra.mxu0 %v2264
    %v2266 = vand.u32 %v61, 4294901760
    %2267 = vmatpush.msra.mxu0 %v2266
    %v2268 = vand.u32 %v1954, 4294901760
    %v2269 = vsub.f32 %v1954, %v2268
    %v2270 = vand.u32 %v2269, 4294901760
    %2271 = vmatmul.f32.gmra.mxu0 %v2270
    %v2272 = vpop.f32.mrf.mxu0
    %v2273 = vadd.f32 %v2243, %v2272
    %v2274 = vand.u32 %v1957, 4294901760
    %v2275 = vsub.f32 %v1957, %v2274
    %v2276 = vand.u32 %v2275, 4294901760
    %2277 = vmatmul.f32.gmra.mxu0 %v2276
    %v2278 = vpop.f32.mrf.mxu0
    %v2279 = vadd.f32 %v2248, %v2278
    %2280 = vdwg.mxu0
    %2281 = vmatpush.msra.mxu0 0.0
    %2282 = vmatpush.msra.mxu0 0.0
    %2283 = vmatpush.msra.mxu0 0.0
    %2284 = vmatpush.msra.mxu0 0.0
    %2285 = vmatpush.msra.mxu0 0.0
    %2286 = vmatpush.msra.mxu0 0.0
    %2287 = vmatpush.msra.mxu0 0.0
    %2288 = vmatpush.msra.mxu0 0.0
    %2289 = vmatpush.msra.mxu0 0.0
    %2290 = vmatpush.msra.mxu0 0.0
    %2291 = vmatpush.msra.mxu0 0.0
    %2292 = vmatpush.msra.mxu0 0.0
    %2293 = vmatpush.msra.mxu0 0.0
    %2294 = vmatpush.msra.mxu0 0.0
    %v2295 = vand.u32 %v63, 4294901760
    %v2296 = vsub.f32 %v63, %v2295
    %v2297 = vand.u32 %v2296, 4294901760
    %2298 = vmatpush.msra.mxu0 %v2297
    %v2299 = vand.u32 %v61, 4294901760
    %v2300 = vsub.f32 %v61, %v2299
    %v2301 = vand.u32 %v2300, 4294901760
    %2302 = vmatpush.msra.mxu0 %v2301
    %v2303 = vand.u32 %v1954, 4294901760
    %2304 = vmatmul.f32.gmra.mxu0 %v2303
    %v2305 = vpop.f32.mrf.mxu0
    %v2306 = vadd.f32 %v2273, %v2305
    %v2307 = vand.u32 %v1957, 4294901760
    %2308 = vmatmul.f32.gmra.mxu0 %v2307
    %v2309 = vpop.f32.mrf.mxu0
    %v2310 = vadd.f32 %v2279, %v2309
    %2311 = vdwg.mxu0
    %2312 = vmatpush.msra.mxu0 0.0
    %2313 = vmatpush.msra.mxu0 0.0
    %2314 = vmatpush.msra.mxu0 0.0
    %2315 = vmatpush.msra.mxu0 0.0
    %2316 = vmatpush.msra.mxu0 0.0
    %2317 = vmatpush.msra.mxu0 0.0
    %2318 = vmatpush.msra.mxu0 0.0
    %2319 = vmatpush.msra.mxu0 0.0
    %2320 = vmatpush.msra.mxu0 0.0
    %2321 = vmatpush.msra.mxu0 0.0
    %2322 = vmatpush.msra.mxu0 0.0
    %2323 = vmatpush.msra.mxu0 0.0
    %2324 = vmatpush.msra.mxu0 0.0
    %2325 = vmatpush.msra.mxu0 0.0
    %v2326 = vand.u32 %v63, 4294901760
    %2327 = vmatpush.msra.mxu0 %v2326
    %v2328 = vand.u32 %v61, 4294901760
    %2329 = vmatpush.msra.mxu0 %v2328
    %v2330 = vand.u32 %v1954, 4294901760
    %2331 = vmatmul.f32.gmra.mxu0 %v2330
    %v2332 = vpop.f32.mrf.mxu0
    %v2333 = vadd.f32 %v2306, %v2332
    %v2334 = vand.u32 %v1957, 4294901760
    %2335 = vmatmul.f32.gmra.mxu0 %v2334
    %v2336 = vpop.f32.mrf.mxu0
    %v2337 = vadd.f32 %v2310, %v2336
    %2338 = vdwg.mxu0
    %v2339 = vmul.f32 %v2143, %v21
    %v2340 = vmul.f32 %v2333, %v22
    %v2341 = vmul.f32 %v2147, %v23
    %v2342 = vmul.f32 %v2337, %v24
    %v2343 = vrot.slane %v2339, 4
    %v2344 = vadd.f32 %v2339, %v2343
    %v2345 = vrot.slane %v2344, 2
    %v2346 = vadd.f32 %v2344, %v2345
    %v2347 = vrot.slane %v2346, 1
    %v2348 = vadd.f32 %v2346, %v2347
    %v2349 = vrot.slane %v2340, 4
    %v2350 = vadd.f32 %v2340, %v2349
    %v2351 = vrot.slane %v2350, 2
    %v2352 = vadd.f32 %v2350, %v2351
    %v2353 = vrot.slane %v2352, 1
    %v2354 = vadd.f32 %v2352, %v2353
    %v2355 = vrot.slane %v2341, 4
    %v2356 = vadd.f32 %v2341, %v2355
    %v2357 = vrot.slane %v2356, 2
    %v2358 = vadd.f32 %v2356, %v2357
    %v2359 = vrot.slane %v2358, 1
    %v2360 = vadd.f32 %v2358, %v2359
    %v2361 = vrot.slane %v2342, 4
    %v2362 = vadd.f32 %v2342, %v2361
    %v2363 = vrot.slane %v2362, 2
    %v2364 = vadd.f32 %v2362, %v2363
    %v2365 = vrot.slane %v2364, 1
    %v2366 = vadd.f32 %v2364, %v2365
    %v2367 = vmul.f32 %v2348, %v2348
    %v2368 = vmul.f32 %v2354, %v2354
    %v2369 = vmul.f32 %v2360, %v2360
    %v2370 = vmul.f32 %v2366, %v2366
    %v2375 = vsel %vm100, %v2369, %v2367
    %v2376 = vsel %vm100, %v2370, %v2368
    %v2379 = vand.u32 %v43, 4294901760
    %2380 = vmatpush.msra.mxu0 %v2379
    %v2381 = vand.u32 %v42, 4294901760
    %2382 = vmatpush.msra.mxu0 %v2381
    %v2383 = vand.u32 %v41, 4294901760
    %2384 = vmatpush.msra.mxu0 %v2383
    %v2385 = vand.u32 %v40, 4294901760
    %2386 = vmatpush.msra.mxu0 %v2385
    %v2387 = vand.u32 %v39, 4294901760
    %2388 = vmatpush.msra.mxu0 %v2387
    %v2389 = vand.u32 %v38, 4294901760
    %2390 = vmatpush.msra.mxu0 %v2389
    %v2391 = vand.u32 %v37, 4294901760
    %2392 = vmatpush.msra.mxu0 %v2391
    %v2393 = vand.u32 %v36, 4294901760
    %2394 = vmatpush.msra.mxu0 %v2393
    %v2395 = vand.u32 %v35, 4294901760
    %2396 = vmatpush.msra.mxu0 %v2395
    %v2397 = vand.u32 %v34, 4294901760
    %2398 = vmatpush.msra.mxu0 %v2397
    %v2399 = vand.u32 %v33, 4294901760
    %2400 = vmatpush.msra.mxu0 %v2399
    %v2401 = vand.u32 %v32, 4294901760
    %2402 = vmatpush.msra.mxu0 %v2401
    %v2403 = vand.u32 %v31, 4294901760
    %2404 = vmatpush.msra.mxu0 %v2403
    %v2405 = vand.u32 %v30, 4294901760
    %2406 = vmatpush.msra.mxu0 %v2405
    %v2407 = vand.u32 %v29, 4294901760
    %2408 = vmatpush.msra.mxu0 %v2407
    %v2409 = vand.u32 %v28, 4294901760
    %2410 = vmatpush.msra.mxu0 %v2409
    %v2411 = vand.u32 %v2375, 4294901760
    %v2412 = vsub.f32 %v2375, %v2411
    %v2413 = vand.u32 %v2412, 4294901760
    %v2414 = vsub.f32 %v2412, %v2413
    %v2415 = vand.u32 %v2414, 4294901760
    %2416 = vmatmul.f32.gmra.mxu0 %v2415
    %v2417 = vpop.f32.mrf.mxu0
    %v2418 = vadd.f32 0.0, %v2417
    %2419 = vdwg.mxu0
    %v2420 = vand.u32 %v43, 4294901760
    %v2421 = vsub.f32 %v43, %v2420
    %v2422 = vand.u32 %v2421, 4294901760
    %v2423 = vsub.f32 %v2421, %v2422
    %v2424 = vand.u32 %v2423, 4294901760
    %2425 = vmatpush.msra.mxu0 %v2424
    %v2426 = vand.u32 %v42, 4294901760
    %v2427 = vsub.f32 %v42, %v2426
    %v2428 = vand.u32 %v2427, 4294901760
    %v2429 = vsub.f32 %v2427, %v2428
    %v2430 = vand.u32 %v2429, 4294901760
    %2431 = vmatpush.msra.mxu0 %v2430
    %v2432 = vand.u32 %v41, 4294901760
    %v2433 = vsub.f32 %v41, %v2432
    %v2434 = vand.u32 %v2433, 4294901760
    %v2435 = vsub.f32 %v2433, %v2434
    %v2436 = vand.u32 %v2435, 4294901760
    %2437 = vmatpush.msra.mxu0 %v2436
    %v2438 = vand.u32 %v40, 4294901760
    %v2439 = vsub.f32 %v40, %v2438
    %v2440 = vand.u32 %v2439, 4294901760
    %v2441 = vsub.f32 %v2439, %v2440
    %v2442 = vand.u32 %v2441, 4294901760
    %2443 = vmatpush.msra.mxu0 %v2442
    %v2444 = vand.u32 %v39, 4294901760
    %v2445 = vsub.f32 %v39, %v2444
    %v2446 = vand.u32 %v2445, 4294901760
    %v2447 = vsub.f32 %v2445, %v2446
    %v2448 = vand.u32 %v2447, 4294901760
    %2449 = vmatpush.msra.mxu0 %v2448
    %v2450 = vand.u32 %v38, 4294901760
    %v2451 = vsub.f32 %v38, %v2450
    %v2452 = vand.u32 %v2451, 4294901760
    %v2453 = vsub.f32 %v2451, %v2452
    %v2454 = vand.u32 %v2453, 4294901760
    %2455 = vmatpush.msra.mxu0 %v2454
    %v2456 = vand.u32 %v37, 4294901760
    %v2457 = vsub.f32 %v37, %v2456
    %v2458 = vand.u32 %v2457, 4294901760
    %v2459 = vsub.f32 %v2457, %v2458
    %v2460 = vand.u32 %v2459, 4294901760
    %2461 = vmatpush.msra.mxu0 %v2460
    %v2462 = vand.u32 %v36, 4294901760
    %v2463 = vsub.f32 %v36, %v2462
    %v2464 = vand.u32 %v2463, 4294901760
    %v2465 = vsub.f32 %v2463, %v2464
    %v2466 = vand.u32 %v2465, 4294901760
    %2467 = vmatpush.msra.mxu0 %v2466
    %v2468 = vand.u32 %v35, 4294901760
    %v2469 = vsub.f32 %v35, %v2468
    %v2470 = vand.u32 %v2469, 4294901760
    %v2471 = vsub.f32 %v2469, %v2470
    %v2472 = vand.u32 %v2471, 4294901760
    %2473 = vmatpush.msra.mxu0 %v2472
    %v2474 = vand.u32 %v34, 4294901760
    %v2475 = vsub.f32 %v34, %v2474
    %v2476 = vand.u32 %v2475, 4294901760
    %v2477 = vsub.f32 %v2475, %v2476
    %v2478 = vand.u32 %v2477, 4294901760
    %2479 = vmatpush.msra.mxu0 %v2478
    %v2480 = vand.u32 %v33, 4294901760
    %v2481 = vsub.f32 %v33, %v2480
    %v2482 = vand.u32 %v2481, 4294901760
    %v2483 = vsub.f32 %v2481, %v2482
    %v2484 = vand.u32 %v2483, 4294901760
    %2485 = vmatpush.msra.mxu0 %v2484
    %v2486 = vand.u32 %v32, 4294901760
    %v2487 = vsub.f32 %v32, %v2486
    %v2488 = vand.u32 %v2487, 4294901760
    %v2489 = vsub.f32 %v2487, %v2488
    %v2490 = vand.u32 %v2489, 4294901760
    %2491 = vmatpush.msra.mxu0 %v2490
    %v2492 = vand.u32 %v31, 4294901760
    %v2493 = vsub.f32 %v31, %v2492
    %v2494 = vand.u32 %v2493, 4294901760
    %v2495 = vsub.f32 %v2493, %v2494
    %v2496 = vand.u32 %v2495, 4294901760
    %2497 = vmatpush.msra.mxu0 %v2496
    %v2498 = vand.u32 %v30, 4294901760
    %v2499 = vsub.f32 %v30, %v2498
    %v2500 = vand.u32 %v2499, 4294901760
    %v2501 = vsub.f32 %v2499, %v2500
    %v2502 = vand.u32 %v2501, 4294901760
    %2503 = vmatpush.msra.mxu0 %v2502
    %v2504 = vand.u32 %v29, 4294901760
    %v2505 = vsub.f32 %v29, %v2504
    %v2506 = vand.u32 %v2505, 4294901760
    %v2507 = vsub.f32 %v2505, %v2506
    %v2508 = vand.u32 %v2507, 4294901760
    %2509 = vmatpush.msra.mxu0 %v2508
    %v2510 = vand.u32 %v28, 4294901760
    %v2511 = vsub.f32 %v28, %v2510
    %v2512 = vand.u32 %v2511, 4294901760
    %v2513 = vsub.f32 %v2511, %v2512
    %v2514 = vand.u32 %v2513, 4294901760
    %2515 = vmatpush.msra.mxu0 %v2514
    %v2516 = vand.u32 %v2375, 4294901760
    %2517 = vmatmul.f32.gmra.mxu0 %v2516
    %v2518 = vpop.f32.mrf.mxu0
    %v2519 = vadd.f32 %v2418, %v2518
    %2520 = vdwg.mxu0
    %v2521 = vand.u32 %v43, 4294901760
    %v2522 = vsub.f32 %v43, %v2521
    %2523 = vmatpush.msra.mxu0 %v2522
    %v2524 = vand.u32 %v42, 4294901760
    %v2525 = vsub.f32 %v42, %v2524
    %2526 = vmatpush.msra.mxu0 %v2525
    %v2527 = vand.u32 %v41, 4294901760
    %v2528 = vsub.f32 %v41, %v2527
    %2529 = vmatpush.msra.mxu0 %v2528
    %v2530 = vand.u32 %v40, 4294901760
    %v2531 = vsub.f32 %v40, %v2530
    %2532 = vmatpush.msra.mxu0 %v2531
    %v2533 = vand.u32 %v39, 4294901760
    %v2534 = vsub.f32 %v39, %v2533
    %2535 = vmatpush.msra.mxu0 %v2534
    %v2536 = vand.u32 %v38, 4294901760
    %v2537 = vsub.f32 %v38, %v2536
    %2538 = vmatpush.msra.mxu0 %v2537
    %v2539 = vand.u32 %v37, 4294901760
    %v2540 = vsub.f32 %v37, %v2539
    %2541 = vmatpush.msra.mxu0 %v2540
    %v2542 = vand.u32 %v36, 4294901760
    %v2543 = vsub.f32 %v36, %v2542
    %2544 = vmatpush.msra.mxu0 %v2543
    %v2545 = vand.u32 %v35, 4294901760
    %v2546 = vsub.f32 %v35, %v2545
    %2547 = vmatpush.msra.mxu0 %v2546
    %v2548 = vand.u32 %v34, 4294901760
    %v2549 = vsub.f32 %v34, %v2548
    %2550 = vmatpush.msra.mxu0 %v2549
    %v2551 = vand.u32 %v33, 4294901760
    %v2552 = vsub.f32 %v33, %v2551
    %2553 = vmatpush.msra.mxu0 %v2552
    %v2554 = vand.u32 %v32, 4294901760
    %v2555 = vsub.f32 %v32, %v2554
    %2556 = vmatpush.msra.mxu0 %v2555
    %v2557 = vand.u32 %v31, 4294901760
    %v2558 = vsub.f32 %v31, %v2557
    %2559 = vmatpush.msra.mxu0 %v2558
    %v2560 = vand.u32 %v30, 4294901760
    %v2561 = vsub.f32 %v30, %v2560
    %2562 = vmatpush.msra.mxu0 %v2561
    %v2563 = vand.u32 %v29, 4294901760
    %v2564 = vsub.f32 %v29, %v2563
    %2565 = vmatpush.msra.mxu0 %v2564
    %v2566 = vand.u32 %v28, 4294901760
    %v2567 = vsub.f32 %v28, %v2566
    %2568 = vmatpush.msra.mxu0 %v2567
    %v2569 = vand.u32 %v2375, 4294901760
    %v2570 = vsub.f32 %v2375, %v2569
    %2571 = vmatmul.f32.gmra.mxu0 %v2570
    %v2572 = vpop.f32.mrf.mxu0
    %v2573 = vadd.f32 %v2519, %v2572
    %2574 = vdwg.mxu0
    %v2575 = vand.u32 %v43, 4294901760
    %2576 = vmatpush.msra.mxu0 %v2575
    %v2577 = vand.u32 %v42, 4294901760
    %2578 = vmatpush.msra.mxu0 %v2577
    %v2579 = vand.u32 %v41, 4294901760
    %2580 = vmatpush.msra.mxu0 %v2579
    %v2581 = vand.u32 %v40, 4294901760
    %2582 = vmatpush.msra.mxu0 %v2581
    %v2583 = vand.u32 %v39, 4294901760
    %2584 = vmatpush.msra.mxu0 %v2583
    %v2585 = vand.u32 %v38, 4294901760
    %2586 = vmatpush.msra.mxu0 %v2585
    %v2587 = vand.u32 %v37, 4294901760
    %2588 = vmatpush.msra.mxu0 %v2587
    %v2589 = vand.u32 %v36, 4294901760
    %2590 = vmatpush.msra.mxu0 %v2589
    %v2591 = vand.u32 %v35, 4294901760
    %2592 = vmatpush.msra.mxu0 %v2591
    %v2593 = vand.u32 %v34, 4294901760
    %2594 = vmatpush.msra.mxu0 %v2593
    %v2595 = vand.u32 %v33, 4294901760
    %2596 = vmatpush.msra.mxu0 %v2595
    %v2597 = vand.u32 %v32, 4294901760
    %2598 = vmatpush.msra.mxu0 %v2597
    %v2599 = vand.u32 %v31, 4294901760
    %2600 = vmatpush.msra.mxu0 %v2599
    %v2601 = vand.u32 %v30, 4294901760
    %2602 = vmatpush.msra.mxu0 %v2601
    %v2603 = vand.u32 %v29, 4294901760
    %2604 = vmatpush.msra.mxu0 %v2603
    %v2605 = vand.u32 %v28, 4294901760
    %2606 = vmatpush.msra.mxu0 %v2605
    %v2607 = vand.u32 %v2375, 4294901760
    %v2608 = vsub.f32 %v2375, %v2607
    %v2609 = vand.u32 %v2608, 4294901760
    %2610 = vmatmul.f32.gmra.mxu0 %v2609
    %v2611 = vpop.f32.mrf.mxu0
    %v2612 = vadd.f32 %v2573, %v2611
    %2613 = vdwg.mxu0
    %v2614 = vand.u32 %v43, 4294901760
    %v2615 = vsub.f32 %v43, %v2614
    %v2616 = vand.u32 %v2615, 4294901760
    %2617 = vmatpush.msra.mxu0 %v2616
    %v2618 = vand.u32 %v42, 4294901760
    %v2619 = vsub.f32 %v42, %v2618
    %v2620 = vand.u32 %v2619, 4294901760
    %2621 = vmatpush.msra.mxu0 %v2620
    %v2622 = vand.u32 %v41, 4294901760
    %v2623 = vsub.f32 %v41, %v2622
    %v2624 = vand.u32 %v2623, 4294901760
    %2625 = vmatpush.msra.mxu0 %v2624
    %v2626 = vand.u32 %v40, 4294901760
    %v2627 = vsub.f32 %v40, %v2626
    %v2628 = vand.u32 %v2627, 4294901760
    %2629 = vmatpush.msra.mxu0 %v2628
    %v2630 = vand.u32 %v39, 4294901760
    %v2631 = vsub.f32 %v39, %v2630
    %v2632 = vand.u32 %v2631, 4294901760
    %2633 = vmatpush.msra.mxu0 %v2632
    %v2634 = vand.u32 %v38, 4294901760
    %v2635 = vsub.f32 %v38, %v2634
    %v2636 = vand.u32 %v2635, 4294901760
    %2637 = vmatpush.msra.mxu0 %v2636
    %v2638 = vand.u32 %v37, 4294901760
    %v2639 = vsub.f32 %v37, %v2638
    %v2640 = vand.u32 %v2639, 4294901760
    %2641 = vmatpush.msra.mxu0 %v2640
    %v2642 = vand.u32 %v36, 4294901760
    %v2643 = vsub.f32 %v36, %v2642
    %v2644 = vand.u32 %v2643, 4294901760
    %2645 = vmatpush.msra.mxu0 %v2644
    %v2646 = vand.u32 %v35, 4294901760
    %v2647 = vsub.f32 %v35, %v2646
    %v2648 = vand.u32 %v2647, 4294901760
    %2649 = vmatpush.msra.mxu0 %v2648
    %v2650 = vand.u32 %v34, 4294901760
    %v2651 = vsub.f32 %v34, %v2650
    %v2652 = vand.u32 %v2651, 4294901760
    %2653 = vmatpush.msra.mxu0 %v2652
    %v2654 = vand.u32 %v33, 4294901760
    %v2655 = vsub.f32 %v33, %v2654
    %v2656 = vand.u32 %v2655, 4294901760
    %2657 = vmatpush.msra.mxu0 %v2656
    %v2658 = vand.u32 %v32, 4294901760
    %v2659 = vsub.f32 %v32, %v2658
    %v2660 = vand.u32 %v2659, 4294901760
    %2661 = vmatpush.msra.mxu0 %v2660
    %v2662 = vand.u32 %v31, 4294901760
    %v2663 = vsub.f32 %v31, %v2662
    %v2664 = vand.u32 %v2663, 4294901760
    %2665 = vmatpush.msra.mxu0 %v2664
    %v2666 = vand.u32 %v30, 4294901760
    %v2667 = vsub.f32 %v30, %v2666
    %v2668 = vand.u32 %v2667, 4294901760
    %2669 = vmatpush.msra.mxu0 %v2668
    %v2670 = vand.u32 %v29, 4294901760
    %v2671 = vsub.f32 %v29, %v2670
    %v2672 = vand.u32 %v2671, 4294901760
    %2673 = vmatpush.msra.mxu0 %v2672
    %v2674 = vand.u32 %v28, 4294901760
    %v2675 = vsub.f32 %v28, %v2674
    %v2676 = vand.u32 %v2675, 4294901760
    %2677 = vmatpush.msra.mxu0 %v2676
    %v2678 = vand.u32 %v2375, 4294901760
    %2679 = vmatmul.f32.gmra.mxu0 %v2678
    %v2680 = vpop.f32.mrf.mxu0
    %v2681 = vadd.f32 %v2612, %v2680
    %2682 = vdwg.mxu0
    %v2683 = vand.u32 %v43, 4294901760
    %2684 = vmatpush.msra.mxu0 %v2683
    %v2685 = vand.u32 %v42, 4294901760
    %2686 = vmatpush.msra.mxu0 %v2685
    %v2687 = vand.u32 %v41, 4294901760
    %2688 = vmatpush.msra.mxu0 %v2687
    %v2689 = vand.u32 %v40, 4294901760
    %2690 = vmatpush.msra.mxu0 %v2689
    %v2691 = vand.u32 %v39, 4294901760
    %2692 = vmatpush.msra.mxu0 %v2691
    %v2693 = vand.u32 %v38, 4294901760
    %2694 = vmatpush.msra.mxu0 %v2693
    %v2695 = vand.u32 %v37, 4294901760
    %2696 = vmatpush.msra.mxu0 %v2695
    %v2697 = vand.u32 %v36, 4294901760
    %2698 = vmatpush.msra.mxu0 %v2697
    %v2699 = vand.u32 %v35, 4294901760
    %2700 = vmatpush.msra.mxu0 %v2699
    %v2701 = vand.u32 %v34, 4294901760
    %2702 = vmatpush.msra.mxu0 %v2701
    %v2703 = vand.u32 %v33, 4294901760
    %2704 = vmatpush.msra.mxu0 %v2703
    %v2705 = vand.u32 %v32, 4294901760
    %2706 = vmatpush.msra.mxu0 %v2705
    %v2707 = vand.u32 %v31, 4294901760
    %2708 = vmatpush.msra.mxu0 %v2707
    %v2709 = vand.u32 %v30, 4294901760
    %2710 = vmatpush.msra.mxu0 %v2709
    %v2711 = vand.u32 %v29, 4294901760
    %2712 = vmatpush.msra.mxu0 %v2711
    %v2713 = vand.u32 %v28, 4294901760
    %2714 = vmatpush.msra.mxu0 %v2713
    %v2715 = vand.u32 %v2375, 4294901760
    %2716 = vmatmul.f32.gmra.mxu0 %v2715
    %v2717 = vpop.f32.mrf.mxu0
    %v2718 = vadd.f32 %v2681, %v2717
    %2719 = vdwg.mxu0
    %v2720 = vand.u32 %v59, 4294901760
    %2721 = vmatpush.msra.mxu0 %v2720
    %v2722 = vand.u32 %v58, 4294901760
    %2723 = vmatpush.msra.mxu0 %v2722
    %v2724 = vand.u32 %v57, 4294901760
    %2725 = vmatpush.msra.mxu0 %v2724
    %v2726 = vand.u32 %v56, 4294901760
    %2727 = vmatpush.msra.mxu0 %v2726
    %v2728 = vand.u32 %v55, 4294901760
    %2729 = vmatpush.msra.mxu0 %v2728
    %v2730 = vand.u32 %v54, 4294901760
    %2731 = vmatpush.msra.mxu0 %v2730
    %v2732 = vand.u32 %v53, 4294901760
    %2733 = vmatpush.msra.mxu0 %v2732
    %v2734 = vand.u32 %v52, 4294901760
    %2735 = vmatpush.msra.mxu0 %v2734
    %v2736 = vand.u32 %v51, 4294901760
    %2737 = vmatpush.msra.mxu0 %v2736
    %v2738 = vand.u32 %v50, 4294901760
    %2739 = vmatpush.msra.mxu0 %v2738
    %v2740 = vand.u32 %v49, 4294901760
    %2741 = vmatpush.msra.mxu0 %v2740
    %v2742 = vand.u32 %v48, 4294901760
    %2743 = vmatpush.msra.mxu0 %v2742
    %v2744 = vand.u32 %v47, 4294901760
    %2745 = vmatpush.msra.mxu0 %v2744
    %v2746 = vand.u32 %v46, 4294901760
    %2747 = vmatpush.msra.mxu0 %v2746
    %v2748 = vand.u32 %v45, 4294901760
    %2749 = vmatpush.msra.mxu0 %v2748
    %v2750 = vand.u32 %v44, 4294901760
    %2751 = vmatpush.msra.mxu0 %v2750
    %v2752 = vand.u32 %v2376, 4294901760
    %v2753 = vsub.f32 %v2376, %v2752
    %v2754 = vand.u32 %v2753, 4294901760
    %v2755 = vsub.f32 %v2753, %v2754
    %v2756 = vand.u32 %v2755, 4294901760
    %2757 = vmatmul.f32.gmra.mxu0 %v2756
    %v2758 = vpop.f32.mrf.mxu0
    %v2759 = vadd.f32 %v2718, %v2758
    %2760 = vdwg.mxu0
    %v2761 = vand.u32 %v59, 4294901760
    %v2762 = vsub.f32 %v59, %v2761
    %v2763 = vand.u32 %v2762, 4294901760
    %v2764 = vsub.f32 %v2762, %v2763
    %v2765 = vand.u32 %v2764, 4294901760
    %2766 = vmatpush.msra.mxu0 %v2765
    %v2767 = vand.u32 %v58, 4294901760
    %v2768 = vsub.f32 %v58, %v2767
    %v2769 = vand.u32 %v2768, 4294901760
    %v2770 = vsub.f32 %v2768, %v2769
    %v2771 = vand.u32 %v2770, 4294901760
    %2772 = vmatpush.msra.mxu0 %v2771
    %v2773 = vand.u32 %v57, 4294901760
    %v2774 = vsub.f32 %v57, %v2773
    %v2775 = vand.u32 %v2774, 4294901760
    %v2776 = vsub.f32 %v2774, %v2775
    %v2777 = vand.u32 %v2776, 4294901760
    %2778 = vmatpush.msra.mxu0 %v2777
    %v2779 = vand.u32 %v56, 4294901760
    %v2780 = vsub.f32 %v56, %v2779
    %v2781 = vand.u32 %v2780, 4294901760
    %v2782 = vsub.f32 %v2780, %v2781
    %v2783 = vand.u32 %v2782, 4294901760
    %2784 = vmatpush.msra.mxu0 %v2783
    %v2785 = vand.u32 %v55, 4294901760
    %v2786 = vsub.f32 %v55, %v2785
    %v2787 = vand.u32 %v2786, 4294901760
    %v2788 = vsub.f32 %v2786, %v2787
    %v2789 = vand.u32 %v2788, 4294901760
    %2790 = vmatpush.msra.mxu0 %v2789
    %v2791 = vand.u32 %v54, 4294901760
    %v2792 = vsub.f32 %v54, %v2791
    %v2793 = vand.u32 %v2792, 4294901760
    %v2794 = vsub.f32 %v2792, %v2793
    %v2795 = vand.u32 %v2794, 4294901760
    %2796 = vmatpush.msra.mxu0 %v2795
    %v2797 = vand.u32 %v53, 4294901760
    %v2798 = vsub.f32 %v53, %v2797
    %v2799 = vand.u32 %v2798, 4294901760
    %v2800 = vsub.f32 %v2798, %v2799
    %v2801 = vand.u32 %v2800, 4294901760
    %2802 = vmatpush.msra.mxu0 %v2801
    %v2803 = vand.u32 %v52, 4294901760
    %v2804 = vsub.f32 %v52, %v2803
    %v2805 = vand.u32 %v2804, 4294901760
    %v2806 = vsub.f32 %v2804, %v2805
    %v2807 = vand.u32 %v2806, 4294901760
    %2808 = vmatpush.msra.mxu0 %v2807
    %v2809 = vand.u32 %v51, 4294901760
    %v2810 = vsub.f32 %v51, %v2809
    %v2811 = vand.u32 %v2810, 4294901760
    %v2812 = vsub.f32 %v2810, %v2811
    %v2813 = vand.u32 %v2812, 4294901760
    %2814 = vmatpush.msra.mxu0 %v2813
    %v2815 = vand.u32 %v50, 4294901760
    %v2816 = vsub.f32 %v50, %v2815
    %v2817 = vand.u32 %v2816, 4294901760
    %v2818 = vsub.f32 %v2816, %v2817
    %v2819 = vand.u32 %v2818, 4294901760
    %2820 = vmatpush.msra.mxu0 %v2819
    %v2821 = vand.u32 %v49, 4294901760
    %v2822 = vsub.f32 %v49, %v2821
    %v2823 = vand.u32 %v2822, 4294901760
    %v2824 = vsub.f32 %v2822, %v2823
    %v2825 = vand.u32 %v2824, 4294901760
    %2826 = vmatpush.msra.mxu0 %v2825
    %v2827 = vand.u32 %v48, 4294901760
    %v2828 = vsub.f32 %v48, %v2827
    %v2829 = vand.u32 %v2828, 4294901760
    %v2830 = vsub.f32 %v2828, %v2829
    %v2831 = vand.u32 %v2830, 4294901760
    %2832 = vmatpush.msra.mxu0 %v2831
    %v2833 = vand.u32 %v47, 4294901760
    %v2834 = vsub.f32 %v47, %v2833
    %v2835 = vand.u32 %v2834, 4294901760
    %v2836 = vsub.f32 %v2834, %v2835
    %v2837 = vand.u32 %v2836, 4294901760
    %2838 = vmatpush.msra.mxu0 %v2837
    %v2839 = vand.u32 %v46, 4294901760
    %v2840 = vsub.f32 %v46, %v2839
    %v2841 = vand.u32 %v2840, 4294901760
    %v2842 = vsub.f32 %v2840, %v2841
    %v2843 = vand.u32 %v2842, 4294901760
    %2844 = vmatpush.msra.mxu0 %v2843
    %v2845 = vand.u32 %v45, 4294901760
    %v2846 = vsub.f32 %v45, %v2845
    %v2847 = vand.u32 %v2846, 4294901760
    %v2848 = vsub.f32 %v2846, %v2847
    %v2849 = vand.u32 %v2848, 4294901760
    %2850 = vmatpush.msra.mxu0 %v2849
    %v2851 = vand.u32 %v44, 4294901760
    %v2852 = vsub.f32 %v44, %v2851
    %v2853 = vand.u32 %v2852, 4294901760
    %v2854 = vsub.f32 %v2852, %v2853
    %v2855 = vand.u32 %v2854, 4294901760
    %2856 = vmatpush.msra.mxu0 %v2855
    %v2857 = vand.u32 %v2376, 4294901760
    %2858 = vmatmul.f32.gmra.mxu0 %v2857
    %v2859 = vpop.f32.mrf.mxu0
    %v2860 = vadd.f32 %v2759, %v2859
    %2861 = vdwg.mxu0
    %v2862 = vand.u32 %v59, 4294901760
    %v2863 = vsub.f32 %v59, %v2862
    %2864 = vmatpush.msra.mxu0 %v2863
    %v2865 = vand.u32 %v58, 4294901760
    %v2866 = vsub.f32 %v58, %v2865
    %2867 = vmatpush.msra.mxu0 %v2866
    %v2868 = vand.u32 %v57, 4294901760
    %v2869 = vsub.f32 %v57, %v2868
    %2870 = vmatpush.msra.mxu0 %v2869
    %v2871 = vand.u32 %v56, 4294901760
    %v2872 = vsub.f32 %v56, %v2871
    %2873 = vmatpush.msra.mxu0 %v2872
    %v2874 = vand.u32 %v55, 4294901760
    %v2875 = vsub.f32 %v55, %v2874
    %2876 = vmatpush.msra.mxu0 %v2875
    %v2877 = vand.u32 %v54, 4294901760
    %v2878 = vsub.f32 %v54, %v2877
    %2879 = vmatpush.msra.mxu0 %v2878
    %v2880 = vand.u32 %v53, 4294901760
    %v2881 = vsub.f32 %v53, %v2880
    %2882 = vmatpush.msra.mxu0 %v2881
    %v2883 = vand.u32 %v52, 4294901760
    %v2884 = vsub.f32 %v52, %v2883
    %2885 = vmatpush.msra.mxu0 %v2884
    %v2886 = vand.u32 %v51, 4294901760
    %v2887 = vsub.f32 %v51, %v2886
    %2888 = vmatpush.msra.mxu0 %v2887
    %v2889 = vand.u32 %v50, 4294901760
    %v2890 = vsub.f32 %v50, %v2889
    %2891 = vmatpush.msra.mxu0 %v2890
    %v2892 = vand.u32 %v49, 4294901760
    %v2893 = vsub.f32 %v49, %v2892
    %2894 = vmatpush.msra.mxu0 %v2893
    %v2895 = vand.u32 %v48, 4294901760
    %v2896 = vsub.f32 %v48, %v2895
    %2897 = vmatpush.msra.mxu0 %v2896
    %v2898 = vand.u32 %v47, 4294901760
    %v2899 = vsub.f32 %v47, %v2898
    %2900 = vmatpush.msra.mxu0 %v2899
    %v2901 = vand.u32 %v46, 4294901760
    %v2902 = vsub.f32 %v46, %v2901
    %2903 = vmatpush.msra.mxu0 %v2902
    %v2904 = vand.u32 %v45, 4294901760
    %v2905 = vsub.f32 %v45, %v2904
    %2906 = vmatpush.msra.mxu0 %v2905
    %v2907 = vand.u32 %v44, 4294901760
    %v2908 = vsub.f32 %v44, %v2907
    %2909 = vmatpush.msra.mxu0 %v2908
    %v2910 = vand.u32 %v2376, 4294901760
    %v2911 = vsub.f32 %v2376, %v2910
    %2912 = vmatmul.f32.gmra.mxu0 %v2911
    %v2913 = vpop.f32.mrf.mxu0
    %v2914 = vadd.f32 %v2860, %v2913
    %2915 = vdwg.mxu0
    %v2916 = vand.u32 %v59, 4294901760
    %2917 = vmatpush.msra.mxu0 %v2916
    %v2918 = vand.u32 %v58, 4294901760
    %2919 = vmatpush.msra.mxu0 %v2918
    %v2920 = vand.u32 %v57, 4294901760
    %2921 = vmatpush.msra.mxu0 %v2920
    %v2922 = vand.u32 %v56, 4294901760
    %2923 = vmatpush.msra.mxu0 %v2922
    %v2924 = vand.u32 %v55, 4294901760
    %2925 = vmatpush.msra.mxu0 %v2924
    %v2926 = vand.u32 %v54, 4294901760
    %2927 = vmatpush.msra.mxu0 %v2926
    %v2928 = vand.u32 %v53, 4294901760
    %2929 = vmatpush.msra.mxu0 %v2928
    %v2930 = vand.u32 %v52, 4294901760
    %2931 = vmatpush.msra.mxu0 %v2930
    %v2932 = vand.u32 %v51, 4294901760
    %2933 = vmatpush.msra.mxu0 %v2932
    %v2934 = vand.u32 %v50, 4294901760
    %2935 = vmatpush.msra.mxu0 %v2934
    %v2936 = vand.u32 %v49, 4294901760
    %2937 = vmatpush.msra.mxu0 %v2936
    %v2938 = vand.u32 %v48, 4294901760
    %2939 = vmatpush.msra.mxu0 %v2938
    %v2940 = vand.u32 %v47, 4294901760
    %2941 = vmatpush.msra.mxu0 %v2940
    %v2942 = vand.u32 %v46, 4294901760
    %2943 = vmatpush.msra.mxu0 %v2942
    %v2944 = vand.u32 %v45, 4294901760
    %2945 = vmatpush.msra.mxu0 %v2944
    %v2946 = vand.u32 %v44, 4294901760
    %2947 = vmatpush.msra.mxu0 %v2946
    %v2948 = vand.u32 %v2376, 4294901760
    %v2949 = vsub.f32 %v2376, %v2948
    %v2950 = vand.u32 %v2949, 4294901760
    %2951 = vmatmul.f32.gmra.mxu0 %v2950
    %v2952 = vpop.f32.mrf.mxu0
    %v2953 = vadd.f32 %v2914, %v2952
    %2954 = vdwg.mxu0
    %v2955 = vand.u32 %v59, 4294901760
    %v2956 = vsub.f32 %v59, %v2955
    %v2957 = vand.u32 %v2956, 4294901760
    %2958 = vmatpush.msra.mxu0 %v2957
    %v2959 = vand.u32 %v58, 4294901760
    %v2960 = vsub.f32 %v58, %v2959
    %v2961 = vand.u32 %v2960, 4294901760
    %2962 = vmatpush.msra.mxu0 %v2961
    %v2963 = vand.u32 %v57, 4294901760
    %v2964 = vsub.f32 %v57, %v2963
    %v2965 = vand.u32 %v2964, 4294901760
    %2966 = vmatpush.msra.mxu0 %v2965
    %v2967 = vand.u32 %v56, 4294901760
    %v2968 = vsub.f32 %v56, %v2967
    %v2969 = vand.u32 %v2968, 4294901760
    %2970 = vmatpush.msra.mxu0 %v2969
    %v2971 = vand.u32 %v55, 4294901760
    %v2972 = vsub.f32 %v55, %v2971
    %v2973 = vand.u32 %v2972, 4294901760
    %2974 = vmatpush.msra.mxu0 %v2973
    %v2975 = vand.u32 %v54, 4294901760
    %v2976 = vsub.f32 %v54, %v2975
    %v2977 = vand.u32 %v2976, 4294901760
    %2978 = vmatpush.msra.mxu0 %v2977
    %v2979 = vand.u32 %v53, 4294901760
    %v2980 = vsub.f32 %v53, %v2979
    %v2981 = vand.u32 %v2980, 4294901760
    %2982 = vmatpush.msra.mxu0 %v2981
    %v2983 = vand.u32 %v52, 4294901760
    %v2984 = vsub.f32 %v52, %v2983
    %v2985 = vand.u32 %v2984, 4294901760
    %2986 = vmatpush.msra.mxu0 %v2985
    %v2987 = vand.u32 %v51, 4294901760
    %v2988 = vsub.f32 %v51, %v2987
    %v2989 = vand.u32 %v2988, 4294901760
    %2990 = vmatpush.msra.mxu0 %v2989
    %v2991 = vand.u32 %v50, 4294901760
    %v2992 = vsub.f32 %v50, %v2991
    %v2993 = vand.u32 %v2992, 4294901760
    %2994 = vmatpush.msra.mxu0 %v2993
    %v2995 = vand.u32 %v49, 4294901760
    %v2996 = vsub.f32 %v49, %v2995
    %v2997 = vand.u32 %v2996, 4294901760
    %2998 = vmatpush.msra.mxu0 %v2997
    %v2999 = vand.u32 %v48, 4294901760
    %v3000 = vsub.f32 %v48, %v2999
    %v3001 = vand.u32 %v3000, 4294901760
    %3002 = vmatpush.msra.mxu0 %v3001
    %v3003 = vand.u32 %v47, 4294901760
    %v3004 = vsub.f32 %v47, %v3003
    %v3005 = vand.u32 %v3004, 4294901760
    %3006 = vmatpush.msra.mxu0 %v3005
    %v3007 = vand.u32 %v46, 4294901760
    %v3008 = vsub.f32 %v46, %v3007
    %v3009 = vand.u32 %v3008, 4294901760
    %3010 = vmatpush.msra.mxu0 %v3009
    %v3011 = vand.u32 %v45, 4294901760
    %v3012 = vsub.f32 %v45, %v3011
    %v3013 = vand.u32 %v3012, 4294901760
    %3014 = vmatpush.msra.mxu0 %v3013
    %v3015 = vand.u32 %v44, 4294901760
    %v3016 = vsub.f32 %v44, %v3015
    %v3017 = vand.u32 %v3016, 4294901760
    %3018 = vmatpush.msra.mxu0 %v3017
    %v3019 = vand.u32 %v2376, 4294901760
    %3020 = vmatmul.f32.gmra.mxu0 %v3019
    %v3021 = vpop.f32.mrf.mxu0
    %v3022 = vadd.f32 %v2953, %v3021
    %3023 = vdwg.mxu0
    %v3024 = vand.u32 %v59, 4294901760
    %3025 = vmatpush.msra.mxu0 %v3024
    %v3026 = vand.u32 %v58, 4294901760
    %3027 = vmatpush.msra.mxu0 %v3026
    %v3028 = vand.u32 %v57, 4294901760
    %3029 = vmatpush.msra.mxu0 %v3028
    %v3030 = vand.u32 %v56, 4294901760
    %3031 = vmatpush.msra.mxu0 %v3030
    %v3032 = vand.u32 %v55, 4294901760
    %3033 = vmatpush.msra.mxu0 %v3032
    %v3034 = vand.u32 %v54, 4294901760
    %3035 = vmatpush.msra.mxu0 %v3034
    %v3036 = vand.u32 %v53, 4294901760
    %3037 = vmatpush.msra.mxu0 %v3036
    %v3038 = vand.u32 %v52, 4294901760
    %3039 = vmatpush.msra.mxu0 %v3038
    %v3040 = vand.u32 %v51, 4294901760
    %3041 = vmatpush.msra.mxu0 %v3040
    %v3042 = vand.u32 %v50, 4294901760
    %3043 = vmatpush.msra.mxu0 %v3042
    %v3044 = vand.u32 %v49, 4294901760
    %3045 = vmatpush.msra.mxu0 %v3044
    %v3046 = vand.u32 %v48, 4294901760
    %3047 = vmatpush.msra.mxu0 %v3046
    %v3048 = vand.u32 %v47, 4294901760
    %3049 = vmatpush.msra.mxu0 %v3048
    %v3050 = vand.u32 %v46, 4294901760
    %3051 = vmatpush.msra.mxu0 %v3050
    %v3052 = vand.u32 %v45, 4294901760
    %3053 = vmatpush.msra.mxu0 %v3052
    %v3054 = vand.u32 %v44, 4294901760
    %3055 = vmatpush.msra.mxu0 %v3054
    %v3056 = vand.u32 %v2376, 4294901760
    %3057 = vmatmul.f32.gmra.mxu0 %v3056
    %v3058 = vpop.f32.mrf.mxu0
    %v3059 = vadd.f32 %v3022, %v3058
    %3060 = vdwg.mxu0
    %v3061 = vadd.f32 %v3059, 1.0
    %v3062 = vadd.f32 %v3059, 1e-12
    %v3063 = vrsqrt.pop %v3062
    %v3064 = vmul.f32 %v3063, %v3062
    %v3065 = vmul.f32 %v3064, %v3063
    %v3066 = vmul.f32 0.5, %v3065
    %v3067 = vsub.f32 1.5, %v3066
    %v3068 = vmul.f32 %v3063, %v3067
    %v3069 = vmul.f32 %v3062, %v3068
    %vm3070 = vcmp.eq.f32.partialorder %v3062, inf
    %v3071 = vsel %vm3070, %v3062, %v3069
    %vm3072 = vcmp.eq.f32.partialorder %v3062, 0.0
    %v3073 = vand.u32 %v3062, 2147483648
    %v3074 = vsel %vm3072, %v3073, %v3071
    %v3075 = vmul.f32 %v3061, %v3074
    %v3076 = vrcp.pop %v3075
    %v3077 = vmul.f32 %v3075, %v3076
    %v3078 = vsub.f32 1.0, %v3077
    %v3079 = vmul.f32 %v3076, %v3078
    %v3080 = vadd.f32 %v3076, %v3079
    %vm3081 = vweird.f32 %v3075
    %vm3082 = vweird.f32 %v3076
    %vm3083 = vmor %vm3081, %vm3082
    %v3084 = vsel %vm3083, %v3076, %v3080
    %v3085 = vand.u32 2147483647, %v3075
    %vm3086 = vcmp.eq.f32.partialorder %v3085, 8.507059e+37
    %v3087 = vand.u32 %v3075, 2147483648
    %v3088 = vor.u32 1.1754944e-38, %v3087
    %v3089 = vsel %vm3086, %v3088, %v3084
    %v3090 = vmul.f32 %v3059, %v3089
    %v3092 = vsel %vm817, %v3090, 0
    %3094 = vmatpush.msra.mxu0 0.0
    %3095 = vmatpush.msra.mxu0 0.0
    %3096 = vmatpush.msra.mxu0 0.0
    %3097 = vmatpush.msra.mxu0 0.0
    %3098 = vmatpush.msra.mxu0 0.0
    %3099 = vmatpush.msra.mxu0 0.0
    %3100 = vmatpush.msra.mxu0 0.0
    %3101 = vmatpush.msra.mxu0 0.0
    %3102 = vmatpush.msra.mxu0 0.0
    %3103 = vmatpush.msra.mxu0 0.0
    %3104 = vmatpush.msra.mxu0 0.0
    %3105 = vmatpush.msra.mxu0 0.0
    %3106 = vmatpush.msra.mxu0 0.0
    %3107 = vmatpush.msra.mxu0 0.0
    %v3108 = vand.u32 %v62, 4294901760
    %3109 = vmatpush.msra.mxu0 %v3108
    %v3110 = vand.u32 %v60, 4294901760
    %3111 = vmatpush.msra.mxu0 %v3110
    %v3112 = vand.u32 %v3092, 4294901760
    %v3113 = vsub.f32 %v3092, %v3112
    %v3114 = vand.u32 %v3113, 4294901760
    %v3115 = vsub.f32 %v3113, %v3114
    %v3116 = vand.u32 %v3115, 4294901760
    %3117 = vmatmul.f32.gmra.mxu0 %v3116
    %v3118 = vpop.f32.mrf.mxu0
    %v3119 = vadd.f32 0.0, %v3118
    %3120 = vdwg.mxu0
    %3121 = vmatpush.msra.mxu0 0.0
    %3122 = vmatpush.msra.mxu0 0.0
    %3123 = vmatpush.msra.mxu0 0.0
    %3124 = vmatpush.msra.mxu0 0.0
    %3125 = vmatpush.msra.mxu0 0.0
    %3126 = vmatpush.msra.mxu0 0.0
    %3127 = vmatpush.msra.mxu0 0.0
    %3128 = vmatpush.msra.mxu0 0.0
    %3129 = vmatpush.msra.mxu0 0.0
    %3130 = vmatpush.msra.mxu0 0.0
    %3131 = vmatpush.msra.mxu0 0.0
    %3132 = vmatpush.msra.mxu0 0.0
    %3133 = vmatpush.msra.mxu0 0.0
    %3134 = vmatpush.msra.mxu0 0.0
    %v3135 = vand.u32 %v62, 4294901760
    %v3136 = vsub.f32 %v62, %v3135
    %v3137 = vand.u32 %v3136, 4294901760
    %v3138 = vsub.f32 %v3136, %v3137
    %v3139 = vand.u32 %v3138, 4294901760
    %3140 = vmatpush.msra.mxu0 %v3139
    %v3141 = vand.u32 %v60, 4294901760
    %v3142 = vsub.f32 %v60, %v3141
    %v3143 = vand.u32 %v3142, 4294901760
    %v3144 = vsub.f32 %v3142, %v3143
    %v3145 = vand.u32 %v3144, 4294901760
    %3146 = vmatpush.msra.mxu0 %v3145
    %v3147 = vand.u32 %v3092, 4294901760
    %3148 = vmatmul.f32.gmra.mxu0 %v3147
    %v3149 = vpop.f32.mrf.mxu0
    %v3150 = vadd.f32 %v3119, %v3149
    %3151 = vdwg.mxu0
    %3152 = vmatpush.msra.mxu0 0.0
    %3153 = vmatpush.msra.mxu0 0.0
    %3154 = vmatpush.msra.mxu0 0.0
    %3155 = vmatpush.msra.mxu0 0.0
    %3156 = vmatpush.msra.mxu0 0.0
    %3157 = vmatpush.msra.mxu0 0.0
    %3158 = vmatpush.msra.mxu0 0.0
    %3159 = vmatpush.msra.mxu0 0.0
    %3160 = vmatpush.msra.mxu0 0.0
    %3161 = vmatpush.msra.mxu0 0.0
    %3162 = vmatpush.msra.mxu0 0.0
    %3163 = vmatpush.msra.mxu0 0.0
    %3164 = vmatpush.msra.mxu0 0.0
    %3165 = vmatpush.msra.mxu0 0.0
    %v3166 = vand.u32 %v62, 4294901760
    %v3167 = vsub.f32 %v62, %v3166
    %3168 = vmatpush.msra.mxu0 %v3167
    %v3169 = vand.u32 %v60, 4294901760
    %v3170 = vsub.f32 %v60, %v3169
    %3171 = vmatpush.msra.mxu0 %v3170
    %v3172 = vand.u32 %v3092, 4294901760
    %v3173 = vsub.f32 %v3092, %v3172
    %3174 = vmatmul.f32.gmra.mxu0 %v3173
    %v3175 = vpop.f32.mrf.mxu0
    %v3176 = vadd.f32 %v3150, %v3175
    %3177 = vdwg.mxu0
    %3178 = vmatpush.msra.mxu0 0.0
    %3179 = vmatpush.msra.mxu0 0.0
    %3180 = vmatpush.msra.mxu0 0.0
    %3181 = vmatpush.msra.mxu0 0.0
    %3182 = vmatpush.msra.mxu0 0.0
    %3183 = vmatpush.msra.mxu0 0.0
    %3184 = vmatpush.msra.mxu0 0.0
    %3185 = vmatpush.msra.mxu0 0.0
    %3186 = vmatpush.msra.mxu0 0.0
    %3187 = vmatpush.msra.mxu0 0.0
    %3188 = vmatpush.msra.mxu0 0.0
    %3189 = vmatpush.msra.mxu0 0.0
    %3190 = vmatpush.msra.mxu0 0.0
    %3191 = vmatpush.msra.mxu0 0.0
    %v3192 = vand.u32 %v62, 4294901760
    %3193 = vmatpush.msra.mxu0 %v3192
    %v3194 = vand.u32 %v60, 4294901760
    %3195 = vmatpush.msra.mxu0 %v3194
    %v3196 = vand.u32 %v3092, 4294901760
    %v3197 = vsub.f32 %v3092, %v3196
    %v3198 = vand.u32 %v3197, 4294901760
    %3199 = vmatmul.f32.gmra.mxu0 %v3198
    %v3200 = vpop.f32.mrf.mxu0
    %v3201 = vadd.f32 %v3176, %v3200
    %3202 = vdwg.mxu0
    %3203 = vmatpush.msra.mxu0 0.0
    %3204 = vmatpush.msra.mxu0 0.0
    %3205 = vmatpush.msra.mxu0 0.0
    %3206 = vmatpush.msra.mxu0 0.0
    %3207 = vmatpush.msra.mxu0 0.0
    %3208 = vmatpush.msra.mxu0 0.0
    %3209 = vmatpush.msra.mxu0 0.0
    %3210 = vmatpush.msra.mxu0 0.0
    %3211 = vmatpush.msra.mxu0 0.0
    %3212 = vmatpush.msra.mxu0 0.0
    %3213 = vmatpush.msra.mxu0 0.0
    %3214 = vmatpush.msra.mxu0 0.0
    %3215 = vmatpush.msra.mxu0 0.0
    %3216 = vmatpush.msra.mxu0 0.0
    %v3217 = vand.u32 %v62, 4294901760
    %v3218 = vsub.f32 %v62, %v3217
    %v3219 = vand.u32 %v3218, 4294901760
    %3220 = vmatpush.msra.mxu0 %v3219
    %v3221 = vand.u32 %v60, 4294901760
    %v3222 = vsub.f32 %v60, %v3221
    %v3223 = vand.u32 %v3222, 4294901760
    %3224 = vmatpush.msra.mxu0 %v3223
    %v3225 = vand.u32 %v3092, 4294901760
    %3226 = vmatmul.f32.gmra.mxu0 %v3225
    %v3227 = vpop.f32.mrf.mxu0
    %v3228 = vadd.f32 %v3201, %v3227
    %3229 = vdwg.mxu0
    %3230 = vmatpush.msra.mxu0 0.0
    %3231 = vmatpush.msra.mxu0 0.0
    %3232 = vmatpush.msra.mxu0 0.0
    %3233 = vmatpush.msra.mxu0 0.0
    %3234 = vmatpush.msra.mxu0 0.0
    %3235 = vmatpush.msra.mxu0 0.0
    %3236 = vmatpush.msra.mxu0 0.0
    %3237 = vmatpush.msra.mxu0 0.0
    %3238 = vmatpush.msra.mxu0 0.0
    %3239 = vmatpush.msra.mxu0 0.0
    %3240 = vmatpush.msra.mxu0 0.0
    %3241 = vmatpush.msra.mxu0 0.0
    %3242 = vmatpush.msra.mxu0 0.0
    %3243 = vmatpush.msra.mxu0 0.0
    %v3244 = vand.u32 %v62, 4294901760
    %3245 = vmatpush.msra.mxu0 %v3244
    %v3246 = vand.u32 %v60, 4294901760
    %3247 = vmatpush.msra.mxu0 %v3246
    %v3248 = vand.u32 %v3092, 4294901760
    %3249 = vmatmul.f32.gmra.mxu0 %v3248
    %v3250 = vpop.f32.mrf.mxu0
    %v3251 = vadd.f32 %v3228, %v3250
    %3252 = vdwg.mxu0
    %3253 = vmatpush.msra.mxu0 0.0
    %3254 = vmatpush.msra.mxu0 0.0
    %3255 = vmatpush.msra.mxu0 0.0
    %3256 = vmatpush.msra.mxu0 0.0
    %3257 = vmatpush.msra.mxu0 0.0
    %3258 = vmatpush.msra.mxu0 0.0
    %3259 = vmatpush.msra.mxu0 0.0
    %3260 = vmatpush.msra.mxu0 0.0
    %3261 = vmatpush.msra.mxu0 0.0
    %3262 = vmatpush.msra.mxu0 0.0
    %3263 = vmatpush.msra.mxu0 0.0
    %3264 = vmatpush.msra.mxu0 0.0
    %3265 = vmatpush.msra.mxu0 0.0
    %3266 = vmatpush.msra.mxu0 0.0
    %v3267 = vand.u32 %v63, 4294901760
    %3268 = vmatpush.msra.mxu0 %v3267
    %v3269 = vand.u32 %v61, 4294901760
    %3270 = vmatpush.msra.mxu0 %v3269
    %v3271 = vand.u32 %v3092, 4294901760
    %v3272 = vsub.f32 %v3092, %v3271
    %v3273 = vand.u32 %v3272, 4294901760
    %v3274 = vsub.f32 %v3272, %v3273
    %v3275 = vand.u32 %v3274, 4294901760
    %3276 = vmatmul.f32.gmra.mxu0 %v3275
    %v3277 = vpop.f32.mrf.mxu0
    %v3278 = vadd.f32 0.0, %v3277
    %3279 = vdwg.mxu0
    %3280 = vmatpush.msra.mxu0 0.0
    %3281 = vmatpush.msra.mxu0 0.0
    %3282 = vmatpush.msra.mxu0 0.0
    %3283 = vmatpush.msra.mxu0 0.0
    %3284 = vmatpush.msra.mxu0 0.0
    %3285 = vmatpush.msra.mxu0 0.0
    %3286 = vmatpush.msra.mxu0 0.0
    %3287 = vmatpush.msra.mxu0 0.0
    %3288 = vmatpush.msra.mxu0 0.0
    %3289 = vmatpush.msra.mxu0 0.0
    %3290 = vmatpush.msra.mxu0 0.0
    %3291 = vmatpush.msra.mxu0 0.0
    %3292 = vmatpush.msra.mxu0 0.0
    %3293 = vmatpush.msra.mxu0 0.0
    %v3294 = vand.u32 %v63, 4294901760
    %v3295 = vsub.f32 %v63, %v3294
    %v3296 = vand.u32 %v3295, 4294901760
    %v3297 = vsub.f32 %v3295, %v3296
    %v3298 = vand.u32 %v3297, 4294901760
    %3299 = vmatpush.msra.mxu0 %v3298
    %v3300 = vand.u32 %v61, 4294901760
    %v3301 = vsub.f32 %v61, %v3300
    %v3302 = vand.u32 %v3301, 4294901760
    %v3303 = vsub.f32 %v3301, %v3302
    %v3304 = vand.u32 %v3303, 4294901760
    %3305 = vmatpush.msra.mxu0 %v3304
    %v3306 = vand.u32 %v3092, 4294901760
    %3307 = vmatmul.f32.gmra.mxu0 %v3306
    %v3308 = vpop.f32.mrf.mxu0
    %v3309 = vadd.f32 %v3278, %v3308
    %3310 = vdwg.mxu0
    %3311 = vmatpush.msra.mxu0 0.0
    %3312 = vmatpush.msra.mxu0 0.0
    %3313 = vmatpush.msra.mxu0 0.0
    %3314 = vmatpush.msra.mxu0 0.0
    %3315 = vmatpush.msra.mxu0 0.0
    %3316 = vmatpush.msra.mxu0 0.0
    %3317 = vmatpush.msra.mxu0 0.0
    %3318 = vmatpush.msra.mxu0 0.0
    %3319 = vmatpush.msra.mxu0 0.0
    %3320 = vmatpush.msra.mxu0 0.0
    %3321 = vmatpush.msra.mxu0 0.0
    %3322 = vmatpush.msra.mxu0 0.0
    %3323 = vmatpush.msra.mxu0 0.0
    %3324 = vmatpush.msra.mxu0 0.0
    %v3325 = vand.u32 %v63, 4294901760
    %v3326 = vsub.f32 %v63, %v3325
    %3327 = vmatpush.msra.mxu0 %v3326
    %v3328 = vand.u32 %v61, 4294901760
    %v3329 = vsub.f32 %v61, %v3328
    %3330 = vmatpush.msra.mxu0 %v3329
    %v3331 = vand.u32 %v3092, 4294901760
    %v3332 = vsub.f32 %v3092, %v3331
    %3333 = vmatmul.f32.gmra.mxu0 %v3332
    %v3334 = vpop.f32.mrf.mxu0
    %v3335 = vadd.f32 %v3309, %v3334
    %3336 = vdwg.mxu0
    %3337 = vmatpush.msra.mxu0 0.0
    %3338 = vmatpush.msra.mxu0 0.0
    %3339 = vmatpush.msra.mxu0 0.0
    %3340 = vmatpush.msra.mxu0 0.0
    %3341 = vmatpush.msra.mxu0 0.0
    %3342 = vmatpush.msra.mxu0 0.0
    %3343 = vmatpush.msra.mxu0 0.0
    %3344 = vmatpush.msra.mxu0 0.0
    %3345 = vmatpush.msra.mxu0 0.0
    %3346 = vmatpush.msra.mxu0 0.0
    %3347 = vmatpush.msra.mxu0 0.0
    %3348 = vmatpush.msra.mxu0 0.0
    %3349 = vmatpush.msra.mxu0 0.0
    %3350 = vmatpush.msra.mxu0 0.0
    %v3351 = vand.u32 %v63, 4294901760
    %3352 = vmatpush.msra.mxu0 %v3351
    %v3353 = vand.u32 %v61, 4294901760
    %3354 = vmatpush.msra.mxu0 %v3353
    %v3355 = vand.u32 %v3092, 4294901760
    %v3356 = vsub.f32 %v3092, %v3355
    %v3357 = vand.u32 %v3356, 4294901760
    %3358 = vmatmul.f32.gmra.mxu0 %v3357
    %v3359 = vpop.f32.mrf.mxu0
    %v3360 = vadd.f32 %v3335, %v3359
    %3361 = vdwg.mxu0
    %3362 = vmatpush.msra.mxu0 0.0
    %3363 = vmatpush.msra.mxu0 0.0
    %3364 = vmatpush.msra.mxu0 0.0
    %3365 = vmatpush.msra.mxu0 0.0
    %3366 = vmatpush.msra.mxu0 0.0
    %3367 = vmatpush.msra.mxu0 0.0
    %3368 = vmatpush.msra.mxu0 0.0
    %3369 = vmatpush.msra.mxu0 0.0
    %3370 = vmatpush.msra.mxu0 0.0
    %3371 = vmatpush.msra.mxu0 0.0
    %3372 = vmatpush.msra.mxu0 0.0
    %3373 = vmatpush.msra.mxu0 0.0
    %3374 = vmatpush.msra.mxu0 0.0
    %3375 = vmatpush.msra.mxu0 0.0
    %v3376 = vand.u32 %v63, 4294901760
    %v3377 = vsub.f32 %v63, %v3376
    %v3378 = vand.u32 %v3377, 4294901760
    %3379 = vmatpush.msra.mxu0 %v3378
    %v3380 = vand.u32 %v61, 4294901760
    %v3381 = vsub.f32 %v61, %v3380
    %v3382 = vand.u32 %v3381, 4294901760
    %3383 = vmatpush.msra.mxu0 %v3382
    %v3384 = vand.u32 %v3092, 4294901760
    %3385 = vmatmul.f32.gmra.mxu0 %v3384
    %v3386 = vpop.f32.mrf.mxu0
    %v3387 = vadd.f32 %v3360, %v3386
    %3388 = vdwg.mxu0
    %3389 = vmatpush.msra.mxu0 0.0
    %3390 = vmatpush.msra.mxu0 0.0
    %3391 = vmatpush.msra.mxu0 0.0
    %3392 = vmatpush.msra.mxu0 0.0
    %3393 = vmatpush.msra.mxu0 0.0
    %3394 = vmatpush.msra.mxu0 0.0
    %3395 = vmatpush.msra.mxu0 0.0
    %3396 = vmatpush.msra.mxu0 0.0
    %3397 = vmatpush.msra.mxu0 0.0
    %3398 = vmatpush.msra.mxu0 0.0
    %3399 = vmatpush.msra.mxu0 0.0
    %3400 = vmatpush.msra.mxu0 0.0
    %3401 = vmatpush.msra.mxu0 0.0
    %3402 = vmatpush.msra.mxu0 0.0
    %v3403 = vand.u32 %v63, 4294901760
    %3404 = vmatpush.msra.mxu0 %v3403
    %v3405 = vand.u32 %v61, 4294901760
    %3406 = vmatpush.msra.mxu0 %v3405
    %v3407 = vand.u32 %v3092, 4294901760
    %3408 = vmatmul.f32.gmra.mxu0 %v3407
    %v3409 = vpop.f32.mrf.mxu0
    %v3410 = vadd.f32 %v3387, %v3409
    %3411 = vdwg.mxu0
    %v3414 = vrot.slane %v3251, 1
    %v3415 = vrot.slane %v3410, 1
    %v3420 = vmul.f32 %v2348, %v3251
    %v3421 = vmul.f32 %v2354, %v3410
    %v3422 = vmul.f32 %v2360, %v3414
    %v3423 = vmul.f32 %v2366, %v3415
    %v3424 = vperm.slane %v3420, 0
    %v3425 = vperm.slane %v3421, 0
    %v3426 = vperm.slane %v3422, 0
    %v3427 = vperm.slane %v3423, 0
    %v3428 = vmul.f32 %v21, %v3424
    %v3429 = vmul.f32 %v22, %v3425
    %v3430 = vmul.f32 %v23, %v3426
    %v3431 = vmul.f32 %v24, %v3427
    %v3432 = vand.u32 %v43, 4294901760
    %3433 = vmatpush.msra.mxu0 %v3432
    %v3434 = vand.u32 %v42, 4294901760
    %3435 = vmatpush.msra.mxu0 %v3434
    %v3436 = vand.u32 %v41, 4294901760
    %3437 = vmatpush.msra.mxu0 %v3436
    %v3438 = vand.u32 %v40, 4294901760
    %3439 = vmatpush.msra.mxu0 %v3438
    %v3440 = vand.u32 %v39, 4294901760
    %3441 = vmatpush.msra.mxu0 %v3440
    %v3442 = vand.u32 %v38, 4294901760
    %3443 = vmatpush.msra.mxu0 %v3442
    %v3444 = vand.u32 %v37, 4294901760
    %3445 = vmatpush.msra.mxu0 %v3444
    %v3446 = vand.u32 %v36, 4294901760
    %3447 = vmatpush.msra.mxu0 %v3446
    %v3448 = vand.u32 %v35, 4294901760
    %3449 = vmatpush.msra.mxu0 %v3448
    %v3450 = vand.u32 %v34, 4294901760
    %3451 = vmatpush.msra.mxu0 %v3450
    %v3452 = vand.u32 %v33, 4294901760
    %3453 = vmatpush.msra.mxu0 %v3452
    %v3454 = vand.u32 %v32, 4294901760
    %3455 = vmatpush.msra.mxu0 %v3454
    %v3456 = vand.u32 %v31, 4294901760
    %3457 = vmatpush.msra.mxu0 %v3456
    %v3458 = vand.u32 %v30, 4294901760
    %3459 = vmatpush.msra.mxu0 %v3458
    %v3460 = vand.u32 %v29, 4294901760
    %3461 = vmatpush.msra.mxu0 %v3460
    %v3462 = vand.u32 %v28, 4294901760
    %3463 = vmatpush.msra.mxu0 %v3462
    %v3464 = vand.u32 %v3428, 4294901760
    %v3465 = vsub.f32 %v3428, %v3464
    %v3466 = vand.u32 %v3465, 4294901760
    %v3467 = vsub.f32 %v3465, %v3466
    %v3468 = vand.u32 %v3467, 4294901760
    %3469 = vmatmul.f32.gmra.mxu0 %v3468
    %v3470 = vpop.f32.mrf.mxu0
    %v3471 = vadd.f32 0.0, %v3470
    %v3472 = vand.u32 %v3430, 4294901760
    %v3473 = vsub.f32 %v3430, %v3472
    %v3474 = vand.u32 %v3473, 4294901760
    %v3475 = vsub.f32 %v3473, %v3474
    %v3476 = vand.u32 %v3475, 4294901760
    %3477 = vmatmul.f32.gmra.mxu0 %v3476
    %v3478 = vpop.f32.mrf.mxu0
    %v3479 = vadd.f32 0.0, %v3478
    %3480 = vdwg.mxu0
    %v3481 = vand.u32 %v43, 4294901760
    %v3482 = vsub.f32 %v43, %v3481
    %v3483 = vand.u32 %v3482, 4294901760
    %v3484 = vsub.f32 %v3482, %v3483
    %v3485 = vand.u32 %v3484, 4294901760
    %3486 = vmatpush.msra.mxu0 %v3485
    %v3487 = vand.u32 %v42, 4294901760
    %v3488 = vsub.f32 %v42, %v3487
    %v3489 = vand.u32 %v3488, 4294901760
    %v3490 = vsub.f32 %v3488, %v3489
    %v3491 = vand.u32 %v3490, 4294901760
    %3492 = vmatpush.msra.mxu0 %v3491
    %v3493 = vand.u32 %v41, 4294901760
    %v3494 = vsub.f32 %v41, %v3493
    %v3495 = vand.u32 %v3494, 4294901760
    %v3496 = vsub.f32 %v3494, %v3495
    %v3497 = vand.u32 %v3496, 4294901760
    %3498 = vmatpush.msra.mxu0 %v3497
    %v3499 = vand.u32 %v40, 4294901760
    %v3500 = vsub.f32 %v40, %v3499
    %v3501 = vand.u32 %v3500, 4294901760
    %v3502 = vsub.f32 %v3500, %v3501
    %v3503 = vand.u32 %v3502, 4294901760
    %3504 = vmatpush.msra.mxu0 %v3503
    %v3505 = vand.u32 %v39, 4294901760
    %v3506 = vsub.f32 %v39, %v3505
    %v3507 = vand.u32 %v3506, 4294901760
    %v3508 = vsub.f32 %v3506, %v3507
    %v3509 = vand.u32 %v3508, 4294901760
    %3510 = vmatpush.msra.mxu0 %v3509
    %v3511 = vand.u32 %v38, 4294901760
    %v3512 = vsub.f32 %v38, %v3511
    %v3513 = vand.u32 %v3512, 4294901760
    %v3514 = vsub.f32 %v3512, %v3513
    %v3515 = vand.u32 %v3514, 4294901760
    %3516 = vmatpush.msra.mxu0 %v3515
    %v3517 = vand.u32 %v37, 4294901760
    %v3518 = vsub.f32 %v37, %v3517
    %v3519 = vand.u32 %v3518, 4294901760
    %v3520 = vsub.f32 %v3518, %v3519
    %v3521 = vand.u32 %v3520, 4294901760
    %3522 = vmatpush.msra.mxu0 %v3521
    %v3523 = vand.u32 %v36, 4294901760
    %v3524 = vsub.f32 %v36, %v3523
    %v3525 = vand.u32 %v3524, 4294901760
    %v3526 = vsub.f32 %v3524, %v3525
    %v3527 = vand.u32 %v3526, 4294901760
    %3528 = vmatpush.msra.mxu0 %v3527
    %v3529 = vand.u32 %v35, 4294901760
    %v3530 = vsub.f32 %v35, %v3529
    %v3531 = vand.u32 %v3530, 4294901760
    %v3532 = vsub.f32 %v3530, %v3531
    %v3533 = vand.u32 %v3532, 4294901760
    %3534 = vmatpush.msra.mxu0 %v3533
    %v3535 = vand.u32 %v34, 4294901760
    %v3536 = vsub.f32 %v34, %v3535
    %v3537 = vand.u32 %v3536, 4294901760
    %v3538 = vsub.f32 %v3536, %v3537
    %v3539 = vand.u32 %v3538, 4294901760
    %3540 = vmatpush.msra.mxu0 %v3539
    %v3541 = vand.u32 %v33, 4294901760
    %v3542 = vsub.f32 %v33, %v3541
    %v3543 = vand.u32 %v3542, 4294901760
    %v3544 = vsub.f32 %v3542, %v3543
    %v3545 = vand.u32 %v3544, 4294901760
    %3546 = vmatpush.msra.mxu0 %v3545
    %v3547 = vand.u32 %v32, 4294901760
    %v3548 = vsub.f32 %v32, %v3547
    %v3549 = vand.u32 %v3548, 4294901760
    %v3550 = vsub.f32 %v3548, %v3549
    %v3551 = vand.u32 %v3550, 4294901760
    %3552 = vmatpush.msra.mxu0 %v3551
    %v3553 = vand.u32 %v31, 4294901760
    %v3554 = vsub.f32 %v31, %v3553
    %v3555 = vand.u32 %v3554, 4294901760
    %v3556 = vsub.f32 %v3554, %v3555
    %v3557 = vand.u32 %v3556, 4294901760
    %3558 = vmatpush.msra.mxu0 %v3557
    %v3559 = vand.u32 %v30, 4294901760
    %v3560 = vsub.f32 %v30, %v3559
    %v3561 = vand.u32 %v3560, 4294901760
    %v3562 = vsub.f32 %v3560, %v3561
    %v3563 = vand.u32 %v3562, 4294901760
    %3564 = vmatpush.msra.mxu0 %v3563
    %v3565 = vand.u32 %v29, 4294901760
    %v3566 = vsub.f32 %v29, %v3565
    %v3567 = vand.u32 %v3566, 4294901760
    %v3568 = vsub.f32 %v3566, %v3567
    %v3569 = vand.u32 %v3568, 4294901760
    %3570 = vmatpush.msra.mxu0 %v3569
    %v3571 = vand.u32 %v28, 4294901760
    %v3572 = vsub.f32 %v28, %v3571
    %v3573 = vand.u32 %v3572, 4294901760
    %v3574 = vsub.f32 %v3572, %v3573
    %v3575 = vand.u32 %v3574, 4294901760
    %3576 = vmatpush.msra.mxu0 %v3575
    %v3577 = vand.u32 %v3428, 4294901760
    %3578 = vmatmul.f32.gmra.mxu0 %v3577
    %v3579 = vpop.f32.mrf.mxu0
    %v3580 = vadd.f32 %v3471, %v3579
    %v3581 = vand.u32 %v3430, 4294901760
    %3582 = vmatmul.f32.gmra.mxu0 %v3581
    %v3583 = vpop.f32.mrf.mxu0
    %v3584 = vadd.f32 %v3479, %v3583
    %3585 = vdwg.mxu0
    %v3586 = vand.u32 %v43, 4294901760
    %v3587 = vsub.f32 %v43, %v3586
    %3588 = vmatpush.msra.mxu0 %v3587
    %v3589 = vand.u32 %v42, 4294901760
    %v3590 = vsub.f32 %v42, %v3589
    %3591 = vmatpush.msra.mxu0 %v3590
    %v3592 = vand.u32 %v41, 4294901760
    %v3593 = vsub.f32 %v41, %v3592
    %3594 = vmatpush.msra.mxu0 %v3593
    %v3595 = vand.u32 %v40, 4294901760
    %v3596 = vsub.f32 %v40, %v3595
    %3597 = vmatpush.msra.mxu0 %v3596
    %v3598 = vand.u32 %v39, 4294901760
    %v3599 = vsub.f32 %v39, %v3598
    %3600 = vmatpush.msra.mxu0 %v3599
    %v3601 = vand.u32 %v38, 4294901760
    %v3602 = vsub.f32 %v38, %v3601
    %3603 = vmatpush.msra.mxu0 %v3602
    %v3604 = vand.u32 %v37, 4294901760
    %v3605 = vsub.f32 %v37, %v3604
    %3606 = vmatpush.msra.mxu0 %v3605
    %v3607 = vand.u32 %v36, 4294901760
    %v3608 = vsub.f32 %v36, %v3607
    %3609 = vmatpush.msra.mxu0 %v3608
    %v3610 = vand.u32 %v35, 4294901760
    %v3611 = vsub.f32 %v35, %v3610
    %3612 = vmatpush.msra.mxu0 %v3611
    %v3613 = vand.u32 %v34, 4294901760
    %v3614 = vsub.f32 %v34, %v3613
    %3615 = vmatpush.msra.mxu0 %v3614
    %v3616 = vand.u32 %v33, 4294901760
    %v3617 = vsub.f32 %v33, %v3616
    %3618 = vmatpush.msra.mxu0 %v3617
    %v3619 = vand.u32 %v32, 4294901760
    %v3620 = vsub.f32 %v32, %v3619
    %3621 = vmatpush.msra.mxu0 %v3620
    %v3622 = vand.u32 %v31, 4294901760
    %v3623 = vsub.f32 %v31, %v3622
    %3624 = vmatpush.msra.mxu0 %v3623
    %v3625 = vand.u32 %v30, 4294901760
    %v3626 = vsub.f32 %v30, %v3625
    %3627 = vmatpush.msra.mxu0 %v3626
    %v3628 = vand.u32 %v29, 4294901760
    %v3629 = vsub.f32 %v29, %v3628
    %3630 = vmatpush.msra.mxu0 %v3629
    %v3631 = vand.u32 %v28, 4294901760
    %v3632 = vsub.f32 %v28, %v3631
    %3633 = vmatpush.msra.mxu0 %v3632
    %v3634 = vand.u32 %v3428, 4294901760
    %v3635 = vsub.f32 %v3428, %v3634
    %3636 = vmatmul.f32.gmra.mxu0 %v3635
    %v3637 = vpop.f32.mrf.mxu0
    %v3638 = vadd.f32 %v3580, %v3637
    %v3639 = vand.u32 %v3430, 4294901760
    %v3640 = vsub.f32 %v3430, %v3639
    %3641 = vmatmul.f32.gmra.mxu0 %v3640
    %v3642 = vpop.f32.mrf.mxu0
    %v3643 = vadd.f32 %v3584, %v3642
    %3644 = vdwg.mxu0
    %v3645 = vand.u32 %v43, 4294901760
    %3646 = vmatpush.msra.mxu0 %v3645
    %v3647 = vand.u32 %v42, 4294901760
    %3648 = vmatpush.msra.mxu0 %v3647
    %v3649 = vand.u32 %v41, 4294901760
    %3650 = vmatpush.msra.mxu0 %v3649
    %v3651 = vand.u32 %v40, 4294901760
    %3652 = vmatpush.msra.mxu0 %v3651
    %v3653 = vand.u32 %v39, 4294901760
    %3654 = vmatpush.msra.mxu0 %v3653
    %v3655 = vand.u32 %v38, 4294901760
    %3656 = vmatpush.msra.mxu0 %v3655
    %v3657 = vand.u32 %v37, 4294901760
    %3658 = vmatpush.msra.mxu0 %v3657
    %v3659 = vand.u32 %v36, 4294901760
    %3660 = vmatpush.msra.mxu0 %v3659
    %v3661 = vand.u32 %v35, 4294901760
    %3662 = vmatpush.msra.mxu0 %v3661
    %v3663 = vand.u32 %v34, 4294901760
    %3664 = vmatpush.msra.mxu0 %v3663
    %v3665 = vand.u32 %v33, 4294901760
    %3666 = vmatpush.msra.mxu0 %v3665
    %v3667 = vand.u32 %v32, 4294901760
    %3668 = vmatpush.msra.mxu0 %v3667
    %v3669 = vand.u32 %v31, 4294901760
    %3670 = vmatpush.msra.mxu0 %v3669
    %v3671 = vand.u32 %v30, 4294901760
    %3672 = vmatpush.msra.mxu0 %v3671
    %v3673 = vand.u32 %v29, 4294901760
    %3674 = vmatpush.msra.mxu0 %v3673
    %v3675 = vand.u32 %v28, 4294901760
    %3676 = vmatpush.msra.mxu0 %v3675
    %v3677 = vand.u32 %v3428, 4294901760
    %v3678 = vsub.f32 %v3428, %v3677
    %v3679 = vand.u32 %v3678, 4294901760
    %3680 = vmatmul.f32.gmra.mxu0 %v3679
    %v3681 = vpop.f32.mrf.mxu0
    %v3682 = vadd.f32 %v3638, %v3681
    %v3683 = vand.u32 %v3430, 4294901760
    %v3684 = vsub.f32 %v3430, %v3683
    %v3685 = vand.u32 %v3684, 4294901760
    %3686 = vmatmul.f32.gmra.mxu0 %v3685
    %v3687 = vpop.f32.mrf.mxu0
    %v3688 = vadd.f32 %v3643, %v3687
    %3689 = vdwg.mxu0
    %v3690 = vand.u32 %v43, 4294901760
    %v3691 = vsub.f32 %v43, %v3690
    %v3692 = vand.u32 %v3691, 4294901760
    %3693 = vmatpush.msra.mxu0 %v3692
    %v3694 = vand.u32 %v42, 4294901760
    %v3695 = vsub.f32 %v42, %v3694
    %v3696 = vand.u32 %v3695, 4294901760
    %3697 = vmatpush.msra.mxu0 %v3696
    %v3698 = vand.u32 %v41, 4294901760
    %v3699 = vsub.f32 %v41, %v3698
    %v3700 = vand.u32 %v3699, 4294901760
    %3701 = vmatpush.msra.mxu0 %v3700
    %v3702 = vand.u32 %v40, 4294901760
    %v3703 = vsub.f32 %v40, %v3702
    %v3704 = vand.u32 %v3703, 4294901760
    %3705 = vmatpush.msra.mxu0 %v3704
    %v3706 = vand.u32 %v39, 4294901760
    %v3707 = vsub.f32 %v39, %v3706
    %v3708 = vand.u32 %v3707, 4294901760
    %3709 = vmatpush.msra.mxu0 %v3708
    %v3710 = vand.u32 %v38, 4294901760
    %v3711 = vsub.f32 %v38, %v3710
    %v3712 = vand.u32 %v3711, 4294901760
    %3713 = vmatpush.msra.mxu0 %v3712
    %v3714 = vand.u32 %v37, 4294901760
    %v3715 = vsub.f32 %v37, %v3714
    %v3716 = vand.u32 %v3715, 4294901760
    %3717 = vmatpush.msra.mxu0 %v3716
    %v3718 = vand.u32 %v36, 4294901760
    %v3719 = vsub.f32 %v36, %v3718
    %v3720 = vand.u32 %v3719, 4294901760
    %3721 = vmatpush.msra.mxu0 %v3720
    %v3722 = vand.u32 %v35, 4294901760
    %v3723 = vsub.f32 %v35, %v3722
    %v3724 = vand.u32 %v3723, 4294901760
    %3725 = vmatpush.msra.mxu0 %v3724
    %v3726 = vand.u32 %v34, 4294901760
    %v3727 = vsub.f32 %v34, %v3726
    %v3728 = vand.u32 %v3727, 4294901760
    %3729 = vmatpush.msra.mxu0 %v3728
    %v3730 = vand.u32 %v33, 4294901760
    %v3731 = vsub.f32 %v33, %v3730
    %v3732 = vand.u32 %v3731, 4294901760
    %3733 = vmatpush.msra.mxu0 %v3732
    %v3734 = vand.u32 %v32, 4294901760
    %v3735 = vsub.f32 %v32, %v3734
    %v3736 = vand.u32 %v3735, 4294901760
    %3737 = vmatpush.msra.mxu0 %v3736
    %v3738 = vand.u32 %v31, 4294901760
    %v3739 = vsub.f32 %v31, %v3738
    %v3740 = vand.u32 %v3739, 4294901760
    %3741 = vmatpush.msra.mxu0 %v3740
    %v3742 = vand.u32 %v30, 4294901760
    %v3743 = vsub.f32 %v30, %v3742
    %v3744 = vand.u32 %v3743, 4294901760
    %3745 = vmatpush.msra.mxu0 %v3744
    %v3746 = vand.u32 %v29, 4294901760
    %v3747 = vsub.f32 %v29, %v3746
    %v3748 = vand.u32 %v3747, 4294901760
    %3749 = vmatpush.msra.mxu0 %v3748
    %v3750 = vand.u32 %v28, 4294901760
    %v3751 = vsub.f32 %v28, %v3750
    %v3752 = vand.u32 %v3751, 4294901760
    %3753 = vmatpush.msra.mxu0 %v3752
    %v3754 = vand.u32 %v3428, 4294901760
    %3755 = vmatmul.f32.gmra.mxu0 %v3754
    %v3756 = vpop.f32.mrf.mxu0
    %v3757 = vadd.f32 %v3682, %v3756
    %v3758 = vand.u32 %v3430, 4294901760
    %3759 = vmatmul.f32.gmra.mxu0 %v3758
    %v3760 = vpop.f32.mrf.mxu0
    %v3761 = vadd.f32 %v3688, %v3760
    %3762 = vdwg.mxu0
    %v3763 = vand.u32 %v43, 4294901760
    %3764 = vmatpush.msra.mxu0 %v3763
    %v3765 = vand.u32 %v42, 4294901760
    %3766 = vmatpush.msra.mxu0 %v3765
    %v3767 = vand.u32 %v41, 4294901760
    %3768 = vmatpush.msra.mxu0 %v3767
    %v3769 = vand.u32 %v40, 4294901760
    %3770 = vmatpush.msra.mxu0 %v3769
    %v3771 = vand.u32 %v39, 4294901760
    %3772 = vmatpush.msra.mxu0 %v3771
    %v3773 = vand.u32 %v38, 4294901760
    %3774 = vmatpush.msra.mxu0 %v3773
    %v3775 = vand.u32 %v37, 4294901760
    %3776 = vmatpush.msra.mxu0 %v3775
    %v3777 = vand.u32 %v36, 4294901760
    %3778 = vmatpush.msra.mxu0 %v3777
    %v3779 = vand.u32 %v35, 4294901760
    %3780 = vmatpush.msra.mxu0 %v3779
    %v3781 = vand.u32 %v34, 4294901760
    %3782 = vmatpush.msra.mxu0 %v3781
    %v3783 = vand.u32 %v33, 4294901760
    %3784 = vmatpush.msra.mxu0 %v3783
    %v3785 = vand.u32 %v32, 4294901760
    %3786 = vmatpush.msra.mxu0 %v3785
    %v3787 = vand.u32 %v31, 4294901760
    %3788 = vmatpush.msra.mxu0 %v3787
    %v3789 = vand.u32 %v30, 4294901760
    %3790 = vmatpush.msra.mxu0 %v3789
    %v3791 = vand.u32 %v29, 4294901760
    %3792 = vmatpush.msra.mxu0 %v3791
    %v3793 = vand.u32 %v28, 4294901760
    %3794 = vmatpush.msra.mxu0 %v3793
    %v3795 = vand.u32 %v3428, 4294901760
    %3796 = vmatmul.f32.gmra.mxu0 %v3795
    %v3797 = vpop.f32.mrf.mxu0
    %v3798 = vadd.f32 %v3757, %v3797
    %v3799 = vand.u32 %v3430, 4294901760
    %3800 = vmatmul.f32.gmra.mxu0 %v3799
    %v3801 = vpop.f32.mrf.mxu0
    %v3802 = vadd.f32 %v3761, %v3801
    %3803 = vdwg.mxu0
    %v3804 = vand.u32 %v59, 4294901760
    %3805 = vmatpush.msra.mxu0 %v3804
    %v3806 = vand.u32 %v58, 4294901760
    %3807 = vmatpush.msra.mxu0 %v3806
    %v3808 = vand.u32 %v57, 4294901760
    %3809 = vmatpush.msra.mxu0 %v3808
    %v3810 = vand.u32 %v56, 4294901760
    %3811 = vmatpush.msra.mxu0 %v3810
    %v3812 = vand.u32 %v55, 4294901760
    %3813 = vmatpush.msra.mxu0 %v3812
    %v3814 = vand.u32 %v54, 4294901760
    %3815 = vmatpush.msra.mxu0 %v3814
    %v3816 = vand.u32 %v53, 4294901760
    %3817 = vmatpush.msra.mxu0 %v3816
    %v3818 = vand.u32 %v52, 4294901760
    %3819 = vmatpush.msra.mxu0 %v3818
    %v3820 = vand.u32 %v51, 4294901760
    %3821 = vmatpush.msra.mxu0 %v3820
    %v3822 = vand.u32 %v50, 4294901760
    %3823 = vmatpush.msra.mxu0 %v3822
    %v3824 = vand.u32 %v49, 4294901760
    %3825 = vmatpush.msra.mxu0 %v3824
    %v3826 = vand.u32 %v48, 4294901760
    %3827 = vmatpush.msra.mxu0 %v3826
    %v3828 = vand.u32 %v47, 4294901760
    %3829 = vmatpush.msra.mxu0 %v3828
    %v3830 = vand.u32 %v46, 4294901760
    %3831 = vmatpush.msra.mxu0 %v3830
    %v3832 = vand.u32 %v45, 4294901760
    %3833 = vmatpush.msra.mxu0 %v3832
    %v3834 = vand.u32 %v44, 4294901760
    %3835 = vmatpush.msra.mxu0 %v3834
    %v3836 = vand.u32 %v3429, 4294901760
    %v3837 = vsub.f32 %v3429, %v3836
    %v3838 = vand.u32 %v3837, 4294901760
    %v3839 = vsub.f32 %v3837, %v3838
    %v3840 = vand.u32 %v3839, 4294901760
    %3841 = vmatmul.f32.gmra.mxu0 %v3840
    %v3842 = vpop.f32.mrf.mxu0
    %v3843 = vadd.f32 %v3798, %v3842
    %v3844 = vand.u32 %v3431, 4294901760
    %v3845 = vsub.f32 %v3431, %v3844
    %v3846 = vand.u32 %v3845, 4294901760
    %v3847 = vsub.f32 %v3845, %v3846
    %v3848 = vand.u32 %v3847, 4294901760
    %3849 = vmatmul.f32.gmra.mxu0 %v3848
    %v3850 = vpop.f32.mrf.mxu0
    %v3851 = vadd.f32 %v3802, %v3850
    %3852 = vdwg.mxu0
    %v3853 = vand.u32 %v59, 4294901760
    %v3854 = vsub.f32 %v59, %v3853
    %v3855 = vand.u32 %v3854, 4294901760
    %v3856 = vsub.f32 %v3854, %v3855
    %v3857 = vand.u32 %v3856, 4294901760
    %3858 = vmatpush.msra.mxu0 %v3857
    %v3859 = vand.u32 %v58, 4294901760
    %v3860 = vsub.f32 %v58, %v3859
    %v3861 = vand.u32 %v3860, 4294901760
    %v3862 = vsub.f32 %v3860, %v3861
    %v3863 = vand.u32 %v3862, 4294901760
    %3864 = vmatpush.msra.mxu0 %v3863
    %v3865 = vand.u32 %v57, 4294901760
    %v3866 = vsub.f32 %v57, %v3865
    %v3867 = vand.u32 %v3866, 4294901760
    %v3868 = vsub.f32 %v3866, %v3867
    %v3869 = vand.u32 %v3868, 4294901760
    %3870 = vmatpush.msra.mxu0 %v3869
    %v3871 = vand.u32 %v56, 4294901760
    %v3872 = vsub.f32 %v56, %v3871
    %v3873 = vand.u32 %v3872, 4294901760
    %v3874 = vsub.f32 %v3872, %v3873
    %v3875 = vand.u32 %v3874, 4294901760
    %3876 = vmatpush.msra.mxu0 %v3875
    %v3877 = vand.u32 %v55, 4294901760
    %v3878 = vsub.f32 %v55, %v3877
    %v3879 = vand.u32 %v3878, 4294901760
    %v3880 = vsub.f32 %v3878, %v3879
    %v3881 = vand.u32 %v3880, 4294901760
    %3882 = vmatpush.msra.mxu0 %v3881
    %v3883 = vand.u32 %v54, 4294901760
    %v3884 = vsub.f32 %v54, %v3883
    %v3885 = vand.u32 %v3884, 4294901760
    %v3886 = vsub.f32 %v3884, %v3885
    %v3887 = vand.u32 %v3886, 4294901760
    %3888 = vmatpush.msra.mxu0 %v3887
    %v3889 = vand.u32 %v53, 4294901760
    %v3890 = vsub.f32 %v53, %v3889
    %v3891 = vand.u32 %v3890, 4294901760
    %v3892 = vsub.f32 %v3890, %v3891
    %v3893 = vand.u32 %v3892, 4294901760
    %3894 = vmatpush.msra.mxu0 %v3893
    %v3895 = vand.u32 %v52, 4294901760
    %v3896 = vsub.f32 %v52, %v3895
    %v3897 = vand.u32 %v3896, 4294901760
    %v3898 = vsub.f32 %v3896, %v3897
    %v3899 = vand.u32 %v3898, 4294901760
    %3900 = vmatpush.msra.mxu0 %v3899
    %v3901 = vand.u32 %v51, 4294901760
    %v3902 = vsub.f32 %v51, %v3901
    %v3903 = vand.u32 %v3902, 4294901760
    %v3904 = vsub.f32 %v3902, %v3903
    %v3905 = vand.u32 %v3904, 4294901760
    %3906 = vmatpush.msra.mxu0 %v3905
    %v3907 = vand.u32 %v50, 4294901760
    %v3908 = vsub.f32 %v50, %v3907
    %v3909 = vand.u32 %v3908, 4294901760
    %v3910 = vsub.f32 %v3908, %v3909
    %v3911 = vand.u32 %v3910, 4294901760
    %3912 = vmatpush.msra.mxu0 %v3911
    %v3913 = vand.u32 %v49, 4294901760
    %v3914 = vsub.f32 %v49, %v3913
    %v3915 = vand.u32 %v3914, 4294901760
    %v3916 = vsub.f32 %v3914, %v3915
    %v3917 = vand.u32 %v3916, 4294901760
    %3918 = vmatpush.msra.mxu0 %v3917
    %v3919 = vand.u32 %v48, 4294901760
    %v3920 = vsub.f32 %v48, %v3919
    %v3921 = vand.u32 %v3920, 4294901760
    %v3922 = vsub.f32 %v3920, %v3921
    %v3923 = vand.u32 %v3922, 4294901760
    %3924 = vmatpush.msra.mxu0 %v3923
    %v3925 = vand.u32 %v47, 4294901760
    %v3926 = vsub.f32 %v47, %v3925
    %v3927 = vand.u32 %v3926, 4294901760
    %v3928 = vsub.f32 %v3926, %v3927
    %v3929 = vand.u32 %v3928, 4294901760
    %3930 = vmatpush.msra.mxu0 %v3929
    %v3931 = vand.u32 %v46, 4294901760
    %v3932 = vsub.f32 %v46, %v3931
    %v3933 = vand.u32 %v3932, 4294901760
    %v3934 = vsub.f32 %v3932, %v3933
    %v3935 = vand.u32 %v3934, 4294901760
    %3936 = vmatpush.msra.mxu0 %v3935
    %v3937 = vand.u32 %v45, 4294901760
    %v3938 = vsub.f32 %v45, %v3937
    %v3939 = vand.u32 %v3938, 4294901760
    %v3940 = vsub.f32 %v3938, %v3939
    %v3941 = vand.u32 %v3940, 4294901760
    %3942 = vmatpush.msra.mxu0 %v3941
    %v3943 = vand.u32 %v44, 4294901760
    %v3944 = vsub.f32 %v44, %v3943
    %v3945 = vand.u32 %v3944, 4294901760
    %v3946 = vsub.f32 %v3944, %v3945
    %v3947 = vand.u32 %v3946, 4294901760
    %3948 = vmatpush.msra.mxu0 %v3947
    %v3949 = vand.u32 %v3429, 4294901760
    %3950 = vmatmul.f32.gmra.mxu0 %v3949
    %v3951 = vpop.f32.mrf.mxu0
    %v3952 = vadd.f32 %v3843, %v3951
    %v3953 = vand.u32 %v3431, 4294901760
    %3954 = vmatmul.f32.gmra.mxu0 %v3953
    %v3955 = vpop.f32.mrf.mxu0
    %v3956 = vadd.f32 %v3851, %v3955
    %3957 = vdwg.mxu0
    %v3958 = vand.u32 %v59, 4294901760
    %v3959 = vsub.f32 %v59, %v3958
    %3960 = vmatpush.msra.mxu0 %v3959
    %v3961 = vand.u32 %v58, 4294901760
    %v3962 = vsub.f32 %v58, %v3961
    %3963 = vmatpush.msra.mxu0 %v3962
    %v3964 = vand.u32 %v57, 4294901760
    %v3965 = vsub.f32 %v57, %v3964
    %3966 = vmatpush.msra.mxu0 %v3965
    %v3967 = vand.u32 %v56, 4294901760
    %v3968 = vsub.f32 %v56, %v3967
    %3969 = vmatpush.msra.mxu0 %v3968
    %v3970 = vand.u32 %v55, 4294901760
    %v3971 = vsub.f32 %v55, %v3970
    %3972 = vmatpush.msra.mxu0 %v3971
    %v3973 = vand.u32 %v54, 4294901760
    %v3974 = vsub.f32 %v54, %v3973
    %3975 = vmatpush.msra.mxu0 %v3974
    %v3976 = vand.u32 %v53, 4294901760
    %v3977 = vsub.f32 %v53, %v3976
    %3978 = vmatpush.msra.mxu0 %v3977
    %v3979 = vand.u32 %v52, 4294901760
    %v3980 = vsub.f32 %v52, %v3979
    %3981 = vmatpush.msra.mxu0 %v3980
    %v3982 = vand.u32 %v51, 4294901760
    %v3983 = vsub.f32 %v51, %v3982
    %3984 = vmatpush.msra.mxu0 %v3983
    %v3985 = vand.u32 %v50, 4294901760
    %v3986 = vsub.f32 %v50, %v3985
    %3987 = vmatpush.msra.mxu0 %v3986
    %v3988 = vand.u32 %v49, 4294901760
    %v3989 = vsub.f32 %v49, %v3988
    %3990 = vmatpush.msra.mxu0 %v3989
    %v3991 = vand.u32 %v48, 4294901760
    %v3992 = vsub.f32 %v48, %v3991
    %3993 = vmatpush.msra.mxu0 %v3992
    %v3994 = vand.u32 %v47, 4294901760
    %v3995 = vsub.f32 %v47, %v3994
    %3996 = vmatpush.msra.mxu0 %v3995
    %v3997 = vand.u32 %v46, 4294901760
    %v3998 = vsub.f32 %v46, %v3997
    %3999 = vmatpush.msra.mxu0 %v3998
    %v4000 = vand.u32 %v45, 4294901760
    %v4001 = vsub.f32 %v45, %v4000
    %4002 = vmatpush.msra.mxu0 %v4001
    %v4003 = vand.u32 %v44, 4294901760
    %v4004 = vsub.f32 %v44, %v4003
    %4005 = vmatpush.msra.mxu0 %v4004
    %v4006 = vand.u32 %v3429, 4294901760
    %v4007 = vsub.f32 %v3429, %v4006
    %4008 = vmatmul.f32.gmra.mxu0 %v4007
    %v4009 = vpop.f32.mrf.mxu0
    %v4010 = vadd.f32 %v3952, %v4009
    %v4011 = vand.u32 %v3431, 4294901760
    %v4012 = vsub.f32 %v3431, %v4011
    %4013 = vmatmul.f32.gmra.mxu0 %v4012
    %v4014 = vpop.f32.mrf.mxu0
    %v4015 = vadd.f32 %v3956, %v4014
    %4016 = vdwg.mxu0
    %v4017 = vand.u32 %v59, 4294901760
    %4018 = vmatpush.msra.mxu0 %v4017
    %v4019 = vand.u32 %v58, 4294901760
    %4020 = vmatpush.msra.mxu0 %v4019
    %v4021 = vand.u32 %v57, 4294901760
    %4022 = vmatpush.msra.mxu0 %v4021
    %v4023 = vand.u32 %v56, 4294901760
    %4024 = vmatpush.msra.mxu0 %v4023
    %v4025 = vand.u32 %v55, 4294901760
    %4026 = vmatpush.msra.mxu0 %v4025
    %v4027 = vand.u32 %v54, 4294901760
    %4028 = vmatpush.msra.mxu0 %v4027
    %v4029 = vand.u32 %v53, 4294901760
    %4030 = vmatpush.msra.mxu0 %v4029
    %v4031 = vand.u32 %v52, 4294901760
    %4032 = vmatpush.msra.mxu0 %v4031
    %v4033 = vand.u32 %v51, 4294901760
    %4034 = vmatpush.msra.mxu0 %v4033
    %v4035 = vand.u32 %v50, 4294901760
    %4036 = vmatpush.msra.mxu0 %v4035
    %v4037 = vand.u32 %v49, 4294901760
    %4038 = vmatpush.msra.mxu0 %v4037
    %v4039 = vand.u32 %v48, 4294901760
    %4040 = vmatpush.msra.mxu0 %v4039
    %v4041 = vand.u32 %v47, 4294901760
    %4042 = vmatpush.msra.mxu0 %v4041
    %v4043 = vand.u32 %v46, 4294901760
    %4044 = vmatpush.msra.mxu0 %v4043
    %v4045 = vand.u32 %v45, 4294901760
    %4046 = vmatpush.msra.mxu0 %v4045
    %v4047 = vand.u32 %v44, 4294901760
    %4048 = vmatpush.msra.mxu0 %v4047
    %v4049 = vand.u32 %v3429, 4294901760
    %v4050 = vsub.f32 %v3429, %v4049
    %v4051 = vand.u32 %v4050, 4294901760
    %4052 = vmatmul.f32.gmra.mxu0 %v4051
    %v4053 = vpop.f32.mrf.mxu0
    %v4054 = vadd.f32 %v4010, %v4053
    %v4055 = vand.u32 %v3431, 4294901760
    %v4056 = vsub.f32 %v3431, %v4055
    %v4057 = vand.u32 %v4056, 4294901760
    %4058 = vmatmul.f32.gmra.mxu0 %v4057
    %v4059 = vpop.f32.mrf.mxu0
    %v4060 = vadd.f32 %v4015, %v4059
    %4061 = vdwg.mxu0
    %v4062 = vand.u32 %v59, 4294901760
    %v4063 = vsub.f32 %v59, %v4062
    %v4064 = vand.u32 %v4063, 4294901760
    %4065 = vmatpush.msra.mxu0 %v4064
    %v4066 = vand.u32 %v58, 4294901760
    %v4067 = vsub.f32 %v58, %v4066
    %v4068 = vand.u32 %v4067, 4294901760
    %4069 = vmatpush.msra.mxu0 %v4068
    %v4070 = vand.u32 %v57, 4294901760
    %v4071 = vsub.f32 %v57, %v4070
    %v4072 = vand.u32 %v4071, 4294901760
    %4073 = vmatpush.msra.mxu0 %v4072
    %v4074 = vand.u32 %v56, 4294901760
    %v4075 = vsub.f32 %v56, %v4074
    %v4076 = vand.u32 %v4075, 4294901760
    %4077 = vmatpush.msra.mxu0 %v4076
    %v4078 = vand.u32 %v55, 4294901760
    %v4079 = vsub.f32 %v55, %v4078
    %v4080 = vand.u32 %v4079, 4294901760
    %4081 = vmatpush.msra.mxu0 %v4080
    %v4082 = vand.u32 %v54, 4294901760
    %v4083 = vsub.f32 %v54, %v4082
    %v4084 = vand.u32 %v4083, 4294901760
    %4085 = vmatpush.msra.mxu0 %v4084
    %v4086 = vand.u32 %v53, 4294901760
    %v4087 = vsub.f32 %v53, %v4086
    %v4088 = vand.u32 %v4087, 4294901760
    %4089 = vmatpush.msra.mxu0 %v4088
    %v4090 = vand.u32 %v52, 4294901760
    %v4091 = vsub.f32 %v52, %v4090
    %v4092 = vand.u32 %v4091, 4294901760
    %4093 = vmatpush.msra.mxu0 %v4092
    %v4094 = vand.u32 %v51, 4294901760
    %v4095 = vsub.f32 %v51, %v4094
    %v4096 = vand.u32 %v4095, 4294901760
    %4097 = vmatpush.msra.mxu0 %v4096
    %v4098 = vand.u32 %v50, 4294901760
    %v4099 = vsub.f32 %v50, %v4098
    %v4100 = vand.u32 %v4099, 4294901760
    %4101 = vmatpush.msra.mxu0 %v4100
    %v4102 = vand.u32 %v49, 4294901760
    %v4103 = vsub.f32 %v49, %v4102
    %v4104 = vand.u32 %v4103, 4294901760
    %4105 = vmatpush.msra.mxu0 %v4104
    %v4106 = vand.u32 %v48, 4294901760
    %v4107 = vsub.f32 %v48, %v4106
    %v4108 = vand.u32 %v4107, 4294901760
    %4109 = vmatpush.msra.mxu0 %v4108
    %v4110 = vand.u32 %v47, 4294901760
    %v4111 = vsub.f32 %v47, %v4110
    %v4112 = vand.u32 %v4111, 4294901760
    %4113 = vmatpush.msra.mxu0 %v4112
    %v4114 = vand.u32 %v46, 4294901760
    %v4115 = vsub.f32 %v46, %v4114
    %v4116 = vand.u32 %v4115, 4294901760
    %4117 = vmatpush.msra.mxu0 %v4116
    %v4118 = vand.u32 %v45, 4294901760
    %v4119 = vsub.f32 %v45, %v4118
    %v4120 = vand.u32 %v4119, 4294901760
    %4121 = vmatpush.msra.mxu0 %v4120
    %v4122 = vand.u32 %v44, 4294901760
    %v4123 = vsub.f32 %v44, %v4122
    %v4124 = vand.u32 %v4123, 4294901760
    %4125 = vmatpush.msra.mxu0 %v4124
    %v4126 = vand.u32 %v3429, 4294901760
    %4127 = vmatmul.f32.gmra.mxu0 %v4126
    %v4128 = vpop.f32.mrf.mxu0
    %v4129 = vadd.f32 %v4054, %v4128
    %v4130 = vand.u32 %v3431, 4294901760
    %4131 = vmatmul.f32.gmra.mxu0 %v4130
    %v4132 = vpop.f32.mrf.mxu0
    %v4133 = vadd.f32 %v4060, %v4132
    %4134 = vdwg.mxu0
    %v4135 = vand.u32 %v59, 4294901760
    %4136 = vmatpush.msra.mxu0 %v4135
    %v4137 = vand.u32 %v58, 4294901760
    %4138 = vmatpush.msra.mxu0 %v4137
    %v4139 = vand.u32 %v57, 4294901760
    %4140 = vmatpush.msra.mxu0 %v4139
    %v4141 = vand.u32 %v56, 4294901760
    %4142 = vmatpush.msra.mxu0 %v4141
    %v4143 = vand.u32 %v55, 4294901760
    %4144 = vmatpush.msra.mxu0 %v4143
    %v4145 = vand.u32 %v54, 4294901760
    %4146 = vmatpush.msra.mxu0 %v4145
    %v4147 = vand.u32 %v53, 4294901760
    %4148 = vmatpush.msra.mxu0 %v4147
    %v4149 = vand.u32 %v52, 4294901760
    %4150 = vmatpush.msra.mxu0 %v4149
    %v4151 = vand.u32 %v51, 4294901760
    %4152 = vmatpush.msra.mxu0 %v4151
    %v4153 = vand.u32 %v50, 4294901760
    %4154 = vmatpush.msra.mxu0 %v4153
    %v4155 = vand.u32 %v49, 4294901760
    %4156 = vmatpush.msra.mxu0 %v4155
    %v4157 = vand.u32 %v48, 4294901760
    %4158 = vmatpush.msra.mxu0 %v4157
    %v4159 = vand.u32 %v47, 4294901760
    %4160 = vmatpush.msra.mxu0 %v4159
    %v4161 = vand.u32 %v46, 4294901760
    %4162 = vmatpush.msra.mxu0 %v4161
    %v4163 = vand.u32 %v45, 4294901760
    %4164 = vmatpush.msra.mxu0 %v4163
    %v4165 = vand.u32 %v44, 4294901760
    %4166 = vmatpush.msra.mxu0 %v4165
    %v4167 = vand.u32 %v3429, 4294901760
    %4168 = vmatmul.f32.gmra.mxu0 %v4167
    %v4169 = vpop.f32.mrf.mxu0
    %v4170 = vadd.f32 %v4129, %v4169
    %v4171 = vand.u32 %v3431, 4294901760
    %4172 = vmatmul.f32.gmra.mxu0 %v4171
    %v4173 = vpop.f32.mrf.mxu0
    %v4174 = vadd.f32 %v4133, %v4173
    %4175 = vdwg.mxu0
    %v4176 = vadd.f32 %v1903, %v4170
    %v4177 = vadd.f32 %v1904, %v4174
    %v4178 = vsel %vm817, %v4176, -inf
    %4179 = vmax.xlane.f32.xlu0 %v4178
    %v4180 = vpop.xlane.xlu0 %4179
    %v4181 = vsel %vm817, %v4177, -inf
    %4182 = vmax.xlane.f32.xlu0 %v4181
    %v4183 = vpop.xlane.xlu0 %4182
    %v4184 = vsub.f32 %v4176, %v4180
    %v4185 = vsub.f32 %v4177, %v4183
    %v4186 = vmul.f32 %v4184, 1.442695
    %v4187 = vpow.pop %v4186
    %v4188 = vmul.f32 %v4185, 1.442695
    %v4189 = vpow.pop %v4188
    %v4190 = vsel %vm817, %v4187, 0.0
    %4191 = vadd.xlane.f32.xlu0 %v4190
    %v4192 = vpop.xlane.xlu0 %4191
    %v4193 = vsel %vm817, %v4189, 0.0
    %4194 = vadd.xlane.f32.xlu0 %v4193
    %v4195 = vpop.xlane.xlu0 %4194
    %v4196 = vrcp.pop %v4192
    %v4197 = vmul.f32 %v4192, %v4196
    %v4198 = vsub.f32 1.0, %v4197
    %v4199 = vmul.f32 %v4196, %v4198
    %v4200 = vadd.f32 %v4196, %v4199
    %vm4201 = vweird.f32 %v4192
    %vm4202 = vweird.f32 %v4196
    %vm4203 = vmor %vm4201, %vm4202
    %v4204 = vsel %vm4203, %v4196, %v4200
    %v4205 = vand.u32 2147483647, %v4192
    %vm4206 = vcmp.eq.f32.partialorder %v4205, 8.507059e+37
    %v4207 = vand.u32 %v4192, 2147483648
    %v4208 = vor.u32 1.1754944e-38, %v4207
    %v4209 = vsel %vm4206, %v4208, %v4204
    %v4210 = vmul.f32 %v4187, %v4209
    %v4211 = vrcp.pop %v4195
    %v4212 = vmul.f32 %v4195, %v4211
    %v4213 = vsub.f32 1.0, %v4212
    %v4214 = vmul.f32 %v4211, %v4213
    %v4215 = vadd.f32 %v4211, %v4214
    %vm4216 = vweird.f32 %v4195
    %vm4217 = vweird.f32 %v4211
    %vm4218 = vmor %vm4216, %vm4217
    %v4219 = vsel %vm4218, %v4211, %v4215
    %v4220 = vand.u32 2147483647, %v4195
    %vm4221 = vcmp.eq.f32.partialorder %v4220, 8.507059e+37
    %v4222 = vand.u32 %v4195, 2147483648
    %v4223 = vor.u32 1.1754944e-38, %v4222
    %v4224 = vsel %vm4221, %v4223, %v4219
    %v4225 = vmul.f32 %v4189, %v4224
    %v4227 = vsel %vm817, %v4210, 0
    %v4230 = vsel %vm817, %v4225, 0
    %4232 = vmatpush.msra.mxu0 0.0
    %4233 = vmatpush.msra.mxu0 0.0
    %4234 = vmatpush.msra.mxu0 0.0
    %4235 = vmatpush.msra.mxu0 0.0
    %4236 = vmatpush.msra.mxu0 0.0
    %4237 = vmatpush.msra.mxu0 0.0
    %4238 = vmatpush.msra.mxu0 0.0
    %4239 = vmatpush.msra.mxu0 0.0
    %4240 = vmatpush.msra.mxu0 0.0
    %4241 = vmatpush.msra.mxu0 0.0
    %4242 = vmatpush.msra.mxu0 0.0
    %4243 = vmatpush.msra.mxu0 0.0
    %4244 = vmatpush.msra.mxu0 0.0
    %4245 = vmatpush.msra.mxu0 0.0
    %v4246 = vand.u32 %v62, 4294901760
    %4247 = vmatpush.msra.mxu0 %v4246
    %v4248 = vand.u32 %v60, 4294901760
    %4249 = vmatpush.msra.mxu0 %v4248
    %v4250 = vand.u32 %v4227, 4294901760
    %v4251 = vsub.f32 %v4227, %v4250
    %v4252 = vand.u32 %v4251, 4294901760
    %v4253 = vsub.f32 %v4251, %v4252
    %v4254 = vand.u32 %v4253, 4294901760
    %4255 = vmatmul.f32.gmra.mxu0 %v4254
    %v4256 = vpop.f32.mrf.mxu0
    %v4257 = vadd.f32 0.0, %v4256
    %v4258 = vand.u32 %v4230, 4294901760
    %v4259 = vsub.f32 %v4230, %v4258
    %v4260 = vand.u32 %v4259, 4294901760
    %v4261 = vsub.f32 %v4259, %v4260
    %v4262 = vand.u32 %v4261, 4294901760
    %4263 = vmatmul.f32.gmra.mxu0 %v4262
    %v4264 = vpop.f32.mrf.mxu0
    %v4265 = vadd.f32 0.0, %v4264
    %4266 = vdwg.mxu0
    %4267 = vmatpush.msra.mxu0 0.0
    %4268 = vmatpush.msra.mxu0 0.0
    %4269 = vmatpush.msra.mxu0 0.0
    %4270 = vmatpush.msra.mxu0 0.0
    %4271 = vmatpush.msra.mxu0 0.0
    %4272 = vmatpush.msra.mxu0 0.0
    %4273 = vmatpush.msra.mxu0 0.0
    %4274 = vmatpush.msra.mxu0 0.0
    %4275 = vmatpush.msra.mxu0 0.0
    %4276 = vmatpush.msra.mxu0 0.0
    %4277 = vmatpush.msra.mxu0 0.0
    %4278 = vmatpush.msra.mxu0 0.0
    %4279 = vmatpush.msra.mxu0 0.0
    %4280 = vmatpush.msra.mxu0 0.0
    %v4281 = vand.u32 %v62, 4294901760
    %v4282 = vsub.f32 %v62, %v4281
    %v4283 = vand.u32 %v4282, 4294901760
    %v4284 = vsub.f32 %v4282, %v4283
    %v4285 = vand.u32 %v4284, 4294901760
    %4286 = vmatpush.msra.mxu0 %v4285
    %v4287 = vand.u32 %v60, 4294901760
    %v4288 = vsub.f32 %v60, %v4287
    %v4289 = vand.u32 %v4288, 4294901760
    %v4290 = vsub.f32 %v4288, %v4289
    %v4291 = vand.u32 %v4290, 4294901760
    %4292 = vmatpush.msra.mxu0 %v4291
    %v4293 = vand.u32 %v4227, 4294901760
    %4294 = vmatmul.f32.gmra.mxu0 %v4293
    %v4295 = vpop.f32.mrf.mxu0
    %v4296 = vadd.f32 %v4257, %v4295
    %v4297 = vand.u32 %v4230, 4294901760
    %4298 = vmatmul.f32.gmra.mxu0 %v4297
    %v4299 = vpop.f32.mrf.mxu0
    %v4300 = vadd.f32 %v4265, %v4299
    %4301 = vdwg.mxu0
    %4302 = vmatpush.msra.mxu0 0.0
    %4303 = vmatpush.msra.mxu0 0.0
    %4304 = vmatpush.msra.mxu0 0.0
    %4305 = vmatpush.msra.mxu0 0.0
    %4306 = vmatpush.msra.mxu0 0.0
    %4307 = vmatpush.msra.mxu0 0.0
    %4308 = vmatpush.msra.mxu0 0.0
    %4309 = vmatpush.msra.mxu0 0.0
    %4310 = vmatpush.msra.mxu0 0.0
    %4311 = vmatpush.msra.mxu0 0.0
    %4312 = vmatpush.msra.mxu0 0.0
    %4313 = vmatpush.msra.mxu0 0.0
    %4314 = vmatpush.msra.mxu0 0.0
    %4315 = vmatpush.msra.mxu0 0.0
    %v4316 = vand.u32 %v62, 4294901760
    %v4317 = vsub.f32 %v62, %v4316
    %4318 = vmatpush.msra.mxu0 %v4317
    %v4319 = vand.u32 %v60, 4294901760
    %v4320 = vsub.f32 %v60, %v4319
    %4321 = vmatpush.msra.mxu0 %v4320
    %v4322 = vand.u32 %v4227, 4294901760
    %v4323 = vsub.f32 %v4227, %v4322
    %4324 = vmatmul.f32.gmra.mxu0 %v4323
    %v4325 = vpop.f32.mrf.mxu0
    %v4326 = vadd.f32 %v4296, %v4325
    %v4327 = vand.u32 %v4230, 4294901760
    %v4328 = vsub.f32 %v4230, %v4327
    %4329 = vmatmul.f32.gmra.mxu0 %v4328
    %v4330 = vpop.f32.mrf.mxu0
    %v4331 = vadd.f32 %v4300, %v4330
    %4332 = vdwg.mxu0
    %4333 = vmatpush.msra.mxu0 0.0
    %4334 = vmatpush.msra.mxu0 0.0
    %4335 = vmatpush.msra.mxu0 0.0
    %4336 = vmatpush.msra.mxu0 0.0
    %4337 = vmatpush.msra.mxu0 0.0
    %4338 = vmatpush.msra.mxu0 0.0
    %4339 = vmatpush.msra.mxu0 0.0
    %4340 = vmatpush.msra.mxu0 0.0
    %4341 = vmatpush.msra.mxu0 0.0
    %4342 = vmatpush.msra.mxu0 0.0
    %4343 = vmatpush.msra.mxu0 0.0
    %4344 = vmatpush.msra.mxu0 0.0
    %4345 = vmatpush.msra.mxu0 0.0
    %4346 = vmatpush.msra.mxu0 0.0
    %v4347 = vand.u32 %v62, 4294901760
    %4348 = vmatpush.msra.mxu0 %v4347
    %v4349 = vand.u32 %v60, 4294901760
    %4350 = vmatpush.msra.mxu0 %v4349
    %v4351 = vand.u32 %v4227, 4294901760
    %v4352 = vsub.f32 %v4227, %v4351
    %v4353 = vand.u32 %v4352, 4294901760
    %4354 = vmatmul.f32.gmra.mxu0 %v4353
    %v4355 = vpop.f32.mrf.mxu0
    %v4356 = vadd.f32 %v4326, %v4355
    %v4357 = vand.u32 %v4230, 4294901760
    %v4358 = vsub.f32 %v4230, %v4357
    %v4359 = vand.u32 %v4358, 4294901760
    %4360 = vmatmul.f32.gmra.mxu0 %v4359
    %v4361 = vpop.f32.mrf.mxu0
    %v4362 = vadd.f32 %v4331, %v4361
    %4363 = vdwg.mxu0
    %4364 = vmatpush.msra.mxu0 0.0
    %4365 = vmatpush.msra.mxu0 0.0
    %4366 = vmatpush.msra.mxu0 0.0
    %4367 = vmatpush.msra.mxu0 0.0
    %4368 = vmatpush.msra.mxu0 0.0
    %4369 = vmatpush.msra.mxu0 0.0
    %4370 = vmatpush.msra.mxu0 0.0
    %4371 = vmatpush.msra.mxu0 0.0
    %4372 = vmatpush.msra.mxu0 0.0
    %4373 = vmatpush.msra.mxu0 0.0
    %4374 = vmatpush.msra.mxu0 0.0
    %4375 = vmatpush.msra.mxu0 0.0
    %4376 = vmatpush.msra.mxu0 0.0
    %4377 = vmatpush.msra.mxu0 0.0
    %v4378 = vand.u32 %v62, 4294901760
    %v4379 = vsub.f32 %v62, %v4378
    %v4380 = vand.u32 %v4379, 4294901760
    %4381 = vmatpush.msra.mxu0 %v4380
    %v4382 = vand.u32 %v60, 4294901760
    %v4383 = vsub.f32 %v60, %v4382
    %v4384 = vand.u32 %v4383, 4294901760
    %4385 = vmatpush.msra.mxu0 %v4384
    %v4386 = vand.u32 %v4227, 4294901760
    %4387 = vmatmul.f32.gmra.mxu0 %v4386
    %v4388 = vpop.f32.mrf.mxu0
    %v4389 = vadd.f32 %v4356, %v4388
    %v4390 = vand.u32 %v4230, 4294901760
    %4391 = vmatmul.f32.gmra.mxu0 %v4390
    %v4392 = vpop.f32.mrf.mxu0
    %v4393 = vadd.f32 %v4362, %v4392
    %4394 = vdwg.mxu0
    %4395 = vmatpush.msra.mxu0 0.0
    %4396 = vmatpush.msra.mxu0 0.0
    %4397 = vmatpush.msra.mxu0 0.0
    %4398 = vmatpush.msra.mxu0 0.0
    %4399 = vmatpush.msra.mxu0 0.0
    %4400 = vmatpush.msra.mxu0 0.0
    %4401 = vmatpush.msra.mxu0 0.0
    %4402 = vmatpush.msra.mxu0 0.0
    %4403 = vmatpush.msra.mxu0 0.0
    %4404 = vmatpush.msra.mxu0 0.0
    %4405 = vmatpush.msra.mxu0 0.0
    %4406 = vmatpush.msra.mxu0 0.0
    %4407 = vmatpush.msra.mxu0 0.0
    %4408 = vmatpush.msra.mxu0 0.0
    %v4409 = vand.u32 %v62, 4294901760
    %4410 = vmatpush.msra.mxu0 %v4409
    %v4411 = vand.u32 %v60, 4294901760
    %4412 = vmatpush.msra.mxu0 %v4411
    %v4413 = vand.u32 %v4227, 4294901760
    %4414 = vmatmul.f32.gmra.mxu0 %v4413
    %v4415 = vpop.f32.mrf.mxu0
    %v4416 = vadd.f32 %v4389, %v4415
    %v4417 = vand.u32 %v4230, 4294901760
    %4418 = vmatmul.f32.gmra.mxu0 %v4417
    %v4419 = vpop.f32.mrf.mxu0
    %v4420 = vadd.f32 %v4393, %v4419
    %4421 = vdwg.mxu0
    %4422 = vmatpush.msra.mxu0 0.0
    %4423 = vmatpush.msra.mxu0 0.0
    %4424 = vmatpush.msra.mxu0 0.0
    %4425 = vmatpush.msra.mxu0 0.0
    %4426 = vmatpush.msra.mxu0 0.0
    %4427 = vmatpush.msra.mxu0 0.0
    %4428 = vmatpush.msra.mxu0 0.0
    %4429 = vmatpush.msra.mxu0 0.0
    %4430 = vmatpush.msra.mxu0 0.0
    %4431 = vmatpush.msra.mxu0 0.0
    %4432 = vmatpush.msra.mxu0 0.0
    %4433 = vmatpush.msra.mxu0 0.0
    %4434 = vmatpush.msra.mxu0 0.0
    %4435 = vmatpush.msra.mxu0 0.0
    %v4436 = vand.u32 %v63, 4294901760
    %4437 = vmatpush.msra.mxu0 %v4436
    %v4438 = vand.u32 %v61, 4294901760
    %4439 = vmatpush.msra.mxu0 %v4438
    %v4440 = vand.u32 %v4227, 4294901760
    %v4441 = vsub.f32 %v4227, %v4440
    %v4442 = vand.u32 %v4441, 4294901760
    %v4443 = vsub.f32 %v4441, %v4442
    %v4444 = vand.u32 %v4443, 4294901760
    %4445 = vmatmul.f32.gmra.mxu0 %v4444
    %v4446 = vpop.f32.mrf.mxu0
    %v4447 = vadd.f32 0.0, %v4446
    %v4448 = vand.u32 %v4230, 4294901760
    %v4449 = vsub.f32 %v4230, %v4448
    %v4450 = vand.u32 %v4449, 4294901760
    %v4451 = vsub.f32 %v4449, %v4450
    %v4452 = vand.u32 %v4451, 4294901760
    %4453 = vmatmul.f32.gmra.mxu0 %v4452
    %v4454 = vpop.f32.mrf.mxu0
    %v4455 = vadd.f32 0.0, %v4454
    %4456 = vdwg.mxu0
    %4457 = vmatpush.msra.mxu0 0.0
    %4458 = vmatpush.msra.mxu0 0.0
    %4459 = vmatpush.msra.mxu0 0.0
    %4460 = vmatpush.msra.mxu0 0.0
    %4461 = vmatpush.msra.mxu0 0.0
    %4462 = vmatpush.msra.mxu0 0.0
    %4463 = vmatpush.msra.mxu0 0.0
    %4464 = vmatpush.msra.mxu0 0.0
    %4465 = vmatpush.msra.mxu0 0.0
    %4466 = vmatpush.msra.mxu0 0.0
    %4467 = vmatpush.msra.mxu0 0.0
    %4468 = vmatpush.msra.mxu0 0.0
    %4469 = vmatpush.msra.mxu0 0.0
    %4470 = vmatpush.msra.mxu0 0.0
    %v4471 = vand.u32 %v63, 4294901760
    %v4472 = vsub.f32 %v63, %v4471
    %v4473 = vand.u32 %v4472, 4294901760
    %v4474 = vsub.f32 %v4472, %v4473
    %v4475 = vand.u32 %v4474, 4294901760
    %4476 = vmatpush.msra.mxu0 %v4475
    %v4477 = vand.u32 %v61, 4294901760
    %v4478 = vsub.f32 %v61, %v4477
    %v4479 = vand.u32 %v4478, 4294901760
    %v4480 = vsub.f32 %v4478, %v4479
    %v4481 = vand.u32 %v4480, 4294901760
    %4482 = vmatpush.msra.mxu0 %v4481
    %v4483 = vand.u32 %v4227, 4294901760
    %4484 = vmatmul.f32.gmra.mxu0 %v4483
    %v4485 = vpop.f32.mrf.mxu0
    %v4486 = vadd.f32 %v4447, %v4485
    %v4487 = vand.u32 %v4230, 4294901760
    %4488 = vmatmul.f32.gmra.mxu0 %v4487
    %v4489 = vpop.f32.mrf.mxu0
    %v4490 = vadd.f32 %v4455, %v4489
    %4491 = vdwg.mxu0
    %4492 = vmatpush.msra.mxu0 0.0
    %4493 = vmatpush.msra.mxu0 0.0
    %4494 = vmatpush.msra.mxu0 0.0
    %4495 = vmatpush.msra.mxu0 0.0
    %4496 = vmatpush.msra.mxu0 0.0
    %4497 = vmatpush.msra.mxu0 0.0
    %4498 = vmatpush.msra.mxu0 0.0
    %4499 = vmatpush.msra.mxu0 0.0
    %4500 = vmatpush.msra.mxu0 0.0
    %4501 = vmatpush.msra.mxu0 0.0
    %4502 = vmatpush.msra.mxu0 0.0
    %4503 = vmatpush.msra.mxu0 0.0
    %4504 = vmatpush.msra.mxu0 0.0
    %4505 = vmatpush.msra.mxu0 0.0
    %v4506 = vand.u32 %v63, 4294901760
    %v4507 = vsub.f32 %v63, %v4506
    %4508 = vmatpush.msra.mxu0 %v4507
    %v4509 = vand.u32 %v61, 4294901760
    %v4510 = vsub.f32 %v61, %v4509
    %4511 = vmatpush.msra.mxu0 %v4510
    %v4512 = vand.u32 %v4227, 4294901760
    %v4513 = vsub.f32 %v4227, %v4512
    %4514 = vmatmul.f32.gmra.mxu0 %v4513
    %v4515 = vpop.f32.mrf.mxu0
    %v4516 = vadd.f32 %v4486, %v4515
    %v4517 = vand.u32 %v4230, 4294901760
    %v4518 = vsub.f32 %v4230, %v4517
    %4519 = vmatmul.f32.gmra.mxu0 %v4518
    %v4520 = vpop.f32.mrf.mxu0
    %v4521 = vadd.f32 %v4490, %v4520
    %4522 = vdwg.mxu0
    %4523 = vmatpush.msra.mxu0 0.0
    %4524 = vmatpush.msra.mxu0 0.0
    %4525 = vmatpush.msra.mxu0 0.0
    %4526 = vmatpush.msra.mxu0 0.0
    %4527 = vmatpush.msra.mxu0 0.0
    %4528 = vmatpush.msra.mxu0 0.0
    %4529 = vmatpush.msra.mxu0 0.0
    %4530 = vmatpush.msra.mxu0 0.0
    %4531 = vmatpush.msra.mxu0 0.0
    %4532 = vmatpush.msra.mxu0 0.0
    %4533 = vmatpush.msra.mxu0 0.0
    %4534 = vmatpush.msra.mxu0 0.0
    %4535 = vmatpush.msra.mxu0 0.0
    %4536 = vmatpush.msra.mxu0 0.0
    %v4537 = vand.u32 %v63, 4294901760
    %4538 = vmatpush.msra.mxu0 %v4537
    %v4539 = vand.u32 %v61, 4294901760
    %4540 = vmatpush.msra.mxu0 %v4539
    %v4541 = vand.u32 %v4227, 4294901760
    %v4542 = vsub.f32 %v4227, %v4541
    %v4543 = vand.u32 %v4542, 4294901760
    %4544 = vmatmul.f32.gmra.mxu0 %v4543
    %v4545 = vpop.f32.mrf.mxu0
    %v4546 = vadd.f32 %v4516, %v4545
    %v4547 = vand.u32 %v4230, 4294901760
    %v4548 = vsub.f32 %v4230, %v4547
    %v4549 = vand.u32 %v4548, 4294901760
    %4550 = vmatmul.f32.gmra.mxu0 %v4549
    %v4551 = vpop.f32.mrf.mxu0
    %v4552 = vadd.f32 %v4521, %v4551
    %4553 = vdwg.mxu0
    %4554 = vmatpush.msra.mxu0 0.0
    %4555 = vmatpush.msra.mxu0 0.0
    %4556 = vmatpush.msra.mxu0 0.0
    %4557 = vmatpush.msra.mxu0 0.0
    %4558 = vmatpush.msra.mxu0 0.0
    %4559 = vmatpush.msra.mxu0 0.0
    %4560 = vmatpush.msra.mxu0 0.0
    %4561 = vmatpush.msra.mxu0 0.0
    %4562 = vmatpush.msra.mxu0 0.0
    %4563 = vmatpush.msra.mxu0 0.0
    %4564 = vmatpush.msra.mxu0 0.0
    %4565 = vmatpush.msra.mxu0 0.0
    %4566 = vmatpush.msra.mxu0 0.0
    %4567 = vmatpush.msra.mxu0 0.0
    %v4568 = vand.u32 %v63, 4294901760
    %v4569 = vsub.f32 %v63, %v4568
    %v4570 = vand.u32 %v4569, 4294901760
    %4571 = vmatpush.msra.mxu0 %v4570
    %v4572 = vand.u32 %v61, 4294901760
    %v4573 = vsub.f32 %v61, %v4572
    %v4574 = vand.u32 %v4573, 4294901760
    %4575 = vmatpush.msra.mxu0 %v4574
    %v4576 = vand.u32 %v4227, 4294901760
    %4577 = vmatmul.f32.gmra.mxu0 %v4576
    %v4578 = vpop.f32.mrf.mxu0
    %v4579 = vadd.f32 %v4546, %v4578
    %v4580 = vand.u32 %v4230, 4294901760
    %4581 = vmatmul.f32.gmra.mxu0 %v4580
    %v4582 = vpop.f32.mrf.mxu0
    %v4583 = vadd.f32 %v4552, %v4582
    %4584 = vdwg.mxu0
    %4585 = vmatpush.msra.mxu0 0.0
    %4586 = vmatpush.msra.mxu0 0.0
    %4587 = vmatpush.msra.mxu0 0.0
    %4588 = vmatpush.msra.mxu0 0.0
    %4589 = vmatpush.msra.mxu0 0.0
    %4590 = vmatpush.msra.mxu0 0.0
    %4591 = vmatpush.msra.mxu0 0.0
    %4592 = vmatpush.msra.mxu0 0.0
    %4593 = vmatpush.msra.mxu0 0.0
    %4594 = vmatpush.msra.mxu0 0.0
    %4595 = vmatpush.msra.mxu0 0.0
    %4596 = vmatpush.msra.mxu0 0.0
    %4597 = vmatpush.msra.mxu0 0.0
    %4598 = vmatpush.msra.mxu0 0.0
    %v4599 = vand.u32 %v63, 4294901760
    %4600 = vmatpush.msra.mxu0 %v4599
    %v4601 = vand.u32 %v61, 4294901760
    %4602 = vmatpush.msra.mxu0 %v4601
    %v4603 = vand.u32 %v4227, 4294901760
    %4604 = vmatmul.f32.gmra.mxu0 %v4603
    %v4605 = vpop.f32.mrf.mxu0
    %v4606 = vadd.f32 %v4579, %v4605
    %v4607 = vand.u32 %v4230, 4294901760
    %4608 = vmatmul.f32.gmra.mxu0 %v4607
    %v4609 = vpop.f32.mrf.mxu0
    %v4610 = vadd.f32 %v4583, %v4609
    %4611 = vdwg.mxu0
    %v4612 = vmul.f32 %v4416, %v21
    %v4613 = vmul.f32 %v4606, %v22
    %v4614 = vmul.f32 %v4420, %v23
    %v4615 = vmul.f32 %v4610, %v24
    %v4616 = vrot.slane %v4612, 4
    %v4617 = vadd.f32 %v4612, %v4616
    %v4618 = vrot.slane %v4617, 2
    %v4619 = vadd.f32 %v4617, %v4618
    %v4620 = vrot.slane %v4619, 1
    %v4621 = vadd.f32 %v4619, %v4620
    %v4622 = vrot.slane %v4613, 4
    %v4623 = vadd.f32 %v4613, %v4622
    %v4624 = vrot.slane %v4623, 2
    %v4625 = vadd.f32 %v4623, %v4624
    %v4626 = vrot.slane %v4625, 1
    %v4627 = vadd.f32 %v4625, %v4626
    %v4628 = vrot.slane %v4614, 4
    %v4629 = vadd.f32 %v4614, %v4628
    %v4630 = vrot.slane %v4629, 2
    %v4631 = vadd.f32 %v4629, %v4630
    %v4632 = vrot.slane %v4631, 1
    %v4633 = vadd.f32 %v4631, %v4632
    %v4634 = vrot.slane %v4615, 4
    %v4635 = vadd.f32 %v4615, %v4634
    %v4636 = vrot.slane %v4635, 2
    %v4637 = vadd.f32 %v4635, %v4636
    %v4638 = vrot.slane %v4637, 1
    %v4639 = vadd.f32 %v4637, %v4638
    %v4640 = vmul.f32 %v4621, %v4621
    %v4641 = vmul.f32 %v4627, %v4627
    %v4642 = vmul.f32 %v4633, %v4633
    %v4643 = vmul.f32 %v4639, %v4639
    %v4648 = vsel %vm100, %v4642, %v4640
    %v4649 = vsel %vm100, %v4643, %v4641
    %v4652 = vand.u32 %v43, 4294901760
    %4653 = vmatpush.msra.mxu0 %v4652
    %v4654 = vand.u32 %v42, 4294901760
    %4655 = vmatpush.msra.mxu0 %v4654
    %v4656 = vand.u32 %v41, 4294901760
    %4657 = vmatpush.msra.mxu0 %v4656
    %v4658 = vand.u32 %v40, 4294901760
    %4659 = vmatpush.msra.mxu0 %v4658
    %v4660 = vand.u32 %v39, 4294901760
    %4661 = vmatpush.msra.mxu0 %v4660
    %v4662 = vand.u32 %v38, 4294901760
    %4663 = vmatpush.msra.mxu0 %v4662
    %v4664 = vand.u32 %v37, 4294901760
    %4665 = vmatpush.msra.mxu0 %v4664
    %v4666 = vand.u32 %v36, 4294901760
    %4667 = vmatpush.msra.mxu0 %v4666
    %v4668 = vand.u32 %v35, 4294901760
    %4669 = vmatpush.msra.mxu0 %v4668
    %v4670 = vand.u32 %v34, 4294901760
    %4671 = vmatpush.msra.mxu0 %v4670
    %v4672 = vand.u32 %v33, 4294901760
    %4673 = vmatpush.msra.mxu0 %v4672
    %v4674 = vand.u32 %v32, 4294901760
    %4675 = vmatpush.msra.mxu0 %v4674
    %v4676 = vand.u32 %v31, 4294901760
    %4677 = vmatpush.msra.mxu0 %v4676
    %v4678 = vand.u32 %v30, 4294901760
    %4679 = vmatpush.msra.mxu0 %v4678
    %v4680 = vand.u32 %v29, 4294901760
    %4681 = vmatpush.msra.mxu0 %v4680
    %v4682 = vand.u32 %v28, 4294901760
    %4683 = vmatpush.msra.mxu0 %v4682
    %v4684 = vand.u32 %v4648, 4294901760
    %v4685 = vsub.f32 %v4648, %v4684
    %v4686 = vand.u32 %v4685, 4294901760
    %v4687 = vsub.f32 %v4685, %v4686
    %v4688 = vand.u32 %v4687, 4294901760
    %4689 = vmatmul.f32.gmra.mxu0 %v4688
    %v4690 = vpop.f32.mrf.mxu0
    %v4691 = vadd.f32 0.0, %v4690
    %4692 = vdwg.mxu0
    %v4693 = vand.u32 %v43, 4294901760
    %v4694 = vsub.f32 %v43, %v4693
    %v4695 = vand.u32 %v4694, 4294901760
    %v4696 = vsub.f32 %v4694, %v4695
    %v4697 = vand.u32 %v4696, 4294901760
    %4698 = vmatpush.msra.mxu0 %v4697
    %v4699 = vand.u32 %v42, 4294901760
    %v4700 = vsub.f32 %v42, %v4699
    %v4701 = vand.u32 %v4700, 4294901760
    %v4702 = vsub.f32 %v4700, %v4701
    %v4703 = vand.u32 %v4702, 4294901760
    %4704 = vmatpush.msra.mxu0 %v4703
    %v4705 = vand.u32 %v41, 4294901760
    %v4706 = vsub.f32 %v41, %v4705
    %v4707 = vand.u32 %v4706, 4294901760
    %v4708 = vsub.f32 %v4706, %v4707
    %v4709 = vand.u32 %v4708, 4294901760
    %4710 = vmatpush.msra.mxu0 %v4709
    %v4711 = vand.u32 %v40, 4294901760
    %v4712 = vsub.f32 %v40, %v4711
    %v4713 = vand.u32 %v4712, 4294901760
    %v4714 = vsub.f32 %v4712, %v4713
    %v4715 = vand.u32 %v4714, 4294901760
    %4716 = vmatpush.msra.mxu0 %v4715
    %v4717 = vand.u32 %v39, 4294901760
    %v4718 = vsub.f32 %v39, %v4717
    %v4719 = vand.u32 %v4718, 4294901760
    %v4720 = vsub.f32 %v4718, %v4719
    %v4721 = vand.u32 %v4720, 4294901760
    %4722 = vmatpush.msra.mxu0 %v4721
    %v4723 = vand.u32 %v38, 4294901760
    %v4724 = vsub.f32 %v38, %v4723
    %v4725 = vand.u32 %v4724, 4294901760
    %v4726 = vsub.f32 %v4724, %v4725
    %v4727 = vand.u32 %v4726, 4294901760
    %4728 = vmatpush.msra.mxu0 %v4727
    %v4729 = vand.u32 %v37, 4294901760
    %v4730 = vsub.f32 %v37, %v4729
    %v4731 = vand.u32 %v4730, 4294901760
    %v4732 = vsub.f32 %v4730, %v4731
    %v4733 = vand.u32 %v4732, 4294901760
    %4734 = vmatpush.msra.mxu0 %v4733
    %v4735 = vand.u32 %v36, 4294901760
    %v4736 = vsub.f32 %v36, %v4735
    %v4737 = vand.u32 %v4736, 4294901760
    %v4738 = vsub.f32 %v4736, %v4737
    %v4739 = vand.u32 %v4738, 4294901760
    %4740 = vmatpush.msra.mxu0 %v4739
    %v4741 = vand.u32 %v35, 4294901760
    %v4742 = vsub.f32 %v35, %v4741
    %v4743 = vand.u32 %v4742, 4294901760
    %v4744 = vsub.f32 %v4742, %v4743
    %v4745 = vand.u32 %v4744, 4294901760
    %4746 = vmatpush.msra.mxu0 %v4745
    %v4747 = vand.u32 %v34, 4294901760
    %v4748 = vsub.f32 %v34, %v4747
    %v4749 = vand.u32 %v4748, 4294901760
    %v4750 = vsub.f32 %v4748, %v4749
    %v4751 = vand.u32 %v4750, 4294901760
    %4752 = vmatpush.msra.mxu0 %v4751
    %v4753 = vand.u32 %v33, 4294901760
    %v4754 = vsub.f32 %v33, %v4753
    %v4755 = vand.u32 %v4754, 4294901760
    %v4756 = vsub.f32 %v4754, %v4755
    %v4757 = vand.u32 %v4756, 4294901760
    %4758 = vmatpush.msra.mxu0 %v4757
    %v4759 = vand.u32 %v32, 4294901760
    %v4760 = vsub.f32 %v32, %v4759
    %v4761 = vand.u32 %v4760, 4294901760
    %v4762 = vsub.f32 %v4760, %v4761
    %v4763 = vand.u32 %v4762, 4294901760
    %4764 = vmatpush.msra.mxu0 %v4763
    %v4765 = vand.u32 %v31, 4294901760
    %v4766 = vsub.f32 %v31, %v4765
    %v4767 = vand.u32 %v4766, 4294901760
    %v4768 = vsub.f32 %v4766, %v4767
    %v4769 = vand.u32 %v4768, 4294901760
    %4770 = vmatpush.msra.mxu0 %v4769
    %v4771 = vand.u32 %v30, 4294901760
    %v4772 = vsub.f32 %v30, %v4771
    %v4773 = vand.u32 %v4772, 4294901760
    %v4774 = vsub.f32 %v4772, %v4773
    %v4775 = vand.u32 %v4774, 4294901760
    %4776 = vmatpush.msra.mxu0 %v4775
    %v4777 = vand.u32 %v29, 4294901760
    %v4778 = vsub.f32 %v29, %v4777
    %v4779 = vand.u32 %v4778, 4294901760
    %v4780 = vsub.f32 %v4778, %v4779
    %v4781 = vand.u32 %v4780, 4294901760
    %4782 = vmatpush.msra.mxu0 %v4781
    %v4783 = vand.u32 %v28, 4294901760
    %v4784 = vsub.f32 %v28, %v4783
    %v4785 = vand.u32 %v4784, 4294901760
    %v4786 = vsub.f32 %v4784, %v4785
    %v4787 = vand.u32 %v4786, 4294901760
    %4788 = vmatpush.msra.mxu0 %v4787
    %v4789 = vand.u32 %v4648, 4294901760
    %4790 = vmatmul.f32.gmra.mxu0 %v4789
    %v4791 = vpop.f32.mrf.mxu0
    %v4792 = vadd.f32 %v4691, %v4791
    %4793 = vdwg.mxu0
    %v4794 = vand.u32 %v43, 4294901760
    %v4795 = vsub.f32 %v43, %v4794
    %4796 = vmatpush.msra.mxu0 %v4795
    %v4797 = vand.u32 %v42, 4294901760
    %v4798 = vsub.f32 %v42, %v4797
    %4799 = vmatpush.msra.mxu0 %v4798
    %v4800 = vand.u32 %v41, 4294901760
    %v4801 = vsub.f32 %v41, %v4800
    %4802 = vmatpush.msra.mxu0 %v4801
    %v4803 = vand.u32 %v40, 4294901760
    %v4804 = vsub.f32 %v40, %v4803
    %4805 = vmatpush.msra.mxu0 %v4804
    %v4806 = vand.u32 %v39, 4294901760
    %v4807 = vsub.f32 %v39, %v4806
    %4808 = vmatpush.msra.mxu0 %v4807
    %v4809 = vand.u32 %v38, 4294901760
    %v4810 = vsub.f32 %v38, %v4809
    %4811 = vmatpush.msra.mxu0 %v4810
    %v4812 = vand.u32 %v37, 4294901760
    %v4813 = vsub.f32 %v37, %v4812
    %4814 = vmatpush.msra.mxu0 %v4813
    %v4815 = vand.u32 %v36, 4294901760
    %v4816 = vsub.f32 %v36, %v4815
    %4817 = vmatpush.msra.mxu0 %v4816
    %v4818 = vand.u32 %v35, 4294901760
    %v4819 = vsub.f32 %v35, %v4818
    %4820 = vmatpush.msra.mxu0 %v4819
    %v4821 = vand.u32 %v34, 4294901760
    %v4822 = vsub.f32 %v34, %v4821
    %4823 = vmatpush.msra.mxu0 %v4822
    %v4824 = vand.u32 %v33, 4294901760
    %v4825 = vsub.f32 %v33, %v4824
    %4826 = vmatpush.msra.mxu0 %v4825
    %v4827 = vand.u32 %v32, 4294901760
    %v4828 = vsub.f32 %v32, %v4827
    %4829 = vmatpush.msra.mxu0 %v4828
    %v4830 = vand.u32 %v31, 4294901760
    %v4831 = vsub.f32 %v31, %v4830
    %4832 = vmatpush.msra.mxu0 %v4831
    %v4833 = vand.u32 %v30, 4294901760
    %v4834 = vsub.f32 %v30, %v4833
    %4835 = vmatpush.msra.mxu0 %v4834
    %v4836 = vand.u32 %v29, 4294901760
    %v4837 = vsub.f32 %v29, %v4836
    %4838 = vmatpush.msra.mxu0 %v4837
    %v4839 = vand.u32 %v28, 4294901760
    %v4840 = vsub.f32 %v28, %v4839
    %4841 = vmatpush.msra.mxu0 %v4840
    %v4842 = vand.u32 %v4648, 4294901760
    %v4843 = vsub.f32 %v4648, %v4842
    %4844 = vmatmul.f32.gmra.mxu0 %v4843
    %v4845 = vpop.f32.mrf.mxu0
    %v4846 = vadd.f32 %v4792, %v4845
    %4847 = vdwg.mxu0
    %v4848 = vand.u32 %v43, 4294901760
    %4849 = vmatpush.msra.mxu0 %v4848
    %v4850 = vand.u32 %v42, 4294901760
    %4851 = vmatpush.msra.mxu0 %v4850
    %v4852 = vand.u32 %v41, 4294901760
    %4853 = vmatpush.msra.mxu0 %v4852
    %v4854 = vand.u32 %v40, 4294901760
    %4855 = vmatpush.msra.mxu0 %v4854
    %v4856 = vand.u32 %v39, 4294901760
    %4857 = vmatpush.msra.mxu0 %v4856
    %v4858 = vand.u32 %v38, 4294901760
    %4859 = vmatpush.msra.mxu0 %v4858
    %v4860 = vand.u32 %v37, 4294901760
    %4861 = vmatpush.msra.mxu0 %v4860
    %v4862 = vand.u32 %v36, 4294901760
    %4863 = vmatpush.msra.mxu0 %v4862
    %v4864 = vand.u32 %v35, 4294901760
    %4865 = vmatpush.msra.mxu0 %v4864
    %v4866 = vand.u32 %v34, 4294901760
    %4867 = vmatpush.msra.mxu0 %v4866
    %v4868 = vand.u32 %v33, 4294901760
    %4869 = vmatpush.msra.mxu0 %v4868
    %v4870 = vand.u32 %v32, 4294901760
    %4871 = vmatpush.msra.mxu0 %v4870
    %v4872 = vand.u32 %v31, 4294901760
    %4873 = vmatpush.msra.mxu0 %v4872
    %v4874 = vand.u32 %v30, 4294901760
    %4875 = vmatpush.msra.mxu0 %v4874
    %v4876 = vand.u32 %v29, 4294901760
    %4877 = vmatpush.msra.mxu0 %v4876
    %v4878 = vand.u32 %v28, 4294901760
    %4879 = vmatpush.msra.mxu0 %v4878
    %v4880 = vand.u32 %v4648, 4294901760
    %v4881 = vsub.f32 %v4648, %v4880
    %v4882 = vand.u32 %v4881, 4294901760
    %4883 = vmatmul.f32.gmra.mxu0 %v4882
    %v4884 = vpop.f32.mrf.mxu0
    %v4885 = vadd.f32 %v4846, %v4884
    %4886 = vdwg.mxu0
    %v4887 = vand.u32 %v43, 4294901760
    %v4888 = vsub.f32 %v43, %v4887
    %v4889 = vand.u32 %v4888, 4294901760
    %4890 = vmatpush.msra.mxu0 %v4889
    %v4891 = vand.u32 %v42, 4294901760
    %v4892 = vsub.f32 %v42, %v4891
    %v4893 = vand.u32 %v4892, 4294901760
    %4894 = vmatpush.msra.mxu0 %v4893
    %v4895 = vand.u32 %v41, 4294901760
    %v4896 = vsub.f32 %v41, %v4895
    %v4897 = vand.u32 %v4896, 4294901760
    %4898 = vmatpush.msra.mxu0 %v4897
    %v4899 = vand.u32 %v40, 4294901760
    %v4900 = vsub.f32 %v40, %v4899
    %v4901 = vand.u32 %v4900, 4294901760
    %4902 = vmatpush.msra.mxu0 %v4901
    %v4903 = vand.u32 %v39, 4294901760
    %v4904 = vsub.f32 %v39, %v4903
    %v4905 = vand.u32 %v4904, 4294901760
    %4906 = vmatpush.msra.mxu0 %v4905
    %v4907 = vand.u32 %v38, 4294901760
    %v4908 = vsub.f32 %v38, %v4907
    %v4909 = vand.u32 %v4908, 4294901760
    %4910 = vmatpush.msra.mxu0 %v4909
    %v4911 = vand.u32 %v37, 4294901760
    %v4912 = vsub.f32 %v37, %v4911
    %v4913 = vand.u32 %v4912, 4294901760
    %4914 = vmatpush.msra.mxu0 %v4913
    %v4915 = vand.u32 %v36, 4294901760
    %v4916 = vsub.f32 %v36, %v4915
    %v4917 = vand.u32 %v4916, 4294901760
    %4918 = vmatpush.msra.mxu0 %v4917
    %v4919 = vand.u32 %v35, 4294901760
    %v4920 = vsub.f32 %v35, %v4919
    %v4921 = vand.u32 %v4920, 4294901760
    %4922 = vmatpush.msra.mxu0 %v4921
    %v4923 = vand.u32 %v34, 4294901760
    %v4924 = vsub.f32 %v34, %v4923
    %v4925 = vand.u32 %v4924, 4294901760
    %4926 = vmatpush.msra.mxu0 %v4925
    %v4927 = vand.u32 %v33, 4294901760
    %v4928 = vsub.f32 %v33, %v4927
    %v4929 = vand.u32 %v4928, 4294901760
    %4930 = vmatpush.msra.mxu0 %v4929
    %v4931 = vand.u32 %v32, 4294901760
    %v4932 = vsub.f32 %v32, %v4931
    %v4933 = vand.u32 %v4932, 4294901760
    %4934 = vmatpush.msra.mxu0 %v4933
    %v4935 = vand.u32 %v31, 4294901760
    %v4936 = vsub.f32 %v31, %v4935
    %v4937 = vand.u32 %v4936, 4294901760
    %4938 = vmatpush.msra.mxu0 %v4937
    %v4939 = vand.u32 %v30, 4294901760
    %v4940 = vsub.f32 %v30, %v4939
    %v4941 = vand.u32 %v4940, 4294901760
    %4942 = vmatpush.msra.mxu0 %v4941
    %v4943 = vand.u32 %v29, 4294901760
    %v4944 = vsub.f32 %v29, %v4943
    %v4945 = vand.u32 %v4944, 4294901760
    %4946 = vmatpush.msra.mxu0 %v4945
    %v4947 = vand.u32 %v28, 4294901760
    %v4948 = vsub.f32 %v28, %v4947
    %v4949 = vand.u32 %v4948, 4294901760
    %4950 = vmatpush.msra.mxu0 %v4949
    %v4951 = vand.u32 %v4648, 4294901760
    %4952 = vmatmul.f32.gmra.mxu0 %v4951
    %v4953 = vpop.f32.mrf.mxu0
    %v4954 = vadd.f32 %v4885, %v4953
    %4955 = vdwg.mxu0
    %v4956 = vand.u32 %v43, 4294901760
    %4957 = vmatpush.msra.mxu0 %v4956
    %v4958 = vand.u32 %v42, 4294901760
    %4959 = vmatpush.msra.mxu0 %v4958
    %v4960 = vand.u32 %v41, 4294901760
    %4961 = vmatpush.msra.mxu0 %v4960
    %v4962 = vand.u32 %v40, 4294901760
    %4963 = vmatpush.msra.mxu0 %v4962
    %v4964 = vand.u32 %v39, 4294901760
    %4965 = vmatpush.msra.mxu0 %v4964
    %v4966 = vand.u32 %v38, 4294901760
    %4967 = vmatpush.msra.mxu0 %v4966
    %v4968 = vand.u32 %v37, 4294901760
    %4969 = vmatpush.msra.mxu0 %v4968
    %v4970 = vand.u32 %v36, 4294901760
    %4971 = vmatpush.msra.mxu0 %v4970
    %v4972 = vand.u32 %v35, 4294901760
    %4973 = vmatpush.msra.mxu0 %v4972
    %v4974 = vand.u32 %v34, 4294901760
    %4975 = vmatpush.msra.mxu0 %v4974
    %v4976 = vand.u32 %v33, 4294901760
    %4977 = vmatpush.msra.mxu0 %v4976
    %v4978 = vand.u32 %v32, 4294901760
    %4979 = vmatpush.msra.mxu0 %v4978
    %v4980 = vand.u32 %v31, 4294901760
    %4981 = vmatpush.msra.mxu0 %v4980
    %v4982 = vand.u32 %v30, 4294901760
    %4983 = vmatpush.msra.mxu0 %v4982
    %v4984 = vand.u32 %v29, 4294901760
    %4985 = vmatpush.msra.mxu0 %v4984
    %v4986 = vand.u32 %v28, 4294901760
    %4987 = vmatpush.msra.mxu0 %v4986
    %v4988 = vand.u32 %v4648, 4294901760
    %4989 = vmatmul.f32.gmra.mxu0 %v4988
    %v4990 = vpop.f32.mrf.mxu0
    %v4991 = vadd.f32 %v4954, %v4990
    %4992 = vdwg.mxu0
    %v4993 = vand.u32 %v59, 4294901760
    %4994 = vmatpush.msra.mxu0 %v4993
    %v4995 = vand.u32 %v58, 4294901760
    %4996 = vmatpush.msra.mxu0 %v4995
    %v4997 = vand.u32 %v57, 4294901760
    %4998 = vmatpush.msra.mxu0 %v4997
    %v4999 = vand.u32 %v56, 4294901760
    %5000 = vmatpush.msra.mxu0 %v4999
    %v5001 = vand.u32 %v55, 4294901760
    %5002 = vmatpush.msra.mxu0 %v5001
    %v5003 = vand.u32 %v54, 4294901760
    %5004 = vmatpush.msra.mxu0 %v5003
    %v5005 = vand.u32 %v53, 4294901760
    %5006 = vmatpush.msra.mxu0 %v5005
    %v5007 = vand.u32 %v52, 4294901760
    %5008 = vmatpush.msra.mxu0 %v5007
    %v5009 = vand.u32 %v51, 4294901760
    %5010 = vmatpush.msra.mxu0 %v5009
    %v5011 = vand.u32 %v50, 4294901760
    %5012 = vmatpush.msra.mxu0 %v5011
    %v5013 = vand.u32 %v49, 4294901760
    %5014 = vmatpush.msra.mxu0 %v5013
    %v5015 = vand.u32 %v48, 4294901760
    %5016 = vmatpush.msra.mxu0 %v5015
    %v5017 = vand.u32 %v47, 4294901760
    %5018 = vmatpush.msra.mxu0 %v5017
    %v5019 = vand.u32 %v46, 4294901760
    %5020 = vmatpush.msra.mxu0 %v5019
    %v5021 = vand.u32 %v45, 4294901760
    %5022 = vmatpush.msra.mxu0 %v5021
    %v5023 = vand.u32 %v44, 4294901760
    %5024 = vmatpush.msra.mxu0 %v5023
    %v5025 = vand.u32 %v4649, 4294901760
    %v5026 = vsub.f32 %v4649, %v5025
    %v5027 = vand.u32 %v5026, 4294901760
    %v5028 = vsub.f32 %v5026, %v5027
    %v5029 = vand.u32 %v5028, 4294901760
    %5030 = vmatmul.f32.gmra.mxu0 %v5029
    %v5031 = vpop.f32.mrf.mxu0
    %v5032 = vadd.f32 %v4991, %v5031
    %5033 = vdwg.mxu0
    %v5034 = vand.u32 %v59, 4294901760
    %v5035 = vsub.f32 %v59, %v5034
    %v5036 = vand.u32 %v5035, 4294901760
    %v5037 = vsub.f32 %v5035, %v5036
    %v5038 = vand.u32 %v5037, 4294901760
    %5039 = vmatpush.msra.mxu0 %v5038
    %v5040 = vand.u32 %v58, 4294901760
    %v5041 = vsub.f32 %v58, %v5040
    %v5042 = vand.u32 %v5041, 4294901760
    %v5043 = vsub.f32 %v5041, %v5042
    %v5044 = vand.u32 %v5043, 4294901760
    %5045 = vmatpush.msra.mxu0 %v5044
    %v5046 = vand.u32 %v57, 4294901760
    %v5047 = vsub.f32 %v57, %v5046
    %v5048 = vand.u32 %v5047, 4294901760
    %v5049 = vsub.f32 %v5047, %v5048
    %v5050 = vand.u32 %v5049, 4294901760
    %5051 = vmatpush.msra.mxu0 %v5050
    %v5052 = vand.u32 %v56, 4294901760
    %v5053 = vsub.f32 %v56, %v5052
    %v5054 = vand.u32 %v5053, 4294901760
    %v5055 = vsub.f32 %v5053, %v5054
    %v5056 = vand.u32 %v5055, 4294901760
    %5057 = vmatpush.msra.mxu0 %v5056
    %v5058 = vand.u32 %v55, 4294901760
    %v5059 = vsub.f32 %v55, %v5058
    %v5060 = vand.u32 %v5059, 4294901760
    %v5061 = vsub.f32 %v5059, %v5060
    %v5062 = vand.u32 %v5061, 4294901760
    %5063 = vmatpush.msra.mxu0 %v5062
    %v5064 = vand.u32 %v54, 4294901760
    %v5065 = vsub.f32 %v54, %v5064
    %v5066 = vand.u32 %v5065, 4294901760
    %v5067 = vsub.f32 %v5065, %v5066
    %v5068 = vand.u32 %v5067, 4294901760
    %5069 = vmatpush.msra.mxu0 %v5068
    %v5070 = vand.u32 %v53, 4294901760
    %v5071 = vsub.f32 %v53, %v5070
    %v5072 = vand.u32 %v5071, 4294901760
    %v5073 = vsub.f32 %v5071, %v5072
    %v5074 = vand.u32 %v5073, 4294901760
    %5075 = vmatpush.msra.mxu0 %v5074
    %v5076 = vand.u32 %v52, 4294901760
    %v5077 = vsub.f32 %v52, %v5076
    %v5078 = vand.u32 %v5077, 4294901760
    %v5079 = vsub.f32 %v5077, %v5078
    %v5080 = vand.u32 %v5079, 4294901760
    %5081 = vmatpush.msra.mxu0 %v5080
    %v5082 = vand.u32 %v51, 4294901760
    %v5083 = vsub.f32 %v51, %v5082
    %v5084 = vand.u32 %v5083, 4294901760
    %v5085 = vsub.f32 %v5083, %v5084
    %v5086 = vand.u32 %v5085, 4294901760
    %5087 = vmatpush.msra.mxu0 %v5086
    %v5088 = vand.u32 %v50, 4294901760
    %v5089 = vsub.f32 %v50, %v5088
    %v5090 = vand.u32 %v5089, 4294901760
    %v5091 = vsub.f32 %v5089, %v5090
    %v5092 = vand.u32 %v5091, 4294901760
    %5093 = vmatpush.msra.mxu0 %v5092
    %v5094 = vand.u32 %v49, 4294901760
    %v5095 = vsub.f32 %v49, %v5094
    %v5096 = vand.u32 %v5095, 4294901760
    %v5097 = vsub.f32 %v5095, %v5096
    %v5098 = vand.u32 %v5097, 4294901760
    %5099 = vmatpush.msra.mxu0 %v5098
    %v5100 = vand.u32 %v48, 4294901760
    %v5101 = vsub.f32 %v48, %v5100
    %v5102 = vand.u32 %v5101, 4294901760
    %v5103 = vsub.f32 %v5101, %v5102
    %v5104 = vand.u32 %v5103, 4294901760
    %5105 = vmatpush.msra.mxu0 %v5104
    %v5106 = vand.u32 %v47, 4294901760
    %v5107 = vsub.f32 %v47, %v5106
    %v5108 = vand.u32 %v5107, 4294901760
    %v5109 = vsub.f32 %v5107, %v5108
    %v5110 = vand.u32 %v5109, 4294901760
    %5111 = vmatpush.msra.mxu0 %v5110
    %v5112 = vand.u32 %v46, 4294901760
    %v5113 = vsub.f32 %v46, %v5112
    %v5114 = vand.u32 %v5113, 4294901760
    %v5115 = vsub.f32 %v5113, %v5114
    %v5116 = vand.u32 %v5115, 4294901760
    %5117 = vmatpush.msra.mxu0 %v5116
    %v5118 = vand.u32 %v45, 4294901760
    %v5119 = vsub.f32 %v45, %v5118
    %v5120 = vand.u32 %v5119, 4294901760
    %v5121 = vsub.f32 %v5119, %v5120
    %v5122 = vand.u32 %v5121, 4294901760
    %5123 = vmatpush.msra.mxu0 %v5122
    %v5124 = vand.u32 %v44, 4294901760
    %v5125 = vsub.f32 %v44, %v5124
    %v5126 = vand.u32 %v5125, 4294901760
    %v5127 = vsub.f32 %v5125, %v5126
    %v5128 = vand.u32 %v5127, 4294901760
    %5129 = vmatpush.msra.mxu0 %v5128
    %v5130 = vand.u32 %v4649, 4294901760
    %5131 = vmatmul.f32.gmra.mxu0 %v5130
    %v5132 = vpop.f32.mrf.mxu0
    %v5133 = vadd.f32 %v5032, %v5132
    %5134 = vdwg.mxu0
    %v5135 = vand.u32 %v59, 4294901760
    %v5136 = vsub.f32 %v59, %v5135
    %5137 = vmatpush.msra.mxu0 %v5136
    %v5138 = vand.u32 %v58, 4294901760
    %v5139 = vsub.f32 %v58, %v5138
    %5140 = vmatpush.msra.mxu0 %v5139
    %v5141 = vand.u32 %v57, 4294901760
    %v5142 = vsub.f32 %v57, %v5141
    %5143 = vmatpush.msra.mxu0 %v5142
    %v5144 = vand.u32 %v56, 4294901760
    %v5145 = vsub.f32 %v56, %v5144
    %5146 = vmatpush.msra.mxu0 %v5145
    %v5147 = vand.u32 %v55, 4294901760
    %v5148 = vsub.f32 %v55, %v5147
    %5149 = vmatpush.msra.mxu0 %v5148
    %v5150 = vand.u32 %v54, 4294901760
    %v5151 = vsub.f32 %v54, %v5150
    %5152 = vmatpush.msra.mxu0 %v5151
    %v5153 = vand.u32 %v53, 4294901760
    %v5154 = vsub.f32 %v53, %v5153
    %5155 = vmatpush.msra.mxu0 %v5154
    %v5156 = vand.u32 %v52, 4294901760
    %v5157 = vsub.f32 %v52, %v5156
    %5158 = vmatpush.msra.mxu0 %v5157
    %v5159 = vand.u32 %v51, 4294901760
    %v5160 = vsub.f32 %v51, %v5159
    %5161 = vmatpush.msra.mxu0 %v5160
    %v5162 = vand.u32 %v50, 4294901760
    %v5163 = vsub.f32 %v50, %v5162
    %5164 = vmatpush.msra.mxu0 %v5163
    %v5165 = vand.u32 %v49, 4294901760
    %v5166 = vsub.f32 %v49, %v5165
    %5167 = vmatpush.msra.mxu0 %v5166
    %v5168 = vand.u32 %v48, 4294901760
    %v5169 = vsub.f32 %v48, %v5168
    %5170 = vmatpush.msra.mxu0 %v5169
    %v5171 = vand.u32 %v47, 4294901760
    %v5172 = vsub.f32 %v47, %v5171
    %5173 = vmatpush.msra.mxu0 %v5172
    %v5174 = vand.u32 %v46, 4294901760
    %v5175 = vsub.f32 %v46, %v5174
    %5176 = vmatpush.msra.mxu0 %v5175
    %v5177 = vand.u32 %v45, 4294901760
    %v5178 = vsub.f32 %v45, %v5177
    %5179 = vmatpush.msra.mxu0 %v5178
    %v5180 = vand.u32 %v44, 4294901760
    %v5181 = vsub.f32 %v44, %v5180
    %5182 = vmatpush.msra.mxu0 %v5181
    %v5183 = vand.u32 %v4649, 4294901760
    %v5184 = vsub.f32 %v4649, %v5183
    %5185 = vmatmul.f32.gmra.mxu0 %v5184
    %v5186 = vpop.f32.mrf.mxu0
    %v5187 = vadd.f32 %v5133, %v5186
    %5188 = vdwg.mxu0
    %v5189 = vand.u32 %v59, 4294901760
    %5190 = vmatpush.msra.mxu0 %v5189
    %v5191 = vand.u32 %v58, 4294901760
    %5192 = vmatpush.msra.mxu0 %v5191
    %v5193 = vand.u32 %v57, 4294901760
    %5194 = vmatpush.msra.mxu0 %v5193
    %v5195 = vand.u32 %v56, 4294901760
    %5196 = vmatpush.msra.mxu0 %v5195
    %v5197 = vand.u32 %v55, 4294901760
    %5198 = vmatpush.msra.mxu0 %v5197
    %v5199 = vand.u32 %v54, 4294901760
    %5200 = vmatpush.msra.mxu0 %v5199
    %v5201 = vand.u32 %v53, 4294901760
    %5202 = vmatpush.msra.mxu0 %v5201
    %v5203 = vand.u32 %v52, 4294901760
    %5204 = vmatpush.msra.mxu0 %v5203
    %v5205 = vand.u32 %v51, 4294901760
    %5206 = vmatpush.msra.mxu0 %v5205
    %v5207 = vand.u32 %v50, 4294901760
    %5208 = vmatpush.msra.mxu0 %v5207
    %v5209 = vand.u32 %v49, 4294901760
    %5210 = vmatpush.msra.mxu0 %v5209
    %v5211 = vand.u32 %v48, 4294901760
    %5212 = vmatpush.msra.mxu0 %v5211
    %v5213 = vand.u32 %v47, 4294901760
    %5214 = vmatpush.msra.mxu0 %v5213
    %v5215 = vand.u32 %v46, 4294901760
    %5216 = vmatpush.msra.mxu0 %v5215
    %v5217 = vand.u32 %v45, 4294901760
    %5218 = vmatpush.msra.mxu0 %v5217
    %v5219 = vand.u32 %v44, 4294901760
    %5220 = vmatpush.msra.mxu0 %v5219
    %v5221 = vand.u32 %v4649, 4294901760
    %v5222 = vsub.f32 %v4649, %v5221
    %v5223 = vand.u32 %v5222, 4294901760
    %5224 = vmatmul.f32.gmra.mxu0 %v5223
    %v5225 = vpop.f32.mrf.mxu0
    %v5226 = vadd.f32 %v5187, %v5225
    %5227 = vdwg.mxu0
    %v5228 = vand.u32 %v59, 4294901760
    %v5229 = vsub.f32 %v59, %v5228
    %v5230 = vand.u32 %v5229, 4294901760
    %5231 = vmatpush.msra.mxu0 %v5230
    %v5232 = vand.u32 %v58, 4294901760
    %v5233 = vsub.f32 %v58, %v5232
    %v5234 = vand.u32 %v5233, 4294901760
    %5235 = vmatpush.msra.mxu0 %v5234
    %v5236 = vand.u32 %v57, 4294901760
    %v5237 = vsub.f32 %v57, %v5236
    %v5238 = vand.u32 %v5237, 4294901760
    %5239 = vmatpush.msra.mxu0 %v5238
    %v5240 = vand.u32 %v56, 4294901760
    %v5241 = vsub.f32 %v56, %v5240
    %v5242 = vand.u32 %v5241, 4294901760
    %5243 = vmatpush.msra.mxu0 %v5242
    %v5244 = vand.u32 %v55, 4294901760
    %v5245 = vsub.f32 %v55, %v5244
    %v5246 = vand.u32 %v5245, 4294901760
    %5247 = vmatpush.msra.mxu0 %v5246
    %v5248 = vand.u32 %v54, 4294901760
    %v5249 = vsub.f32 %v54, %v5248
    %v5250 = vand.u32 %v5249, 4294901760
    %5251 = vmatpush.msra.mxu0 %v5250
    %v5252 = vand.u32 %v53, 4294901760
    %v5253 = vsub.f32 %v53, %v5252
    %v5254 = vand.u32 %v5253, 4294901760
    %5255 = vmatpush.msra.mxu0 %v5254
    %v5256 = vand.u32 %v52, 4294901760
    %v5257 = vsub.f32 %v52, %v5256
    %v5258 = vand.u32 %v5257, 4294901760
    %5259 = vmatpush.msra.mxu0 %v5258
    %v5260 = vand.u32 %v51, 4294901760
    %v5261 = vsub.f32 %v51, %v5260
    %v5262 = vand.u32 %v5261, 4294901760
    %5263 = vmatpush.msra.mxu0 %v5262
    %v5264 = vand.u32 %v50, 4294901760
    %v5265 = vsub.f32 %v50, %v5264
    %v5266 = vand.u32 %v5265, 4294901760
    %5267 = vmatpush.msra.mxu0 %v5266
    %v5268 = vand.u32 %v49, 4294901760
    %v5269 = vsub.f32 %v49, %v5268
    %v5270 = vand.u32 %v5269, 4294901760
    %5271 = vmatpush.msra.mxu0 %v5270
    %v5272 = vand.u32 %v48, 4294901760
    %v5273 = vsub.f32 %v48, %v5272
    %v5274 = vand.u32 %v5273, 4294901760
    %5275 = vmatpush.msra.mxu0 %v5274
    %v5276 = vand.u32 %v47, 4294901760
    %v5277 = vsub.f32 %v47, %v5276
    %v5278 = vand.u32 %v5277, 4294901760
    %5279 = vmatpush.msra.mxu0 %v5278
    %v5280 = vand.u32 %v46, 4294901760
    %v5281 = vsub.f32 %v46, %v5280
    %v5282 = vand.u32 %v5281, 4294901760
    %5283 = vmatpush.msra.mxu0 %v5282
    %v5284 = vand.u32 %v45, 4294901760
    %v5285 = vsub.f32 %v45, %v5284
    %v5286 = vand.u32 %v5285, 4294901760
    %5287 = vmatpush.msra.mxu0 %v5286
    %v5288 = vand.u32 %v44, 4294901760
    %v5289 = vsub.f32 %v44, %v5288
    %v5290 = vand.u32 %v5289, 4294901760
    %5291 = vmatpush.msra.mxu0 %v5290
    %v5292 = vand.u32 %v4649, 4294901760
    %5293 = vmatmul.f32.gmra.mxu0 %v5292
    %v5294 = vpop.f32.mrf.mxu0
    %v5295 = vadd.f32 %v5226, %v5294
    %5296 = vdwg.mxu0
    %v5297 = vand.u32 %v59, 4294901760
    %5298 = vmatpush.msra.mxu0 %v5297
    %v5299 = vand.u32 %v58, 4294901760
    %5300 = vmatpush.msra.mxu0 %v5299
    %v5301 = vand.u32 %v57, 4294901760
    %5302 = vmatpush.msra.mxu0 %v5301
    %v5303 = vand.u32 %v56, 4294901760
    %5304 = vmatpush.msra.mxu0 %v5303
    %v5305 = vand.u32 %v55, 4294901760
    %5306 = vmatpush.msra.mxu0 %v5305
    %v5307 = vand.u32 %v54, 4294901760
    %5308 = vmatpush.msra.mxu0 %v5307
    %v5309 = vand.u32 %v53, 4294901760
    %5310 = vmatpush.msra.mxu0 %v5309
    %v5311 = vand.u32 %v52, 4294901760
    %5312 = vmatpush.msra.mxu0 %v5311
    %v5313 = vand.u32 %v51, 4294901760
    %5314 = vmatpush.msra.mxu0 %v5313
    %v5315 = vand.u32 %v50, 4294901760
    %5316 = vmatpush.msra.mxu0 %v5315
    %v5317 = vand.u32 %v49, 4294901760
    %5318 = vmatpush.msra.mxu0 %v5317
    %v5319 = vand.u32 %v48, 4294901760
    %5320 = vmatpush.msra.mxu0 %v5319
    %v5321 = vand.u32 %v47, 4294901760
    %5322 = vmatpush.msra.mxu0 %v5321
    %v5323 = vand.u32 %v46, 4294901760
    %5324 = vmatpush.msra.mxu0 %v5323
    %v5325 = vand.u32 %v45, 4294901760
    %5326 = vmatpush.msra.mxu0 %v5325
    %v5327 = vand.u32 %v44, 4294901760
    %5328 = vmatpush.msra.mxu0 %v5327
    %v5329 = vand.u32 %v4649, 4294901760
    %5330 = vmatmul.f32.gmra.mxu0 %v5329
    %v5331 = vpop.f32.mrf.mxu0
    %v5332 = vadd.f32 %v5295, %v5331
    %5333 = vdwg.mxu0
    %v5334 = vadd.f32 %v5332, 1.0
    %v5335 = vadd.f32 %v5332, 1e-12
    %v5336 = vrsqrt.pop %v5335
    %v5337 = vmul.f32 %v5336, %v5335
    %v5338 = vmul.f32 %v5337, %v5336
    %v5339 = vmul.f32 0.5, %v5338
    %v5340 = vsub.f32 1.5, %v5339
    %v5341 = vmul.f32 %v5336, %v5340
    %v5342 = vmul.f32 %v5335, %v5341
    %vm5343 = vcmp.eq.f32.partialorder %v5335, inf
    %v5344 = vsel %vm5343, %v5335, %v5342
    %vm5345 = vcmp.eq.f32.partialorder %v5335, 0.0
    %v5346 = vand.u32 %v5335, 2147483648
    %v5347 = vsel %vm5345, %v5346, %v5344
    %v5348 = vmul.f32 %v5334, %v5347
    %v5349 = vrcp.pop %v5348
    %v5350 = vmul.f32 %v5348, %v5349
    %v5351 = vsub.f32 1.0, %v5350
    %v5352 = vmul.f32 %v5349, %v5351
    %v5353 = vadd.f32 %v5349, %v5352
    %vm5354 = vweird.f32 %v5348
    %vm5355 = vweird.f32 %v5349
    %vm5356 = vmor %vm5354, %vm5355
    %v5357 = vsel %vm5356, %v5349, %v5353
    %v5358 = vand.u32 2147483647, %v5348
    %vm5359 = vcmp.eq.f32.partialorder %v5358, 8.507059e+37
    %v5360 = vand.u32 %v5348, 2147483648
    %v5361 = vor.u32 1.1754944e-38, %v5360
    %v5362 = vsel %vm5359, %v5361, %v5357
    %v5363 = vmul.f32 %v5332, %v5362
    %v5365 = vsel %vm817, %v5363, 0
    %5367 = vmatpush.msra.mxu0 0.0
    %5368 = vmatpush.msra.mxu0 0.0
    %5369 = vmatpush.msra.mxu0 0.0
    %5370 = vmatpush.msra.mxu0 0.0
    %5371 = vmatpush.msra.mxu0 0.0
    %5372 = vmatpush.msra.mxu0 0.0
    %5373 = vmatpush.msra.mxu0 0.0
    %5374 = vmatpush.msra.mxu0 0.0
    %5375 = vmatpush.msra.mxu0 0.0
    %5376 = vmatpush.msra.mxu0 0.0
    %5377 = vmatpush.msra.mxu0 0.0
    %5378 = vmatpush.msra.mxu0 0.0
    %5379 = vmatpush.msra.mxu0 0.0
    %5380 = vmatpush.msra.mxu0 0.0
    %v5381 = vand.u32 %v62, 4294901760
    %5382 = vmatpush.msra.mxu0 %v5381
    %v5383 = vand.u32 %v60, 4294901760
    %5384 = vmatpush.msra.mxu0 %v5383
    %v5385 = vand.u32 %v5365, 4294901760
    %v5386 = vsub.f32 %v5365, %v5385
    %v5387 = vand.u32 %v5386, 4294901760
    %v5388 = vsub.f32 %v5386, %v5387
    %v5389 = vand.u32 %v5388, 4294901760
    %5390 = vmatmul.f32.gmra.mxu0 %v5389
    %v5391 = vpop.f32.mrf.mxu0
    %v5392 = vadd.f32 0.0, %v5391
    %5393 = vdwg.mxu0
    %5394 = vmatpush.msra.mxu0 0.0
    %5395 = vmatpush.msra.mxu0 0.0
    %5396 = vmatpush.msra.mxu0 0.0
    %5397 = vmatpush.msra.mxu0 0.0
    %5398 = vmatpush.msra.mxu0 0.0
    %5399 = vmatpush.msra.mxu0 0.0
    %5400 = vmatpush.msra.mxu0 0.0
    %5401 = vmatpush.msra.mxu0 0.0
    %5402 = vmatpush.msra.mxu0 0.0
    %5403 = vmatpush.msra.mxu0 0.0
    %5404 = vmatpush.msra.mxu0 0.0
    %5405 = vmatpush.msra.mxu0 0.0
    %5406 = vmatpush.msra.mxu0 0.0
    %5407 = vmatpush.msra.mxu0 0.0
    %v5408 = vand.u32 %v62, 4294901760
    %v5409 = vsub.f32 %v62, %v5408
    %v5410 = vand.u32 %v5409, 4294901760
    %v5411 = vsub.f32 %v5409, %v5410
    %v5412 = vand.u32 %v5411, 4294901760
    %5413 = vmatpush.msra.mxu0 %v5412
    %v5414 = vand.u32 %v60, 4294901760
    %v5415 = vsub.f32 %v60, %v5414
    %v5416 = vand.u32 %v5415, 4294901760
    %v5417 = vsub.f32 %v5415, %v5416
    %v5418 = vand.u32 %v5417, 4294901760
    %5419 = vmatpush.msra.mxu0 %v5418
    %v5420 = vand.u32 %v5365, 4294901760
    %5421 = vmatmul.f32.gmra.mxu0 %v5420
    %v5422 = vpop.f32.mrf.mxu0
    %v5423 = vadd.f32 %v5392, %v5422
    %5424 = vdwg.mxu0
    %5425 = vmatpush.msra.mxu0 0.0
    %5426 = vmatpush.msra.mxu0 0.0
    %5427 = vmatpush.msra.mxu0 0.0
    %5428 = vmatpush.msra.mxu0 0.0
    %5429 = vmatpush.msra.mxu0 0.0
    %5430 = vmatpush.msra.mxu0 0.0
    %5431 = vmatpush.msra.mxu0 0.0
    %5432 = vmatpush.msra.mxu0 0.0
    %5433 = vmatpush.msra.mxu0 0.0
    %5434 = vmatpush.msra.mxu0 0.0
    %5435 = vmatpush.msra.mxu0 0.0
    %5436 = vmatpush.msra.mxu0 0.0
    %5437 = vmatpush.msra.mxu0 0.0
    %5438 = vmatpush.msra.mxu0 0.0
    %v5439 = vand.u32 %v62, 4294901760
    %v5440 = vsub.f32 %v62, %v5439
    %5441 = vmatpush.msra.mxu0 %v5440
    %v5442 = vand.u32 %v60, 4294901760
    %v5443 = vsub.f32 %v60, %v5442
    %5444 = vmatpush.msra.mxu0 %v5443
    %v5445 = vand.u32 %v5365, 4294901760
    %v5446 = vsub.f32 %v5365, %v5445
    %5447 = vmatmul.f32.gmra.mxu0 %v5446
    %v5448 = vpop.f32.mrf.mxu0
    %v5449 = vadd.f32 %v5423, %v5448
    %5450 = vdwg.mxu0
    %5451 = vmatpush.msra.mxu0 0.0
    %5452 = vmatpush.msra.mxu0 0.0
    %5453 = vmatpush.msra.mxu0 0.0
    %5454 = vmatpush.msra.mxu0 0.0
    %5455 = vmatpush.msra.mxu0 0.0
    %5456 = vmatpush.msra.mxu0 0.0
    %5457 = vmatpush.msra.mxu0 0.0
    %5458 = vmatpush.msra.mxu0 0.0
    %5459 = vmatpush.msra.mxu0 0.0
    %5460 = vmatpush.msra.mxu0 0.0
    %5461 = vmatpush.msra.mxu0 0.0
    %5462 = vmatpush.msra.mxu0 0.0
    %5463 = vmatpush.msra.mxu0 0.0
    %5464 = vmatpush.msra.mxu0 0.0
    %v5465 = vand.u32 %v62, 4294901760
    %5466 = vmatpush.msra.mxu0 %v5465
    %v5467 = vand.u32 %v60, 4294901760
    %5468 = vmatpush.msra.mxu0 %v5467
    %v5469 = vand.u32 %v5365, 4294901760
    %v5470 = vsub.f32 %v5365, %v5469
    %v5471 = vand.u32 %v5470, 4294901760
    %5472 = vmatmul.f32.gmra.mxu0 %v5471
    %v5473 = vpop.f32.mrf.mxu0
    %v5474 = vadd.f32 %v5449, %v5473
    %5475 = vdwg.mxu0
    %5476 = vmatpush.msra.mxu0 0.0
    %5477 = vmatpush.msra.mxu0 0.0
    %5478 = vmatpush.msra.mxu0 0.0
    %5479 = vmatpush.msra.mxu0 0.0
    %5480 = vmatpush.msra.mxu0 0.0
    %5481 = vmatpush.msra.mxu0 0.0
    %5482 = vmatpush.msra.mxu0 0.0
    %5483 = vmatpush.msra.mxu0 0.0
    %5484 = vmatpush.msra.mxu0 0.0
    %5485 = vmatpush.msra.mxu0 0.0
    %5486 = vmatpush.msra.mxu0 0.0
    %5487 = vmatpush.msra.mxu0 0.0
    %5488 = vmatpush.msra.mxu0 0.0
    %5489 = vmatpush.msra.mxu0 0.0
    %v5490 = vand.u32 %v62, 4294901760
    %v5491 = vsub.f32 %v62, %v5490
    %v5492 = vand.u32 %v5491, 4294901760
    %5493 = vmatpush.msra.mxu0 %v5492
    %v5494 = vand.u32 %v60, 4294901760
    %v5495 = vsub.f32 %v60, %v5494
    %v5496 = vand.u32 %v5495, 4294901760
    %5497 = vmatpush.msra.mxu0 %v5496
    %v5498 = vand.u32 %v5365, 4294901760
    %5499 = vmatmul.f32.gmra.mxu0 %v5498
    %v5500 = vpop.f32.mrf.mxu0
    %v5501 = vadd.f32 %v5474, %v5500
    %5502 = vdwg.mxu0
    %5503 = vmatpush.msra.mxu0 0.0
    %5504 = vmatpush.msra.mxu0 0.0
    %5505 = vmatpush.msra.mxu0 0.0
    %5506 = vmatpush.msra.mxu0 0.0
    %5507 = vmatpush.msra.mxu0 0.0
    %5508 = vmatpush.msra.mxu0 0.0
    %5509 = vmatpush.msra.mxu0 0.0
    %5510 = vmatpush.msra.mxu0 0.0
    %5511 = vmatpush.msra.mxu0 0.0
    %5512 = vmatpush.msra.mxu0 0.0
    %5513 = vmatpush.msra.mxu0 0.0
    %5514 = vmatpush.msra.mxu0 0.0
    %5515 = vmatpush.msra.mxu0 0.0
    %5516 = vmatpush.msra.mxu0 0.0
    %v5517 = vand.u32 %v62, 4294901760
    %5518 = vmatpush.msra.mxu0 %v5517
    %v5519 = vand.u32 %v60, 4294901760
    %5520 = vmatpush.msra.mxu0 %v5519
    %v5521 = vand.u32 %v5365, 4294901760
    %5522 = vmatmul.f32.gmra.mxu0 %v5521
    %v5523 = vpop.f32.mrf.mxu0
    %v5524 = vadd.f32 %v5501, %v5523
    %5525 = vdwg.mxu0
    %5526 = vmatpush.msra.mxu0 0.0
    %5527 = vmatpush.msra.mxu0 0.0
    %5528 = vmatpush.msra.mxu0 0.0
    %5529 = vmatpush.msra.mxu0 0.0
    %5530 = vmatpush.msra.mxu0 0.0
    %5531 = vmatpush.msra.mxu0 0.0
    %5532 = vmatpush.msra.mxu0 0.0
    %5533 = vmatpush.msra.mxu0 0.0
    %5534 = vmatpush.msra.mxu0 0.0
    %5535 = vmatpush.msra.mxu0 0.0
    %5536 = vmatpush.msra.mxu0 0.0
    %5537 = vmatpush.msra.mxu0 0.0
    %5538 = vmatpush.msra.mxu0 0.0
    %5539 = vmatpush.msra.mxu0 0.0
    %v5540 = vand.u32 %v63, 4294901760
    %5541 = vmatpush.msra.mxu0 %v5540
    %v5542 = vand.u32 %v61, 4294901760
    %5543 = vmatpush.msra.mxu0 %v5542
    %v5544 = vand.u32 %v5365, 4294901760
    %v5545 = vsub.f32 %v5365, %v5544
    %v5546 = vand.u32 %v5545, 4294901760
    %v5547 = vsub.f32 %v5545, %v5546
    %v5548 = vand.u32 %v5547, 4294901760
    %5549 = vmatmul.f32.gmra.mxu0 %v5548
    %v5550 = vpop.f32.mrf.mxu0
    %v5551 = vadd.f32 0.0, %v5550
    %5552 = vdwg.mxu0
    %5553 = vmatpush.msra.mxu0 0.0
    %5554 = vmatpush.msra.mxu0 0.0
    %5555 = vmatpush.msra.mxu0 0.0
    %5556 = vmatpush.msra.mxu0 0.0
    %5557 = vmatpush.msra.mxu0 0.0
    %5558 = vmatpush.msra.mxu0 0.0
    %5559 = vmatpush.msra.mxu0 0.0
    %5560 = vmatpush.msra.mxu0 0.0
    %5561 = vmatpush.msra.mxu0 0.0
    %5562 = vmatpush.msra.mxu0 0.0
    %5563 = vmatpush.msra.mxu0 0.0
    %5564 = vmatpush.msra.mxu0 0.0
    %5565 = vmatpush.msra.mxu0 0.0
    %5566 = vmatpush.msra.mxu0 0.0
    %v5567 = vand.u32 %v63, 4294901760
    %v5568 = vsub.f32 %v63, %v5567
    %v5569 = vand.u32 %v5568, 4294901760
    %v5570 = vsub.f32 %v5568, %v5569
    %v5571 = vand.u32 %v5570, 4294901760
    %5572 = vmatpush.msra.mxu0 %v5571
    %v5573 = vand.u32 %v61, 4294901760
    %v5574 = vsub.f32 %v61, %v5573
    %v5575 = vand.u32 %v5574, 4294901760
    %v5576 = vsub.f32 %v5574, %v5575
    %v5577 = vand.u32 %v5576, 4294901760
    %5578 = vmatpush.msra.mxu0 %v5577
    %v5579 = vand.u32 %v5365, 4294901760
    %5580 = vmatmul.f32.gmra.mxu0 %v5579
    %v5581 = vpop.f32.mrf.mxu0
    %v5582 = vadd.f32 %v5551, %v5581
    %5583 = vdwg.mxu0
    %5584 = vmatpush.msra.mxu0 0.0
    %5585 = vmatpush.msra.mxu0 0.0
    %5586 = vmatpush.msra.mxu0 0.0
    %5587 = vmatpush.msra.mxu0 0.0
    %5588 = vmatpush.msra.mxu0 0.0
    %5589 = vmatpush.msra.mxu0 0.0
    %5590 = vmatpush.msra.mxu0 0.0
    %5591 = vmatpush.msra.mxu0 0.0
    %5592 = vmatpush.msra.mxu0 0.0
    %5593 = vmatpush.msra.mxu0 0.0
    %5594 = vmatpush.msra.mxu0 0.0
    %5595 = vmatpush.msra.mxu0 0.0
    %5596 = vmatpush.msra.mxu0 0.0
    %5597 = vmatpush.msra.mxu0 0.0
    %v5598 = vand.u32 %v63, 4294901760
    %v5599 = vsub.f32 %v63, %v5598
    %5600 = vmatpush.msra.mxu0 %v5599
    %v5601 = vand.u32 %v61, 4294901760
    %v5602 = vsub.f32 %v61, %v5601
    %5603 = vmatpush.msra.mxu0 %v5602
    %v5604 = vand.u32 %v5365, 4294901760
    %v5605 = vsub.f32 %v5365, %v5604
    %5606 = vmatmul.f32.gmra.mxu0 %v5605
    %v5607 = vpop.f32.mrf.mxu0
    %v5608 = vadd.f32 %v5582, %v5607
    %5609 = vdwg.mxu0
    %5610 = vmatpush.msra.mxu0 0.0
    %5611 = vmatpush.msra.mxu0 0.0
    %5612 = vmatpush.msra.mxu0 0.0
    %5613 = vmatpush.msra.mxu0 0.0
    %5614 = vmatpush.msra.mxu0 0.0
    %5615 = vmatpush.msra.mxu0 0.0
    %5616 = vmatpush.msra.mxu0 0.0
    %5617 = vmatpush.msra.mxu0 0.0
    %5618 = vmatpush.msra.mxu0 0.0
    %5619 = vmatpush.msra.mxu0 0.0
    %5620 = vmatpush.msra.mxu0 0.0
    %5621 = vmatpush.msra.mxu0 0.0
    %5622 = vmatpush.msra.mxu0 0.0
    %5623 = vmatpush.msra.mxu0 0.0
    %v5624 = vand.u32 %v63, 4294901760
    %5625 = vmatpush.msra.mxu0 %v5624
    %v5626 = vand.u32 %v61, 4294901760
    %5627 = vmatpush.msra.mxu0 %v5626
    %v5628 = vand.u32 %v5365, 4294901760
    %v5629 = vsub.f32 %v5365, %v5628
    %v5630 = vand.u32 %v5629, 4294901760
    %5631 = vmatmul.f32.gmra.mxu0 %v5630
    %v5632 = vpop.f32.mrf.mxu0
    %v5633 = vadd.f32 %v5608, %v5632
    %5634 = vdwg.mxu0
    %5635 = vmatpush.msra.mxu0 0.0
    %5636 = vmatpush.msra.mxu0 0.0
    %5637 = vmatpush.msra.mxu0 0.0
    %5638 = vmatpush.msra.mxu0 0.0
    %5639 = vmatpush.msra.mxu0 0.0
    %5640 = vmatpush.msra.mxu0 0.0
    %5641 = vmatpush.msra.mxu0 0.0
    %5642 = vmatpush.msra.mxu0 0.0
    %5643 = vmatpush.msra.mxu0 0.0
    %5644 = vmatpush.msra.mxu0 0.0
    %5645 = vmatpush.msra.mxu0 0.0
    %5646 = vmatpush.msra.mxu0 0.0
    %5647 = vmatpush.msra.mxu0 0.0
    %5648 = vmatpush.msra.mxu0 0.0
    %v5649 = vand.u32 %v63, 4294901760
    %v5650 = vsub.f32 %v63, %v5649
    %v5651 = vand.u32 %v5650, 4294901760
    %5652 = vmatpush.msra.mxu0 %v5651
    %v5653 = vand.u32 %v61, 4294901760
    %v5654 = vsub.f32 %v61, %v5653
    %v5655 = vand.u32 %v5654, 4294901760
    %5656 = vmatpush.msra.mxu0 %v5655
    %v5657 = vand.u32 %v5365, 4294901760
    %5658 = vmatmul.f32.gmra.mxu0 %v5657
    %v5659 = vpop.f32.mrf.mxu0
    %v5660 = vadd.f32 %v5633, %v5659
    %5661 = vdwg.mxu0
    %5662 = vmatpush.msra.mxu0 0.0
    %5663 = vmatpush.msra.mxu0 0.0
    %5664 = vmatpush.msra.mxu0 0.0
    %5665 = vmatpush.msra.mxu0 0.0
    %5666 = vmatpush.msra.mxu0 0.0
    %5667 = vmatpush.msra.mxu0 0.0
    %5668 = vmatpush.msra.mxu0 0.0
    %5669 = vmatpush.msra.mxu0 0.0
    %5670 = vmatpush.msra.mxu0 0.0
    %5671 = vmatpush.msra.mxu0 0.0
    %5672 = vmatpush.msra.mxu0 0.0
    %5673 = vmatpush.msra.mxu0 0.0
    %5674 = vmatpush.msra.mxu0 0.0
    %5675 = vmatpush.msra.mxu0 0.0
    %v5676 = vand.u32 %v63, 4294901760
    %5677 = vmatpush.msra.mxu0 %v5676
    %v5678 = vand.u32 %v61, 4294901760
    %5679 = vmatpush.msra.mxu0 %v5678
    %v5680 = vand.u32 %v5365, 4294901760
    %5681 = vmatmul.f32.gmra.mxu0 %v5680
    %v5682 = vpop.f32.mrf.mxu0
    %v5683 = vadd.f32 %v5660, %v5682
    %5684 = vdwg.mxu0
    %v5687 = vrot.slane %v5524, 1
    %v5688 = vrot.slane %v5683, 1
    %v5693 = vmul.f32 %v4621, %v5524
    %v5694 = vmul.f32 %v4627, %v5683
    %v5695 = vmul.f32 %v4633, %v5687
    %v5696 = vmul.f32 %v4639, %v5688
    %v5697 = vperm.slane %v5693, 0
    %v5698 = vperm.slane %v5694, 0
    %v5699 = vperm.slane %v5695, 0
    %v5700 = vperm.slane %v5696, 0
    %v5701 = vmul.f32 %v21, %v5697
    %v5702 = vmul.f32 %v22, %v5698
    %v5703 = vmul.f32 %v23, %v5699
    %v5704 = vmul.f32 %v24, %v5700
    %v5705 = vand.u32 %v43, 4294901760
    %5706 = vmatpush.msra.mxu0 %v5705
    %v5707 = vand.u32 %v42, 4294901760
    %5708 = vmatpush.msra.mxu0 %v5707
    %v5709 = vand.u32 %v41, 4294901760
    %5710 = vmatpush.msra.mxu0 %v5709
    %v5711 = vand.u32 %v40, 4294901760
    %5712 = vmatpush.msra.mxu0 %v5711
    %v5713 = vand.u32 %v39, 4294901760
    %5714 = vmatpush.msra.mxu0 %v5713
    %v5715 = vand.u32 %v38, 4294901760
    %5716 = vmatpush.msra.mxu0 %v5715
    %v5717 = vand.u32 %v37, 4294901760
    %5718 = vmatpush.msra.mxu0 %v5717
    %v5719 = vand.u32 %v36, 4294901760
    %5720 = vmatpush.msra.mxu0 %v5719
    %v5721 = vand.u32 %v35, 4294901760
    %5722 = vmatpush.msra.mxu0 %v5721
    %v5723 = vand.u32 %v34, 4294901760
    %5724 = vmatpush.msra.mxu0 %v5723
    %v5725 = vand.u32 %v33, 4294901760
    %5726 = vmatpush.msra.mxu0 %v5725
    %v5727 = vand.u32 %v32, 4294901760
    %5728 = vmatpush.msra.mxu0 %v5727
    %v5729 = vand.u32 %v31, 4294901760
    %5730 = vmatpush.msra.mxu0 %v5729
    %v5731 = vand.u32 %v30, 4294901760
    %5732 = vmatpush.msra.mxu0 %v5731
    %v5733 = vand.u32 %v29, 4294901760
    %5734 = vmatpush.msra.mxu0 %v5733
    %v5735 = vand.u32 %v28, 4294901760
    %5736 = vmatpush.msra.mxu0 %v5735
    %v5737 = vand.u32 %v5701, 4294901760
    %v5738 = vsub.f32 %v5701, %v5737
    %v5739 = vand.u32 %v5738, 4294901760
    %v5740 = vsub.f32 %v5738, %v5739
    %v5741 = vand.u32 %v5740, 4294901760
    %5742 = vmatmul.f32.gmra.mxu0 %v5741
    %v5743 = vpop.f32.mrf.mxu0
    %v5744 = vadd.f32 0.0, %v5743
    %v5745 = vand.u32 %v5703, 4294901760
    %v5746 = vsub.f32 %v5703, %v5745
    %v5747 = vand.u32 %v5746, 4294901760
    %v5748 = vsub.f32 %v5746, %v5747
    %v5749 = vand.u32 %v5748, 4294901760
    %5750 = vmatmul.f32.gmra.mxu0 %v5749
    %v5751 = vpop.f32.mrf.mxu0
    %v5752 = vadd.f32 0.0, %v5751
    %5753 = vdwg.mxu0
    %v5754 = vand.u32 %v43, 4294901760
    %v5755 = vsub.f32 %v43, %v5754
    %v5756 = vand.u32 %v5755, 4294901760
    %v5757 = vsub.f32 %v5755, %v5756
    %v5758 = vand.u32 %v5757, 4294901760
    %5759 = vmatpush.msra.mxu0 %v5758
    %v5760 = vand.u32 %v42, 4294901760
    %v5761 = vsub.f32 %v42, %v5760
    %v5762 = vand.u32 %v5761, 4294901760
    %v5763 = vsub.f32 %v5761, %v5762
    %v5764 = vand.u32 %v5763, 4294901760
    %5765 = vmatpush.msra.mxu0 %v5764
    %v5766 = vand.u32 %v41, 4294901760
    %v5767 = vsub.f32 %v41, %v5766
    %v5768 = vand.u32 %v5767, 4294901760
    %v5769 = vsub.f32 %v5767, %v5768
    %v5770 = vand.u32 %v5769, 4294901760
    %5771 = vmatpush.msra.mxu0 %v5770
    %v5772 = vand.u32 %v40, 4294901760
    %v5773 = vsub.f32 %v40, %v5772
    %v5774 = vand.u32 %v5773, 4294901760
    %v5775 = vsub.f32 %v5773, %v5774
    %v5776 = vand.u32 %v5775, 4294901760
    %5777 = vmatpush.msra.mxu0 %v5776
    %v5778 = vand.u32 %v39, 4294901760
    %v5779 = vsub.f32 %v39, %v5778
    %v5780 = vand.u32 %v5779, 4294901760
    %v5781 = vsub.f32 %v5779, %v5780
    %v5782 = vand.u32 %v5781, 4294901760
    %5783 = vmatpush.msra.mxu0 %v5782
    %v5784 = vand.u32 %v38, 4294901760
    %v5785 = vsub.f32 %v38, %v5784
    %v5786 = vand.u32 %v5785, 4294901760
    %v5787 = vsub.f32 %v5785, %v5786
    %v5788 = vand.u32 %v5787, 4294901760
    %5789 = vmatpush.msra.mxu0 %v5788
    %v5790 = vand.u32 %v37, 4294901760
    %v5791 = vsub.f32 %v37, %v5790
    %v5792 = vand.u32 %v5791, 4294901760
    %v5793 = vsub.f32 %v5791, %v5792
    %v5794 = vand.u32 %v5793, 4294901760
    %5795 = vmatpush.msra.mxu0 %v5794
    %v5796 = vand.u32 %v36, 4294901760
    %v5797 = vsub.f32 %v36, %v5796
    %v5798 = vand.u32 %v5797, 4294901760
    %v5799 = vsub.f32 %v5797, %v5798
    %v5800 = vand.u32 %v5799, 4294901760
    %5801 = vmatpush.msra.mxu0 %v5800
    %v5802 = vand.u32 %v35, 4294901760
    %v5803 = vsub.f32 %v35, %v5802
    %v5804 = vand.u32 %v5803, 4294901760
    %v5805 = vsub.f32 %v5803, %v5804
    %v5806 = vand.u32 %v5805, 4294901760
    %5807 = vmatpush.msra.mxu0 %v5806
    %v5808 = vand.u32 %v34, 4294901760
    %v5809 = vsub.f32 %v34, %v5808
    %v5810 = vand.u32 %v5809, 4294901760
    %v5811 = vsub.f32 %v5809, %v5810
    %v5812 = vand.u32 %v5811, 4294901760
    %5813 = vmatpush.msra.mxu0 %v5812
    %v5814 = vand.u32 %v33, 4294901760
    %v5815 = vsub.f32 %v33, %v5814
    %v5816 = vand.u32 %v5815, 4294901760
    %v5817 = vsub.f32 %v5815, %v5816
    %v5818 = vand.u32 %v5817, 4294901760
    %5819 = vmatpush.msra.mxu0 %v5818
    %v5820 = vand.u32 %v32, 4294901760
    %v5821 = vsub.f32 %v32, %v5820
    %v5822 = vand.u32 %v5821, 4294901760
    %v5823 = vsub.f32 %v5821, %v5822
    %v5824 = vand.u32 %v5823, 4294901760
    %5825 = vmatpush.msra.mxu0 %v5824
    %v5826 = vand.u32 %v31, 4294901760
    %v5827 = vsub.f32 %v31, %v5826
    %v5828 = vand.u32 %v5827, 4294901760
    %v5829 = vsub.f32 %v5827, %v5828
    %v5830 = vand.u32 %v5829, 4294901760
    %5831 = vmatpush.msra.mxu0 %v5830
    %v5832 = vand.u32 %v30, 4294901760
    %v5833 = vsub.f32 %v30, %v5832
    %v5834 = vand.u32 %v5833, 4294901760
    %v5835 = vsub.f32 %v5833, %v5834
    %v5836 = vand.u32 %v5835, 4294901760
    %5837 = vmatpush.msra.mxu0 %v5836
    %v5838 = vand.u32 %v29, 4294901760
    %v5839 = vsub.f32 %v29, %v5838
    %v5840 = vand.u32 %v5839, 4294901760
    %v5841 = vsub.f32 %v5839, %v5840
    %v5842 = vand.u32 %v5841, 4294901760
    %5843 = vmatpush.msra.mxu0 %v5842
    %v5844 = vand.u32 %v28, 4294901760
    %v5845 = vsub.f32 %v28, %v5844
    %v5846 = vand.u32 %v5845, 4294901760
    %v5847 = vsub.f32 %v5845, %v5846
    %v5848 = vand.u32 %v5847, 4294901760
    %5849 = vmatpush.msra.mxu0 %v5848
    %v5850 = vand.u32 %v5701, 4294901760
    %5851 = vmatmul.f32.gmra.mxu0 %v5850
    %v5852 = vpop.f32.mrf.mxu0
    %v5853 = vadd.f32 %v5744, %v5852
    %v5854 = vand.u32 %v5703, 4294901760
    %5855 = vmatmul.f32.gmra.mxu0 %v5854
    %v5856 = vpop.f32.mrf.mxu0
    %v5857 = vadd.f32 %v5752, %v5856
    %5858 = vdwg.mxu0
    %v5859 = vand.u32 %v43, 4294901760
    %v5860 = vsub.f32 %v43, %v5859
    %5861 = vmatpush.msra.mxu0 %v5860
    %v5862 = vand.u32 %v42, 4294901760
    %v5863 = vsub.f32 %v42, %v5862
    %5864 = vmatpush.msra.mxu0 %v5863
    %v5865 = vand.u32 %v41, 4294901760
    %v5866 = vsub.f32 %v41, %v5865
    %5867 = vmatpush.msra.mxu0 %v5866
    %v5868 = vand.u32 %v40, 4294901760
    %v5869 = vsub.f32 %v40, %v5868
    %5870 = vmatpush.msra.mxu0 %v5869
    %v5871 = vand.u32 %v39, 4294901760
    %v5872 = vsub.f32 %v39, %v5871
    %5873 = vmatpush.msra.mxu0 %v5872
    %v5874 = vand.u32 %v38, 4294901760
    %v5875 = vsub.f32 %v38, %v5874
    %5876 = vmatpush.msra.mxu0 %v5875
    %v5877 = vand.u32 %v37, 4294901760
    %v5878 = vsub.f32 %v37, %v5877
    %5879 = vmatpush.msra.mxu0 %v5878
    %v5880 = vand.u32 %v36, 4294901760
    %v5881 = vsub.f32 %v36, %v5880
    %5882 = vmatpush.msra.mxu0 %v5881
    %v5883 = vand.u32 %v35, 4294901760
    %v5884 = vsub.f32 %v35, %v5883
    %5885 = vmatpush.msra.mxu0 %v5884
    %v5886 = vand.u32 %v34, 4294901760
    %v5887 = vsub.f32 %v34, %v5886
    %5888 = vmatpush.msra.mxu0 %v5887
    %v5889 = vand.u32 %v33, 4294901760
    %v5890 = vsub.f32 %v33, %v5889
    %5891 = vmatpush.msra.mxu0 %v5890
    %v5892 = vand.u32 %v32, 4294901760
    %v5893 = vsub.f32 %v32, %v5892
    %5894 = vmatpush.msra.mxu0 %v5893
    %v5895 = vand.u32 %v31, 4294901760
    %v5896 = vsub.f32 %v31, %v5895
    %5897 = vmatpush.msra.mxu0 %v5896
    %v5898 = vand.u32 %v30, 4294901760
    %v5899 = vsub.f32 %v30, %v5898
    %5900 = vmatpush.msra.mxu0 %v5899
    %v5901 = vand.u32 %v29, 4294901760
    %v5902 = vsub.f32 %v29, %v5901
    %5903 = vmatpush.msra.mxu0 %v5902
    %v5904 = vand.u32 %v28, 4294901760
    %v5905 = vsub.f32 %v28, %v5904
    %5906 = vmatpush.msra.mxu0 %v5905
    %v5907 = vand.u32 %v5701, 4294901760
    %v5908 = vsub.f32 %v5701, %v5907
    %5909 = vmatmul.f32.gmra.mxu0 %v5908
    %v5910 = vpop.f32.mrf.mxu0
    %v5911 = vadd.f32 %v5853, %v5910
    %v5912 = vand.u32 %v5703, 4294901760
    %v5913 = vsub.f32 %v5703, %v5912
    %5914 = vmatmul.f32.gmra.mxu0 %v5913
    %v5915 = vpop.f32.mrf.mxu0
    %v5916 = vadd.f32 %v5857, %v5915
    %5917 = vdwg.mxu0
    %v5918 = vand.u32 %v43, 4294901760
    %5919 = vmatpush.msra.mxu0 %v5918
    %v5920 = vand.u32 %v42, 4294901760
    %5921 = vmatpush.msra.mxu0 %v5920
    %v5922 = vand.u32 %v41, 4294901760
    %5923 = vmatpush.msra.mxu0 %v5922
    %v5924 = vand.u32 %v40, 4294901760
    %5925 = vmatpush.msra.mxu0 %v5924
    %v5926 = vand.u32 %v39, 4294901760
    %5927 = vmatpush.msra.mxu0 %v5926
    %v5928 = vand.u32 %v38, 4294901760
    %5929 = vmatpush.msra.mxu0 %v5928
    %v5930 = vand.u32 %v37, 4294901760
    %5931 = vmatpush.msra.mxu0 %v5930
    %v5932 = vand.u32 %v36, 4294901760
    %5933 = vmatpush.msra.mxu0 %v5932
    %v5934 = vand.u32 %v35, 4294901760
    %5935 = vmatpush.msra.mxu0 %v5934
    %v5936 = vand.u32 %v34, 4294901760
    %5937 = vmatpush.msra.mxu0 %v5936
    %v5938 = vand.u32 %v33, 4294901760
    %5939 = vmatpush.msra.mxu0 %v5938
    %v5940 = vand.u32 %v32, 4294901760
    %5941 = vmatpush.msra.mxu0 %v5940
    %v5942 = vand.u32 %v31, 4294901760
    %5943 = vmatpush.msra.mxu0 %v5942
    %v5944 = vand.u32 %v30, 4294901760
    %5945 = vmatpush.msra.mxu0 %v5944
    %v5946 = vand.u32 %v29, 4294901760
    %5947 = vmatpush.msra.mxu0 %v5946
    %v5948 = vand.u32 %v28, 4294901760
    %5949 = vmatpush.msra.mxu0 %v5948
    %v5950 = vand.u32 %v5701, 4294901760
    %v5951 = vsub.f32 %v5701, %v5950
    %v5952 = vand.u32 %v5951, 4294901760
    %5953 = vmatmul.f32.gmra.mxu0 %v5952
    %v5954 = vpop.f32.mrf.mxu0
    %v5955 = vadd.f32 %v5911, %v5954
    %v5956 = vand.u32 %v5703, 4294901760
    %v5957 = vsub.f32 %v5703, %v5956
    %v5958 = vand.u32 %v5957, 4294901760
    %5959 = vmatmul.f32.gmra.mxu0 %v5958
    %v5960 = vpop.f32.mrf.mxu0
    %v5961 = vadd.f32 %v5916, %v5960
    %5962 = vdwg.mxu0
    %v5963 = vand.u32 %v43, 4294901760
    %v5964 = vsub.f32 %v43, %v5963
    %v5965 = vand.u32 %v5964, 4294901760
    %5966 = vmatpush.msra.mxu0 %v5965
    %v5967 = vand.u32 %v42, 4294901760
    %v5968 = vsub.f32 %v42, %v5967
    %v5969 = vand.u32 %v5968, 4294901760
    %5970 = vmatpush.msra.mxu0 %v5969
    %v5971 = vand.u32 %v41, 4294901760
    %v5972 = vsub.f32 %v41, %v5971
    %v5973 = vand.u32 %v5972, 4294901760
    %5974 = vmatpush.msra.mxu0 %v5973
    %v5975 = vand.u32 %v40, 4294901760
    %v5976 = vsub.f32 %v40, %v5975
    %v5977 = vand.u32 %v5976, 4294901760
    %5978 = vmatpush.msra.mxu0 %v5977
    %v5979 = vand.u32 %v39, 4294901760
    %v5980 = vsub.f32 %v39, %v5979
    %v5981 = vand.u32 %v5980, 4294901760
    %5982 = vmatpush.msra.mxu0 %v5981
    %v5983 = vand.u32 %v38, 4294901760
    %v5984 = vsub.f32 %v38, %v5983
    %v5985 = vand.u32 %v5984, 4294901760
    %5986 = vmatpush.msra.mxu0 %v5985
    %v5987 = vand.u32 %v37, 4294901760
    %v5988 = vsub.f32 %v37, %v5987
    %v5989 = vand.u32 %v5988, 4294901760
    %5990 = vmatpush.msra.mxu0 %v5989
    %v5991 = vand.u32 %v36, 4294901760
    %v5992 = vsub.f32 %v36, %v5991
    %v5993 = vand.u32 %v5992, 4294901760
    %5994 = vmatpush.msra.mxu0 %v5993
    %v5995 = vand.u32 %v35, 4294901760
    %v5996 = vsub.f32 %v35, %v5995
    %v5997 = vand.u32 %v5996, 4294901760
    %5998 = vmatpush.msra.mxu0 %v5997
    %v5999 = vand.u32 %v34, 4294901760
    %v6000 = vsub.f32 %v34, %v5999
    %v6001 = vand.u32 %v6000, 4294901760
    %6002 = vmatpush.msra.mxu0 %v6001
    %v6003 = vand.u32 %v33, 4294901760
    %v6004 = vsub.f32 %v33, %v6003
    %v6005 = vand.u32 %v6004, 4294901760
    %6006 = vmatpush.msra.mxu0 %v6005
    %v6007 = vand.u32 %v32, 4294901760
    %v6008 = vsub.f32 %v32, %v6007
    %v6009 = vand.u32 %v6008, 4294901760
    %6010 = vmatpush.msra.mxu0 %v6009
    %v6011 = vand.u32 %v31, 4294901760
    %v6012 = vsub.f32 %v31, %v6011
    %v6013 = vand.u32 %v6012, 4294901760
    %6014 = vmatpush.msra.mxu0 %v6013
    %v6015 = vand.u32 %v30, 4294901760
    %v6016 = vsub.f32 %v30, %v6015
    %v6017 = vand.u32 %v6016, 4294901760
    %6018 = vmatpush.msra.mxu0 %v6017
    %v6019 = vand.u32 %v29, 4294901760
    %v6020 = vsub.f32 %v29, %v6019
    %v6021 = vand.u32 %v6020, 4294901760
    %6022 = vmatpush.msra.mxu0 %v6021
    %v6023 = vand.u32 %v28, 4294901760
    %v6024 = vsub.f32 %v28, %v6023
    %v6025 = vand.u32 %v6024, 4294901760
    %6026 = vmatpush.msra.mxu0 %v6025
    %v6027 = vand.u32 %v5701, 4294901760
    %6028 = vmatmul.f32.gmra.mxu0 %v6027
    %v6029 = vpop.f32.mrf.mxu0
    %v6030 = vadd.f32 %v5955, %v6029
    %v6031 = vand.u32 %v5703, 4294901760
    %6032 = vmatmul.f32.gmra.mxu0 %v6031
    %v6033 = vpop.f32.mrf.mxu0
    %v6034 = vadd.f32 %v5961, %v6033
    %6035 = vdwg.mxu0
    %v6036 = vand.u32 %v43, 4294901760
    %6037 = vmatpush.msra.mxu0 %v6036
    %v6038 = vand.u32 %v42, 4294901760
    %6039 = vmatpush.msra.mxu0 %v6038
    %v6040 = vand.u32 %v41, 4294901760
    %6041 = vmatpush.msra.mxu0 %v6040
    %v6042 = vand.u32 %v40, 4294901760
    %6043 = vmatpush.msra.mxu0 %v6042
    %v6044 = vand.u32 %v39, 4294901760
    %6045 = vmatpush.msra.mxu0 %v6044
    %v6046 = vand.u32 %v38, 4294901760
    %6047 = vmatpush.msra.mxu0 %v6046
    %v6048 = vand.u32 %v37, 4294901760
    %6049 = vmatpush.msra.mxu0 %v6048
    %v6050 = vand.u32 %v36, 4294901760
    %6051 = vmatpush.msra.mxu0 %v6050
    %v6052 = vand.u32 %v35, 4294901760
    %6053 = vmatpush.msra.mxu0 %v6052
    %v6054 = vand.u32 %v34, 4294901760
    %6055 = vmatpush.msra.mxu0 %v6054
    %v6056 = vand.u32 %v33, 4294901760
    %6057 = vmatpush.msra.mxu0 %v6056
    %v6058 = vand.u32 %v32, 4294901760
    %6059 = vmatpush.msra.mxu0 %v6058
    %v6060 = vand.u32 %v31, 4294901760
    %6061 = vmatpush.msra.mxu0 %v6060
    %v6062 = vand.u32 %v30, 4294901760
    %6063 = vmatpush.msra.mxu0 %v6062
    %v6064 = vand.u32 %v29, 4294901760
    %6065 = vmatpush.msra.mxu0 %v6064
    %v6066 = vand.u32 %v28, 4294901760
    %6067 = vmatpush.msra.mxu0 %v6066
    %v6068 = vand.u32 %v5701, 4294901760
    %6069 = vmatmul.f32.gmra.mxu0 %v6068
    %v6070 = vpop.f32.mrf.mxu0
    %v6071 = vadd.f32 %v6030, %v6070
    %v6072 = vand.u32 %v5703, 4294901760
    %6073 = vmatmul.f32.gmra.mxu0 %v6072
    %v6074 = vpop.f32.mrf.mxu0
    %v6075 = vadd.f32 %v6034, %v6074
    %6076 = vdwg.mxu0
    %v6077 = vand.u32 %v59, 4294901760
    %6078 = vmatpush.msra.mxu0 %v6077
    %v6079 = vand.u32 %v58, 4294901760
    %6080 = vmatpush.msra.mxu0 %v6079
    %v6081 = vand.u32 %v57, 4294901760
    %6082 = vmatpush.msra.mxu0 %v6081
    %v6083 = vand.u32 %v56, 4294901760
    %6084 = vmatpush.msra.mxu0 %v6083
    %v6085 = vand.u32 %v55, 4294901760
    %6086 = vmatpush.msra.mxu0 %v6085
    %v6087 = vand.u32 %v54, 4294901760
    %6088 = vmatpush.msra.mxu0 %v6087
    %v6089 = vand.u32 %v53, 4294901760
    %6090 = vmatpush.msra.mxu0 %v6089
    %v6091 = vand.u32 %v52, 4294901760
    %6092 = vmatpush.msra.mxu0 %v6091
    %v6093 = vand.u32 %v51, 4294901760
    %6094 = vmatpush.msra.mxu0 %v6093
    %v6095 = vand.u32 %v50, 4294901760
    %6096 = vmatpush.msra.mxu0 %v6095
    %v6097 = vand.u32 %v49, 4294901760
    %6098 = vmatpush.msra.mxu0 %v6097
    %v6099 = vand.u32 %v48, 4294901760
    %6100 = vmatpush.msra.mxu0 %v6099
    %v6101 = vand.u32 %v47, 4294901760
    %6102 = vmatpush.msra.mxu0 %v6101
    %v6103 = vand.u32 %v46, 4294901760
    %6104 = vmatpush.msra.mxu0 %v6103
    %v6105 = vand.u32 %v45, 4294901760
    %6106 = vmatpush.msra.mxu0 %v6105
    %v6107 = vand.u32 %v44, 4294901760
    %6108 = vmatpush.msra.mxu0 %v6107
    %v6109 = vand.u32 %v5702, 4294901760
    %v6110 = vsub.f32 %v5702, %v6109
    %v6111 = vand.u32 %v6110, 4294901760
    %v6112 = vsub.f32 %v6110, %v6111
    %v6113 = vand.u32 %v6112, 4294901760
    %6114 = vmatmul.f32.gmra.mxu0 %v6113
    %v6115 = vpop.f32.mrf.mxu0
    %v6116 = vadd.f32 %v6071, %v6115
    %v6117 = vand.u32 %v5704, 4294901760
    %v6118 = vsub.f32 %v5704, %v6117
    %v6119 = vand.u32 %v6118, 4294901760
    %v6120 = vsub.f32 %v6118, %v6119
    %v6121 = vand.u32 %v6120, 4294901760
    %6122 = vmatmul.f32.gmra.mxu0 %v6121
    %v6123 = vpop.f32.mrf.mxu0
    %v6124 = vadd.f32 %v6075, %v6123
    %6125 = vdwg.mxu0
    %v6126 = vand.u32 %v59, 4294901760
    %v6127 = vsub.f32 %v59, %v6126
    %v6128 = vand.u32 %v6127, 4294901760
    %v6129 = vsub.f32 %v6127, %v6128
    %v6130 = vand.u32 %v6129, 4294901760
    %6131 = vmatpush.msra.mxu0 %v6130
    %v6132 = vand.u32 %v58, 4294901760
    %v6133 = vsub.f32 %v58, %v6132
    %v6134 = vand.u32 %v6133, 4294901760
    %v6135 = vsub.f32 %v6133, %v6134
    %v6136 = vand.u32 %v6135, 4294901760
    %6137 = vmatpush.msra.mxu0 %v6136
    %v6138 = vand.u32 %v57, 4294901760
    %v6139 = vsub.f32 %v57, %v6138
    %v6140 = vand.u32 %v6139, 4294901760
    %v6141 = vsub.f32 %v6139, %v6140
    %v6142 = vand.u32 %v6141, 4294901760
    %6143 = vmatpush.msra.mxu0 %v6142
    %v6144 = vand.u32 %v56, 4294901760
    %v6145 = vsub.f32 %v56, %v6144
    %v6146 = vand.u32 %v6145, 4294901760
    %v6147 = vsub.f32 %v6145, %v6146
    %v6148 = vand.u32 %v6147, 4294901760
    %6149 = vmatpush.msra.mxu0 %v6148
    %v6150 = vand.u32 %v55, 4294901760
    %v6151 = vsub.f32 %v55, %v6150
    %v6152 = vand.u32 %v6151, 4294901760
    %v6153 = vsub.f32 %v6151, %v6152
    %v6154 = vand.u32 %v6153, 4294901760
    %6155 = vmatpush.msra.mxu0 %v6154
    %v6156 = vand.u32 %v54, 4294901760
    %v6157 = vsub.f32 %v54, %v6156
    %v6158 = vand.u32 %v6157, 4294901760
    %v6159 = vsub.f32 %v6157, %v6158
    %v6160 = vand.u32 %v6159, 4294901760
    %6161 = vmatpush.msra.mxu0 %v6160
    %v6162 = vand.u32 %v53, 4294901760
    %v6163 = vsub.f32 %v53, %v6162
    %v6164 = vand.u32 %v6163, 4294901760
    %v6165 = vsub.f32 %v6163, %v6164
    %v6166 = vand.u32 %v6165, 4294901760
    %6167 = vmatpush.msra.mxu0 %v6166
    %v6168 = vand.u32 %v52, 4294901760
    %v6169 = vsub.f32 %v52, %v6168
    %v6170 = vand.u32 %v6169, 4294901760
    %v6171 = vsub.f32 %v6169, %v6170
    %v6172 = vand.u32 %v6171, 4294901760
    %6173 = vmatpush.msra.mxu0 %v6172
    %v6174 = vand.u32 %v51, 4294901760
    %v6175 = vsub.f32 %v51, %v6174
    %v6176 = vand.u32 %v6175, 4294901760
    %v6177 = vsub.f32 %v6175, %v6176
    %v6178 = vand.u32 %v6177, 4294901760
    %6179 = vmatpush.msra.mxu0 %v6178
    %v6180 = vand.u32 %v50, 4294901760
    %v6181 = vsub.f32 %v50, %v6180
    %v6182 = vand.u32 %v6181, 4294901760
    %v6183 = vsub.f32 %v6181, %v6182
    %v6184 = vand.u32 %v6183, 4294901760
    %6185 = vmatpush.msra.mxu0 %v6184
    %v6186 = vand.u32 %v49, 4294901760
    %v6187 = vsub.f32 %v49, %v6186
    %v6188 = vand.u32 %v6187, 4294901760
    %v6189 = vsub.f32 %v6187, %v6188
    %v6190 = vand.u32 %v6189, 4294901760
    %6191 = vmatpush.msra.mxu0 %v6190
    %v6192 = vand.u32 %v48, 4294901760
    %v6193 = vsub.f32 %v48, %v6192
    %v6194 = vand.u32 %v6193, 4294901760
    %v6195 = vsub.f32 %v6193, %v6194
    %v6196 = vand.u32 %v6195, 4294901760
    %6197 = vmatpush.msra.mxu0 %v6196
    %v6198 = vand.u32 %v47, 4294901760
    %v6199 = vsub.f32 %v47, %v6198
    %v6200 = vand.u32 %v6199, 4294901760
    %v6201 = vsub.f32 %v6199, %v6200
    %v6202 = vand.u32 %v6201, 4294901760
    %6203 = vmatpush.msra.mxu0 %v6202
    %v6204 = vand.u32 %v46, 4294901760
    %v6205 = vsub.f32 %v46, %v6204
    %v6206 = vand.u32 %v6205, 4294901760
    %v6207 = vsub.f32 %v6205, %v6206
    %v6208 = vand.u32 %v6207, 4294901760
    %6209 = vmatpush.msra.mxu0 %v6208
    %v6210 = vand.u32 %v45, 4294901760
    %v6211 = vsub.f32 %v45, %v6210
    %v6212 = vand.u32 %v6211, 4294901760
    %v6213 = vsub.f32 %v6211, %v6212
    %v6214 = vand.u32 %v6213, 4294901760
    %6215 = vmatpush.msra.mxu0 %v6214
    %v6216 = vand.u32 %v44, 4294901760
    %v6217 = vsub.f32 %v44, %v6216
    %v6218 = vand.u32 %v6217, 4294901760
    %v6219 = vsub.f32 %v6217, %v6218
    %v6220 = vand.u32 %v6219, 4294901760
    %6221 = vmatpush.msra.mxu0 %v6220
    %v6222 = vand.u32 %v5702, 4294901760
    %6223 = vmatmul.f32.gmra.mxu0 %v6222
    %v6224 = vpop.f32.mrf.mxu0
    %v6225 = vadd.f32 %v6116, %v6224
    %v6226 = vand.u32 %v5704, 4294901760
    %6227 = vmatmul.f32.gmra.mxu0 %v6226
    %v6228 = vpop.f32.mrf.mxu0
    %v6229 = vadd.f32 %v6124, %v6228
    %6230 = vdwg.mxu0
    %v6231 = vand.u32 %v59, 4294901760
    %v6232 = vsub.f32 %v59, %v6231
    %6233 = vmatpush.msra.mxu0 %v6232
    %v6234 = vand.u32 %v58, 4294901760
    %v6235 = vsub.f32 %v58, %v6234
    %6236 = vmatpush.msra.mxu0 %v6235
    %v6237 = vand.u32 %v57, 4294901760
    %v6238 = vsub.f32 %v57, %v6237
    %6239 = vmatpush.msra.mxu0 %v6238
    %v6240 = vand.u32 %v56, 4294901760
    %v6241 = vsub.f32 %v56, %v6240
    %6242 = vmatpush.msra.mxu0 %v6241
    %v6243 = vand.u32 %v55, 4294901760
    %v6244 = vsub.f32 %v55, %v6243
    %6245 = vmatpush.msra.mxu0 %v6244
    %v6246 = vand.u32 %v54, 4294901760
    %v6247 = vsub.f32 %v54, %v6246
    %6248 = vmatpush.msra.mxu0 %v6247
    %v6249 = vand.u32 %v53, 4294901760
    %v6250 = vsub.f32 %v53, %v6249
    %6251 = vmatpush.msra.mxu0 %v6250
    %v6252 = vand.u32 %v52, 4294901760
    %v6253 = vsub.f32 %v52, %v6252
    %6254 = vmatpush.msra.mxu0 %v6253
    %v6255 = vand.u32 %v51, 4294901760
    %v6256 = vsub.f32 %v51, %v6255
    %6257 = vmatpush.msra.mxu0 %v6256
    %v6258 = vand.u32 %v50, 4294901760
    %v6259 = vsub.f32 %v50, %v6258
    %6260 = vmatpush.msra.mxu0 %v6259
    %v6261 = vand.u32 %v49, 4294901760
    %v6262 = vsub.f32 %v49, %v6261
    %6263 = vmatpush.msra.mxu0 %v6262
    %v6264 = vand.u32 %v48, 4294901760
    %v6265 = vsub.f32 %v48, %v6264
    %6266 = vmatpush.msra.mxu0 %v6265
    %v6267 = vand.u32 %v47, 4294901760
    %v6268 = vsub.f32 %v47, %v6267
    %6269 = vmatpush.msra.mxu0 %v6268
    %v6270 = vand.u32 %v46, 4294901760
    %v6271 = vsub.f32 %v46, %v6270
    %6272 = vmatpush.msra.mxu0 %v6271
    %v6273 = vand.u32 %v45, 4294901760
    %v6274 = vsub.f32 %v45, %v6273
    %6275 = vmatpush.msra.mxu0 %v6274
    %v6276 = vand.u32 %v44, 4294901760
    %v6277 = vsub.f32 %v44, %v6276
    %6278 = vmatpush.msra.mxu0 %v6277
    %v6279 = vand.u32 %v5702, 4294901760
    %v6280 = vsub.f32 %v5702, %v6279
    %6281 = vmatmul.f32.gmra.mxu0 %v6280
    %v6282 = vpop.f32.mrf.mxu0
    %v6283 = vadd.f32 %v6225, %v6282
    %v6284 = vand.u32 %v5704, 4294901760
    %v6285 = vsub.f32 %v5704, %v6284
    %6286 = vmatmul.f32.gmra.mxu0 %v6285
    %v6287 = vpop.f32.mrf.mxu0
    %v6288 = vadd.f32 %v6229, %v6287
    %6289 = vdwg.mxu0
    %v6290 = vand.u32 %v59, 4294901760
    %6291 = vmatpush.msra.mxu0 %v6290
    %v6292 = vand.u32 %v58, 4294901760
    %6293 = vmatpush.msra.mxu0 %v6292
    %v6294 = vand.u32 %v57, 4294901760
    %6295 = vmatpush.msra.mxu0 %v6294
    %v6296 = vand.u32 %v56, 4294901760
    %6297 = vmatpush.msra.mxu0 %v6296
    %v6298 = vand.u32 %v55, 4294901760
    %6299 = vmatpush.msra.mxu0 %v6298
    %v6300 = vand.u32 %v54, 4294901760
    %6301 = vmatpush.msra.mxu0 %v6300
    %v6302 = vand.u32 %v53, 4294901760
    %6303 = vmatpush.msra.mxu0 %v6302
    %v6304 = vand.u32 %v52, 4294901760
    %6305 = vmatpush.msra.mxu0 %v6304
    %v6306 = vand.u32 %v51, 4294901760
    %6307 = vmatpush.msra.mxu0 %v6306
    %v6308 = vand.u32 %v50, 4294901760
    %6309 = vmatpush.msra.mxu0 %v6308
    %v6310 = vand.u32 %v49, 4294901760
    %6311 = vmatpush.msra.mxu0 %v6310
    %v6312 = vand.u32 %v48, 4294901760
    %6313 = vmatpush.msra.mxu0 %v6312
    %v6314 = vand.u32 %v47, 4294901760
    %6315 = vmatpush.msra.mxu0 %v6314
    %v6316 = vand.u32 %v46, 4294901760
    %6317 = vmatpush.msra.mxu0 %v6316
    %v6318 = vand.u32 %v45, 4294901760
    %6319 = vmatpush.msra.mxu0 %v6318
    %v6320 = vand.u32 %v44, 4294901760
    %6321 = vmatpush.msra.mxu0 %v6320
    %v6322 = vand.u32 %v5702, 4294901760
    %v6323 = vsub.f32 %v5702, %v6322
    %v6324 = vand.u32 %v6323, 4294901760
    %6325 = vmatmul.f32.gmra.mxu0 %v6324
    %v6326 = vpop.f32.mrf.mxu0
    %v6327 = vadd.f32 %v6283, %v6326
    %v6328 = vand.u32 %v5704, 4294901760
    %v6329 = vsub.f32 %v5704, %v6328
    %v6330 = vand.u32 %v6329, 4294901760
    %6331 = vmatmul.f32.gmra.mxu0 %v6330
    %v6332 = vpop.f32.mrf.mxu0
    %v6333 = vadd.f32 %v6288, %v6332
    %6334 = vdwg.mxu0
    %v6335 = vand.u32 %v59, 4294901760
    %v6336 = vsub.f32 %v59, %v6335
    %v6337 = vand.u32 %v6336, 4294901760
    %6338 = vmatpush.msra.mxu0 %v6337
    %v6339 = vand.u32 %v58, 4294901760
    %v6340 = vsub.f32 %v58, %v6339
    %v6341 = vand.u32 %v6340, 4294901760
    %6342 = vmatpush.msra.mxu0 %v6341
    %v6343 = vand.u32 %v57, 4294901760
    %v6344 = vsub.f32 %v57, %v6343
    %v6345 = vand.u32 %v6344, 4294901760
    %6346 = vmatpush.msra.mxu0 %v6345
    %v6347 = vand.u32 %v56, 4294901760
    %v6348 = vsub.f32 %v56, %v6347
    %v6349 = vand.u32 %v6348, 4294901760
    %6350 = vmatpush.msra.mxu0 %v6349
    %v6351 = vand.u32 %v55, 4294901760
    %v6352 = vsub.f32 %v55, %v6351
    %v6353 = vand.u32 %v6352, 4294901760
    %6354 = vmatpush.msra.mxu0 %v6353
    %v6355 = vand.u32 %v54, 4294901760
    %v6356 = vsub.f32 %v54, %v6355
    %v6357 = vand.u32 %v6356, 4294901760
    %6358 = vmatpush.msra.mxu0 %v6357
    %v6359 = vand.u32 %v53, 4294901760
    %v6360 = vsub.f32 %v53, %v6359
    %v6361 = vand.u32 %v6360, 4294901760
    %6362 = vmatpush.msra.mxu0 %v6361
    %v6363 = vand.u32 %v52, 4294901760
    %v6364 = vsub.f32 %v52, %v6363
    %v6365 = vand.u32 %v6364, 4294901760
    %6366 = vmatpush.msra.mxu0 %v6365
    %v6367 = vand.u32 %v51, 4294901760
    %v6368 = vsub.f32 %v51, %v6367
    %v6369 = vand.u32 %v6368, 4294901760
    %6370 = vmatpush.msra.mxu0 %v6369
    %v6371 = vand.u32 %v50, 4294901760
    %v6372 = vsub.f32 %v50, %v6371
    %v6373 = vand.u32 %v6372, 4294901760
    %6374 = vmatpush.msra.mxu0 %v6373
    %v6375 = vand.u32 %v49, 4294901760
    %v6376 = vsub.f32 %v49, %v6375
    %v6377 = vand.u32 %v6376, 4294901760
    %6378 = vmatpush.msra.mxu0 %v6377
    %v6379 = vand.u32 %v48, 4294901760
    %v6380 = vsub.f32 %v48, %v6379
    %v6381 = vand.u32 %v6380, 4294901760
    %6382 = vmatpush.msra.mxu0 %v6381
    %v6383 = vand.u32 %v47, 4294901760
    %v6384 = vsub.f32 %v47, %v6383
    %v6385 = vand.u32 %v6384, 4294901760
    %6386 = vmatpush.msra.mxu0 %v6385
    %v6387 = vand.u32 %v46, 4294901760
    %v6388 = vsub.f32 %v46, %v6387
    %v6389 = vand.u32 %v6388, 4294901760
    %6390 = vmatpush.msra.mxu0 %v6389
    %v6391 = vand.u32 %v45, 4294901760
    %v6392 = vsub.f32 %v45, %v6391
    %v6393 = vand.u32 %v6392, 4294901760
    %6394 = vmatpush.msra.mxu0 %v6393
    %v6395 = vand.u32 %v44, 4294901760
    %v6396 = vsub.f32 %v44, %v6395
    %v6397 = vand.u32 %v6396, 4294901760
    %6398 = vmatpush.msra.mxu0 %v6397
    %v6399 = vand.u32 %v5702, 4294901760
    %6400 = vmatmul.f32.gmra.mxu0 %v6399
    %v6401 = vpop.f32.mrf.mxu0
    %v6402 = vadd.f32 %v6327, %v6401
    %v6403 = vand.u32 %v5704, 4294901760
    %6404 = vmatmul.f32.gmra.mxu0 %v6403
    %v6405 = vpop.f32.mrf.mxu0
    %v6406 = vadd.f32 %v6333, %v6405
    %6407 = vdwg.mxu0
    %v6408 = vand.u32 %v59, 4294901760
    %6409 = vmatpush.msra.mxu0 %v6408
    %v6410 = vand.u32 %v58, 4294901760
    %6411 = vmatpush.msra.mxu0 %v6410
    %v6412 = vand.u32 %v57, 4294901760
    %6413 = vmatpush.msra.mxu0 %v6412
    %v6414 = vand.u32 %v56, 4294901760
    %6415 = vmatpush.msra.mxu0 %v6414
    %v6416 = vand.u32 %v55, 4294901760
    %6417 = vmatpush.msra.mxu0 %v6416
    %v6418 = vand.u32 %v54, 4294901760
    %6419 = vmatpush.msra.mxu0 %v6418
    %v6420 = vand.u32 %v53, 4294901760
    %6421 = vmatpush.msra.mxu0 %v6420
    %v6422 = vand.u32 %v52, 4294901760
    %6423 = vmatpush.msra.mxu0 %v6422
    %v6424 = vand.u32 %v51, 4294901760
    %6425 = vmatpush.msra.mxu0 %v6424
    %v6426 = vand.u32 %v50, 4294901760
    %6427 = vmatpush.msra.mxu0 %v6426
    %v6428 = vand.u32 %v49, 4294901760
    %6429 = vmatpush.msra.mxu0 %v6428
    %v6430 = vand.u32 %v48, 4294901760
    %6431 = vmatpush.msra.mxu0 %v6430
    %v6432 = vand.u32 %v47, 4294901760
    %6433 = vmatpush.msra.mxu0 %v6432
    %v6434 = vand.u32 %v46, 4294901760
    %6435 = vmatpush.msra.mxu0 %v6434
    %v6436 = vand.u32 %v45, 4294901760
    %6437 = vmatpush.msra.mxu0 %v6436
    %v6438 = vand.u32 %v44, 4294901760
    %6439 = vmatpush.msra.mxu0 %v6438
    %v6440 = vand.u32 %v5702, 4294901760
    %6441 = vmatmul.f32.gmra.mxu0 %v6440
    %v6442 = vpop.f32.mrf.mxu0
    %v6443 = vadd.f32 %v6402, %v6442
    %v6444 = vand.u32 %v5704, 4294901760
    %6445 = vmatmul.f32.gmra.mxu0 %v6444
    %v6446 = vpop.f32.mrf.mxu0
    %v6447 = vadd.f32 %v6406, %v6446
    %6448 = vdwg.mxu0
    %v6449 = vadd.f32 %v4176, %v6443
    %v6450 = vadd.f32 %v4177, %v6447
    %v6451 = vsel %vm817, %v6449, -inf
    %6452 = vmax.xlane.f32.xlu0 %v6451
    %v6453 = vpop.xlane.xlu0 %6452
    %v6454 = vsel %vm817, %v6450, -inf
    %6455 = vmax.xlane.f32.xlu0 %v6454
    %v6456 = vpop.xlane.xlu0 %6455
    %v6457 = vsub.f32 %v6449, %v6453
    %v6458 = vsub.f32 %v6450, %v6456
    %v6459 = vmul.f32 %v6457, 1.442695
    %v6460 = vpow.pop %v6459
    %v6461 = vmul.f32 %v6458, 1.442695
    %v6462 = vpow.pop %v6461
    %v6463 = vsel %vm817, %v6460, 0.0
    %6464 = vadd.xlane.f32.xlu0 %v6463
    %v6465 = vpop.xlane.xlu0 %6464
    %v6466 = vsel %vm817, %v6462, 0.0
    %6467 = vadd.xlane.f32.xlu0 %v6466
    %v6468 = vpop.xlane.xlu0 %6467
    %v6469 = vrcp.pop %v6465
    %v6470 = vmul.f32 %v6465, %v6469
    %v6471 = vsub.f32 1.0, %v6470
    %v6472 = vmul.f32 %v6469, %v6471
    %v6473 = vadd.f32 %v6469, %v6472
    %vm6474 = vweird.f32 %v6465
    %vm6475 = vweird.f32 %v6469
    %vm6476 = vmor %vm6474, %vm6475
    %v6477 = vsel %vm6476, %v6469, %v6473
    %v6478 = vand.u32 2147483647, %v6465
    %vm6479 = vcmp.eq.f32.partialorder %v6478, 8.507059e+37
    %v6480 = vand.u32 %v6465, 2147483648
    %v6481 = vor.u32 1.1754944e-38, %v6480
    %v6482 = vsel %vm6479, %v6481, %v6477
    %v6483 = vmul.f32 %v6460, %v6482
    %v6484 = vrcp.pop %v6468
    %v6485 = vmul.f32 %v6468, %v6484
    %v6486 = vsub.f32 1.0, %v6485
    %v6487 = vmul.f32 %v6484, %v6486
    %v6488 = vadd.f32 %v6484, %v6487
    %vm6489 = vweird.f32 %v6468
    %vm6490 = vweird.f32 %v6484
    %vm6491 = vmor %vm6489, %vm6490
    %v6492 = vsel %vm6491, %v6484, %v6488
    %v6493 = vand.u32 2147483647, %v6468
    %vm6494 = vcmp.eq.f32.partialorder %v6493, 8.507059e+37
    %v6495 = vand.u32 %v6468, 2147483648
    %v6496 = vor.u32 1.1754944e-38, %v6495
    %v6497 = vsel %vm6494, %v6496, %v6492
    %v6498 = vmul.f32 %v6462, %v6497
    %v6500 = vsel %vm817, %v6483, 0
    %v6503 = vsel %vm817, %v6498, 0
    %6505 = vmatpush.msra.mxu0 0.0
    %6506 = vmatpush.msra.mxu0 0.0
    %6507 = vmatpush.msra.mxu0 0.0
    %6508 = vmatpush.msra.mxu0 0.0
    %6509 = vmatpush.msra.mxu0 0.0
    %6510 = vmatpush.msra.mxu0 0.0
    %6511 = vmatpush.msra.mxu0 0.0
    %6512 = vmatpush.msra.mxu0 0.0
    %6513 = vmatpush.msra.mxu0 0.0
    %6514 = vmatpush.msra.mxu0 0.0
    %6515 = vmatpush.msra.mxu0 0.0
    %6516 = vmatpush.msra.mxu0 0.0
    %6517 = vmatpush.msra.mxu0 0.0
    %6518 = vmatpush.msra.mxu0 0.0
    %v6519 = vand.u32 %v62, 4294901760
    %6520 = vmatpush.msra.mxu0 %v6519
    %v6521 = vand.u32 %v60, 4294901760
    %6522 = vmatpush.msra.mxu0 %v6521
    %v6523 = vand.u32 %v6500, 4294901760
    %v6524 = vsub.f32 %v6500, %v6523
    %v6525 = vand.u32 %v6524, 4294901760
    %v6526 = vsub.f32 %v6524, %v6525
    %v6527 = vand.u32 %v6526, 4294901760
    %6528 = vmatmul.f32.gmra.mxu0 %v6527
    %v6529 = vpop.f32.mrf.mxu0
    %v6530 = vadd.f32 0.0, %v6529
    %v6531 = vand.u32 %v6503, 4294901760
    %v6532 = vsub.f32 %v6503, %v6531
    %v6533 = vand.u32 %v6532, 4294901760
    %v6534 = vsub.f32 %v6532, %v6533
    %v6535 = vand.u32 %v6534, 4294901760
    %6536 = vmatmul.f32.gmra.mxu0 %v6535
    %v6537 = vpop.f32.mrf.mxu0
    %v6538 = vadd.f32 0.0, %v6537
    %6539 = vdwg.mxu0
    %6540 = vmatpush.msra.mxu0 0.0
    %6541 = vmatpush.msra.mxu0 0.0
    %6542 = vmatpush.msra.mxu0 0.0
    %6543 = vmatpush.msra.mxu0 0.0
    %6544 = vmatpush.msra.mxu0 0.0
    %6545 = vmatpush.msra.mxu0 0.0
    %6546 = vmatpush.msra.mxu0 0.0
    %6547 = vmatpush.msra.mxu0 0.0
    %6548 = vmatpush.msra.mxu0 0.0
    %6549 = vmatpush.msra.mxu0 0.0
    %6550 = vmatpush.msra.mxu0 0.0
    %6551 = vmatpush.msra.mxu0 0.0
    %6552 = vmatpush.msra.mxu0 0.0
    %6553 = vmatpush.msra.mxu0 0.0
    %v6554 = vand.u32 %v62, 4294901760
    %v6555 = vsub.f32 %v62, %v6554
    %v6556 = vand.u32 %v6555, 4294901760
    %v6557 = vsub.f32 %v6555, %v6556
    %v6558 = vand.u32 %v6557, 4294901760
    %6559 = vmatpush.msra.mxu0 %v6558
    %v6560 = vand.u32 %v60, 4294901760
    %v6561 = vsub.f32 %v60, %v6560
    %v6562 = vand.u32 %v6561, 4294901760
    %v6563 = vsub.f32 %v6561, %v6562
    %v6564 = vand.u32 %v6563, 4294901760
    %6565 = vmatpush.msra.mxu0 %v6564
    %v6566 = vand.u32 %v6500, 4294901760
    %6567 = vmatmul.f32.gmra.mxu0 %v6566
    %v6568 = vpop.f32.mrf.mxu0
    %v6569 = vadd.f32 %v6530, %v6568
    %v6570 = vand.u32 %v6503, 4294901760
    %6571 = vmatmul.f32.gmra.mxu0 %v6570
    %v6572 = vpop.f32.mrf.mxu0
    %v6573 = vadd.f32 %v6538, %v6572
    %6574 = vdwg.mxu0
    %6575 = vmatpush.msra.mxu0 0.0
    %6576 = vmatpush.msra.mxu0 0.0
    %6577 = vmatpush.msra.mxu0 0.0
    %6578 = vmatpush.msra.mxu0 0.0
    %6579 = vmatpush.msra.mxu0 0.0
    %6580 = vmatpush.msra.mxu0 0.0
    %6581 = vmatpush.msra.mxu0 0.0
    %6582 = vmatpush.msra.mxu0 0.0
    %6583 = vmatpush.msra.mxu0 0.0
    %6584 = vmatpush.msra.mxu0 0.0
    %6585 = vmatpush.msra.mxu0 0.0
    %6586 = vmatpush.msra.mxu0 0.0
    %6587 = vmatpush.msra.mxu0 0.0
    %6588 = vmatpush.msra.mxu0 0.0
    %v6589 = vand.u32 %v62, 4294901760
    %v6590 = vsub.f32 %v62, %v6589
    %6591 = vmatpush.msra.mxu0 %v6590
    %v6592 = vand.u32 %v60, 4294901760
    %v6593 = vsub.f32 %v60, %v6592
    %6594 = vmatpush.msra.mxu0 %v6593
    %v6595 = vand.u32 %v6500, 4294901760
    %v6596 = vsub.f32 %v6500, %v6595
    %6597 = vmatmul.f32.gmra.mxu0 %v6596
    %v6598 = vpop.f32.mrf.mxu0
    %v6599 = vadd.f32 %v6569, %v6598
    %v6600 = vand.u32 %v6503, 4294901760
    %v6601 = vsub.f32 %v6503, %v6600
    %6602 = vmatmul.f32.gmra.mxu0 %v6601
    %v6603 = vpop.f32.mrf.mxu0
    %v6604 = vadd.f32 %v6573, %v6603
    %6605 = vdwg.mxu0
    %6606 = vmatpush.msra.mxu0 0.0
    %6607 = vmatpush.msra.mxu0 0.0
    %6608 = vmatpush.msra.mxu0 0.0
    %6609 = vmatpush.msra.mxu0 0.0
    %6610 = vmatpush.msra.mxu0 0.0
    %6611 = vmatpush.msra.mxu0 0.0
    %6612 = vmatpush.msra.mxu0 0.0
    %6613 = vmatpush.msra.mxu0 0.0
    %6614 = vmatpush.msra.mxu0 0.0
    %6615 = vmatpush.msra.mxu0 0.0
    %6616 = vmatpush.msra.mxu0 0.0
    %6617 = vmatpush.msra.mxu0 0.0
    %6618 = vmatpush.msra.mxu0 0.0
    %6619 = vmatpush.msra.mxu0 0.0
    %v6620 = vand.u32 %v62, 4294901760
    %6621 = vmatpush.msra.mxu0 %v6620
    %v6622 = vand.u32 %v60, 4294901760
    %6623 = vmatpush.msra.mxu0 %v6622
    %v6624 = vand.u32 %v6500, 4294901760
    %v6625 = vsub.f32 %v6500, %v6624
    %v6626 = vand.u32 %v6625, 4294901760
    %6627 = vmatmul.f32.gmra.mxu0 %v6626
    %v6628 = vpop.f32.mrf.mxu0
    %v6629 = vadd.f32 %v6599, %v6628
    %v6630 = vand.u32 %v6503, 4294901760
    %v6631 = vsub.f32 %v6503, %v6630
    %v6632 = vand.u32 %v6631, 4294901760
    %6633 = vmatmul.f32.gmra.mxu0 %v6632
    %v6634 = vpop.f32.mrf.mxu0
    %v6635 = vadd.f32 %v6604, %v6634
    %6636 = vdwg.mxu0
    %6637 = vmatpush.msra.mxu0 0.0
    %6638 = vmatpush.msra.mxu0 0.0
    %6639 = vmatpush.msra.mxu0 0.0
    %6640 = vmatpush.msra.mxu0 0.0
    %6641 = vmatpush.msra.mxu0 0.0
    %6642 = vmatpush.msra.mxu0 0.0
    %6643 = vmatpush.msra.mxu0 0.0
    %6644 = vmatpush.msra.mxu0 0.0
    %6645 = vmatpush.msra.mxu0 0.0
    %6646 = vmatpush.msra.mxu0 0.0
    %6647 = vmatpush.msra.mxu0 0.0
    %6648 = vmatpush.msra.mxu0 0.0
    %6649 = vmatpush.msra.mxu0 0.0
    %6650 = vmatpush.msra.mxu0 0.0
    %v6651 = vand.u32 %v62, 4294901760
    %v6652 = vsub.f32 %v62, %v6651
    %v6653 = vand.u32 %v6652, 4294901760
    %6654 = vmatpush.msra.mxu0 %v6653
    %v6655 = vand.u32 %v60, 4294901760
    %v6656 = vsub.f32 %v60, %v6655
    %v6657 = vand.u32 %v6656, 4294901760
    %6658 = vmatpush.msra.mxu0 %v6657
    %v6659 = vand.u32 %v6500, 4294901760
    %6660 = vmatmul.f32.gmra.mxu0 %v6659
    %v6661 = vpop.f32.mrf.mxu0
    %v6662 = vadd.f32 %v6629, %v6661
    %v6663 = vand.u32 %v6503, 4294901760
    %6664 = vmatmul.f32.gmra.mxu0 %v6663
    %v6665 = vpop.f32.mrf.mxu0
    %v6666 = vadd.f32 %v6635, %v6665
    %6667 = vdwg.mxu0
    %6668 = vmatpush.msra.mxu0 0.0
    %6669 = vmatpush.msra.mxu0 0.0
    %6670 = vmatpush.msra.mxu0 0.0
    %6671 = vmatpush.msra.mxu0 0.0
    %6672 = vmatpush.msra.mxu0 0.0
    %6673 = vmatpush.msra.mxu0 0.0
    %6674 = vmatpush.msra.mxu0 0.0
    %6675 = vmatpush.msra.mxu0 0.0
    %6676 = vmatpush.msra.mxu0 0.0
    %6677 = vmatpush.msra.mxu0 0.0
    %6678 = vmatpush.msra.mxu0 0.0
    %6679 = vmatpush.msra.mxu0 0.0
    %6680 = vmatpush.msra.mxu0 0.0
    %6681 = vmatpush.msra.mxu0 0.0
    %v6682 = vand.u32 %v62, 4294901760
    %6683 = vmatpush.msra.mxu0 %v6682
    %v6684 = vand.u32 %v60, 4294901760
    %6685 = vmatpush.msra.mxu0 %v6684
    %v6686 = vand.u32 %v6500, 4294901760
    %6687 = vmatmul.f32.gmra.mxu0 %v6686
    %v6688 = vpop.f32.mrf.mxu0
    %v6689 = vadd.f32 %v6662, %v6688
    %v6690 = vand.u32 %v6503, 4294901760
    %6691 = vmatmul.f32.gmra.mxu0 %v6690
    %v6692 = vpop.f32.mrf.mxu0
    %v6693 = vadd.f32 %v6666, %v6692
    %6694 = vdwg.mxu0
    %6695 = vmatpush.msra.mxu0 0.0
    %6696 = vmatpush.msra.mxu0 0.0
    %6697 = vmatpush.msra.mxu0 0.0
    %6698 = vmatpush.msra.mxu0 0.0
    %6699 = vmatpush.msra.mxu0 0.0
    %6700 = vmatpush.msra.mxu0 0.0
    %6701 = vmatpush.msra.mxu0 0.0
    %6702 = vmatpush.msra.mxu0 0.0
    %6703 = vmatpush.msra.mxu0 0.0
    %6704 = vmatpush.msra.mxu0 0.0
    %6705 = vmatpush.msra.mxu0 0.0
    %6706 = vmatpush.msra.mxu0 0.0
    %6707 = vmatpush.msra.mxu0 0.0
    %6708 = vmatpush.msra.mxu0 0.0
    %v6709 = vand.u32 %v63, 4294901760
    %6710 = vmatpush.msra.mxu0 %v6709
    %v6711 = vand.u32 %v61, 4294901760
    %6712 = vmatpush.msra.mxu0 %v6711
    %v6713 = vand.u32 %v6500, 4294901760
    %v6714 = vsub.f32 %v6500, %v6713
    %v6715 = vand.u32 %v6714, 4294901760
    %v6716 = vsub.f32 %v6714, %v6715
    %v6717 = vand.u32 %v6716, 4294901760
    %6718 = vmatmul.f32.gmra.mxu0 %v6717
    %v6719 = vpop.f32.mrf.mxu0
    %v6720 = vadd.f32 0.0, %v6719
    %v6721 = vand.u32 %v6503, 4294901760
    %v6722 = vsub.f32 %v6503, %v6721
    %v6723 = vand.u32 %v6722, 4294901760
    %v6724 = vsub.f32 %v6722, %v6723
    %v6725 = vand.u32 %v6724, 4294901760
    %6726 = vmatmul.f32.gmra.mxu0 %v6725
    %v6727 = vpop.f32.mrf.mxu0
    %v6728 = vadd.f32 0.0, %v6727
    %6729 = vdwg.mxu0
    %6730 = vmatpush.msra.mxu0 0.0
    %6731 = vmatpush.msra.mxu0 0.0
    %6732 = vmatpush.msra.mxu0 0.0
    %6733 = vmatpush.msra.mxu0 0.0
    %6734 = vmatpush.msra.mxu0 0.0
    %6735 = vmatpush.msra.mxu0 0.0
    %6736 = vmatpush.msra.mxu0 0.0
    %6737 = vmatpush.msra.mxu0 0.0
    %6738 = vmatpush.msra.mxu0 0.0
    %6739 = vmatpush.msra.mxu0 0.0
    %6740 = vmatpush.msra.mxu0 0.0
    %6741 = vmatpush.msra.mxu0 0.0
    %6742 = vmatpush.msra.mxu0 0.0
    %6743 = vmatpush.msra.mxu0 0.0
    %v6744 = vand.u32 %v63, 4294901760
    %v6745 = vsub.f32 %v63, %v6744
    %v6746 = vand.u32 %v6745, 4294901760
    %v6747 = vsub.f32 %v6745, %v6746
    %v6748 = vand.u32 %v6747, 4294901760
    %6749 = vmatpush.msra.mxu0 %v6748
    %v6750 = vand.u32 %v61, 4294901760
    %v6751 = vsub.f32 %v61, %v6750
    %v6752 = vand.u32 %v6751, 4294901760
    %v6753 = vsub.f32 %v6751, %v6752
    %v6754 = vand.u32 %v6753, 4294901760
    %6755 = vmatpush.msra.mxu0 %v6754
    %v6756 = vand.u32 %v6500, 4294901760
    %6757 = vmatmul.f32.gmra.mxu0 %v6756
    %v6758 = vpop.f32.mrf.mxu0
    %v6759 = vadd.f32 %v6720, %v6758
    %v6760 = vand.u32 %v6503, 4294901760
    %6761 = vmatmul.f32.gmra.mxu0 %v6760
    %v6762 = vpop.f32.mrf.mxu0
    %v6763 = vadd.f32 %v6728, %v6762
    %6764 = vdwg.mxu0
    %6765 = vmatpush.msra.mxu0 0.0
    %6766 = vmatpush.msra.mxu0 0.0
    %6767 = vmatpush.msra.mxu0 0.0
    %6768 = vmatpush.msra.mxu0 0.0
    %6769 = vmatpush.msra.mxu0 0.0
    %6770 = vmatpush.msra.mxu0 0.0
    %6771 = vmatpush.msra.mxu0 0.0
    %6772 = vmatpush.msra.mxu0 0.0
    %6773 = vmatpush.msra.mxu0 0.0
    %6774 = vmatpush.msra.mxu0 0.0
    %6775 = vmatpush.msra.mxu0 0.0
    %6776 = vmatpush.msra.mxu0 0.0
    %6777 = vmatpush.msra.mxu0 0.0
    %6778 = vmatpush.msra.mxu0 0.0
    %v6779 = vand.u32 %v63, 4294901760
    %v6780 = vsub.f32 %v63, %v6779
    %6781 = vmatpush.msra.mxu0 %v6780
    %v6782 = vand.u32 %v61, 4294901760
    %v6783 = vsub.f32 %v61, %v6782
    %6784 = vmatpush.msra.mxu0 %v6783
    %v6785 = vand.u32 %v6500, 4294901760
    %v6786 = vsub.f32 %v6500, %v6785
    %6787 = vmatmul.f32.gmra.mxu0 %v6786
    %v6788 = vpop.f32.mrf.mxu0
    %v6789 = vadd.f32 %v6759, %v6788
    %v6790 = vand.u32 %v6503, 4294901760
    %v6791 = vsub.f32 %v6503, %v6790
    %6792 = vmatmul.f32.gmra.mxu0 %v6791
    %v6793 = vpop.f32.mrf.mxu0
    %v6794 = vadd.f32 %v6763, %v6793
    %6795 = vdwg.mxu0
    %6796 = vmatpush.msra.mxu0 0.0
    %6797 = vmatpush.msra.mxu0 0.0
    %6798 = vmatpush.msra.mxu0 0.0
    %6799 = vmatpush.msra.mxu0 0.0
    %6800 = vmatpush.msra.mxu0 0.0
    %6801 = vmatpush.msra.mxu0 0.0
    %6802 = vmatpush.msra.mxu0 0.0
    %6803 = vmatpush.msra.mxu0 0.0
    %6804 = vmatpush.msra.mxu0 0.0
    %6805 = vmatpush.msra.mxu0 0.0
    %6806 = vmatpush.msra.mxu0 0.0
    %6807 = vmatpush.msra.mxu0 0.0
    %6808 = vmatpush.msra.mxu0 0.0
    %6809 = vmatpush.msra.mxu0 0.0
    %v6810 = vand.u32 %v63, 4294901760
    %6811 = vmatpush.msra.mxu0 %v6810
    %v6812 = vand.u32 %v61, 4294901760
    %6813 = vmatpush.msra.mxu0 %v6812
    %v6814 = vand.u32 %v6500, 4294901760
    %v6815 = vsub.f32 %v6500, %v6814
    %v6816 = vand.u32 %v6815, 4294901760
    %6817 = vmatmul.f32.gmra.mxu0 %v6816
    %v6818 = vpop.f32.mrf.mxu0
    %v6819 = vadd.f32 %v6789, %v6818
    %v6820 = vand.u32 %v6503, 4294901760
    %v6821 = vsub.f32 %v6503, %v6820
    %v6822 = vand.u32 %v6821, 4294901760
    %6823 = vmatmul.f32.gmra.mxu0 %v6822
    %v6824 = vpop.f32.mrf.mxu0
    %v6825 = vadd.f32 %v6794, %v6824
    %6826 = vdwg.mxu0
    %6827 = vmatpush.msra.mxu0 0.0
    %6828 = vmatpush.msra.mxu0 0.0
    %6829 = vmatpush.msra.mxu0 0.0
    %6830 = vmatpush.msra.mxu0 0.0
    %6831 = vmatpush.msra.mxu0 0.0
    %6832 = vmatpush.msra.mxu0 0.0
    %6833 = vmatpush.msra.mxu0 0.0
    %6834 = vmatpush.msra.mxu0 0.0
    %6835 = vmatpush.msra.mxu0 0.0
    %6836 = vmatpush.msra.mxu0 0.0
    %6837 = vmatpush.msra.mxu0 0.0
    %6838 = vmatpush.msra.mxu0 0.0
    %6839 = vmatpush.msra.mxu0 0.0
    %6840 = vmatpush.msra.mxu0 0.0
    %v6841 = vand.u32 %v63, 4294901760
    %v6842 = vsub.f32 %v63, %v6841
    %v6843 = vand.u32 %v6842, 4294901760
    %6844 = vmatpush.msra.mxu0 %v6843
    %v6845 = vand.u32 %v61, 4294901760
    %v6846 = vsub.f32 %v61, %v6845
    %v6847 = vand.u32 %v6846, 4294901760
    %6848 = vmatpush.msra.mxu0 %v6847
    %v6849 = vand.u32 %v6500, 4294901760
    %6850 = vmatmul.f32.gmra.mxu0 %v6849
    %v6851 = vpop.f32.mrf.mxu0
    %v6852 = vadd.f32 %v6819, %v6851
    %v6853 = vand.u32 %v6503, 4294901760
    %6854 = vmatmul.f32.gmra.mxu0 %v6853
    %v6855 = vpop.f32.mrf.mxu0
    %v6856 = vadd.f32 %v6825, %v6855
    %6857 = vdwg.mxu0
    %6858 = vmatpush.msra.mxu0 0.0
    %6859 = vmatpush.msra.mxu0 0.0
    %6860 = vmatpush.msra.mxu0 0.0
    %6861 = vmatpush.msra.mxu0 0.0
    %6862 = vmatpush.msra.mxu0 0.0
    %6863 = vmatpush.msra.mxu0 0.0
    %6864 = vmatpush.msra.mxu0 0.0
    %6865 = vmatpush.msra.mxu0 0.0
    %6866 = vmatpush.msra.mxu0 0.0
    %6867 = vmatpush.msra.mxu0 0.0
    %6868 = vmatpush.msra.mxu0 0.0
    %6869 = vmatpush.msra.mxu0 0.0
    %6870 = vmatpush.msra.mxu0 0.0
    %6871 = vmatpush.msra.mxu0 0.0
    %v6872 = vand.u32 %v63, 4294901760
    %6873 = vmatpush.msra.mxu0 %v6872
    %v6874 = vand.u32 %v61, 4294901760
    %6875 = vmatpush.msra.mxu0 %v6874
    %v6876 = vand.u32 %v6500, 4294901760
    %6877 = vmatmul.f32.gmra.mxu0 %v6876
    %v6878 = vpop.f32.mrf.mxu0
    %v6879 = vadd.f32 %v6852, %v6878
    %v6880 = vand.u32 %v6503, 4294901760
    %6881 = vmatmul.f32.gmra.mxu0 %v6880
    %v6882 = vpop.f32.mrf.mxu0
    %v6883 = vadd.f32 %v6856, %v6882
    %6884 = vdwg.mxu0
    %v6885 = vmul.f32 %v6689, %v21
    %v6886 = vmul.f32 %v6879, %v22
    %v6887 = vmul.f32 %v6693, %v23
    %v6888 = vmul.f32 %v6883, %v24
    %v6889 = vrot.slane %v6885, 4
    %v6890 = vadd.f32 %v6885, %v6889
    %v6891 = vrot.slane %v6890, 2
    %v6892 = vadd.f32 %v6890, %v6891
    %v6893 = vrot.slane %v6892, 1
    %v6894 = vadd.f32 %v6892, %v6893
    %v6895 = vrot.slane %v6886, 4
    %v6896 = vadd.f32 %v6886, %v6895
    %v6897 = vrot.slane %v6896, 2
    %v6898 = vadd.f32 %v6896, %v6897
    %v6899 = vrot.slane %v6898, 1
    %v6900 = vadd.f32 %v6898, %v6899
    %v6901 = vrot.slane %v6887, 4
    %v6902 = vadd.f32 %v6887, %v6901
    %v6903 = vrot.slane %v6902, 2
    %v6904 = vadd.f32 %v6902, %v6903
    %v6905 = vrot.slane %v6904, 1
    %v6906 = vadd.f32 %v6904, %v6905
    %v6907 = vrot.slane %v6888, 4
    %v6908 = vadd.f32 %v6888, %v6907
    %v6909 = vrot.slane %v6908, 2
    %v6910 = vadd.f32 %v6908, %v6909
    %v6911 = vrot.slane %v6910, 1
    %v6912 = vadd.f32 %v6910, %v6911
    %v6913 = vmul.f32 %v6894, %v6894
    %v6914 = vmul.f32 %v6900, %v6900
    %v6915 = vmul.f32 %v6906, %v6906
    %v6916 = vmul.f32 %v6912, %v6912
    %v6921 = vsel %vm100, %v6915, %v6913
    %v6922 = vsel %vm100, %v6916, %v6914
    %v6925 = vand.u32 %v43, 4294901760
    %6926 = vmatpush.msra.mxu0 %v6925
    %v6927 = vand.u32 %v42, 4294901760
    %6928 = vmatpush.msra.mxu0 %v6927
    %v6929 = vand.u32 %v41, 4294901760
    %6930 = vmatpush.msra.mxu0 %v6929
    %v6931 = vand.u32 %v40, 4294901760
    %6932 = vmatpush.msra.mxu0 %v6931
    %v6933 = vand.u32 %v39, 4294901760
    %6934 = vmatpush.msra.mxu0 %v6933
    %v6935 = vand.u32 %v38, 4294901760
    %6936 = vmatpush.msra.mxu0 %v6935
    %v6937 = vand.u32 %v37, 4294901760
    %6938 = vmatpush.msra.mxu0 %v6937
    %v6939 = vand.u32 %v36, 4294901760
    %6940 = vmatpush.msra.mxu0 %v6939
    %v6941 = vand.u32 %v35, 4294901760
    %6942 = vmatpush.msra.mxu0 %v6941
    %v6943 = vand.u32 %v34, 4294901760
    %6944 = vmatpush.msra.mxu0 %v6943
    %v6945 = vand.u32 %v33, 4294901760
    %6946 = vmatpush.msra.mxu0 %v6945
    %v6947 = vand.u32 %v32, 4294901760
    %6948 = vmatpush.msra.mxu0 %v6947
    %v6949 = vand.u32 %v31, 4294901760
    %6950 = vmatpush.msra.mxu0 %v6949
    %v6951 = vand.u32 %v30, 4294901760
    %6952 = vmatpush.msra.mxu0 %v6951
    %v6953 = vand.u32 %v29, 4294901760
    %6954 = vmatpush.msra.mxu0 %v6953
    %v6955 = vand.u32 %v28, 4294901760
    %6956 = vmatpush.msra.mxu0 %v6955
    %v6957 = vand.u32 %v6921, 4294901760
    %v6958 = vsub.f32 %v6921, %v6957
    %v6959 = vand.u32 %v6958, 4294901760
    %v6960 = vsub.f32 %v6958, %v6959
    %v6961 = vand.u32 %v6960, 4294901760
    %6962 = vmatmul.f32.gmra.mxu0 %v6961
    %v6963 = vpop.f32.mrf.mxu0
    %v6964 = vadd.f32 0.0, %v6963
    %6965 = vdwg.mxu0
    %v6966 = vand.u32 %v43, 4294901760
    %v6967 = vsub.f32 %v43, %v6966
    %v6968 = vand.u32 %v6967, 4294901760
    %v6969 = vsub.f32 %v6967, %v6968
    %v6970 = vand.u32 %v6969, 4294901760
    %6971 = vmatpush.msra.mxu0 %v6970
    %v6972 = vand.u32 %v42, 4294901760
    %v6973 = vsub.f32 %v42, %v6972
    %v6974 = vand.u32 %v6973, 4294901760
    %v6975 = vsub.f32 %v6973, %v6974
    %v6976 = vand.u32 %v6975, 4294901760
    %6977 = vmatpush.msra.mxu0 %v6976
    %v6978 = vand.u32 %v41, 4294901760
    %v6979 = vsub.f32 %v41, %v6978
    %v6980 = vand.u32 %v6979, 4294901760
    %v6981 = vsub.f32 %v6979, %v6980
    %v6982 = vand.u32 %v6981, 4294901760
    %6983 = vmatpush.msra.mxu0 %v6982
    %v6984 = vand.u32 %v40, 4294901760
    %v6985 = vsub.f32 %v40, %v6984
    %v6986 = vand.u32 %v6985, 4294901760
    %v6987 = vsub.f32 %v6985, %v6986
    %v6988 = vand.u32 %v6987, 4294901760
    %6989 = vmatpush.msra.mxu0 %v6988
    %v6990 = vand.u32 %v39, 4294901760
    %v6991 = vsub.f32 %v39, %v6990
    %v6992 = vand.u32 %v6991, 4294901760
    %v6993 = vsub.f32 %v6991, %v6992
    %v6994 = vand.u32 %v6993, 4294901760
    %6995 = vmatpush.msra.mxu0 %v6994
    %v6996 = vand.u32 %v38, 4294901760
    %v6997 = vsub.f32 %v38, %v6996
    %v6998 = vand.u32 %v6997, 4294901760
    %v6999 = vsub.f32 %v6997, %v6998
    %v7000 = vand.u32 %v6999, 4294901760
    %7001 = vmatpush.msra.mxu0 %v7000
    %v7002 = vand.u32 %v37, 4294901760
    %v7003 = vsub.f32 %v37, %v7002
    %v7004 = vand.u32 %v7003, 4294901760
    %v7005 = vsub.f32 %v7003, %v7004
    %v7006 = vand.u32 %v7005, 4294901760
    %7007 = vmatpush.msra.mxu0 %v7006
    %v7008 = vand.u32 %v36, 4294901760
    %v7009 = vsub.f32 %v36, %v7008
    %v7010 = vand.u32 %v7009, 4294901760
    %v7011 = vsub.f32 %v7009, %v7010
    %v7012 = vand.u32 %v7011, 4294901760
    %7013 = vmatpush.msra.mxu0 %v7012
    %v7014 = vand.u32 %v35, 4294901760
    %v7015 = vsub.f32 %v35, %v7014
    %v7016 = vand.u32 %v7015, 4294901760
    %v7017 = vsub.f32 %v7015, %v7016
    %v7018 = vand.u32 %v7017, 4294901760
    %7019 = vmatpush.msra.mxu0 %v7018
    %v7020 = vand.u32 %v34, 4294901760
    %v7021 = vsub.f32 %v34, %v7020
    %v7022 = vand.u32 %v7021, 4294901760
    %v7023 = vsub.f32 %v7021, %v7022
    %v7024 = vand.u32 %v7023, 4294901760
    %7025 = vmatpush.msra.mxu0 %v7024
    %v7026 = vand.u32 %v33, 4294901760
    %v7027 = vsub.f32 %v33, %v7026
    %v7028 = vand.u32 %v7027, 4294901760
    %v7029 = vsub.f32 %v7027, %v7028
    %v7030 = vand.u32 %v7029, 4294901760
    %7031 = vmatpush.msra.mxu0 %v7030
    %v7032 = vand.u32 %v32, 4294901760
    %v7033 = vsub.f32 %v32, %v7032
    %v7034 = vand.u32 %v7033, 4294901760
    %v7035 = vsub.f32 %v7033, %v7034
    %v7036 = vand.u32 %v7035, 4294901760
    %7037 = vmatpush.msra.mxu0 %v7036
    %v7038 = vand.u32 %v31, 4294901760
    %v7039 = vsub.f32 %v31, %v7038
    %v7040 = vand.u32 %v7039, 4294901760
    %v7041 = vsub.f32 %v7039, %v7040
    %v7042 = vand.u32 %v7041, 4294901760
    %7043 = vmatpush.msra.mxu0 %v7042
    %v7044 = vand.u32 %v30, 4294901760
    %v7045 = vsub.f32 %v30, %v7044
    %v7046 = vand.u32 %v7045, 4294901760
    %v7047 = vsub.f32 %v7045, %v7046
    %v7048 = vand.u32 %v7047, 4294901760
    %7049 = vmatpush.msra.mxu0 %v7048
    %v7050 = vand.u32 %v29, 4294901760
    %v7051 = vsub.f32 %v29, %v7050
    %v7052 = vand.u32 %v7051, 4294901760
    %v7053 = vsub.f32 %v7051, %v7052
    %v7054 = vand.u32 %v7053, 4294901760
    %7055 = vmatpush.msra.mxu0 %v7054
    %v7056 = vand.u32 %v28, 4294901760
    %v7057 = vsub.f32 %v28, %v7056
    %v7058 = vand.u32 %v7057, 4294901760
    %v7059 = vsub.f32 %v7057, %v7058
    %v7060 = vand.u32 %v7059, 4294901760
    %7061 = vmatpush.msra.mxu0 %v7060
    %v7062 = vand.u32 %v6921, 4294901760
    %7063 = vmatmul.f32.gmra.mxu0 %v7062
    %v7064 = vpop.f32.mrf.mxu0
    %v7065 = vadd.f32 %v6964, %v7064
    %7066 = vdwg.mxu0
    %v7067 = vand.u32 %v43, 4294901760
    %v7068 = vsub.f32 %v43, %v7067
    %7069 = vmatpush.msra.mxu0 %v7068
    %v7070 = vand.u32 %v42, 4294901760
    %v7071 = vsub.f32 %v42, %v7070
    %7072 = vmatpush.msra.mxu0 %v7071
    %v7073 = vand.u32 %v41, 4294901760
    %v7074 = vsub.f32 %v41, %v7073
    %7075 = vmatpush.msra.mxu0 %v7074
    %v7076 = vand.u32 %v40, 4294901760
    %v7077 = vsub.f32 %v40, %v7076
    %7078 = vmatpush.msra.mxu0 %v7077
    %v7079 = vand.u32 %v39, 4294901760
    %v7080 = vsub.f32 %v39, %v7079
    %7081 = vmatpush.msra.mxu0 %v7080
    %v7082 = vand.u32 %v38, 4294901760
    %v7083 = vsub.f32 %v38, %v7082
    %7084 = vmatpush.msra.mxu0 %v7083
    %v7085 = vand.u32 %v37, 4294901760
    %v7086 = vsub.f32 %v37, %v7085
    %7087 = vmatpush.msra.mxu0 %v7086
    %v7088 = vand.u32 %v36, 4294901760
    %v7089 = vsub.f32 %v36, %v7088
    %7090 = vmatpush.msra.mxu0 %v7089
    %v7091 = vand.u32 %v35, 4294901760
    %v7092 = vsub.f32 %v35, %v7091
    %7093 = vmatpush.msra.mxu0 %v7092
    %v7094 = vand.u32 %v34, 4294901760
    %v7095 = vsub.f32 %v34, %v7094
    %7096 = vmatpush.msra.mxu0 %v7095
    %v7097 = vand.u32 %v33, 4294901760
    %v7098 = vsub.f32 %v33, %v7097
    %7099 = vmatpush.msra.mxu0 %v7098
    %v7100 = vand.u32 %v32, 4294901760
    %v7101 = vsub.f32 %v32, %v7100
    %7102 = vmatpush.msra.mxu0 %v7101
    %v7103 = vand.u32 %v31, 4294901760
    %v7104 = vsub.f32 %v31, %v7103
    %7105 = vmatpush.msra.mxu0 %v7104
    %v7106 = vand.u32 %v30, 4294901760
    %v7107 = vsub.f32 %v30, %v7106
    %7108 = vmatpush.msra.mxu0 %v7107
    %v7109 = vand.u32 %v29, 4294901760
    %v7110 = vsub.f32 %v29, %v7109
    %7111 = vmatpush.msra.mxu0 %v7110
    %v7112 = vand.u32 %v28, 4294901760
    %v7113 = vsub.f32 %v28, %v7112
    %7114 = vmatpush.msra.mxu0 %v7113
    %v7115 = vand.u32 %v6921, 4294901760
    %v7116 = vsub.f32 %v6921, %v7115
    %7117 = vmatmul.f32.gmra.mxu0 %v7116
    %v7118 = vpop.f32.mrf.mxu0
    %v7119 = vadd.f32 %v7065, %v7118
    %7120 = vdwg.mxu0
    %v7121 = vand.u32 %v43, 4294901760
    %7122 = vmatpush.msra.mxu0 %v7121
    %v7123 = vand.u32 %v42, 4294901760
    %7124 = vmatpush.msra.mxu0 %v7123
    %v7125 = vand.u32 %v41, 4294901760
    %7126 = vmatpush.msra.mxu0 %v7125
    %v7127 = vand.u32 %v40, 4294901760
    %7128 = vmatpush.msra.mxu0 %v7127
    %v7129 = vand.u32 %v39, 4294901760
    %7130 = vmatpush.msra.mxu0 %v7129
    %v7131 = vand.u32 %v38, 4294901760
    %7132 = vmatpush.msra.mxu0 %v7131
    %v7133 = vand.u32 %v37, 4294901760
    %7134 = vmatpush.msra.mxu0 %v7133
    %v7135 = vand.u32 %v36, 4294901760
    %7136 = vmatpush.msra.mxu0 %v7135
    %v7137 = vand.u32 %v35, 4294901760
    %7138 = vmatpush.msra.mxu0 %v7137
    %v7139 = vand.u32 %v34, 4294901760
    %7140 = vmatpush.msra.mxu0 %v7139
    %v7141 = vand.u32 %v33, 4294901760
    %7142 = vmatpush.msra.mxu0 %v7141
    %v7143 = vand.u32 %v32, 4294901760
    %7144 = vmatpush.msra.mxu0 %v7143
    %v7145 = vand.u32 %v31, 4294901760
    %7146 = vmatpush.msra.mxu0 %v7145
    %v7147 = vand.u32 %v30, 4294901760
    %7148 = vmatpush.msra.mxu0 %v7147
    %v7149 = vand.u32 %v29, 4294901760
    %7150 = vmatpush.msra.mxu0 %v7149
    %v7151 = vand.u32 %v28, 4294901760
    %7152 = vmatpush.msra.mxu0 %v7151
    %v7153 = vand.u32 %v6921, 4294901760
    %v7154 = vsub.f32 %v6921, %v7153
    %v7155 = vand.u32 %v7154, 4294901760
    %7156 = vmatmul.f32.gmra.mxu0 %v7155
    %v7157 = vpop.f32.mrf.mxu0
    %v7158 = vadd.f32 %v7119, %v7157
    %7159 = vdwg.mxu0
    %v7160 = vand.u32 %v43, 4294901760
    %v7161 = vsub.f32 %v43, %v7160
    %v7162 = vand.u32 %v7161, 4294901760
    %7163 = vmatpush.msra.mxu0 %v7162
    %v7164 = vand.u32 %v42, 4294901760
    %v7165 = vsub.f32 %v42, %v7164
    %v7166 = vand.u32 %v7165, 4294901760
    %7167 = vmatpush.msra.mxu0 %v7166
    %v7168 = vand.u32 %v41, 4294901760
    %v7169 = vsub.f32 %v41, %v7168
    %v7170 = vand.u32 %v7169, 4294901760
    %7171 = vmatpush.msra.mxu0 %v7170
    %v7172 = vand.u32 %v40, 4294901760
    %v7173 = vsub.f32 %v40, %v7172
    %v7174 = vand.u32 %v7173, 4294901760
    %7175 = vmatpush.msra.mxu0 %v7174
    %v7176 = vand.u32 %v39, 4294901760
    %v7177 = vsub.f32 %v39, %v7176
    %v7178 = vand.u32 %v7177, 4294901760
    %7179 = vmatpush.msra.mxu0 %v7178
    %v7180 = vand.u32 %v38, 4294901760
    %v7181 = vsub.f32 %v38, %v7180
    %v7182 = vand.u32 %v7181, 4294901760
    %7183 = vmatpush.msra.mxu0 %v7182
    %v7184 = vand.u32 %v37, 4294901760
    %v7185 = vsub.f32 %v37, %v7184
    %v7186 = vand.u32 %v7185, 4294901760
    %7187 = vmatpush.msra.mxu0 %v7186
    %v7188 = vand.u32 %v36, 4294901760
    %v7189 = vsub.f32 %v36, %v7188
    %v7190 = vand.u32 %v7189, 4294901760
    %7191 = vmatpush.msra.mxu0 %v7190
    %v7192 = vand.u32 %v35, 4294901760
    %v7193 = vsub.f32 %v35, %v7192
    %v7194 = vand.u32 %v7193, 4294901760
    %7195 = vmatpush.msra.mxu0 %v7194
    %v7196 = vand.u32 %v34, 4294901760
    %v7197 = vsub.f32 %v34, %v7196
    %v7198 = vand.u32 %v7197, 4294901760
    %7199 = vmatpush.msra.mxu0 %v7198
    %v7200 = vand.u32 %v33, 4294901760
    %v7201 = vsub.f32 %v33, %v7200
    %v7202 = vand.u32 %v7201, 4294901760
    %7203 = vmatpush.msra.mxu0 %v7202
    %v7204 = vand.u32 %v32, 4294901760
    %v7205 = vsub.f32 %v32, %v7204
    %v7206 = vand.u32 %v7205, 4294901760
    %7207 = vmatpush.msra.mxu0 %v7206
    %v7208 = vand.u32 %v31, 4294901760
    %v7209 = vsub.f32 %v31, %v7208
    %v7210 = vand.u32 %v7209, 4294901760
    %7211 = vmatpush.msra.mxu0 %v7210
    %v7212 = vand.u32 %v30, 4294901760
    %v7213 = vsub.f32 %v30, %v7212
    %v7214 = vand.u32 %v7213, 4294901760
    %7215 = vmatpush.msra.mxu0 %v7214
    %v7216 = vand.u32 %v29, 4294901760
    %v7217 = vsub.f32 %v29, %v7216
    %v7218 = vand.u32 %v7217, 4294901760
    %7219 = vmatpush.msra.mxu0 %v7218
    %v7220 = vand.u32 %v28, 4294901760
    %v7221 = vsub.f32 %v28, %v7220
    %v7222 = vand.u32 %v7221, 4294901760
    %7223 = vmatpush.msra.mxu0 %v7222
    %v7224 = vand.u32 %v6921, 4294901760
    %7225 = vmatmul.f32.gmra.mxu0 %v7224
    %v7226 = vpop.f32.mrf.mxu0
    %v7227 = vadd.f32 %v7158, %v7226
    %7228 = vdwg.mxu0
    %v7229 = vand.u32 %v43, 4294901760
    %7230 = vmatpush.msra.mxu0 %v7229
    %v7231 = vand.u32 %v42, 4294901760
    %7232 = vmatpush.msra.mxu0 %v7231
    %v7233 = vand.u32 %v41, 4294901760
    %7234 = vmatpush.msra.mxu0 %v7233
    %v7235 = vand.u32 %v40, 4294901760
    %7236 = vmatpush.msra.mxu0 %v7235
    %v7237 = vand.u32 %v39, 4294901760
    %7238 = vmatpush.msra.mxu0 %v7237
    %v7239 = vand.u32 %v38, 4294901760
    %7240 = vmatpush.msra.mxu0 %v7239
    %v7241 = vand.u32 %v37, 4294901760
    %7242 = vmatpush.msra.mxu0 %v7241
    %v7243 = vand.u32 %v36, 4294901760
    %7244 = vmatpush.msra.mxu0 %v7243
    %v7245 = vand.u32 %v35, 4294901760
    %7246 = vmatpush.msra.mxu0 %v7245
    %v7247 = vand.u32 %v34, 4294901760
    %7248 = vmatpush.msra.mxu0 %v7247
    %v7249 = vand.u32 %v33, 4294901760
    %7250 = vmatpush.msra.mxu0 %v7249
    %v7251 = vand.u32 %v32, 4294901760
    %7252 = vmatpush.msra.mxu0 %v7251
    %v7253 = vand.u32 %v31, 4294901760
    %7254 = vmatpush.msra.mxu0 %v7253
    %v7255 = vand.u32 %v30, 4294901760
    %7256 = vmatpush.msra.mxu0 %v7255
    %v7257 = vand.u32 %v29, 4294901760
    %7258 = vmatpush.msra.mxu0 %v7257
    %v7259 = vand.u32 %v28, 4294901760
    %7260 = vmatpush.msra.mxu0 %v7259
    %v7261 = vand.u32 %v6921, 4294901760
    %7262 = vmatmul.f32.gmra.mxu0 %v7261
    %v7263 = vpop.f32.mrf.mxu0
    %v7264 = vadd.f32 %v7227, %v7263
    %7265 = vdwg.mxu0
    %v7266 = vand.u32 %v59, 4294901760
    %7267 = vmatpush.msra.mxu0 %v7266
    %v7268 = vand.u32 %v58, 4294901760
    %7269 = vmatpush.msra.mxu0 %v7268
    %v7270 = vand.u32 %v57, 4294901760
    %7271 = vmatpush.msra.mxu0 %v7270
    %v7272 = vand.u32 %v56, 4294901760
    %7273 = vmatpush.msra.mxu0 %v7272
    %v7274 = vand.u32 %v55, 4294901760
    %7275 = vmatpush.msra.mxu0 %v7274
    %v7276 = vand.u32 %v54, 4294901760
    %7277 = vmatpush.msra.mxu0 %v7276
    %v7278 = vand.u32 %v53, 4294901760
    %7279 = vmatpush.msra.mxu0 %v7278
    %v7280 = vand.u32 %v52, 4294901760
    %7281 = vmatpush.msra.mxu0 %v7280
    %v7282 = vand.u32 %v51, 4294901760
    %7283 = vmatpush.msra.mxu0 %v7282
    %v7284 = vand.u32 %v50, 4294901760
    %7285 = vmatpush.msra.mxu0 %v7284
    %v7286 = vand.u32 %v49, 4294901760
    %7287 = vmatpush.msra.mxu0 %v7286
    %v7288 = vand.u32 %v48, 4294901760
    %7289 = vmatpush.msra.mxu0 %v7288
    %v7290 = vand.u32 %v47, 4294901760
    %7291 = vmatpush.msra.mxu0 %v7290
    %v7292 = vand.u32 %v46, 4294901760
    %7293 = vmatpush.msra.mxu0 %v7292
    %v7294 = vand.u32 %v45, 4294901760
    %7295 = vmatpush.msra.mxu0 %v7294
    %v7296 = vand.u32 %v44, 4294901760
    %7297 = vmatpush.msra.mxu0 %v7296
    %v7298 = vand.u32 %v6922, 4294901760
    %v7299 = vsub.f32 %v6922, %v7298
    %v7300 = vand.u32 %v7299, 4294901760
    %v7301 = vsub.f32 %v7299, %v7300
    %v7302 = vand.u32 %v7301, 4294901760
    %7303 = vmatmul.f32.gmra.mxu0 %v7302
    %v7304 = vpop.f32.mrf.mxu0
    %v7305 = vadd.f32 %v7264, %v7304
    %7306 = vdwg.mxu0
    %v7307 = vand.u32 %v59, 4294901760
    %v7308 = vsub.f32 %v59, %v7307
    %v7309 = vand.u32 %v7308, 4294901760
    %v7310 = vsub.f32 %v7308, %v7309
    %v7311 = vand.u32 %v7310, 4294901760
    %7312 = vmatpush.msra.mxu0 %v7311
    %v7313 = vand.u32 %v58, 4294901760
    %v7314 = vsub.f32 %v58, %v7313
    %v7315 = vand.u32 %v7314, 4294901760
    %v7316 = vsub.f32 %v7314, %v7315
    %v7317 = vand.u32 %v7316, 4294901760
    %7318 = vmatpush.msra.mxu0 %v7317
    %v7319 = vand.u32 %v57, 4294901760
    %v7320 = vsub.f32 %v57, %v7319
    %v7321 = vand.u32 %v7320, 4294901760
    %v7322 = vsub.f32 %v7320, %v7321
    %v7323 = vand.u32 %v7322, 4294901760
    %7324 = vmatpush.msra.mxu0 %v7323
    %v7325 = vand.u32 %v56, 4294901760
    %v7326 = vsub.f32 %v56, %v7325
    %v7327 = vand.u32 %v7326, 4294901760
    %v7328 = vsub.f32 %v7326, %v7327
    %v7329 = vand.u32 %v7328, 4294901760
    %7330 = vmatpush.msra.mxu0 %v7329
    %v7331 = vand.u32 %v55, 4294901760
    %v7332 = vsub.f32 %v55, %v7331
    %v7333 = vand.u32 %v7332, 4294901760
    %v7334 = vsub.f32 %v7332, %v7333
    %v7335 = vand.u32 %v7334, 4294901760
    %7336 = vmatpush.msra.mxu0 %v7335
    %v7337 = vand.u32 %v54, 4294901760
    %v7338 = vsub.f32 %v54, %v7337
    %v7339 = vand.u32 %v7338, 4294901760
    %v7340 = vsub.f32 %v7338, %v7339
    %v7341 = vand.u32 %v7340, 4294901760
    %7342 = vmatpush.msra.mxu0 %v7341
    %v7343 = vand.u32 %v53, 4294901760
    %v7344 = vsub.f32 %v53, %v7343
    %v7345 = vand.u32 %v7344, 4294901760
    %v7346 = vsub.f32 %v7344, %v7345
    %v7347 = vand.u32 %v7346, 4294901760
    %7348 = vmatpush.msra.mxu0 %v7347
    %v7349 = vand.u32 %v52, 4294901760
    %v7350 = vsub.f32 %v52, %v7349
    %v7351 = vand.u32 %v7350, 4294901760
    %v7352 = vsub.f32 %v7350, %v7351
    %v7353 = vand.u32 %v7352, 4294901760
    %7354 = vmatpush.msra.mxu0 %v7353
    %v7355 = vand.u32 %v51, 4294901760
    %v7356 = vsub.f32 %v51, %v7355
    %v7357 = vand.u32 %v7356, 4294901760
    %v7358 = vsub.f32 %v7356, %v7357
    %v7359 = vand.u32 %v7358, 4294901760
    %7360 = vmatpush.msra.mxu0 %v7359
    %v7361 = vand.u32 %v50, 4294901760
    %v7362 = vsub.f32 %v50, %v7361
    %v7363 = vand.u32 %v7362, 4294901760
    %v7364 = vsub.f32 %v7362, %v7363
    %v7365 = vand.u32 %v7364, 4294901760
    %7366 = vmatpush.msra.mxu0 %v7365
    %v7367 = vand.u32 %v49, 4294901760
    %v7368 = vsub.f32 %v49, %v7367
    %v7369 = vand.u32 %v7368, 4294901760
    %v7370 = vsub.f32 %v7368, %v7369
    %v7371 = vand.u32 %v7370, 4294901760
    %7372 = vmatpush.msra.mxu0 %v7371
    %v7373 = vand.u32 %v48, 4294901760
    %v7374 = vsub.f32 %v48, %v7373
    %v7375 = vand.u32 %v7374, 4294901760
    %v7376 = vsub.f32 %v7374, %v7375
    %v7377 = vand.u32 %v7376, 4294901760
    %7378 = vmatpush.msra.mxu0 %v7377
    %v7379 = vand.u32 %v47, 4294901760
    %v7380 = vsub.f32 %v47, %v7379
    %v7381 = vand.u32 %v7380, 4294901760
    %v7382 = vsub.f32 %v7380, %v7381
    %v7383 = vand.u32 %v7382, 4294901760
    %7384 = vmatpush.msra.mxu0 %v7383
    %v7385 = vand.u32 %v46, 4294901760
    %v7386 = vsub.f32 %v46, %v7385
    %v7387 = vand.u32 %v7386, 4294901760
    %v7388 = vsub.f32 %v7386, %v7387
    %v7389 = vand.u32 %v7388, 4294901760
    %7390 = vmatpush.msra.mxu0 %v7389
    %v7391 = vand.u32 %v45, 4294901760
    %v7392 = vsub.f32 %v45, %v7391
    %v7393 = vand.u32 %v7392, 4294901760
    %v7394 = vsub.f32 %v7392, %v7393
    %v7395 = vand.u32 %v7394, 4294901760
    %7396 = vmatpush.msra.mxu0 %v7395
    %v7397 = vand.u32 %v44, 4294901760
    %v7398 = vsub.f32 %v44, %v7397
    %v7399 = vand.u32 %v7398, 4294901760
    %v7400 = vsub.f32 %v7398, %v7399
    %v7401 = vand.u32 %v7400, 4294901760
    %7402 = vmatpush.msra.mxu0 %v7401
    %v7403 = vand.u32 %v6922, 4294901760
    %7404 = vmatmul.f32.gmra.mxu0 %v7403
    %v7405 = vpop.f32.mrf.mxu0
    %v7406 = vadd.f32 %v7305, %v7405
    %7407 = vdwg.mxu0
    %v7408 = vand.u32 %v59, 4294901760
    %v7409 = vsub.f32 %v59, %v7408
    %7410 = vmatpush.msra.mxu0 %v7409
    %v7411 = vand.u32 %v58, 4294901760
    %v7412 = vsub.f32 %v58, %v7411
    %7413 = vmatpush.msra.mxu0 %v7412
    %v7414 = vand.u32 %v57, 4294901760
    %v7415 = vsub.f32 %v57, %v7414
    %7416 = vmatpush.msra.mxu0 %v7415
    %v7417 = vand.u32 %v56, 4294901760
    %v7418 = vsub.f32 %v56, %v7417
    %7419 = vmatpush.msra.mxu0 %v7418
    %v7420 = vand.u32 %v55, 4294901760
    %v7421 = vsub.f32 %v55, %v7420
    %7422 = vmatpush.msra.mxu0 %v7421
    %v7423 = vand.u32 %v54, 4294901760
    %v7424 = vsub.f32 %v54, %v7423
    %7425 = vmatpush.msra.mxu0 %v7424
    %v7426 = vand.u32 %v53, 4294901760
    %v7427 = vsub.f32 %v53, %v7426
    %7428 = vmatpush.msra.mxu0 %v7427
    %v7429 = vand.u32 %v52, 4294901760
    %v7430 = vsub.f32 %v52, %v7429
    %7431 = vmatpush.msra.mxu0 %v7430
    %v7432 = vand.u32 %v51, 4294901760
    %v7433 = vsub.f32 %v51, %v7432
    %7434 = vmatpush.msra.mxu0 %v7433
    %v7435 = vand.u32 %v50, 4294901760
    %v7436 = vsub.f32 %v50, %v7435
    %7437 = vmatpush.msra.mxu0 %v7436
    %v7438 = vand.u32 %v49, 4294901760
    %v7439 = vsub.f32 %v49, %v7438
    %7440 = vmatpush.msra.mxu0 %v7439
    %v7441 = vand.u32 %v48, 4294901760
    %v7442 = vsub.f32 %v48, %v7441
    %7443 = vmatpush.msra.mxu0 %v7442
    %v7444 = vand.u32 %v47, 4294901760
    %v7445 = vsub.f32 %v47, %v7444
    %7446 = vmatpush.msra.mxu0 %v7445
    %v7447 = vand.u32 %v46, 4294901760
    %v7448 = vsub.f32 %v46, %v7447
    %7449 = vmatpush.msra.mxu0 %v7448
    %v7450 = vand.u32 %v45, 4294901760
    %v7451 = vsub.f32 %v45, %v7450
    %7452 = vmatpush.msra.mxu0 %v7451
    %v7453 = vand.u32 %v44, 4294901760
    %v7454 = vsub.f32 %v44, %v7453
    %7455 = vmatpush.msra.mxu0 %v7454
    %v7456 = vand.u32 %v6922, 4294901760
    %v7457 = vsub.f32 %v6922, %v7456
    %7458 = vmatmul.f32.gmra.mxu0 %v7457
    %v7459 = vpop.f32.mrf.mxu0
    %v7460 = vadd.f32 %v7406, %v7459
    %7461 = vdwg.mxu0
    %v7462 = vand.u32 %v59, 4294901760
    %7463 = vmatpush.msra.mxu0 %v7462
    %v7464 = vand.u32 %v58, 4294901760
    %7465 = vmatpush.msra.mxu0 %v7464
    %v7466 = vand.u32 %v57, 4294901760
    %7467 = vmatpush.msra.mxu0 %v7466
    %v7468 = vand.u32 %v56, 4294901760
    %7469 = vmatpush.msra.mxu0 %v7468
    %v7470 = vand.u32 %v55, 4294901760
    %7471 = vmatpush.msra.mxu0 %v7470
    %v7472 = vand.u32 %v54, 4294901760
    %7473 = vmatpush.msra.mxu0 %v7472
    %v7474 = vand.u32 %v53, 4294901760
    %7475 = vmatpush.msra.mxu0 %v7474
    %v7476 = vand.u32 %v52, 4294901760
    %7477 = vmatpush.msra.mxu0 %v7476
    %v7478 = vand.u32 %v51, 4294901760
    %7479 = vmatpush.msra.mxu0 %v7478
    %v7480 = vand.u32 %v50, 4294901760
    %7481 = vmatpush.msra.mxu0 %v7480
    %v7482 = vand.u32 %v49, 4294901760
    %7483 = vmatpush.msra.mxu0 %v7482
    %v7484 = vand.u32 %v48, 4294901760
    %7485 = vmatpush.msra.mxu0 %v7484
    %v7486 = vand.u32 %v47, 4294901760
    %7487 = vmatpush.msra.mxu0 %v7486
    %v7488 = vand.u32 %v46, 4294901760
    %7489 = vmatpush.msra.mxu0 %v7488
    %v7490 = vand.u32 %v45, 4294901760
    %7491 = vmatpush.msra.mxu0 %v7490
    %v7492 = vand.u32 %v44, 4294901760
    %7493 = vmatpush.msra.mxu0 %v7492
    %v7494 = vand.u32 %v6922, 4294901760
    %v7495 = vsub.f32 %v6922, %v7494
    %v7496 = vand.u32 %v7495, 4294901760
    %7497 = vmatmul.f32.gmra.mxu0 %v7496
    %v7498 = vpop.f32.mrf.mxu0
    %v7499 = vadd.f32 %v7460, %v7498
    %7500 = vdwg.mxu0
    %v7501 = vand.u32 %v59, 4294901760
    %v7502 = vsub.f32 %v59, %v7501
    %v7503 = vand.u32 %v7502, 4294901760
    %7504 = vmatpush.msra.mxu0 %v7503
    %v7505 = vand.u32 %v58, 4294901760
    %v7506 = vsub.f32 %v58, %v7505
    %v7507 = vand.u32 %v7506, 4294901760
    %7508 = vmatpush.msra.mxu0 %v7507
    %v7509 = vand.u32 %v57, 4294901760
    %v7510 = vsub.f32 %v57, %v7509
    %v7511 = vand.u32 %v7510, 4294901760
    %7512 = vmatpush.msra.mxu0 %v7511
    %v7513 = vand.u32 %v56, 4294901760
    %v7514 = vsub.f32 %v56, %v7513
    %v7515 = vand.u32 %v7514, 4294901760
    %7516 = vmatpush.msra.mxu0 %v7515
    %v7517 = vand.u32 %v55, 4294901760
    %v7518 = vsub.f32 %v55, %v7517
    %v7519 = vand.u32 %v7518, 4294901760
    %7520 = vmatpush.msra.mxu0 %v7519
    %v7521 = vand.u32 %v54, 4294901760
    %v7522 = vsub.f32 %v54, %v7521
    %v7523 = vand.u32 %v7522, 4294901760
    %7524 = vmatpush.msra.mxu0 %v7523
    %v7525 = vand.u32 %v53, 4294901760
    %v7526 = vsub.f32 %v53, %v7525
    %v7527 = vand.u32 %v7526, 4294901760
    %7528 = vmatpush.msra.mxu0 %v7527
    %v7529 = vand.u32 %v52, 4294901760
    %v7530 = vsub.f32 %v52, %v7529
    %v7531 = vand.u32 %v7530, 4294901760
    %7532 = vmatpush.msra.mxu0 %v7531
    %v7533 = vand.u32 %v51, 4294901760
    %v7534 = vsub.f32 %v51, %v7533
    %v7535 = vand.u32 %v7534, 4294901760
    %7536 = vmatpush.msra.mxu0 %v7535
    %v7537 = vand.u32 %v50, 4294901760
    %v7538 = vsub.f32 %v50, %v7537
    %v7539 = vand.u32 %v7538, 4294901760
    %7540 = vmatpush.msra.mxu0 %v7539
    %v7541 = vand.u32 %v49, 4294901760
    %v7542 = vsub.f32 %v49, %v7541
    %v7543 = vand.u32 %v7542, 4294901760
    %7544 = vmatpush.msra.mxu0 %v7543
    %v7545 = vand.u32 %v48, 4294901760
    %v7546 = vsub.f32 %v48, %v7545
    %v7547 = vand.u32 %v7546, 4294901760
    %7548 = vmatpush.msra.mxu0 %v7547
    %v7549 = vand.u32 %v47, 4294901760
    %v7550 = vsub.f32 %v47, %v7549
    %v7551 = vand.u32 %v7550, 4294901760
    %7552 = vmatpush.msra.mxu0 %v7551
    %v7553 = vand.u32 %v46, 4294901760
    %v7554 = vsub.f32 %v46, %v7553
    %v7555 = vand.u32 %v7554, 4294901760
    %7556 = vmatpush.msra.mxu0 %v7555
    %v7557 = vand.u32 %v45, 4294901760
    %v7558 = vsub.f32 %v45, %v7557
    %v7559 = vand.u32 %v7558, 4294901760
    %7560 = vmatpush.msra.mxu0 %v7559
    %v7561 = vand.u32 %v44, 4294901760
    %v7562 = vsub.f32 %v44, %v7561
    %v7563 = vand.u32 %v7562, 4294901760
    %7564 = vmatpush.msra.mxu0 %v7563
    %v7565 = vand.u32 %v6922, 4294901760
    %7566 = vmatmul.f32.gmra.mxu0 %v7565
    %v7567 = vpop.f32.mrf.mxu0
    %v7568 = vadd.f32 %v7499, %v7567
    %7569 = vdwg.mxu0
    %v7570 = vand.u32 %v59, 4294901760
    %7571 = vmatpush.msra.mxu0 %v7570
    %v7572 = vand.u32 %v58, 4294901760
    %7573 = vmatpush.msra.mxu0 %v7572
    %v7574 = vand.u32 %v57, 4294901760
    %7575 = vmatpush.msra.mxu0 %v7574
    %v7576 = vand.u32 %v56, 4294901760
    %7577 = vmatpush.msra.mxu0 %v7576
    %v7578 = vand.u32 %v55, 4294901760
    %7579 = vmatpush.msra.mxu0 %v7578
    %v7580 = vand.u32 %v54, 4294901760
    %7581 = vmatpush.msra.mxu0 %v7580
    %v7582 = vand.u32 %v53, 4294901760
    %7583 = vmatpush.msra.mxu0 %v7582
    %v7584 = vand.u32 %v52, 4294901760
    %7585 = vmatpush.msra.mxu0 %v7584
    %v7586 = vand.u32 %v51, 4294901760
    %7587 = vmatpush.msra.mxu0 %v7586
    %v7588 = vand.u32 %v50, 4294901760
    %7589 = vmatpush.msra.mxu0 %v7588
    %v7590 = vand.u32 %v49, 4294901760
    %7591 = vmatpush.msra.mxu0 %v7590
    %v7592 = vand.u32 %v48, 4294901760
    %7593 = vmatpush.msra.mxu0 %v7592
    %v7594 = vand.u32 %v47, 4294901760
    %7595 = vmatpush.msra.mxu0 %v7594
    %v7596 = vand.u32 %v46, 4294901760
    %7597 = vmatpush.msra.mxu0 %v7596
    %v7598 = vand.u32 %v45, 4294901760
    %7599 = vmatpush.msra.mxu0 %v7598
    %v7600 = vand.u32 %v44, 4294901760
    %7601 = vmatpush.msra.mxu0 %v7600
    %v7602 = vand.u32 %v6922, 4294901760
    %7603 = vmatmul.f32.gmra.mxu0 %v7602
    %v7604 = vpop.f32.mrf.mxu0
    %v7605 = vadd.f32 %v7568, %v7604
    %7606 = vdwg.mxu0
    %v7607 = vadd.f32 %v7605, 1.0
    %v7608 = vadd.f32 %v7605, 1e-12
    %v7609 = vrsqrt.pop %v7608
    %v7610 = vmul.f32 %v7609, %v7608
    %v7611 = vmul.f32 %v7610, %v7609
    %v7612 = vmul.f32 0.5, %v7611
    %v7613 = vsub.f32 1.5, %v7612
    %v7614 = vmul.f32 %v7609, %v7613
    %v7615 = vmul.f32 %v7608, %v7614
    %vm7616 = vcmp.eq.f32.partialorder %v7608, inf
    %v7617 = vsel %vm7616, %v7608, %v7615
    %vm7618 = vcmp.eq.f32.partialorder %v7608, 0.0
    %v7619 = vand.u32 %v7608, 2147483648
    %v7620 = vsel %vm7618, %v7619, %v7617
    %v7621 = vmul.f32 %v7607, %v7620
    %v7622 = vrcp.pop %v7621
    %v7623 = vmul.f32 %v7621, %v7622
    %v7624 = vsub.f32 1.0, %v7623
    %v7625 = vmul.f32 %v7622, %v7624
    %v7626 = vadd.f32 %v7622, %v7625
    %vm7627 = vweird.f32 %v7621
    %vm7628 = vweird.f32 %v7622
    %vm7629 = vmor %vm7627, %vm7628
    %v7630 = vsel %vm7629, %v7622, %v7626
    %v7631 = vand.u32 2147483647, %v7621
    %vm7632 = vcmp.eq.f32.partialorder %v7631, 8.507059e+37
    %v7633 = vand.u32 %v7621, 2147483648
    %v7634 = vor.u32 1.1754944e-38, %v7633
    %v7635 = vsel %vm7632, %v7634, %v7630
    %v7636 = vmul.f32 %v7605, %v7635
    %v7638 = vsel %vm817, %v7636, 0
    %7640 = vmatpush.msra.mxu0 0.0
    %7641 = vmatpush.msra.mxu0 0.0
    %7642 = vmatpush.msra.mxu0 0.0
    %7643 = vmatpush.msra.mxu0 0.0
    %7644 = vmatpush.msra.mxu0 0.0
    %7645 = vmatpush.msra.mxu0 0.0
    %7646 = vmatpush.msra.mxu0 0.0
    %7647 = vmatpush.msra.mxu0 0.0
    %7648 = vmatpush.msra.mxu0 0.0
    %7649 = vmatpush.msra.mxu0 0.0
    %7650 = vmatpush.msra.mxu0 0.0
    %7651 = vmatpush.msra.mxu0 0.0
    %7652 = vmatpush.msra.mxu0 0.0
    %7653 = vmatpush.msra.mxu0 0.0
    %v7654 = vand.u32 %v62, 4294901760
    %7655 = vmatpush.msra.mxu0 %v7654
    %v7656 = vand.u32 %v60, 4294901760
    %7657 = vmatpush.msra.mxu0 %v7656
    %v7658 = vand.u32 %v7638, 4294901760
    %v7659 = vsub.f32 %v7638, %v7658
    %v7660 = vand.u32 %v7659, 4294901760
    %v7661 = vsub.f32 %v7659, %v7660
    %v7662 = vand.u32 %v7661, 4294901760
    %7663 = vmatmul.f32.gmra.mxu0 %v7662
    %v7664 = vpop.f32.mrf.mxu0
    %v7665 = vadd.f32 0.0, %v7664
    %7666 = vdwg.mxu0
    %7667 = vmatpush.msra.mxu0 0.0
    %7668 = vmatpush.msra.mxu0 0.0
    %7669 = vmatpush.msra.mxu0 0.0
    %7670 = vmatpush.msra.mxu0 0.0
    %7671 = vmatpush.msra.mxu0 0.0
    %7672 = vmatpush.msra.mxu0 0.0
    %7673 = vmatpush.msra.mxu0 0.0
    %7674 = vmatpush.msra.mxu0 0.0
    %7675 = vmatpush.msra.mxu0 0.0
    %7676 = vmatpush.msra.mxu0 0.0
    %7677 = vmatpush.msra.mxu0 0.0
    %7678 = vmatpush.msra.mxu0 0.0
    %7679 = vmatpush.msra.mxu0 0.0
    %7680 = vmatpush.msra.mxu0 0.0
    %v7681 = vand.u32 %v62, 4294901760
    %v7682 = vsub.f32 %v62, %v7681
    %v7683 = vand.u32 %v7682, 4294901760
    %v7684 = vsub.f32 %v7682, %v7683
    %v7685 = vand.u32 %v7684, 4294901760
    %7686 = vmatpush.msra.mxu0 %v7685
    %v7687 = vand.u32 %v60, 4294901760
    %v7688 = vsub.f32 %v60, %v7687
    %v7689 = vand.u32 %v7688, 4294901760
    %v7690 = vsub.f32 %v7688, %v7689
    %v7691 = vand.u32 %v7690, 4294901760
    %7692 = vmatpush.msra.mxu0 %v7691
    %v7693 = vand.u32 %v7638, 4294901760
    %7694 = vmatmul.f32.gmra.mxu0 %v7693
    %v7695 = vpop.f32.mrf.mxu0
    %v7696 = vadd.f32 %v7665, %v7695
    %7697 = vdwg.mxu0
    %7698 = vmatpush.msra.mxu0 0.0
    %7699 = vmatpush.msra.mxu0 0.0
    %7700 = vmatpush.msra.mxu0 0.0
    %7701 = vmatpush.msra.mxu0 0.0
    %7702 = vmatpush.msra.mxu0 0.0
    %7703 = vmatpush.msra.mxu0 0.0
    %7704 = vmatpush.msra.mxu0 0.0
    %7705 = vmatpush.msra.mxu0 0.0
    %7706 = vmatpush.msra.mxu0 0.0
    %7707 = vmatpush.msra.mxu0 0.0
    %7708 = vmatpush.msra.mxu0 0.0
    %7709 = vmatpush.msra.mxu0 0.0
    %7710 = vmatpush.msra.mxu0 0.0
    %7711 = vmatpush.msra.mxu0 0.0
    %v7712 = vand.u32 %v62, 4294901760
    %v7713 = vsub.f32 %v62, %v7712
    %7714 = vmatpush.msra.mxu0 %v7713
    %v7715 = vand.u32 %v60, 4294901760
    %v7716 = vsub.f32 %v60, %v7715
    %7717 = vmatpush.msra.mxu0 %v7716
    %v7718 = vand.u32 %v7638, 4294901760
    %v7719 = vsub.f32 %v7638, %v7718
    %7720 = vmatmul.f32.gmra.mxu0 %v7719
    %v7721 = vpop.f32.mrf.mxu0
    %v7722 = vadd.f32 %v7696, %v7721
    %7723 = vdwg.mxu0
    %7724 = vmatpush.msra.mxu0 0.0
    %7725 = vmatpush.msra.mxu0 0.0
    %7726 = vmatpush.msra.mxu0 0.0
    %7727 = vmatpush.msra.mxu0 0.0
    %7728 = vmatpush.msra.mxu0 0.0
    %7729 = vmatpush.msra.mxu0 0.0
    %7730 = vmatpush.msra.mxu0 0.0
    %7731 = vmatpush.msra.mxu0 0.0
    %7732 = vmatpush.msra.mxu0 0.0
    %7733 = vmatpush.msra.mxu0 0.0
    %7734 = vmatpush.msra.mxu0 0.0
    %7735 = vmatpush.msra.mxu0 0.0
    %7736 = vmatpush.msra.mxu0 0.0
    %7737 = vmatpush.msra.mxu0 0.0
    %v7738 = vand.u32 %v62, 4294901760
    %7739 = vmatpush.msra.mxu0 %v7738
    %v7740 = vand.u32 %v60, 4294901760
    %7741 = vmatpush.msra.mxu0 %v7740
    %v7742 = vand.u32 %v7638, 4294901760
    %v7743 = vsub.f32 %v7638, %v7742
    %v7744 = vand.u32 %v7743, 4294901760
    %7745 = vmatmul.f32.gmra.mxu0 %v7744
    %v7746 = vpop.f32.mrf.mxu0
    %v7747 = vadd.f32 %v7722, %v7746
    %7748 = vdwg.mxu0
    %7749 = vmatpush.msra.mxu0 0.0
    %7750 = vmatpush.msra.mxu0 0.0
    %7751 = vmatpush.msra.mxu0 0.0
    %7752 = vmatpush.msra.mxu0 0.0
    %7753 = vmatpush.msra.mxu0 0.0
    %7754 = vmatpush.msra.mxu0 0.0
    %7755 = vmatpush.msra.mxu0 0.0
    %7756 = vmatpush.msra.mxu0 0.0
    %7757 = vmatpush.msra.mxu0 0.0
    %7758 = vmatpush.msra.mxu0 0.0
    %7759 = vmatpush.msra.mxu0 0.0
    %7760 = vmatpush.msra.mxu0 0.0
    %7761 = vmatpush.msra.mxu0 0.0
    %7762 = vmatpush.msra.mxu0 0.0
    %v7763 = vand.u32 %v62, 4294901760
    %v7764 = vsub.f32 %v62, %v7763
    %v7765 = vand.u32 %v7764, 4294901760
    %7766 = vmatpush.msra.mxu0 %v7765
    %v7767 = vand.u32 %v60, 4294901760
    %v7768 = vsub.f32 %v60, %v7767
    %v7769 = vand.u32 %v7768, 4294901760
    %7770 = vmatpush.msra.mxu0 %v7769
    %v7771 = vand.u32 %v7638, 4294901760
    %7772 = vmatmul.f32.gmra.mxu0 %v7771
    %v7773 = vpop.f32.mrf.mxu0
    %v7774 = vadd.f32 %v7747, %v7773
    %7775 = vdwg.mxu0
    %7776 = vmatpush.msra.mxu0 0.0
    %7777 = vmatpush.msra.mxu0 0.0
    %7778 = vmatpush.msra.mxu0 0.0
    %7779 = vmatpush.msra.mxu0 0.0
    %7780 = vmatpush.msra.mxu0 0.0
    %7781 = vmatpush.msra.mxu0 0.0
    %7782 = vmatpush.msra.mxu0 0.0
    %7783 = vmatpush.msra.mxu0 0.0
    %7784 = vmatpush.msra.mxu0 0.0
    %7785 = vmatpush.msra.mxu0 0.0
    %7786 = vmatpush.msra.mxu0 0.0
    %7787 = vmatpush.msra.mxu0 0.0
    %7788 = vmatpush.msra.mxu0 0.0
    %7789 = vmatpush.msra.mxu0 0.0
    %v7790 = vand.u32 %v62, 4294901760
    %7791 = vmatpush.msra.mxu0 %v7790
    %v7792 = vand.u32 %v60, 4294901760
    %7793 = vmatpush.msra.mxu0 %v7792
    %v7794 = vand.u32 %v7638, 4294901760
    %7795 = vmatmul.f32.gmra.mxu0 %v7794
    %v7796 = vpop.f32.mrf.mxu0
    %v7797 = vadd.f32 %v7774, %v7796
    %7798 = vdwg.mxu0
    %7799 = vmatpush.msra.mxu0 0.0
    %7800 = vmatpush.msra.mxu0 0.0
    %7801 = vmatpush.msra.mxu0 0.0
    %7802 = vmatpush.msra.mxu0 0.0
    %7803 = vmatpush.msra.mxu0 0.0
    %7804 = vmatpush.msra.mxu0 0.0
    %7805 = vmatpush.msra.mxu0 0.0
    %7806 = vmatpush.msra.mxu0 0.0
    %7807 = vmatpush.msra.mxu0 0.0
    %7808 = vmatpush.msra.mxu0 0.0
    %7809 = vmatpush.msra.mxu0 0.0
    %7810 = vmatpush.msra.mxu0 0.0
    %7811 = vmatpush.msra.mxu0 0.0
    %7812 = vmatpush.msra.mxu0 0.0
    %v7813 = vand.u32 %v63, 4294901760
    %7814 = vmatpush.msra.mxu0 %v7813
    %v7815 = vand.u32 %v61, 4294901760
    %7816 = vmatpush.msra.mxu0 %v7815
    %v7817 = vand.u32 %v7638, 4294901760
    %v7818 = vsub.f32 %v7638, %v7817
    %v7819 = vand.u32 %v7818, 4294901760
    %v7820 = vsub.f32 %v7818, %v7819
    %v7821 = vand.u32 %v7820, 4294901760
    %7822 = vmatmul.f32.gmra.mxu0 %v7821
    %v7823 = vpop.f32.mrf.mxu0
    %v7824 = vadd.f32 0.0, %v7823
    %7825 = vdwg.mxu0
    %7826 = vmatpush.msra.mxu0 0.0
    %7827 = vmatpush.msra.mxu0 0.0
    %7828 = vmatpush.msra.mxu0 0.0
    %7829 = vmatpush.msra.mxu0 0.0
    %7830 = vmatpush.msra.mxu0 0.0
    %7831 = vmatpush.msra.mxu0 0.0
    %7832 = vmatpush.msra.mxu0 0.0
    %7833 = vmatpush.msra.mxu0 0.0
    %7834 = vmatpush.msra.mxu0 0.0
    %7835 = vmatpush.msra.mxu0 0.0
    %7836 = vmatpush.msra.mxu0 0.0
    %7837 = vmatpush.msra.mxu0 0.0
    %7838 = vmatpush.msra.mxu0 0.0
    %7839 = vmatpush.msra.mxu0 0.0
    %v7840 = vand.u32 %v63, 4294901760
    %v7841 = vsub.f32 %v63, %v7840
    %v7842 = vand.u32 %v7841, 4294901760
    %v7843 = vsub.f32 %v7841, %v7842
    %v7844 = vand.u32 %v7843, 4294901760
    %7845 = vmatpush.msra.mxu0 %v7844
    %v7846 = vand.u32 %v61, 4294901760
    %v7847 = vsub.f32 %v61, %v7846
    %v7848 = vand.u32 %v7847, 4294901760
    %v7849 = vsub.f32 %v7847, %v7848
    %v7850 = vand.u32 %v7849, 4294901760
    %7851 = vmatpush.msra.mxu0 %v7850
    %v7852 = vand.u32 %v7638, 4294901760
    %7853 = vmatmul.f32.gmra.mxu0 %v7852
    %v7854 = vpop.f32.mrf.mxu0
    %v7855 = vadd.f32 %v7824, %v7854
    %7856 = vdwg.mxu0
    %7857 = vmatpush.msra.mxu0 0.0
    %7858 = vmatpush.msra.mxu0 0.0
    %7859 = vmatpush.msra.mxu0 0.0
    %7860 = vmatpush.msra.mxu0 0.0
    %7861 = vmatpush.msra.mxu0 0.0
    %7862 = vmatpush.msra.mxu0 0.0
    %7863 = vmatpush.msra.mxu0 0.0
    %7864 = vmatpush.msra.mxu0 0.0
    %7865 = vmatpush.msra.mxu0 0.0
    %7866 = vmatpush.msra.mxu0 0.0
    %7867 = vmatpush.msra.mxu0 0.0
    %7868 = vmatpush.msra.mxu0 0.0
    %7869 = vmatpush.msra.mxu0 0.0
    %7870 = vmatpush.msra.mxu0 0.0
    %v7871 = vand.u32 %v63, 4294901760
    %v7872 = vsub.f32 %v63, %v7871
    %7873 = vmatpush.msra.mxu0 %v7872
    %v7874 = vand.u32 %v61, 4294901760
    %v7875 = vsub.f32 %v61, %v7874
    %7876 = vmatpush.msra.mxu0 %v7875
    %v7877 = vand.u32 %v7638, 4294901760
    %v7878 = vsub.f32 %v7638, %v7877
    %7879 = vmatmul.f32.gmra.mxu0 %v7878
    %v7880 = vpop.f32.mrf.mxu0
    %v7881 = vadd.f32 %v7855, %v7880
    %7882 = vdwg.mxu0
    %7883 = vmatpush.msra.mxu0 0.0
    %7884 = vmatpush.msra.mxu0 0.0
    %7885 = vmatpush.msra.mxu0 0.0
    %7886 = vmatpush.msra.mxu0 0.0
    %7887 = vmatpush.msra.mxu0 0.0
    %7888 = vmatpush.msra.mxu0 0.0
    %7889 = vmatpush.msra.mxu0 0.0
    %7890 = vmatpush.msra.mxu0 0.0
    %7891 = vmatpush.msra.mxu0 0.0
    %7892 = vmatpush.msra.mxu0 0.0
    %7893 = vmatpush.msra.mxu0 0.0
    %7894 = vmatpush.msra.mxu0 0.0
    %7895 = vmatpush.msra.mxu0 0.0
    %7896 = vmatpush.msra.mxu0 0.0
    %v7897 = vand.u32 %v63, 4294901760
    %7898 = vmatpush.msra.mxu0 %v7897
    %v7899 = vand.u32 %v61, 4294901760
    %7900 = vmatpush.msra.mxu0 %v7899
    %v7901 = vand.u32 %v7638, 4294901760
    %v7902 = vsub.f32 %v7638, %v7901
    %v7903 = vand.u32 %v7902, 4294901760
    %7904 = vmatmul.f32.gmra.mxu0 %v7903
    %v7905 = vpop.f32.mrf.mxu0
    %v7906 = vadd.f32 %v7881, %v7905
    %7907 = vdwg.mxu0
    %7908 = vmatpush.msra.mxu0 0.0
    %7909 = vmatpush.msra.mxu0 0.0
    %7910 = vmatpush.msra.mxu0 0.0
    %7911 = vmatpush.msra.mxu0 0.0
    %7912 = vmatpush.msra.mxu0 0.0
    %7913 = vmatpush.msra.mxu0 0.0
    %7914 = vmatpush.msra.mxu0 0.0
    %7915 = vmatpush.msra.mxu0 0.0
    %7916 = vmatpush.msra.mxu0 0.0
    %7917 = vmatpush.msra.mxu0 0.0
    %7918 = vmatpush.msra.mxu0 0.0
    %7919 = vmatpush.msra.mxu0 0.0
    %7920 = vmatpush.msra.mxu0 0.0
    %7921 = vmatpush.msra.mxu0 0.0
    %v7922 = vand.u32 %v63, 4294901760
    %v7923 = vsub.f32 %v63, %v7922
    %v7924 = vand.u32 %v7923, 4294901760
    %7925 = vmatpush.msra.mxu0 %v7924
    %v7926 = vand.u32 %v61, 4294901760
    %v7927 = vsub.f32 %v61, %v7926
    %v7928 = vand.u32 %v7927, 4294901760
    %7929 = vmatpush.msra.mxu0 %v7928
    %v7930 = vand.u32 %v7638, 4294901760
    %7931 = vmatmul.f32.gmra.mxu0 %v7930
    %v7932 = vpop.f32.mrf.mxu0
    %v7933 = vadd.f32 %v7906, %v7932
    %7934 = vdwg.mxu0
    %7935 = vmatpush.msra.mxu0 0.0
    %7936 = vmatpush.msra.mxu0 0.0
    %7937 = vmatpush.msra.mxu0 0.0
    %7938 = vmatpush.msra.mxu0 0.0
    %7939 = vmatpush.msra.mxu0 0.0
    %7940 = vmatpush.msra.mxu0 0.0
    %7941 = vmatpush.msra.mxu0 0.0
    %7942 = vmatpush.msra.mxu0 0.0
    %7943 = vmatpush.msra.mxu0 0.0
    %7944 = vmatpush.msra.mxu0 0.0
    %7945 = vmatpush.msra.mxu0 0.0
    %7946 = vmatpush.msra.mxu0 0.0
    %7947 = vmatpush.msra.mxu0 0.0
    %7948 = vmatpush.msra.mxu0 0.0
    %v7949 = vand.u32 %v63, 4294901760
    %7950 = vmatpush.msra.mxu0 %v7949
    %v7951 = vand.u32 %v61, 4294901760
    %7952 = vmatpush.msra.mxu0 %v7951
    %v7953 = vand.u32 %v7638, 4294901760
    %7954 = vmatmul.f32.gmra.mxu0 %v7953
    %v7955 = vpop.f32.mrf.mxu0
    %v7956 = vadd.f32 %v7933, %v7955
    %7957 = vdwg.mxu0
    %v7960 = vrot.slane %v7797, 1
    %v7961 = vrot.slane %v7956, 1
    %v7966 = vmul.f32 %v6894, %v7797
    %v7967 = vmul.f32 %v6900, %v7956
    %v7968 = vmul.f32 %v6906, %v7960
    %v7969 = vmul.f32 %v6912, %v7961
    %v7974 = vrot.slane %v7967, 6
    %v7975 = vrot.slane %v7969, 6
    %vm7976 = vcmask 1041408
    %v7977 = vsel %vm7976, %v7966, %v7974
    %v7978 = vsel %vm7976, %v7968, %v7975
    %vm7979 = vcmask 1044484
    %v7980 = vsel %vm7979, %v7977, %v7977
    %vm7981 = vcmask 1046534
    %v7982 = vsel %vm7981, %v7977, %v7980
    %v7983 = vrot.slane %v7978, 7
    %v7984 = vsel %vm100, %v7983, %v7982
    %vm7985 = vcmask 1043459
    %v7986 = vsel %vm7985, %v7983, %v7984
    %vm7987 = vcmask 1045509
    %v7988 = vsel %vm7987, %v7983, %v7986
    %vm7989 = vcmask 1047559
    %v7990 = vsel %vm7989, %v7983, %v7988
    %7992 = vst [vmem:[#allocation2] sm:$0xf] %v7990
    // Predicated region
    $region22: #{tpu_custom_call.1} parent=1 // pred_check
      _
    $region23: #{tpu_custom_call.1} parent=1 // pred_check_branch
      %7994 = sbr.rel (0) target = $region25
    $region24: #{tpu_custom_call.1} parent=1 // pred_region
      %7996 = vsyncadd [#allocation3], 0
      %s7998 = sshll.u32 [#allocation2], 4
      %s7999 = int_to_ptr.vmem [resolvable:$true] %s7998
      %s8000 = sshll.u32 %s5, 4
      %s8001 = int_to_ptr.hbm [resolvable:$true] %s8000
      %8003 = dma.vmem_to_hbm [thread:$0]  %s7999, 64, %s8001, [#allocation3]
    $region25: #{tpu_custom_call.1} parent=1 // pred_fallthru
      _
    // Predicated region
    $region26: #{tpu_custom_call.1} parent=1 // pred_check
      _
    $region27: #{tpu_custom_call.1} parent=1 // pred_check_branch
      %8005 = sbr.rel (0) target = $region29
    $region28: #{tpu_custom_call.1} parent=1 // pred_region
      %8007 = dma.done [#allocation3], 64
    $region29: #{tpu_custom_call.1} parent=1 // pred_fallthru
      _
    %8008 = vsyncpa [#allocation3], 1

</llo_original>
